<compile_context>
chip_gen: v6e
topology: v6e:2x2x1
jax: 0.10.0
libtpu: 0.0.40
codegen_flags: <defaults>
</compile_context>

<pallas_src>
import math

import jax
import jax.numpy as jnp
from jax.experimental import pallas as pl
from jax.experimental.pallas import tpu as pltpu


# ---------------------------------------------------------------------------
# In-kernel helpers (traced inside the Pallas kernel)
# ---------------------------------------------------------------------------
def _bn(h, gamma, beta, eps=1e-5):
    # Single-pass BatchNorm forward with batch statistics (biased variance).
    # h: (rows, C), gamma/beta: (1, C).  var = E[x^2] - E[x]^2 (clamped), which
    # trades a second pass over h for a mild cancellation risk (fine at these
    # magnitudes, guarded by eps).
    mean = jnp.mean(h, axis=0, keepdims=True)
    meansq = jnp.mean(h * h, axis=0, keepdims=True)
    var = jnp.maximum(meansq - mean * mean, 0.0)
    return (h - mean) * jax.lax.rsqrt(var + eps) * gamma + beta


def _leaky(h, slope=0.01):
    return jnp.where(h >= 0, h, slope * h)


def _mm(a, w):
    # MXU GEMM with bf16 operands, f32 accumulation.
    return jnp.dot(a.astype(jnp.bfloat16), w.astype(jnp.bfloat16),
                   preferred_element_type=jnp.float32)


# ---------------------------------------------------------------------------
# Fused GraphNN forward kernel
#   refs = [x, 3 * (10 Wcompute params + 4 Gconv params), out]
# ---------------------------------------------------------------------------
_N_PARAMS_PER_LAYER = 14
_N_LAYERS = 3


def _graphnn_kernel(*refs):
    x_ref = refs[0]
    p_refs = refs[1:1 + _N_LAYERS * _N_PARAMS_PER_LAYER]
    out_ref = refs[1 + _N_LAYERS * _N_PARAMS_PER_LAYER]

    x = x_ref[...]                                     # (B, N, F0), f32
    B, N, _ = x.shape

    # Diagonal mask built once, reused by all three Wcompute stages.
    neg_diag = jnp.where(
        jax.lax.broadcasted_iota(jnp.int32, (N, N), 0)
        == jax.lax.broadcasted_iota(jnp.int32, (N, N), 1),
        jnp.float32(-1e8), jnp.float32(0.0))[None, :, :]          # (1, N, N)

    def layer(x, p):
        (w1, b1, g1, be1, w2, b2, g2, be2, wl, bl,
         wfc, bfc, gfc, befc) = [r[...] for r in p]

        # ---- Wcompute: edge-feature MLP over |x_i - x_j| --------------------
        diff = jnp.abs(x[:, :, None, :] - x[:, None, :, :])        # (B,N,N,F)
        h = diff.reshape(B * N * N, diff.shape[-1])                # rows = pairs

        h = _mm(h, w1) + b1                                        # 1x1 conv_1
        h = _leaky(_bn(h, g1, be1))
        h = _mm(h, w2) + b2                                        # 1x1 conv_2
        h = _leaky(_bn(h, g2, be2))

        # conv2d_last (-> 1 channel): VPU mul + lane reduce (not an N=1 matmul)
        c2 = h.shape[-1]
        logits = jnp.sum(h.reshape(B, N, N, c2) * wl.reshape(1, 1, 1, c2),
                         axis=-1) + bl                             # (B, N, N)

        # mask diagonal (W_id * 1e8) and softmax over neighbor axis j
        logits = logits + neg_diag
        m = jnp.max(logits, axis=2, keepdims=True)
        e = jnp.exp(logits - m)
        s = e * pl.reciprocal(jnp.sum(e, axis=2, keepdims=True), approx=True)

        # ---- Gconv: gmul with J2 ops [I, S] -> Linear -> BN1d -> LeakyReLU --
        # I @ x == x ; S @ x as one batched contraction (no per-batch loop).
        sx = jnp.einsum('bij,bjd->bid', s, x,
                        preferred_element_type=jnp.float32)        # (B, N, d)
        hh = jnp.concatenate([x, sx], axis=2).reshape(B * N, -1)   # (B*N, 2d)
        hh = _mm(hh, wfc) + bfc
        hh = _leaky(_bn(hh, gfc, befc))                            # leaky from GraphNN.forward
        return hh.reshape(B, N, hh.shape[-1])

    x_new = layer(x, p_refs[0:14])                                 # (B, N, 64)
    x = jnp.concatenate([x, x_new], axis=2)
    x_new = layer(x, p_refs[14:28])                                # (B, N, 64)
    x = jnp.concatenate([x, x_new], axis=2)
    x_new = layer(x, p_refs[28:42])                                # (B, N, 128)
    out_ref[...] = x_new                                           # lane-dense store


# ---------------------------------------------------------------------------
# pallas_call wrapper (single launch for the whole forward)
# ---------------------------------------------------------------------------
def _full_spec(shape):
    n = len(shape)
    return pl.BlockSpec(shape, lambda i, n=n: (0,) * n)


_W_KEYS = ('w1', 'b1', 'g1', 'be1', 'w2', 'b2', 'g2', 'be2', 'wl', 'bl')
_G_KEYS = ('wfc', 'bfc', 'g', 'be')


def _flatten_params(params):
    flat = []
    for wkey, lkey in (('w0', 'l0'), ('w1', 'l1'), ('w2', 'l2')):
        flat += [params[wkey][k] for k in _W_KEYS]
        flat += [params[lkey][k] for k in _G_KEYS]
    return flat


@jax.jit
def graphnn_forward(params, x):
    B, N, _ = x.shape
    f_out = params['l2']['wfc'].shape[1]
    args = (x, *_flatten_params(params))
    # TODO(synk): for v7x (2 TCs) a parallel grid axis would help, but BN needs
    # global batch statistics, so the fused body stays single-program here.
    return pl.pallas_call(
        _graphnn_kernel,
        grid=(1,),
        in_specs=[_full_spec(a.shape) for a in args],
        out_specs=_full_spec((B, N, f_out)),
        out_shape=jax.ShapeDtypeStruct((B, N, f_out), jnp.float32),
        compiler_params=pltpu.CompilerParams(dimension_semantics=("arbitrary",)),
    )(*args)


# ---------------------------------------------------------------------------
# Deterministic synthetic parameter init (shapes match the PyTorch modules;
# weights stored pre-transposed as (in, out) so the kernel does x @ W directly)
# ---------------------------------------------------------------------------
def _init_wcompute(key, f_in, nf=128):
    c1, c2 = 2 * nf, nf
    ks = jax.random.split(key, 6)
    s1, s2, s3 = 1.0 / math.sqrt(f_in), 1.0 / math.sqrt(c1), 1.0 / math.sqrt(c2)
    f32 = jnp.float32
    return {
        'w1': jax.random.normal(ks[0], (f_in, c1), f32) * s1,
        'b1': jax.random.normal(ks[1], (1, c1), f32) * s1,
        'g1': jnp.ones((1, c1), f32), 'be1': jnp.zeros((1, c1), f32),
        'w2': jax.random.normal(ks[2], (c1, c2), f32) * s2,
        'b2': jax.random.normal(ks[3], (1, c2), f32) * s2,
        'g2': jnp.ones((1, c2), f32), 'be2': jnp.zeros((1, c2), f32),
        'wl': jax.random.normal(ks[4], (1, c2), f32) * s3,
        'bl': jax.random.normal(ks[5], (1, 1), f32) * s3,
    }


def _init_gconv(key, f_in, f_out, J=2):
    ks = jax.random.split(key, 2)
    s = 1.0 / math.sqrt(J * f_in)
    f32 = jnp.float32
    return {
        'wfc': jax.random.normal(ks[0], (J * f_in, f_out), f32) * s,
        'bfc': jax.random.normal(ks[1], (1, f_out), f32) * s,
        'g': jnp.ones((1, f_out), f32), 'be': jnp.zeros((1, f_out), f32),
    }


def init_graphnn(key, nfeat, nf=128):
    k = jax.random.split(key, 6)
    return {
        'w0': _init_wcompute(k[0], nfeat, nf),
        'l0': _init_gconv(k[1], nfeat, nf // 2),
        'w1': _init_wcompute(k[2], nfeat + nf // 2, nf),
        'l1': _init_gconv(k[3], nfeat + nf // 2, nf // 2),
        'w2': _init_wcompute(k[4], nfeat + nf, nf),
        'l2': _init_gconv(k[5], nfeat + nf, nf),
    }


if __name__ == "__main__":
    B, N, nfeat = 2, 8, 16                    # batch, nodes, input features
    key = jax.random.PRNGKey(0)
    kx, kp = jax.random.split(key)
    x = jax.random.normal(kx, (B, N, nfeat), jnp.float32)
    params = init_graphnn(kp, nfeat)

    out = graphnn_forward(params, x)
    jax.block_until_ready(out)

    assert out.shape == (B, N, 128), out.shape
    assert out.dtype == jnp.float32
    assert bool(jnp.all(jnp.isfinite(out)))
    print("KERNEL_OK")
</pallas_src>

<mosaic_0001>
module attributes {stable_mosaic.version = 11 : i64} {
  func.func @_graphnn_kernel(%arg0: i32, %arg1: memref<2x8x16xf32, #tpu.memory_space<vmem>>, %arg2: memref<16x256xf32, #tpu.memory_space<vmem>>, %arg3: memref<1x256xf32, #tpu.memory_space<vmem>>, %arg4: memref<1x256xf32, #tpu.memory_space<vmem>>, %arg5: memref<1x256xf32, #tpu.memory_space<vmem>>, %arg6: memref<256x128xf32, #tpu.memory_space<vmem>>, %arg7: memref<1x128xf32, #tpu.memory_space<vmem>>, %arg8: memref<1x128xf32, #tpu.memory_space<vmem>>, %arg9: memref<1x128xf32, #tpu.memory_space<vmem>>, %arg10: memref<1x128xf32, #tpu.memory_space<vmem>>, %arg11: memref<1x1xf32, #tpu.memory_space<vmem>>, %arg12: memref<32x64xf32, #tpu.memory_space<vmem>>, %arg13: memref<1x64xf32, #tpu.memory_space<vmem>>, %arg14: memref<1x64xf32, #tpu.memory_space<vmem>>, %arg15: memref<1x64xf32, #tpu.memory_space<vmem>>, %arg16: memref<80x256xf32, #tpu.memory_space<vmem>>, %arg17: memref<1x256xf32, #tpu.memory_space<vmem>>, %arg18: memref<1x256xf32, #tpu.memory_space<vmem>>, %arg19: memref<1x256xf32, #tpu.memory_space<vmem>>, %arg20: memref<256x128xf32, #tpu.memory_space<vmem>>, %arg21: memref<1x128xf32, #tpu.memory_space<vmem>>, %arg22: memref<1x128xf32, #tpu.memory_space<vmem>>, %arg23: memref<1x128xf32, #tpu.memory_space<vmem>>, %arg24: memref<1x128xf32, #tpu.memory_space<vmem>>, %arg25: memref<1x1xf32, #tpu.memory_space<vmem>>, %arg26: memref<160x64xf32, #tpu.memory_space<vmem>>, %arg27: memref<1x64xf32, #tpu.memory_space<vmem>>, %arg28: memref<1x64xf32, #tpu.memory_space<vmem>>, %arg29: memref<1x64xf32, #tpu.memory_space<vmem>>, %arg30: memref<144x256xf32, #tpu.memory_space<vmem>>, %arg31: memref<1x256xf32, #tpu.memory_space<vmem>>, %arg32: memref<1x256xf32, #tpu.memory_space<vmem>>, %arg33: memref<1x256xf32, #tpu.memory_space<vmem>>, %arg34: memref<256x128xf32, #tpu.memory_space<vmem>>, %arg35: memref<1x128xf32, #tpu.memory_space<vmem>>, %arg36: memref<1x128xf32, #tpu.memory_space<vmem>>, %arg37: memref<1x128xf32, #tpu.memory_space<vmem>>, %arg38: memref<1x128xf32, #tpu.memory_space<vmem>>, %arg39: memref<1x1xf32, #tpu.memory_space<vmem>>, %arg40: memref<288x128xf32, #tpu.memory_space<vmem>>, %arg41: memref<1x128xf32, #tpu.memory_space<vmem>>, %arg42: memref<1x128xf32, #tpu.memory_space<vmem>>, %arg43: memref<1x128xf32, #tpu.memory_space<vmem>>, %arg44: memref<2x8x128xf32, #tpu.memory_space<vmem>>) attributes {dimension_semantics = [#tpu.dimension_semantics<arbitrary>], iteration_bounds = array<i64: 1>, scalar_prefetch = 0 : i64, scratch_operands = 0 : i64, tpu.core_type = #tpu.core_type<tc>, window_params = [{pipeline_mode = #tpu.pipeline_mode<synchronous>, transform_indices = @transform_0, window_bounds = array<i64: 2, 8, 16>}, {pipeline_mode = #tpu.pipeline_mode<synchronous>, transform_indices = @transform_1, window_bounds = array<i64: 16, 256>}, {pipeline_mode = #tpu.pipeline_mode<synchronous>, transform_indices = @transform_2, window_bounds = array<i64: 1, 256>}, {pipeline_mode = #tpu.pipeline_mode<synchronous>, transform_indices = @transform_3, window_bounds = array<i64: 1, 256>}, {pipeline_mode = #tpu.pipeline_mode<synchronous>, transform_indices = @transform_4, window_bounds = array<i64: 1, 256>}, {pipeline_mode = #tpu.pipeline_mode<synchronous>, transform_indices = @transform_5, window_bounds = array<i64: 256, 128>}, {pipeline_mode = #tpu.pipeline_mode<synchronous>, transform_indices = @transform_6, window_bounds = array<i64: 1, 128>}, {pipeline_mode = #tpu.pipeline_mode<synchronous>, transform_indices = @transform_7, window_bounds = array<i64: 1, 128>}, {pipeline_mode = #tpu.pipeline_mode<synchronous>, transform_indices = @transform_8, window_bounds = array<i64: 1, 128>}, {pipeline_mode = #tpu.pipeline_mode<synchronous>, transform_indices = @transform_9, window_bounds = array<i64: 1, 128>}, {pipeline_mode = #tpu.pipeline_mode<synchronous>, transform_indices = @transform_10, window_bounds = array<i64: 1, 1>}, {pipeline_mode = #tpu.pipeline_mode<synchronous>, transform_indices = @transform_11, window_bounds = array<i64: 32, 64>}, {pipeline_mode = #tpu.pipeline_mode<synchronous>, transform_indices = @transform_12, window_bounds = array<i64: 1, 64>}, {pipeline_mode = #tpu.pipeline_mode<synchronous>, transform_indices = @transform_13, window_bounds = array<i64: 1, 64>}, {pipeline_mode = #tpu.pipeline_mode<synchronous>, transform_indices = @transform_14, window_bounds = array<i64: 1, 64>}, {pipeline_mode = #tpu.pipeline_mode<synchronous>, transform_indices = @transform_15, window_bounds = array<i64: 80, 256>}, {pipeline_mode = #tpu.pipeline_mode<synchronous>, transform_indices = @transform_16, window_bounds = array<i64: 1, 256>}, {pipeline_mode = #tpu.pipeline_mode<synchronous>, transform_indices = @transform_17, window_bounds = array<i64: 1, 256>}, {pipeline_mode = #tpu.pipeline_mode<synchronous>, transform_indices = @transform_18, window_bounds = array<i64: 1, 256>}, {pipeline_mode = #tpu.pipeline_mode<synchronous>, transform_indices = @transform_19, window_bounds = array<i64: 256, 128>}, {pipeline_mode = #tpu.pipeline_mode<synchronous>, transform_indices = @transform_20, window_bounds = array<i64: 1, 128>}, {pipeline_mode = #tpu.pipeline_mode<synchronous>, transform_indices = @transform_21, window_bounds = array<i64: 1, 128>}, {pipeline_mode = #tpu.pipeline_mode<synchronous>, transform_indices = @transform_22, window_bounds = array<i64: 1, 128>}, {pipeline_mode = #tpu.pipeline_mode<synchronous>, transform_indices = @transform_23, window_bounds = array<i64: 1, 128>}, {pipeline_mode = #tpu.pipeline_mode<synchronous>, transform_indices = @transform_24, window_bounds = array<i64: 1, 1>}, {pipeline_mode = #tpu.pipeline_mode<synchronous>, transform_indices = @transform_25, window_bounds = array<i64: 160, 64>}, {pipeline_mode = #tpu.pipeline_mode<synchronous>, transform_indices = @transform_26, window_bounds = array<i64: 1, 64>}, {pipeline_mode = #tpu.pipeline_mode<synchronous>, transform_indices = @transform_27, window_bounds = array<i64: 1, 64>}, {pipeline_mode = #tpu.pipeline_mode<synchronous>, transform_indices = @transform_28, window_bounds = array<i64: 1, 64>}, {pipeline_mode = #tpu.pipeline_mode<synchronous>, transform_indices = @transform_29, window_bounds = array<i64: 144, 256>}, {pipeline_mode = #tpu.pipeline_mode<synchronous>, transform_indices = @transform_30, window_bounds = array<i64: 1, 256>}, {pipeline_mode = #tpu.pipeline_mode<synchronous>, transform_indices = @transform_31, window_bounds = array<i64: 1, 256>}, {pipeline_mode = #tpu.pipeline_mode<synchronous>, transform_indices = @transform_32, window_bounds = array<i64: 1, 256>}, {pipeline_mode = #tpu.pipeline_mode<synchronous>, transform_indices = @transform_33, window_bounds = array<i64: 256, 128>}, {pipeline_mode = #tpu.pipeline_mode<synchronous>, transform_indices = @transform_34, window_bounds = array<i64: 1, 128>}, {pipeline_mode = #tpu.pipeline_mode<synchronous>, transform_indices = @transform_35, window_bounds = array<i64: 1, 128>}, {pipeline_mode = #tpu.pipeline_mode<synchronous>, transform_indices = @transform_36, window_bounds = array<i64: 1, 128>}, {pipeline_mode = #tpu.pipeline_mode<synchronous>, transform_indices = @transform_37, window_bounds = array<i64: 1, 128>}, {pipeline_mode = #tpu.pipeline_mode<synchronous>, transform_indices = @transform_38, window_bounds = array<i64: 1, 1>}, {pipeline_mode = #tpu.pipeline_mode<synchronous>, transform_indices = @transform_39, window_bounds = array<i64: 288, 128>}, {pipeline_mode = #tpu.pipeline_mode<synchronous>, transform_indices = @transform_40, window_bounds = array<i64: 1, 128>}, {pipeline_mode = #tpu.pipeline_mode<synchronous>, transform_indices = @transform_41, window_bounds = array<i64: 1, 128>}, {pipeline_mode = #tpu.pipeline_mode<synchronous>, transform_indices = @transform_42, window_bounds = array<i64: 1, 128>}, {pipeline_mode = #tpu.pipeline_mode<synchronous>, transform_indices = @transform_43, window_bounds = array<i64: 2, 8, 128>}]} {
    %c0 = arith.constant 0 : index
    %c0_0 = arith.constant 0 : index
    %c0_1 = arith.constant 0 : index
    %0 = vector.load %arg1[%c0, %c0_0, %c0_1] : memref<2x8x16xf32, #tpu.memory_space<vmem>>, vector<2x8x16xf32>
    %1 = tpu.iota {dimensions = array<i32: 0>} : vector<8x8xi32>
    %2 = tpu.iota {dimensions = array<i32: 1>} : vector<8x8xi32>
    %3 = arith.cmpi eq, %1, %2 : vector<8x8xi32>
    %cst = arith.constant -1.000000e+08 : f32
    %cst_2 = arith.constant 0.000000e+00 : f32
    %4 = vector.broadcast %cst : f32 to vector<8x8xf32>
    %5 = vector.broadcast %cst_2 : f32 to vector<8x8xf32>
    %6 = arith.select %3, %4, %5 : vector<8x8xi1>, vector<8x8xf32>
    %7 = vector.shape_cast %6 : vector<8x8xf32> to vector<1x8x8xf32>
    %c0_3 = arith.constant 0 : index
    %c0_4 = arith.constant 0 : index
    %8 = vector.load %arg2[%c0_3, %c0_4] : memref<16x256xf32, #tpu.memory_space<vmem>>, vector<16x256xf32>
    %c0_5 = arith.constant 0 : index
    %c0_6 = arith.constant 0 : index
    %9 = vector.load %arg3[%c0_5, %c0_6] : memref<1x256xf32, #tpu.memory_space<vmem>>, vector<1x256xf32>
    %c0_7 = arith.constant 0 : index
    %c0_8 = arith.constant 0 : index
    %10 = vector.load %arg4[%c0_7, %c0_8] : memref<1x256xf32, #tpu.memory_space<vmem>>, vector<1x256xf32>
    %c0_9 = arith.constant 0 : index
    %c0_10 = arith.constant 0 : index
    %11 = vector.load %arg5[%c0_9, %c0_10] : memref<1x256xf32, #tpu.memory_space<vmem>>, vector<1x256xf32>
    %c0_11 = arith.constant 0 : index
    %c0_12 = arith.constant 0 : index
    %12 = vector.load %arg6[%c0_11, %c0_12] : memref<256x128xf32, #tpu.memory_space<vmem>>, vector<256x128xf32>
    %c0_13 = arith.constant 0 : index
    %c0_14 = arith.constant 0 : index
    %13 = vector.load %arg7[%c0_13, %c0_14] : memref<1x128xf32, #tpu.memory_space<vmem>>, vector<1x128xf32>
    %c0_15 = arith.constant 0 : index
    %c0_16 = arith.constant 0 : index
    %14 = vector.load %arg8[%c0_15, %c0_16] : memref<1x128xf32, #tpu.memory_space<vmem>>, vector<1x128xf32>
    %c0_17 = arith.constant 0 : index
    %c0_18 = arith.constant 0 : index
    %15 = vector.load %arg9[%c0_17, %c0_18] : memref<1x128xf32, #tpu.memory_space<vmem>>, vector<1x128xf32>
    %c0_19 = arith.constant 0 : index
    %c0_20 = arith.constant 0 : index
    %16 = vector.load %arg10[%c0_19, %c0_20] : memref<1x128xf32, #tpu.memory_space<vmem>>, vector<1x128xf32>
    %c0_21 = arith.constant 0 : index
    %c0_22 = arith.constant 0 : index
    %17 = vector.load %arg11[%c0_21, %c0_22] : memref<1x1xf32, #tpu.memory_space<vmem>>, vector<1x1xf32>
    %c0_23 = arith.constant 0 : index
    %c0_24 = arith.constant 0 : index
    %18 = vector.load %arg12[%c0_23, %c0_24] : memref<32x64xf32, #tpu.memory_space<vmem>>, vector<32x64xf32>
    %c0_25 = arith.constant 0 : index
    %c0_26 = arith.constant 0 : index
    %19 = vector.load %arg13[%c0_25, %c0_26] : memref<1x64xf32, #tpu.memory_space<vmem>>, vector<1x64xf32>
    %c0_27 = arith.constant 0 : index
    %c0_28 = arith.constant 0 : index
    %20 = vector.load %arg14[%c0_27, %c0_28] : memref<1x64xf32, #tpu.memory_space<vmem>>, vector<1x64xf32>
    %c0_29 = arith.constant 0 : index
    %c0_30 = arith.constant 0 : index
    %21 = vector.load %arg15[%c0_29, %c0_30] : memref<1x64xf32, #tpu.memory_space<vmem>>, vector<1x64xf32>
    %22 = vector.shape_cast %0 : vector<2x8x16xf32> to vector<2x8x1x16xf32>
    %23 = vector.shape_cast %0 : vector<2x8x16xf32> to vector<2x1x8x16xf32>
    %24 = vector.broadcast %22 : vector<2x8x1x16xf32> to vector<2x8x8x16xf32>
    %25 = vector.broadcast %23 : vector<2x1x8x16xf32> to vector<2x8x8x16xf32>
    %26 = arith.subf %24, %25 : vector<2x8x8x16xf32>
    %27 = math.absf %26 : vector<2x8x8x16xf32>
    %28 = vector.shape_cast %27 : vector<2x8x8x16xf32> to vector<128x16xf32>
    %29 = arith.truncf %28 : vector<128x16xf32> to vector<128x16xbf16>
    %30 = arith.truncf %8 : vector<16x256xf32> to vector<16x256xbf16>
    %cst_31 = arith.constant dense<0.000000e+00> : vector<128x256xf32>
    %31 = tpu.matmul %29, %30, %cst_31 {dimension_numbers = #tpu.dot_dimension_numbers<[1], [0], [0], [1], [0, 0, 1, 1], [], []>} : vector<128x16xbf16>, vector<16x256xbf16>, vector<128x256xf32> -> vector<128x256xf32>
    %32 = vector.broadcast %9 : vector<1x256xf32> to vector<128x256xf32>
    %33 = arith.addf %31, %32 : vector<128x256xf32>
    %cst_32 = arith.constant dense<0.000000e+00> : vector<256xf32>
    %34 = vector.multi_reduction <add>, %33, %cst_32 [0] : vector<128x256xf32> to vector<256xf32>
    %35 = vector.shape_cast %34 : vector<256xf32> to vector<1x256xf32>
    %cst_33 = arith.constant 1.280000e+02 : f32
    %36 = vector.broadcast %cst_33 : f32 to vector<1x256xf32>
    %37 = arith.divf %35, %36 : vector<1x256xf32>
    %38 = arith.mulf %33, %33 : vector<128x256xf32>
    %cst_34 = arith.constant dense<0.000000e+00> : vector<256xf32>
    %39 = vector.multi_reduction <add>, %38, %cst_34 [0] : vector<128x256xf32> to vector<256xf32>
    %40 = vector.shape_cast %39 : vector<256xf32> to vector<1x256xf32>
    %cst_35 = arith.constant 1.280000e+02 : f32
    %41 = vector.broadcast %cst_35 : f32 to vector<1x256xf32>
    %42 = arith.divf %40, %41 : vector<1x256xf32>
    %43 = arith.mulf %37, %37 : vector<1x256xf32>
    %44 = arith.subf %42, %43 : vector<1x256xf32>
    %cst_36 = arith.constant 0.000000e+00 : f32
    %45 = vector.broadcast %cst_36 : f32 to vector<1x256xf32>
    %46 = arith.maximumf %44, %45 : vector<1x256xf32>
    %47 = vector.broadcast %37 : vector<1x256xf32> to vector<128x256xf32>
    %48 = arith.subf %33, %47 : vector<128x256xf32>
    %cst_37 = arith.constant 9.99999974E-6 : f32
    %49 = vector.broadcast %cst_37 : f32 to vector<1x256xf32>
    %50 = arith.addf %46, %49 : vector<1x256xf32>
    %51 = math.rsqrt %50 : vector<1x256xf32>
    %52 = vector.broadcast %51 : vector<1x256xf32> to vector<128x256xf32>
    %53 = arith.mulf %48, %52 : vector<128x256xf32>
    %54 = vector.broadcast %10 : vector<1x256xf32> to vector<128x256xf32>
    %55 = arith.mulf %53, %54 : vector<128x256xf32>
    %56 = vector.broadcast %11 : vector<1x256xf32> to vector<128x256xf32>
    %57 = arith.addf %55, %56 : vector<128x256xf32>
    %cst_38 = arith.constant 0.000000e+00 : f32
    %58 = vector.broadcast %cst_38 : f32 to vector<128x256xf32>
    %59 = arith.cmpf oge, %57, %58 : vector<128x256xf32>
    %cst_39 = arith.constant 0.00999999977 : f32
    %60 = vector.broadcast %cst_39 : f32 to vector<128x256xf32>
    %61 = arith.mulf %60, %57 : vector<128x256xf32>
    %62 = arith.select %59, %57, %61 : vector<128x256xi1>, vector<128x256xf32>
    %63 = arith.truncf %62 : vector<128x256xf32> to vector<128x256xbf16>
    %64 = arith.truncf %12 : vector<256x128xf32> to vector<256x128xbf16>
    %cst_40 = arith.constant dense<0.000000e+00> : vector<128x128xf32>
    %65 = tpu.matmul %63, %64, %cst_40 {dimension_numbers = #tpu.dot_dimension_numbers<[1], [0], [0], [1], [0, 0, 1, 1], [], []>} : vector<128x256xbf16>, vector<256x128xbf16>, vector<128x128xf32> -> vector<128x128xf32>
    %66 = vector.broadcast %13 : vector<1x128xf32> to vector<128x128xf32>
    %67 = arith.addf %65, %66 : vector<128x128xf32>
    %cst_41 = arith.constant dense<0.000000e+00> : vector<128xf32>
    %68 = vector.multi_reduction <add>, %67, %cst_41 [0] : vector<128x128xf32> to vector<128xf32>
    %69 = vector.shape_cast %68 : vector<128xf32> to vector<1x128xf32>
    %cst_42 = arith.constant 1.280000e+02 : f32
    %70 = vector.broadcast %cst_42 : f32 to vector<1x128xf32>
    %71 = arith.divf %69, %70 : vector<1x128xf32>
    %72 = arith.mulf %67, %67 : vector<128x128xf32>
    %cst_43 = arith.constant dense<0.000000e+00> : vector<128xf32>
    %73 = vector.multi_reduction <add>, %72, %cst_43 [0] : vector<128x128xf32> to vector<128xf32>
    %74 = vector.shape_cast %73 : vector<128xf32> to vector<1x128xf32>
    %cst_44 = arith.constant 1.280000e+02 : f32
    %75 = vector.broadcast %cst_44 : f32 to vector<1x128xf32>
    %76 = arith.divf %74, %75 : vector<1x128xf32>
    %77 = arith.mulf %71, %71 : vector<1x128xf32>
    %78 = arith.subf %76, %77 : vector<1x128xf32>
    %cst_45 = arith.constant 0.000000e+00 : f32
    %79 = vector.broadcast %cst_45 : f32 to vector<1x128xf32>
    %80 = arith.maximumf %78, %79 : vector<1x128xf32>
    %81 = vector.broadcast %71 : vector<1x128xf32> to vector<128x128xf32>
    %82 = arith.subf %67, %81 : vector<128x128xf32>
    %cst_46 = arith.constant 9.99999974E-6 : f32
    %83 = vector.broadcast %cst_46 : f32 to vector<1x128xf32>
    %84 = arith.addf %80, %83 : vector<1x128xf32>
    %85 = math.rsqrt %84 : vector<1x128xf32>
    %86 = vector.broadcast %85 : vector<1x128xf32> to vector<128x128xf32>
    %87 = arith.mulf %82, %86 : vector<128x128xf32>
    %88 = vector.broadcast %14 : vector<1x128xf32> to vector<128x128xf32>
    %89 = arith.mulf %87, %88 : vector<128x128xf32>
    %90 = vector.broadcast %15 : vector<1x128xf32> to vector<128x128xf32>
    %91 = arith.addf %89, %90 : vector<128x128xf32>
    %cst_47 = arith.constant 0.000000e+00 : f32
    %92 = vector.broadcast %cst_47 : f32 to vector<128x128xf32>
    %93 = arith.cmpf oge, %91, %92 : vector<128x128xf32>
    %cst_48 = arith.constant 0.00999999977 : f32
    %94 = vector.broadcast %cst_48 : f32 to vector<128x128xf32>
    %95 = arith.mulf %94, %91 : vector<128x128xf32>
    %96 = arith.select %93, %91, %95 : vector<128x128xi1>, vector<128x128xf32>
    %97 = vector.shape_cast %96 : vector<128x128xf32> to vector<2x8x8x128xf32>
    %98 = vector.shape_cast %16 : vector<1x128xf32> to vector<1x1x1x128xf32>
    %99 = vector.broadcast %98 : vector<1x1x1x128xf32> to vector<2x8x8x128xf32>
    %100 = arith.mulf %97, %99 : vector<2x8x8x128xf32>
    %cst_49 = arith.constant dense<0.000000e+00> : vector<2x8x8xf32>
    %101 = vector.multi_reduction <add>, %100, %cst_49 [3] : vector<2x8x8x128xf32> to vector<2x8x8xf32>
    %102 = vector.shape_cast %17 : vector<1x1xf32> to vector<1x1x1xf32>
    %103 = vector.broadcast %102 : vector<1x1x1xf32> to vector<2x8x8xf32>
    %104 = arith.addf %101, %103 : vector<2x8x8xf32>
    %105 = vector.broadcast %7 : vector<1x8x8xf32> to vector<2x8x8xf32>
    %106 = arith.addf %104, %105 : vector<2x8x8xf32>
    %cst_50 = arith.constant dense<0xFF800000> : vector<2x8xf32>
    %107 = vector.multi_reduction <maximumf>, %106, %cst_50 [2] : vector<2x8x8xf32> to vector<2x8xf32>
    %108 = vector.shape_cast %107 : vector<2x8xf32> to vector<2x8x1xf32>
    %109 = vector.broadcast %108 : vector<2x8x1xf32> to vector<2x8x8xf32>
    %110 = arith.subf %106, %109 : vector<2x8x8xf32>
    %111 = math.exp %110 : vector<2x8x8xf32>
    %cst_51 = arith.constant dense<0.000000e+00> : vector<2x8xf32>
    %112 = vector.multi_reduction <add>, %111, %cst_51 [2] : vector<2x8x8xf32> to vector<2x8xf32>
    %113 = vector.shape_cast %112 : vector<2x8xf32> to vector<2x8x1xf32>
    %114 = tpu.reciprocal %113 {approx = true} : vector<2x8x1xf32> -> vector<2x8x1xf32>
    %115 = vector.broadcast %114 : vector<2x8x1xf32> to vector<2x8x8xf32>
    %116 = arith.mulf %111, %115 : vector<2x8x8xf32>
    "tpu.trace_start"() <{level = 10 : i32, message = "bij,bjd->bid"}> : () -> ()
    %cst_52 = arith.constant dense<0.000000e+00> : vector<2x8x16xf32>
    %117 = tpu.matmul %116, %0, %cst_52 {dimension_numbers = #tpu.dot_dimension_numbers<[2], [1], [1], [2], [0, 0, 0, 1, 1, 2], [0], [0]>} : vector<2x8x8xf32>, vector<2x8x16xf32>, vector<2x8x16xf32> -> vector<2x8x16xf32>
    "tpu.trace_stop"() : () -> ()
    %118 = tpu.concatenate %0, %117 in 2 : vector<2x8x16xf32>, vector<2x8x16xf32> -> vector<2x8x32xf32>
    %119 = vector.shape_cast %118 : vector<2x8x32xf32> to vector<16x32xf32>
    %120 = arith.truncf %119 : vector<16x32xf32> to vector<16x32xbf16>
    %121 = arith.truncf %18 : vector<32x64xf32> to vector<32x64xbf16>
    %cst_53 = arith.constant dense<0.000000e+00> : vector<16x64xf32>
    %122 = tpu.matmul %120, %121, %cst_53 {dimension_numbers = #tpu.dot_dimension_numbers<[1], [0], [0], [1], [0, 0, 1, 1], [], []>} : vector<16x32xbf16>, vector<32x64xbf16>, vector<16x64xf32> -> vector<16x64xf32>
    %123 = vector.broadcast %19 : vector<1x64xf32> to vector<16x64xf32>
    %124 = arith.addf %122, %123 : vector<16x64xf32>
    %cst_54 = arith.constant dense<0.000000e+00> : vector<64xf32>
    %125 = vector.multi_reduction <add>, %124, %cst_54 [0] : vector<16x64xf32> to vector<64xf32>
    %126 = vector.shape_cast %125 : vector<64xf32> to vector<1x64xf32>
    %cst_55 = arith.constant 1.600000e+01 : f32
    %127 = vector.broadcast %cst_55 : f32 to vector<1x64xf32>
    %128 = arith.divf %126, %127 : vector<1x64xf32>
    %129 = arith.mulf %124, %124 : vector<16x64xf32>
    %cst_56 = arith.constant dense<0.000000e+00> : vector<64xf32>
    %130 = vector.multi_reduction <add>, %129, %cst_56 [0] : vector<16x64xf32> to vector<64xf32>
    %131 = vector.shape_cast %130 : vector<64xf32> to vector<1x64xf32>
    %cst_57 = arith.constant 1.600000e+01 : f32
    %132 = vector.broadcast %cst_57 : f32 to vector<1x64xf32>
    %133 = arith.divf %131, %132 : vector<1x64xf32>
    %134 = arith.mulf %128, %128 : vector<1x64xf32>
    %135 = arith.subf %133, %134 : vector<1x64xf32>
    %cst_58 = arith.constant 0.000000e+00 : f32
    %136 = vector.broadcast %cst_58 : f32 to vector<1x64xf32>
    %137 = arith.maximumf %135, %136 : vector<1x64xf32>
    %138 = vector.broadcast %128 : vector<1x64xf32> to vector<16x64xf32>
    %139 = arith.subf %124, %138 : vector<16x64xf32>
    %cst_59 = arith.constant 9.99999974E-6 : f32
    %140 = vector.broadcast %cst_59 : f32 to vector<1x64xf32>
    %141 = arith.addf %137, %140 : vector<1x64xf32>
    %142 = math.rsqrt %141 : vector<1x64xf32>
    %143 = vector.broadcast %142 : vector<1x64xf32> to vector<16x64xf32>
    %144 = arith.mulf %139, %143 : vector<16x64xf32>
    %145 = vector.broadcast %20 : vector<1x64xf32> to vector<16x64xf32>
    %146 = arith.mulf %144, %145 : vector<16x64xf32>
    %147 = vector.broadcast %21 : vector<1x64xf32> to vector<16x64xf32>
    %148 = arith.addf %146, %147 : vector<16x64xf32>
    %cst_60 = arith.constant 0.000000e+00 : f32
    %149 = vector.broadcast %cst_60 : f32 to vector<16x64xf32>
    %150 = arith.cmpf oge, %148, %149 : vector<16x64xf32>
    %cst_61 = arith.constant 0.00999999977 : f32
    %151 = vector.broadcast %cst_61 : f32 to vector<16x64xf32>
    %152 = arith.mulf %151, %148 : vector<16x64xf32>
    %153 = arith.select %150, %148, %152 : vector<16x64xi1>, vector<16x64xf32>
    %154 = vector.shape_cast %153 : vector<16x64xf32> to vector<2x8x64xf32>
    %155 = tpu.concatenate %0, %154 in 2 : vector<2x8x16xf32>, vector<2x8x64xf32> -> vector<2x8x80xf32>
    %c0_62 = arith.constant 0 : index
    %c0_63 = arith.constant 0 : index
    %156 = vector.load %arg16[%c0_62, %c0_63] : memref<80x256xf32, #tpu.memory_space<vmem>>, vector<80x256xf32>
    %c0_64 = arith.constant 0 : index
    %c0_65 = arith.constant 0 : index
    %157 = vector.load %arg17[%c0_64, %c0_65] : memref<1x256xf32, #tpu.memory_space<vmem>>, vector<1x256xf32>
    %c0_66 = arith.constant 0 : index
    %c0_67 = arith.constant 0 : index
    %158 = vector.load %arg18[%c0_66, %c0_67] : memref<1x256xf32, #tpu.memory_space<vmem>>, vector<1x256xf32>
    %c0_68 = arith.constant 0 : index
    %c0_69 = arith.constant 0 : index
    %159 = vector.load %arg19[%c0_68, %c0_69] : memref<1x256xf32, #tpu.memory_space<vmem>>, vector<1x256xf32>
    %c0_70 = arith.constant 0 : index
    %c0_71 = arith.constant 0 : index
    %160 = vector.load %arg20[%c0_70, %c0_71] : memref<256x128xf32, #tpu.memory_space<vmem>>, vector<256x128xf32>
    %c0_72 = arith.constant 0 : index
    %c0_73 = arith.constant 0 : index
    %161 = vector.load %arg21[%c0_72, %c0_73] : memref<1x128xf32, #tpu.memory_space<vmem>>, vector<1x128xf32>
    %c0_74 = arith.constant 0 : index
    %c0_75 = arith.constant 0 : index
    %162 = vector.load %arg22[%c0_74, %c0_75] : memref<1x128xf32, #tpu.memory_space<vmem>>, vector<1x128xf32>
    %c0_76 = arith.constant 0 : index
    %c0_77 = arith.constant 0 : index
    %163 = vector.load %arg23[%c0_76, %c0_77] : memref<1x128xf32, #tpu.memory_space<vmem>>, vector<1x128xf32>
    %c0_78 = arith.constant 0 : index
    %c0_79 = arith.constant 0 : index
    %164 = vector.load %arg24[%c0_78, %c0_79] : memref<1x128xf32, #tpu.memory_space<vmem>>, vector<1x128xf32>
    %c0_80 = arith.constant 0 : index
    %c0_81 = arith.constant 0 : index
    %165 = vector.load %arg25[%c0_80, %c0_81] : memref<1x1xf32, #tpu.memory_space<vmem>>, vector<1x1xf32>
    %c0_82 = arith.constant 0 : index
    %c0_83 = arith.constant 0 : index
    %166 = vector.load %arg26[%c0_82, %c0_83] : memref<160x64xf32, #tpu.memory_space<vmem>>, vector<160x64xf32>
    %c0_84 = arith.constant 0 : index
    %c0_85 = arith.constant 0 : index
    %167 = vector.load %arg27[%c0_84, %c0_85] : memref<1x64xf32, #tpu.memory_space<vmem>>, vector<1x64xf32>
    %c0_86 = arith.constant 0 : index
    %c0_87 = arith.constant 0 : index
    %168 = vector.load %arg28[%c0_86, %c0_87] : memref<1x64xf32, #tpu.memory_space<vmem>>, vector<1x64xf32>
    %c0_88 = arith.constant 0 : index
    %c0_89 = arith.constant 0 : index
    %169 = vector.load %arg29[%c0_88, %c0_89] : memref<1x64xf32, #tpu.memory_space<vmem>>, vector<1x64xf32>
    %170 = vector.shape_cast %155 : vector<2x8x80xf32> to vector<2x8x1x80xf32>
    %171 = vector.shape_cast %155 : vector<2x8x80xf32> to vector<2x1x8x80xf32>
    %172 = vector.broadcast %170 : vector<2x8x1x80xf32> to vector<2x8x8x80xf32>
    %173 = vector.broadcast %171 : vector<2x1x8x80xf32> to vector<2x8x8x80xf32>
    %174 = arith.subf %172, %173 : vector<2x8x8x80xf32>
    %175 = math.absf %174 : vector<2x8x8x80xf32>
    %176 = vector.shape_cast %175 : vector<2x8x8x80xf32> to vector<128x80xf32>
    %177 = arith.truncf %176 : vector<128x80xf32> to vector<128x80xbf16>
    %178 = arith.truncf %156 : vector<80x256xf32> to vector<80x256xbf16>
    %cst_90 = arith.constant dense<0.000000e+00> : vector<128x256xf32>
    %179 = tpu.matmul %177, %178, %cst_90 {dimension_numbers = #tpu.dot_dimension_numbers<[1], [0], [0], [1], [0, 0, 1, 1], [], []>} : vector<128x80xbf16>, vector<80x256xbf16>, vector<128x256xf32> -> vector<128x256xf32>
    %180 = vector.broadcast %157 : vector<1x256xf32> to vector<128x256xf32>
    %181 = arith.addf %179, %180 : vector<128x256xf32>
    %cst_91 = arith.constant dense<0.000000e+00> : vector<256xf32>
    %182 = vector.multi_reduction <add>, %181, %cst_91 [0] : vector<128x256xf32> to vector<256xf32>
    %183 = vector.shape_cast %182 : vector<256xf32> to vector<1x256xf32>
    %cst_92 = arith.constant 1.280000e+02 : f32
    %184 = vector.broadcast %cst_92 : f32 to vector<1x256xf32>
    %185 = arith.divf %183, %184 : vector<1x256xf32>
    %186 = arith.mulf %181, %181 : vector<128x256xf32>
    %cst_93 = arith.constant dense<0.000000e+00> : vector<256xf32>
    %187 = vector.multi_reduction <add>, %186, %cst_93 [0] : vector<128x256xf32> to vector<256xf32>
    %188 = vector.shape_cast %187 : vector<256xf32> to vector<1x256xf32>
    %cst_94 = arith.constant 1.280000e+02 : f32
    %189 = vector.broadcast %cst_94 : f32 to vector<1x256xf32>
    %190 = arith.divf %188, %189 : vector<1x256xf32>
    %191 = arith.mulf %185, %185 : vector<1x256xf32>
    %192 = arith.subf %190, %191 : vector<1x256xf32>
    %cst_95 = arith.constant 0.000000e+00 : f32
    %193 = vector.broadcast %cst_95 : f32 to vector<1x256xf32>
    %194 = arith.maximumf %192, %193 : vector<1x256xf32>
    %195 = vector.broadcast %185 : vector<1x256xf32> to vector<128x256xf32>
    %196 = arith.subf %181, %195 : vector<128x256xf32>
    %cst_96 = arith.constant 9.99999974E-6 : f32
    %197 = vector.broadcast %cst_96 : f32 to vector<1x256xf32>
    %198 = arith.addf %194, %197 : vector<1x256xf32>
    %199 = math.rsqrt %198 : vector<1x256xf32>
    %200 = vector.broadcast %199 : vector<1x256xf32> to vector<128x256xf32>
    %201 = arith.mulf %196, %200 : vector<128x256xf32>
    %202 = vector.broadcast %158 : vector<1x256xf32> to vector<128x256xf32>
    %203 = arith.mulf %201, %202 : vector<128x256xf32>
    %204 = vector.broadcast %159 : vector<1x256xf32> to vector<128x256xf32>
    %205 = arith.addf %203, %204 : vector<128x256xf32>
    %cst_97 = arith.constant 0.000000e+00 : f32
    %206 = vector.broadcast %cst_97 : f32 to vector<128x256xf32>
    %207 = arith.cmpf oge, %205, %206 : vector<128x256xf32>
    %cst_98 = arith.constant 0.00999999977 : f32
    %208 = vector.broadcast %cst_98 : f32 to vector<128x256xf32>
    %209 = arith.mulf %208, %205 : vector<128x256xf32>
    %210 = arith.select %207, %205, %209 : vector<128x256xi1>, vector<128x256xf32>
    %211 = arith.truncf %210 : vector<128x256xf32> to vector<128x256xbf16>
    %212 = arith.truncf %160 : vector<256x128xf32> to vector<256x128xbf16>
    %cst_99 = arith.constant dense<0.000000e+00> : vector<128x128xf32>
    %213 = tpu.matmul %211, %212, %cst_99 {dimension_numbers = #tpu.dot_dimension_numbers<[1], [0], [0], [1], [0, 0, 1, 1], [], []>} : vector<128x256xbf16>, vector<256x128xbf16>, vector<128x128xf32> -> vector<128x128xf32>
    %214 = vector.broadcast %161 : vector<1x128xf32> to vector<128x128xf32>
    %215 = arith.addf %213, %214 : vector<128x128xf32>
    %cst_100 = arith.constant dense<0.000000e+00> : vector<128xf32>
    %216 = vector.multi_reduction <add>, %215, %cst_100 [0] : vector<128x128xf32> to vector<128xf32>
    %217 = vector.shape_cast %216 : vector<128xf32> to vector<1x128xf32>
    %cst_101 = arith.constant 1.280000e+02 : f32
    %218 = vector.broadcast %cst_101 : f32 to vector<1x128xf32>
    %219 = arith.divf %217, %218 : vector<1x128xf32>
    %220 = arith.mulf %215, %215 : vector<128x128xf32>
    %cst_102 = arith.constant dense<0.000000e+00> : vector<128xf32>
    %221 = vector.multi_reduction <add>, %220, %cst_102 [0] : vector<128x128xf32> to vector<128xf32>
    %222 = vector.shape_cast %221 : vector<128xf32> to vector<1x128xf32>
    %cst_103 = arith.constant 1.280000e+02 : f32
    %223 = vector.broadcast %cst_103 : f32 to vector<1x128xf32>
    %224 = arith.divf %222, %223 : vector<1x128xf32>
    %225 = arith.mulf %219, %219 : vector<1x128xf32>
    %226 = arith.subf %224, %225 : vector<1x128xf32>
    %cst_104 = arith.constant 0.000000e+00 : f32
    %227 = vector.broadcast %cst_104 : f32 to vector<1x128xf32>
    %228 = arith.maximumf %226, %227 : vector<1x128xf32>
    %229 = vector.broadcast %219 : vector<1x128xf32> to vector<128x128xf32>
    %230 = arith.subf %215, %229 : vector<128x128xf32>
    %cst_105 = arith.constant 9.99999974E-6 : f32
    %231 = vector.broadcast %cst_105 : f32 to vector<1x128xf32>
    %232 = arith.addf %228, %231 : vector<1x128xf32>
    %233 = math.rsqrt %232 : vector<1x128xf32>
    %234 = vector.broadcast %233 : vector<1x128xf32> to vector<128x128xf32>
    %235 = arith.mulf %230, %234 : vector<128x128xf32>
    %236 = vector.broadcast %162 : vector<1x128xf32> to vector<128x128xf32>
    %237 = arith.mulf %235, %236 : vector<128x128xf32>
    %238 = vector.broadcast %163 : vector<1x128xf32> to vector<128x128xf32>
    %239 = arith.addf %237, %238 : vector<128x128xf32>
    %cst_106 = arith.constant 0.000000e+00 : f32
    %240 = vector.broadcast %cst_106 : f32 to vector<128x128xf32>
    %241 = arith.cmpf oge, %239, %240 : vector<128x128xf32>
    %cst_107 = arith.constant 0.00999999977 : f32
    %242 = vector.broadcast %cst_107 : f32 to vector<128x128xf32>
    %243 = arith.mulf %242, %239 : vector<128x128xf32>
    %244 = arith.select %241, %239, %243 : vector<128x128xi1>, vector<128x128xf32>
    %245 = vector.shape_cast %244 : vector<128x128xf32> to vector<2x8x8x128xf32>
    %246 = vector.shape_cast %164 : vector<1x128xf32> to vector<1x1x1x128xf32>
    %247 = vector.broadcast %246 : vector<1x1x1x128xf32> to vector<2x8x8x128xf32>
    %248 = arith.mulf %245, %247 : vector<2x8x8x128xf32>
    %cst_108 = arith.constant dense<0.000000e+00> : vector<2x8x8xf32>
    %249 = vector.multi_reduction <add>, %248, %cst_108 [3] : vector<2x8x8x128xf32> to vector<2x8x8xf32>
    %250 = vector.shape_cast %165 : vector<1x1xf32> to vector<1x1x1xf32>
    %251 = vector.broadcast %250 : vector<1x1x1xf32> to vector<2x8x8xf32>
    %252 = arith.addf %249, %251 : vector<2x8x8xf32>
    %253 = vector.broadcast %7 : vector<1x8x8xf32> to vector<2x8x8xf32>
    %254 = arith.addf %252, %253 : vector<2x8x8xf32>
    %cst_109 = arith.constant dense<0xFF800000> : vector<2x8xf32>
    %255 = vector.multi_reduction <maximumf>, %254, %cst_109 [2] : vector<2x8x8xf32> to vector<2x8xf32>
    %256 = vector.shape_cast %255 : vector<2x8xf32> to vector<2x8x1xf32>
    %257 = vector.broadcast %256 : vector<2x8x1xf32> to vector<2x8x8xf32>
    %258 = arith.subf %254, %257 : vector<2x8x8xf32>
    %259 = math.exp %258 : vector<2x8x8xf32>
    %cst_110 = arith.constant dense<0.000000e+00> : vector<2x8xf32>
    %260 = vector.multi_reduction <add>, %259, %cst_110 [2] : vector<2x8x8xf32> to vector<2x8xf32>
    %261 = vector.shape_cast %260 : vector<2x8xf32> to vector<2x8x1xf32>
    %262 = tpu.reciprocal %261 {approx = true} : vector<2x8x1xf32> -> vector<2x8x1xf32>
    %263 = vector.broadcast %262 : vector<2x8x1xf32> to vector<2x8x8xf32>
    %264 = arith.mulf %259, %263 : vector<2x8x8xf32>
    "tpu.trace_start"() <{level = 10 : i32, message = "bij,bjd->bid"}> : () -> ()
    %cst_111 = arith.constant dense<0.000000e+00> : vector<2x8x80xf32>
    %265 = tpu.matmul %264, %155, %cst_111 {dimension_numbers = #tpu.dot_dimension_numbers<[2], [1], [1], [2], [0, 0, 0, 1, 1, 2], [0], [0]>} : vector<2x8x8xf32>, vector<2x8x80xf32>, vector<2x8x80xf32> -> vector<2x8x80xf32>
    "tpu.trace_stop"() : () -> ()
    %266 = tpu.concatenate %155, %265 in 2 : vector<2x8x80xf32>, vector<2x8x80xf32> -> vector<2x8x160xf32>
    %267 = vector.shape_cast %266 : vector<2x8x160xf32> to vector<16x160xf32>
    %268 = arith.truncf %267 : vector<16x160xf32> to vector<16x160xbf16>
    %269 = arith.truncf %166 : vector<160x64xf32> to vector<160x64xbf16>
    %cst_112 = arith.constant dense<0.000000e+00> : vector<16x64xf32>
    %270 = tpu.matmul %268, %269, %cst_112 {dimension_numbers = #tpu.dot_dimension_numbers<[1], [0], [0], [1], [0, 0, 1, 1], [], []>} : vector<16x160xbf16>, vector<160x64xbf16>, vector<16x64xf32> -> vector<16x64xf32>
    %271 = vector.broadcast %167 : vector<1x64xf32> to vector<16x64xf32>
    %272 = arith.addf %270, %271 : vector<16x64xf32>
    %cst_113 = arith.constant dense<0.000000e+00> : vector<64xf32>
    %273 = vector.multi_reduction <add>, %272, %cst_113 [0] : vector<16x64xf32> to vector<64xf32>
    %274 = vector.shape_cast %273 : vector<64xf32> to vector<1x64xf32>
    %cst_114 = arith.constant 1.600000e+01 : f32
    %275 = vector.broadcast %cst_114 : f32 to vector<1x64xf32>
    %276 = arith.divf %274, %275 : vector<1x64xf32>
    %277 = arith.mulf %272, %272 : vector<16x64xf32>
    %cst_115 = arith.constant dense<0.000000e+00> : vector<64xf32>
    %278 = vector.multi_reduction <add>, %277, %cst_115 [0] : vector<16x64xf32> to vector<64xf32>
    %279 = vector.shape_cast %278 : vector<64xf32> to vector<1x64xf32>
    %cst_116 = arith.constant 1.600000e+01 : f32
    %280 = vector.broadcast %cst_116 : f32 to vector<1x64xf32>
    %281 = arith.divf %279, %280 : vector<1x64xf32>
    %282 = arith.mulf %276, %276 : vector<1x64xf32>
    %283 = arith.subf %281, %282 : vector<1x64xf32>
    %cst_117 = arith.constant 0.000000e+00 : f32
    %284 = vector.broadcast %cst_117 : f32 to vector<1x64xf32>
    %285 = arith.maximumf %283, %284 : vector<1x64xf32>
    %286 = vector.broadcast %276 : vector<1x64xf32> to vector<16x64xf32>
    %287 = arith.subf %272, %286 : vector<16x64xf32>
    %cst_118 = arith.constant 9.99999974E-6 : f32
    %288 = vector.broadcast %cst_118 : f32 to vector<1x64xf32>
    %289 = arith.addf %285, %288 : vector<1x64xf32>
    %290 = math.rsqrt %289 : vector<1x64xf32>
    %291 = vector.broadcast %290 : vector<1x64xf32> to vector<16x64xf32>
    %292 = arith.mulf %287, %291 : vector<16x64xf32>
    %293 = vector.broadcast %168 : vector<1x64xf32> to vector<16x64xf32>
    %294 = arith.mulf %292, %293 : vector<16x64xf32>
    %295 = vector.broadcast %169 : vector<1x64xf32> to vector<16x64xf32>
    %296 = arith.addf %294, %295 : vector<16x64xf32>
    %cst_119 = arith.constant 0.000000e+00 : f32
    %297 = vector.broadcast %cst_119 : f32 to vector<16x64xf32>
    %298 = arith.cmpf oge, %296, %297 : vector<16x64xf32>
    %cst_120 = arith.constant 0.00999999977 : f32
    %299 = vector.broadcast %cst_120 : f32 to vector<16x64xf32>
    %300 = arith.mulf %299, %296 : vector<16x64xf32>
    %301 = arith.select %298, %296, %300 : vector<16x64xi1>, vector<16x64xf32>
    %302 = vector.shape_cast %301 : vector<16x64xf32> to vector<2x8x64xf32>
    %303 = tpu.concatenate %155, %302 in 2 : vector<2x8x80xf32>, vector<2x8x64xf32> -> vector<2x8x144xf32>
    %c0_121 = arith.constant 0 : index
    %c0_122 = arith.constant 0 : index
    %304 = vector.load %arg30[%c0_121, %c0_122] : memref<144x256xf32, #tpu.memory_space<vmem>>, vector<144x256xf32>
    %c0_123 = arith.constant 0 : index
    %c0_124 = arith.constant 0 : index
    %305 = vector.load %arg31[%c0_123, %c0_124] : memref<1x256xf32, #tpu.memory_space<vmem>>, vector<1x256xf32>
    %c0_125 = arith.constant 0 : index
    %c0_126 = arith.constant 0 : index
    %306 = vector.load %arg32[%c0_125, %c0_126] : memref<1x256xf32, #tpu.memory_space<vmem>>, vector<1x256xf32>
    %c0_127 = arith.constant 0 : index
    %c0_128 = arith.constant 0 : index
    %307 = vector.load %arg33[%c0_127, %c0_128] : memref<1x256xf32, #tpu.memory_space<vmem>>, vector<1x256xf32>
    %c0_129 = arith.constant 0 : index
    %c0_130 = arith.constant 0 : index
    %308 = vector.load %arg34[%c0_129, %c0_130] : memref<256x128xf32, #tpu.memory_space<vmem>>, vector<256x128xf32>
    %c0_131 = arith.constant 0 : index
    %c0_132 = arith.constant 0 : index
    %309 = vector.load %arg35[%c0_131, %c0_132] : memref<1x128xf32, #tpu.memory_space<vmem>>, vector<1x128xf32>
    %c0_133 = arith.constant 0 : index
    %c0_134 = arith.constant 0 : index
    %310 = vector.load %arg36[%c0_133, %c0_134] : memref<1x128xf32, #tpu.memory_space<vmem>>, vector<1x128xf32>
    %c0_135 = arith.constant 0 : index
    %c0_136 = arith.constant 0 : index
    %311 = vector.load %arg37[%c0_135, %c0_136] : memref<1x128xf32, #tpu.memory_space<vmem>>, vector<1x128xf32>
    %c0_137 = arith.constant 0 : index
    %c0_138 = arith.constant 0 : index
    %312 = vector.load %arg38[%c0_137, %c0_138] : memref<1x128xf32, #tpu.memory_space<vmem>>, vector<1x128xf32>
    %c0_139 = arith.constant 0 : index
    %c0_140 = arith.constant 0 : index
    %313 = vector.load %arg39[%c0_139, %c0_140] : memref<1x1xf32, #tpu.memory_space<vmem>>, vector<1x1xf32>
    %c0_141 = arith.constant 0 : index
    %c0_142 = arith.constant 0 : index
    %314 = vector.load %arg40[%c0_141, %c0_142] : memref<288x128xf32, #tpu.memory_space<vmem>>, vector<288x128xf32>
    %c0_143 = arith.constant 0 : index
    %c0_144 = arith.constant 0 : index
    %315 = vector.load %arg41[%c0_143, %c0_144] : memref<1x128xf32, #tpu.memory_space<vmem>>, vector<1x128xf32>
    %c0_145 = arith.constant 0 : index
    %c0_146 = arith.constant 0 : index
    %316 = vector.load %arg42[%c0_145, %c0_146] : memref<1x128xf32, #tpu.memory_space<vmem>>, vector<1x128xf32>
    %c0_147 = arith.constant 0 : index
    %c0_148 = arith.constant 0 : index
    %317 = vector.load %arg43[%c0_147, %c0_148] : memref<1x128xf32, #tpu.memory_space<vmem>>, vector<1x128xf32>
    %318 = vector.shape_cast %303 : vector<2x8x144xf32> to vector<2x8x1x144xf32>
    %319 = vector.shape_cast %303 : vector<2x8x144xf32> to vector<2x1x8x144xf32>
    %320 = vector.broadcast %318 : vector<2x8x1x144xf32> to vector<2x8x8x144xf32>
    %321 = vector.broadcast %319 : vector<2x1x8x144xf32> to vector<2x8x8x144xf32>
    %322 = arith.subf %320, %321 : vector<2x8x8x144xf32>
    %323 = math.absf %322 : vector<2x8x8x144xf32>
    %324 = vector.shape_cast %323 : vector<2x8x8x144xf32> to vector<128x144xf32>
    %325 = arith.truncf %324 : vector<128x144xf32> to vector<128x144xbf16>
    %326 = arith.truncf %304 : vector<144x256xf32> to vector<144x256xbf16>
    %cst_149 = arith.constant dense<0.000000e+00> : vector<128x256xf32>
    %327 = tpu.matmul %325, %326, %cst_149 {dimension_numbers = #tpu.dot_dimension_numbers<[1], [0], [0], [1], [0, 0, 1, 1], [], []>} : vector<128x144xbf16>, vector<144x256xbf16>, vector<128x256xf32> -> vector<128x256xf32>
    %328 = vector.broadcast %305 : vector<1x256xf32> to vector<128x256xf32>
    %329 = arith.addf %327, %328 : vector<128x256xf32>
    %cst_150 = arith.constant dense<0.000000e+00> : vector<256xf32>
    %330 = vector.multi_reduction <add>, %329, %cst_150 [0] : vector<128x256xf32> to vector<256xf32>
    %331 = vector.shape_cast %330 : vector<256xf32> to vector<1x256xf32>
    %cst_151 = arith.constant 1.280000e+02 : f32
    %332 = vector.broadcast %cst_151 : f32 to vector<1x256xf32>
    %333 = arith.divf %331, %332 : vector<1x256xf32>
    %334 = arith.mulf %329, %329 : vector<128x256xf32>
    %cst_152 = arith.constant dense<0.000000e+00> : vector<256xf32>
    %335 = vector.multi_reduction <add>, %334, %cst_152 [0] : vector<128x256xf32> to vector<256xf32>
    %336 = vector.shape_cast %335 : vector<256xf32> to vector<1x256xf32>
    %cst_153 = arith.constant 1.280000e+02 : f32
    %337 = vector.broadcast %cst_153 : f32 to vector<1x256xf32>
    %338 = arith.divf %336, %337 : vector<1x256xf32>
    %339 = arith.mulf %333, %333 : vector<1x256xf32>
    %340 = arith.subf %338, %339 : vector<1x256xf32>
    %cst_154 = arith.constant 0.000000e+00 : f32
    %341 = vector.broadcast %cst_154 : f32 to vector<1x256xf32>
    %342 = arith.maximumf %340, %341 : vector<1x256xf32>
    %343 = vector.broadcast %333 : vector<1x256xf32> to vector<128x256xf32>
    %344 = arith.subf %329, %343 : vector<128x256xf32>
    %cst_155 = arith.constant 9.99999974E-6 : f32
    %345 = vector.broadcast %cst_155 : f32 to vector<1x256xf32>
    %346 = arith.addf %342, %345 : vector<1x256xf32>
    %347 = math.rsqrt %346 : vector<1x256xf32>
    %348 = vector.broadcast %347 : vector<1x256xf32> to vector<128x256xf32>
    %349 = arith.mulf %344, %348 : vector<128x256xf32>
    %350 = vector.broadcast %306 : vector<1x256xf32> to vector<128x256xf32>
    %351 = arith.mulf %349, %350 : vector<128x256xf32>
    %352 = vector.broadcast %307 : vector<1x256xf32> to vector<128x256xf32>
    %353 = arith.addf %351, %352 : vector<128x256xf32>
    %cst_156 = arith.constant 0.000000e+00 : f32
    %354 = vector.broadcast %cst_156 : f32 to vector<128x256xf32>
    %355 = arith.cmpf oge, %353, %354 : vector<128x256xf32>
    %cst_157 = arith.constant 0.00999999977 : f32
    %356 = vector.broadcast %cst_157 : f32 to vector<128x256xf32>
    %357 = arith.mulf %356, %353 : vector<128x256xf32>
    %358 = arith.select %355, %353, %357 : vector<128x256xi1>, vector<128x256xf32>
    %359 = arith.truncf %358 : vector<128x256xf32> to vector<128x256xbf16>
    %360 = arith.truncf %308 : vector<256x128xf32> to vector<256x128xbf16>
    %cst_158 = arith.constant dense<0.000000e+00> : vector<128x128xf32>
    %361 = tpu.matmul %359, %360, %cst_158 {dimension_numbers = #tpu.dot_dimension_numbers<[1], [0], [0], [1], [0, 0, 1, 1], [], []>} : vector<128x256xbf16>, vector<256x128xbf16>, vector<128x128xf32> -> vector<128x128xf32>
    %362 = vector.broadcast %309 : vector<1x128xf32> to vector<128x128xf32>
    %363 = arith.addf %361, %362 : vector<128x128xf32>
    %cst_159 = arith.constant dense<0.000000e+00> : vector<128xf32>
    %364 = vector.multi_reduction <add>, %363, %cst_159 [0] : vector<128x128xf32> to vector<128xf32>
    %365 = vector.shape_cast %364 : vector<128xf32> to vector<1x128xf32>
    %cst_160 = arith.constant 1.280000e+02 : f32
    %366 = vector.broadcast %cst_160 : f32 to vector<1x128xf32>
    %367 = arith.divf %365, %366 : vector<1x128xf32>
    %368 = arith.mulf %363, %363 : vector<128x128xf32>
    %cst_161 = arith.constant dense<0.000000e+00> : vector<128xf32>
    %369 = vector.multi_reduction <add>, %368, %cst_161 [0] : vector<128x128xf32> to vector<128xf32>
    %370 = vector.shape_cast %369 : vector<128xf32> to vector<1x128xf32>
    %cst_162 = arith.constant 1.280000e+02 : f32
    %371 = vector.broadcast %cst_162 : f32 to vector<1x128xf32>
    %372 = arith.divf %370, %371 : vector<1x128xf32>
    %373 = arith.mulf %367, %367 : vector<1x128xf32>
    %374 = arith.subf %372, %373 : vector<1x128xf32>
    %cst_163 = arith.constant 0.000000e+00 : f32
    %375 = vector.broadcast %cst_163 : f32 to vector<1x128xf32>
    %376 = arith.maximumf %374, %375 : vector<1x128xf32>
    %377 = vector.broadcast %367 : vector<1x128xf32> to vector<128x128xf32>
    %378 = arith.subf %363, %377 : vector<128x128xf32>
    %cst_164 = arith.constant 9.99999974E-6 : f32
    %379 = vector.broadcast %cst_164 : f32 to vector<1x128xf32>
    %380 = arith.addf %376, %379 : vector<1x128xf32>
    %381 = math.rsqrt %380 : vector<1x128xf32>
    %382 = vector.broadcast %381 : vector<1x128xf32> to vector<128x128xf32>
    %383 = arith.mulf %378, %382 : vector<128x128xf32>
    %384 = vector.broadcast %310 : vector<1x128xf32> to vector<128x128xf32>
    %385 = arith.mulf %383, %384 : vector<128x128xf32>
    %386 = vector.broadcast %311 : vector<1x128xf32> to vector<128x128xf32>
    %387 = arith.addf %385, %386 : vector<128x128xf32>
    %cst_165 = arith.constant 0.000000e+00 : f32
    %388 = vector.broadcast %cst_165 : f32 to vector<128x128xf32>
    %389 = arith.cmpf oge, %387, %388 : vector<128x128xf32>
    %cst_166 = arith.constant 0.00999999977 : f32
    %390 = vector.broadcast %cst_166 : f32 to vector<128x128xf32>
    %391 = arith.mulf %390, %387 : vector<128x128xf32>
    %392 = arith.select %389, %387, %391 : vector<128x128xi1>, vector<128x128xf32>
    %393 = vector.shape_cast %392 : vector<128x128xf32> to vector<2x8x8x128xf32>
    %394 = vector.shape_cast %312 : vector<1x128xf32> to vector<1x1x1x128xf32>
    %395 = vector.broadcast %394 : vector<1x1x1x128xf32> to vector<2x8x8x128xf32>
    %396 = arith.mulf %393, %395 : vector<2x8x8x128xf32>
    %cst_167 = arith.constant dense<0.000000e+00> : vector<2x8x8xf32>
    %397 = vector.multi_reduction <add>, %396, %cst_167 [3] : vector<2x8x8x128xf32> to vector<2x8x8xf32>
    %398 = vector.shape_cast %313 : vector<1x1xf32> to vector<1x1x1xf32>
    %399 = vector.broadcast %398 : vector<1x1x1xf32> to vector<2x8x8xf32>
    %400 = arith.addf %397, %399 : vector<2x8x8xf32>
    %401 = vector.broadcast %7 : vector<1x8x8xf32> to vector<2x8x8xf32>
    %402 = arith.addf %400, %401 : vector<2x8x8xf32>
    %cst_168 = arith.constant dense<0xFF800000> : vector<2x8xf32>
    %403 = vector.multi_reduction <maximumf>, %402, %cst_168 [2] : vector<2x8x8xf32> to vector<2x8xf32>
    %404 = vector.shape_cast %403 : vector<2x8xf32> to vector<2x8x1xf32>
    %405 = vector.broadcast %404 : vector<2x8x1xf32> to vector<2x8x8xf32>
    %406 = arith.subf %402, %405 : vector<2x8x8xf32>
    %407 = math.exp %406 : vector<2x8x8xf32>
    %cst_169 = arith.constant dense<0.000000e+00> : vector<2x8xf32>
    %408 = vector.multi_reduction <add>, %407, %cst_169 [2] : vector<2x8x8xf32> to vector<2x8xf32>
    %409 = vector.shape_cast %408 : vector<2x8xf32> to vector<2x8x1xf32>
    %410 = tpu.reciprocal %409 {approx = true} : vector<2x8x1xf32> -> vector<2x8x1xf32>
    %411 = vector.broadcast %410 : vector<2x8x1xf32> to vector<2x8x8xf32>
    %412 = arith.mulf %407, %411 : vector<2x8x8xf32>
    "tpu.trace_start"() <{level = 10 : i32, message = "bij,bjd->bid"}> : () -> ()
    %cst_170 = arith.constant dense<0.000000e+00> : vector<2x8x144xf32>
    %413 = tpu.matmul %412, %303, %cst_170 {dimension_numbers = #tpu.dot_dimension_numbers<[2], [1], [1], [2], [0, 0, 0, 1, 1, 2], [0], [0]>} : vector<2x8x8xf32>, vector<2x8x144xf32>, vector<2x8x144xf32> -> vector<2x8x144xf32>
    "tpu.trace_stop"() : () -> ()
    %414 = tpu.concatenate %303, %413 in 2 : vector<2x8x144xf32>, vector<2x8x144xf32> -> vector<2x8x288xf32>
    %415 = vector.shape_cast %414 : vector<2x8x288xf32> to vector<16x288xf32>
    %416 = arith.truncf %415 : vector<16x288xf32> to vector<16x288xbf16>
    %417 = arith.truncf %314 : vector<288x128xf32> to vector<288x128xbf16>
    %cst_171 = arith.constant dense<0.000000e+00> : vector<16x128xf32>
    %418 = tpu.matmul %416, %417, %cst_171 {dimension_numbers = #tpu.dot_dimension_numbers<[1], [0], [0], [1], [0, 0, 1, 1], [], []>} : vector<16x288xbf16>, vector<288x128xbf16>, vector<16x128xf32> -> vector<16x128xf32>
    %419 = vector.broadcast %315 : vector<1x128xf32> to vector<16x128xf32>
    %420 = arith.addf %418, %419 : vector<16x128xf32>
    %cst_172 = arith.constant dense<0.000000e+00> : vector<128xf32>
    %421 = vector.multi_reduction <add>, %420, %cst_172 [0] : vector<16x128xf32> to vector<128xf32>
    %422 = vector.shape_cast %421 : vector<128xf32> to vector<1x128xf32>
    %cst_173 = arith.constant 1.600000e+01 : f32
    %423 = vector.broadcast %cst_173 : f32 to vector<1x128xf32>
    %424 = arith.divf %422, %423 : vector<1x128xf32>
    %425 = arith.mulf %420, %420 : vector<16x128xf32>
    %cst_174 = arith.constant dense<0.000000e+00> : vector<128xf32>
    %426 = vector.multi_reduction <add>, %425, %cst_174 [0] : vector<16x128xf32> to vector<128xf32>
    %427 = vector.shape_cast %426 : vector<128xf32> to vector<1x128xf32>
    %cst_175 = arith.constant 1.600000e+01 : f32
    %428 = vector.broadcast %cst_175 : f32 to vector<1x128xf32>
    %429 = arith.divf %427, %428 : vector<1x128xf32>
    %430 = arith.mulf %424, %424 : vector<1x128xf32>
    %431 = arith.subf %429, %430 : vector<1x128xf32>
    %cst_176 = arith.constant 0.000000e+00 : f32
    %432 = vector.broadcast %cst_176 : f32 to vector<1x128xf32>
    %433 = arith.maximumf %431, %432 : vector<1x128xf32>
    %434 = vector.broadcast %424 : vector<1x128xf32> to vector<16x128xf32>
    %435 = arith.subf %420, %434 : vector<16x128xf32>
    %cst_177 = arith.constant 9.99999974E-6 : f32
    %436 = vector.broadcast %cst_177 : f32 to vector<1x128xf32>
    %437 = arith.addf %433, %436 : vector<1x128xf32>
    %438 = math.rsqrt %437 : vector<1x128xf32>
    %439 = vector.broadcast %438 : vector<1x128xf32> to vector<16x128xf32>
    %440 = arith.mulf %435, %439 : vector<16x128xf32>
    %441 = vector.broadcast %316 : vector<1x128xf32> to vector<16x128xf32>
    %442 = arith.mulf %440, %441 : vector<16x128xf32>
    %443 = vector.broadcast %317 : vector<1x128xf32> to vector<16x128xf32>
    %444 = arith.addf %442, %443 : vector<16x128xf32>
    %cst_178 = arith.constant 0.000000e+00 : f32
    %445 = vector.broadcast %cst_178 : f32 to vector<16x128xf32>
    %446 = arith.cmpf oge, %444, %445 : vector<16x128xf32>
    %cst_179 = arith.constant 0.00999999977 : f32
    %447 = vector.broadcast %cst_179 : f32 to vector<16x128xf32>
    %448 = arith.mulf %447, %444 : vector<16x128xf32>
    %449 = arith.select %446, %444, %448 : vector<16x128xi1>, vector<16x128xf32>
    %450 = vector.shape_cast %449 : vector<16x128xf32> to vector<2x8x128xf32>
    %c0_180 = arith.constant 0 : index
    %c0_181 = arith.constant 0 : index
    %c0_182 = arith.constant 0 : index
    %451 = vector.load %arg44[%c0_180, %c0_181, %c0_182] : memref<2x8x128xf32, #tpu.memory_space<vmem>>, vector<2x8x128xf32>
    tpu.vector_store %arg44[%c0_180, %c0_181, %c0_182], %450 {strides = array<i32>} : memref<2x8x128xf32, #tpu.memory_space<vmem>>, vector<2x8x128xf32>,
    return
  }
  func.func @transform_0(%arg0: i32) -> (i32, i32, i32) {
    %c0_i32 = arith.constant 0 : i32
    %c0_i32_0 = arith.constant 0 : i32
    %c0_i32_1 = arith.constant 0 : i32
    %c0_i32_2 = arith.constant 0 : i32
    return %c0_i32, %c0_i32_0, %c0_i32_1 : i32, i32, i32
  }
  func.func @transform_1(%arg0: i32) -> (i32, i32) {
    %c0_i32 = arith.constant 0 : i32
    %c0_i32_0 = arith.constant 0 : i32
    %c0_i32_1 = arith.constant 0 : i32
    return %c0_i32, %c0_i32_0 : i32, i32
  }
  func.func @transform_2(%arg0: i32) -> (i32, i32) {
    %c0_i32 = arith.constant 0 : i32
    %c0_i32_0 = arith.constant 0 : i32
    %c0_i32_1 = arith.constant 0 : i32
    return %c0_i32, %c0_i32_0 : i32, i32
  }
  func.func @transform_3(%arg0: i32) -> (i32, i32) {
    %c0_i32 = arith.constant 0 : i32
    %c0_i32_0 = arith.constant 0 : i32
    %c0_i32_1 = arith.constant 0 : i32
    return %c0_i32, %c0_i32_0 : i32, i32
  }
  func.func @transform_4(%arg0: i32) -> (i32, i32) {
    %c0_i32 = arith.constant 0 : i32
    %c0_i32_0 = arith.constant 0 : i32
    %c0_i32_1 = arith.constant 0 : i32
    return %c0_i32, %c0_i32_0 : i32, i32
  }
  func.func @transform_5(%arg0: i32) -> (i32, i32) {
    %c0_i32 = arith.constant 0 : i32
    %c0_i32_0 = arith.constant 0 : i32
    %c0_i32_1 = arith.constant 0 : i32
    return %c0_i32, %c0_i32_0 : i32, i32
  }
  func.func @transform_6(%arg0: i32) -> (i32, i32) {
    %c0_i32 = arith.constant 0 : i32
    %c0_i32_0 = arith.constant 0 : i32
    %c0_i32_1 = arith.constant 0 : i32
    return %c0_i32, %c0_i32_0 : i32, i32
  }
  func.func @transform_7(%arg0: i32) -> (i32, i32) {
    %c0_i32 = arith.constant 0 : i32
    %c0_i32_0 = arith.constant 0 : i32
    %c0_i32_1 = arith.constant 0 : i32
    return %c0_i32, %c0_i32_0 : i32, i32
  }
  func.func @transform_8(%arg0: i32) -> (i32, i32) {
    %c0_i32 = arith.constant 0 : i32
    %c0_i32_0 = arith.constant 0 : i32
    %c0_i32_1 = arith.constant 0 : i32
    return %c0_i32, %c0_i32_0 : i32, i32
  }
  func.func @transform_9(%arg0: i32) -> (i32, i32) {
    %c0_i32 = arith.constant 0 : i32
    %c0_i32_0 = arith.constant 0 : i32
    %c0_i32_1 = arith.constant 0 : i32
    return %c0_i32, %c0_i32_0 : i32, i32
  }
  func.func @transform_10(%arg0: i32) -> (i32, i32) {
    %c0_i32 = arith.constant 0 : i32
    %c0_i32_0 = arith.constant 0 : i32
    %c0_i32_1 = arith.constant 0 : i32
    return %c0_i32, %c0_i32_0 : i32, i32
  }
  func.func @transform_11(%arg0: i32) -> (i32, i32) {
    %c0_i32 = arith.constant 0 : i32
    %c0_i32_0 = arith.constant 0 : i32
    %c0_i32_1 = arith.constant 0 : i32
    return %c0_i32, %c0_i32_0 : i32, i32
  }
  func.func @transform_12(%arg0: i32) -> (i32, i32) {
    %c0_i32 = arith.constant 0 : i32
    %c0_i32_0 = arith.constant 0 : i32
    %c0_i32_1 = arith.constant 0 : i32
    return %c0_i32, %c0_i32_0 : i32, i32
  }
  func.func @transform_13(%arg0: i32) -> (i32, i32) {
    %c0_i32 = arith.constant 0 : i32
    %c0_i32_0 = arith.constant 0 : i32
    %c0_i32_1 = arith.constant 0 : i32
    return %c0_i32, %c0_i32_0 : i32, i32
  }
  func.func @transform_14(%arg0: i32) -> (i32, i32) {
    %c0_i32 = arith.constant 0 : i32
    %c0_i32_0 = arith.constant 0 : i32
    %c0_i32_1 = arith.constant 0 : i32
    return %c0_i32, %c0_i32_0 : i32, i32
  }
  func.func @transform_15(%arg0: i32) -> (i32, i32) {
    %c0_i32 = arith.constant 0 : i32
    %c0_i32_0 = arith.constant 0 : i32
    %c0_i32_1 = arith.constant 0 : i32
    return %c0_i32, %c0_i32_0 : i32, i32
  }
  func.func @transform_16(%arg0: i32) -> (i32, i32) {
    %c0_i32 = arith.constant 0 : i32
    %c0_i32_0 = arith.constant 0 : i32
    %c0_i32_1 = arith.constant 0 : i32
    return %c0_i32, %c0_i32_0 : i32, i32
  }
  func.func @transform_17(%arg0: i32) -> (i32, i32) {
    %c0_i32 = arith.constant 0 : i32
    %c0_i32_0 = arith.constant 0 : i32
    %c0_i32_1 = arith.constant 0 : i32
    return %c0_i32, %c0_i32_0 : i32, i32
  }
  func.func @transform_18(%arg0: i32) -> (i32, i32) {
    %c0_i32 = arith.constant 0 : i32
    %c0_i32_0 = arith.constant 0 : i32
    %c0_i32_1 = arith.constant 0 : i32
    return %c0_i32, %c0_i32_0 : i32, i32
  }
  func.func @transform_19(%arg0: i32) -> (i32, i32) {
    %c0_i32 = arith.constant 0 : i32
    %c0_i32_0 = arith.constant 0 : i32
    %c0_i32_1 = arith.constant 0 : i32
    return %c0_i32, %c0_i32_0 : i32, i32
  }
  func.func @transform_20(%arg0: i32) -> (i32, i32) {
    %c0_i32 = arith.constant 0 : i32
    %c0_i32_0 = arith.constant 0 : i32
    %c0_i32_1 = arith.constant 0 : i32
    return %c0_i32, %c0_i32_0 : i32, i32
  }
  func.func @transform_21(%arg0: i32) -> (i32, i32) {
    %c0_i32 = arith.constant 0 : i32
    %c0_i32_0 = arith.constant 0 : i32
    %c0_i32_1 = arith.constant 0 : i32
    return %c0_i32, %c0_i32_0 : i32, i32
  }
  func.func @transform_22(%arg0: i32) -> (i32, i32) {
    %c0_i32 = arith.constant 0 : i32
    %c0_i32_0 = arith.constant 0 : i32
    %c0_i32_1 = arith.constant 0 : i32
    return %c0_i32, %c0_i32_0 : i32, i32
  }
  func.func @transform_23(%arg0: i32) -> (i32, i32) {
    %c0_i32 = arith.constant 0 : i32
    %c0_i32_0 = arith.constant 0 : i32
    %c0_i32_1 = arith.constant 0 : i32
    return %c0_i32, %c0_i32_0 : i32, i32
  }
  func.func @transform_24(%arg0: i32) -> (i32, i32) {
    %c0_i32 = arith.constant 0 : i32
    %c0_i32_0 = arith.constant 0 : i32
    %c0_i32_1 = arith.constant 0 : i32
    return %c0_i32, %c0_i32_0 : i32, i32
  }
  func.func @transform_25(%arg0: i32) -> (i32, i32) {
    %c0_i32 = arith.constant 0 : i32
    %c0_i32_0 = arith.constant 0 : i32
    %c0_i32_1 = arith.constant 0 : i32
    return %c0_i32, %c0_i32_0 : i32, i32
  }
  func.func @transform_26(%arg0: i32) -> (i32, i32) {
    %c0_i32 = arith.constant 0 : i32
    %c0_i32_0 = arith.constant 0 : i32
    %c0_i32_1 = arith.constant 0 : i32
    return %c0_i32, %c0_i32_0 : i32, i32
  }
  func.func @transform_27(%arg0: i32) -> (i32, i32) {
    %c0_i32 = arith.constant 0 : i32
    %c0_i32_0 = arith.constant 0 : i32
    %c0_i32_1 = arith.constant 0 : i32
    return %c0_i32, %c0_i32_0 : i32, i32
  }
  func.func @transform_28(%arg0: i32) -> (i32, i32) {
    %c0_i32 = arith.constant 0 : i32
    %c0_i32_0 = arith.constant 0 : i32
    %c0_i32_1 = arith.constant 0 : i32
    return %c0_i32, %c0_i32_0 : i32, i32
  }
  func.func @transform_29(%arg0: i32) -> (i32, i32) {
    %c0_i32 = arith.constant 0 : i32
    %c0_i32_0 = arith.constant 0 : i32
    %c0_i32_1 = arith.constant 0 : i32
    return %c0_i32, %c0_i32_0 : i32, i32
  }
  func.func @transform_30(%arg0: i32) -> (i32, i32) {
    %c0_i32 = arith.constant 0 : i32
    %c0_i32_0 = arith.constant 0 : i32
    %c0_i32_1 = arith.constant 0 : i32
    return %c0_i32, %c0_i32_0 : i32, i32
  }
  func.func @transform_31(%arg0: i32) -> (i32, i32) {
    %c0_i32 = arith.constant 0 : i32
    %c0_i32_0 = arith.constant 0 : i32
    %c0_i32_1 = arith.constant 0 : i32
    return %c0_i32, %c0_i32_0 : i32, i32
  }
  func.func @transform_32(%arg0: i32) -> (i32, i32) {
    %c0_i32 = arith.constant 0 : i32
    %c0_i32_0 = arith.constant 0 : i32
    %c0_i32_1 = arith.constant 0 : i32
    return %c0_i32, %c0_i32_0 : i32, i32
  }
  func.func @transform_33(%arg0: i32) -> (i32, i32) {
    %c0_i32 = arith.constant 0 : i32
    %c0_i32_0 = arith.constant 0 : i32
    %c0_i32_1 = arith.constant 0 : i32
    return %c0_i32, %c0_i32_0 : i32, i32
  }
  func.func @transform_34(%arg0: i32) -> (i32, i32) {
    %c0_i32 = arith.constant 0 : i32
    %c0_i32_0 = arith.constant 0 : i32
    %c0_i32_1 = arith.constant 0 : i32
    return %c0_i32, %c0_i32_0 : i32, i32
  }
  func.func @transform_35(%arg0: i32) -> (i32, i32) {
    %c0_i32 = arith.constant 0 : i32
    %c0_i32_0 = arith.constant 0 : i32
    %c0_i32_1 = arith.constant 0 : i32
    return %c0_i32, %c0_i32_0 : i32, i32
  }
  func.func @transform_36(%arg0: i32) -> (i32, i32) {
    %c0_i32 = arith.constant 0 : i32
    %c0_i32_0 = arith.constant 0 : i32
    %c0_i32_1 = arith.constant 0 : i32
    return %c0_i32, %c0_i32_0 : i32, i32
  }
  func.func @transform_37(%arg0: i32) -> (i32, i32) {
    %c0_i32 = arith.constant 0 : i32
    %c0_i32_0 = arith.constant 0 : i32
    %c0_i32_1 = arith.constant 0 : i32
    return %c0_i32, %c0_i32_0 : i32, i32
  }
  func.func @transform_38(%arg0: i32) -> (i32, i32) {
    %c0_i32 = arith.constant 0 : i32
    %c0_i32_0 = arith.constant 0 : i32
    %c0_i32_1 = arith.constant 0 : i32
    return %c0_i32, %c0_i32_0 : i32, i32
  }
  func.func @transform_39(%arg0: i32) -> (i32, i32) {
    %c0_i32 = arith.constant 0 : i32
    %c0_i32_0 = arith.constant 0 : i32
    %c0_i32_1 = arith.constant 0 : i32
    return %c0_i32, %c0_i32_0 : i32, i32
  }
  func.func @transform_40(%arg0: i32) -> (i32, i32) {
    %c0_i32 = arith.constant 0 : i32
    %c0_i32_0 = arith.constant 0 : i32
    %c0_i32_1 = arith.constant 0 : i32
    return %c0_i32, %c0_i32_0 : i32, i32
  }
  func.func @transform_41(%arg0: i32) -> (i32, i32) {
    %c0_i32 = arith.constant 0 : i32
    %c0_i32_0 = arith.constant 0 : i32
    %c0_i32_1 = arith.constant 0 : i32
    return %c0_i32, %c0_i32_0 : i32, i32
  }
  func.func @transform_42(%arg0: i32) -> (i32, i32) {
    %c0_i32 = arith.constant 0 : i32
    %c0_i32_0 = arith.constant 0 : i32
    %c0_i32_1 = arith.constant 0 : i32
    return %c0_i32, %c0_i32_0 : i32, i32
  }
  func.func @transform_43(%arg0: i32) -> (i32, i32, i32) {
    %c0_i32 = arith.constant 0 : i32
    %c0_i32_0 = arith.constant 0 : i32
    %c0_i32_1 = arith.constant 0 : i32
    %c0_i32_2 = arith.constant 0 : i32
    return %c0_i32, %c0_i32_0, %c0_i32_1 : i32, i32, i32
  }
}

</mosaic_0001>

<llo_original>
// kernel: graphnn_forward.1
$region0: #{graphnn_forward.1}
  #allocation0 [shape = 'u32[]', space=smem, size = 0x4, offset = 0x4, fixed_abs, tag = 'smem constant byte address 0x4 - core index']
  #allocation1 [shape = 'u32[144,128]{1,0:T(1,128)}', space=vmem, size = 0x12000, scoped, tag = 'internal scratch']
  #allocation2 [shape = 'f32[1,1]{1,0:T(1,128)S(1)}', space=vmem, size = 0x200, scoped, tag = 'scoped memory for graphnn_forward.1']
  #allocation3 [shape = 'f32[1,1]{1,0:T(1,128)S(1)}', space=vmem, size = 0x200, scoped, tag = 'scoped memory for graphnn_forward.1']
  #allocation4 [shape = 'f32[1,1]{1,0:T(1,128)S(1)}', space=vmem, size = 0x200, scoped, tag = 'scoped memory for graphnn_forward.1']
  %s0 = inlined_call_operand.smem [shape: u32[44], index: -1, kind: input, shape index: {}]
  %s1 = sld [smem:[%s0]]
  %s2 = scalar_lea.smem %s0, 1
  %s3 = sld [smem:[%s2]]
  %s4 = scalar_lea.smem %s0, 2
  %s5 = sld [smem:[%s4]]
  %s6 = scalar_lea.smem %s0, 3
  %s7 = sld [smem:[%s6]]
  %s8 = scalar_lea.smem %s0, 4
  %s9 = sld [smem:[%s8]]
  %s10 = scalar_lea.smem %s0, 5
  %s11 = sld [smem:[%s10]]
  %s12 = scalar_lea.smem %s0, 6
  %s13 = sld [smem:[%s12]]
  %s14 = scalar_lea.smem %s0, 7
  %s15 = sld [smem:[%s14]]
  %s16 = scalar_lea.smem %s0, 8
  %s17 = sld [smem:[%s16]]
  %s18 = scalar_lea.smem %s0, 9
  %s19 = sld [smem:[%s18]]
  %s20 = scalar_lea.smem %s0, 10
  %s21 = sld [smem:[%s20]]
  %s22 = scalar_lea.smem %s0, 11
  %s23 = sld [smem:[%s22]]
  %s24 = scalar_lea.smem %s0, 12
  %s25 = sld [smem:[%s24]]
  %s26 = scalar_lea.smem %s0, 13
  %s27 = sld [smem:[%s26]]
  %s28 = scalar_lea.smem %s0, 14
  %s29 = sld [smem:[%s28]]
  %s30 = scalar_lea.smem %s0, 15
  %s31 = sld [smem:[%s30]]
  %s32 = scalar_lea.smem %s0, 16
  %s33 = sld [smem:[%s32]]
  %s34 = scalar_lea.smem %s0, 17
  %s35 = sld [smem:[%s34]]
  %s36 = scalar_lea.smem %s0, 18
  %s37 = sld [smem:[%s36]]
  %s38 = scalar_lea.smem %s0, 19
  %s39 = sld [smem:[%s38]]
  %s40 = scalar_lea.smem %s0, 20
  %s41 = sld [smem:[%s40]]
  %s42 = scalar_lea.smem %s0, 21
  %s43 = sld [smem:[%s42]]
  %s44 = scalar_lea.smem %s0, 22
  %s45 = sld [smem:[%s44]]
  %s46 = scalar_lea.smem %s0, 23
  %s47 = sld [smem:[%s46]]
  %s48 = scalar_lea.smem %s0, 24
  %s49 = sld [smem:[%s48]]
  %s50 = scalar_lea.smem %s0, 25
  %s51 = sld [smem:[%s50]]
  %s52 = scalar_lea.smem %s0, 26
  %s53 = sld [smem:[%s52]]
  %s54 = scalar_lea.smem %s0, 27
  %s55 = sld [smem:[%s54]]
  %s56 = scalar_lea.smem %s0, 28
  %s57 = sld [smem:[%s56]]
  %s58 = scalar_lea.smem %s0, 29
  %s59 = sld [smem:[%s58]]
  %s60 = scalar_lea.smem %s0, 30
  %s61 = sld [smem:[%s60]]
  %s62 = scalar_lea.smem %s0, 31
  %s63 = sld [smem:[%s62]]
  %s64 = scalar_lea.smem %s0, 32
  %s65 = sld [smem:[%s64]]
  %s66 = scalar_lea.smem %s0, 33
  %s67 = sld [smem:[%s66]]
  %s68 = scalar_lea.smem %s0, 34
  %s69 = sld [smem:[%s68]]
  %s70 = scalar_lea.smem %s0, 35
  %s71 = sld [smem:[%s70]]
  %s72 = scalar_lea.smem %s0, 36
  %s73 = sld [smem:[%s72]]
  %s74 = scalar_lea.smem %s0, 37
  %s75 = sld [smem:[%s74]]
  %s76 = scalar_lea.smem %s0, 38
  %s77 = sld [smem:[%s76]]
  %s78 = scalar_lea.smem %s0, 39
  %s79 = sld [smem:[%s78]]
  %s80 = scalar_lea.smem %s0, 40
  %s81 = sld [smem:[%s80]]
  %s82 = scalar_lea.smem %s0, 41
  %s83 = sld [smem:[%s82]]
  %s84 = scalar_lea.smem %s0, 42
  %s85 = sld [smem:[%s84]]
  %s86 = scalar_lea.smem %s0, 43
  %s87 = sld [smem:[%s86]]
  %s88 = sld [smem:[#allocation0]]
  $region306: #{graphnn_forward.1} parent=0
    _
  %s90 = ssub.s32 1, %s88
  %s91 = scalar_select 0, %s90, %s88
  %v92 = vstv %s21
  %93 = vst [vmem:[#allocation2] sm:$0x1] %v92
  %v94 = vstv %s49
  %95 = vst [vmem:[#allocation3] sm:$0x1] %v94
  %v96 = vstv %s77
  %97 = vst [vmem:[#allocation4] sm:$0x1] %v96
  $region1: #{graphnn_forward.1} parent=0
    #allocation5 [shape = 'u8[8192]{0}', space=vmem, size = 0x2000, scoped, tag = 'input window, operand 0, single buffered']
    #allocation6 [shape = 's32[1]{0}', space=sflag, size = 0x4, scoped, tag = 'scoped memory for graphnn_forward.1']
    #allocation7 [shape = 's32[1]{0}', space=sflag, size = 0x4, scoped, tag = 'scoped memory for graphnn_forward.1']
    #allocation8 [shape = 'u8[131072]{0}', space=vmem, size = 0x20000, scoped, tag = 'input window, operand 5, single buffered']
    #allocation9 [shape = 's32[1]{0}', space=sflag, size = 0x4, scoped, tag = 'scoped memory for graphnn_forward.1']
    #allocation10 [shape = 'u8[512]{0}', space=vmem, size = 0x400, scoped, tag = 'input window, operand 7, single buffered']
    #allocation11 [shape = 'u8[512]{0}', space=vmem, size = 0x400, scoped, tag = 'input window, operand 8, single buffered']
    #allocation12 [shape = 's32[1]{0}', space=sflag, size = 0x4, scoped, tag = 'scoped memory for graphnn_forward.1']
    #allocation13 [shape = 'u8[512]{0}', space=vmem, size = 0x400, scoped, tag = 'input window, operand 9, single buffered']
    #allocation14 [shape = 'u8[512]{0}', space=vmem, size = 0x400, scoped, tag = 'input window, operand 12, single buffered']
    #allocation15 [shape = 's32[1]{0}', space=sflag, size = 0x4, scoped, tag = 'scoped memory for graphnn_forward.1']
    #allocation16 [shape = 'u8[512]{0}', space=vmem, size = 0x400, scoped, tag = 'input window, operand 13, single buffered']
    #allocation17 [shape = 'u8[512]{0}', space=vmem, size = 0x400, scoped, tag = 'input window, operand 14, single buffered']
    #allocation18 [shape = 's32[1]{0}', space=sflag, size = 0x4, scoped, tag = 'scoped memory for graphnn_forward.1']
    #allocation19 [shape = 'u8[81920]{0}', space=vmem, size = 0x14000, scoped, tag = 'input window, operand 15, single buffered']
    #allocation20 [shape = 'u8[1024]{0}', space=vmem, size = 0x400, scoped, tag = 'input window, operand 16, single buffered']
    #allocation21 [shape = 's32[1]{0}', space=sflag, size = 0x4, scoped, tag = 'scoped memory for graphnn_forward.1']
    #allocation22 [shape = 'u8[1024]{0}', space=vmem, size = 0x400, scoped, tag = 'input window, operand 17, single buffered']
    #allocation23 [shape = 'u8[1024]{0}', space=vmem, size = 0x400, scoped, tag = 'input window, operand 18, single buffered']
    #allocation24 [shape = 's32[1]{0}', space=sflag, size = 0x4, scoped, tag = 'scoped memory for graphnn_forward.1']
    #allocation25 [shape = 'u8[131072]{0}', space=vmem, size = 0x20000, scoped, tag = 'input window, operand 19, single buffered']
    #allocation26 [shape = 'u8[512]{0}', space=vmem, size = 0x400, scoped, tag = 'input window, operand 20, single buffered']
    #allocation27 [shape = 's32[1]{0}', space=sflag, size = 0x4, scoped, tag = 'scoped memory for graphnn_forward.1']
    #allocation28 [shape = 'u8[512]{0}', space=vmem, size = 0x400, scoped, tag = 'input window, operand 21, single buffered']
    #allocation29 [shape = 'u8[512]{0}', space=vmem, size = 0x400, scoped, tag = 'input window, operand 22, single buffered']
    #allocation30 [shape = 's32[1]{0}', space=sflag, size = 0x4, scoped, tag = 'scoped memory for graphnn_forward.1']
    #allocation31 [shape = 'u8[512]{0}', space=vmem, size = 0x400, scoped, tag = 'input window, operand 23, single buffered']
    #allocation32 [shape = 'u8[512]{0}', space=vmem, size = 0x400, scoped, tag = 'input window, operand 26, single buffered']
    #allocation33 [shape = 's32[1]{0}', space=sflag, size = 0x4, scoped, tag = 'scoped memory for graphnn_forward.1']
    #allocation34 [shape = 'u8[512]{0}', space=vmem, size = 0x400, scoped, tag = 'input window, operand 27, single buffered']
    #allocation35 [shape = 'u8[512]{0}', space=vmem, size = 0x400, scoped, tag = 'input window, operand 28, single buffered']
    #allocation36 [shape = 's32[1]{0}', space=sflag, size = 0x4, scoped, tag = 'scoped memory for graphnn_forward.1']
    #allocation37 [shape = 'u8[1024]{0}', space=vmem, size = 0x400, scoped, tag = 'input window, operand 30, single buffered']
    #allocation38 [shape = 'u8[1024]{0}', space=vmem, size = 0x400, scoped, tag = 'input window, operand 31, single buffered']
    #allocation39 [shape = 's32[1]{0}', space=sflag, size = 0x4, scoped, tag = 'scoped memory for graphnn_forward.1']
    #allocation40 [shape = 'u8[1024]{0}', space=vmem, size = 0x400, scoped, tag = 'input window, operand 32, single buffered']
    #allocation41 [shape = 'u8[131072]{0}', space=vmem, size = 0x20000, scoped, tag = 'input window, operand 33, single buffered']
    #allocation42 [shape = 's32[1]{0}', space=sflag, size = 0x4, scoped, tag = 'scoped memory for graphnn_forward.1']
    #allocation43 [shape = 'u8[512]{0}', space=vmem, size = 0x400, scoped, tag = 'input window, operand 34, single buffered']
    #allocation44 [shape = 'u8[512]{0}', space=vmem, size = 0x400, scoped, tag = 'input window, operand 35, single buffered']
    #allocation45 [shape = 's32[1]{0}', space=sflag, size = 0x4, scoped, tag = 'scoped memory for graphnn_forward.1']
    #allocation46 [shape = 'u8[512]{0}', space=vmem, size = 0x400, scoped, tag = 'input window, operand 36, single buffered']
    #allocation47 [shape = 'u8[147456]{0}', space=vmem, size = 0x24000, scoped, tag = 'input window, operand 39, single buffered']
    #allocation48 [shape = 's32[1]{0}', space=sflag, size = 0x4, scoped, tag = 'scoped memory for graphnn_forward.1']
    #allocation49 [shape = 'u8[512]{0}', space=vmem, size = 0x400, scoped, tag = 'input window, operand 40, single buffered']
    #allocation50 [shape = 'u8[512]{0}', space=vmem, size = 0x400, scoped, tag = 'input window, operand 41, single buffered']
    #allocation51 [shape = 's32[1]{0}', space=sflag, size = 0x4, scoped, tag = 'scoped memory for graphnn_forward.1']
    #allocation52 [shape = 'u8[512]{0}', space=vmem, size = 0x400, scoped, tag = 'input window, operand 42, single buffered']
    #allocation53 [shape = 'u8[8192]{0}', space=vmem, size = 0x2000, scoped, tag = 'output window, operand 0, single buffered']
    %98 = vsyncpa [#allocation6], 0
    %99 = vsyncpa [#allocation9], 0
    %100 = vsyncpa [#allocation12], 0
    %101 = vsyncpa [#allocation15], 0
    %102 = vsyncpa [#allocation18], 0
    %103 = vsyncpa [#allocation21], 0
    %104 = vsyncpa [#allocation24], 0
    %105 = vsyncpa [#allocation27], 0
    %106 = vsyncpa [#allocation30], 0
    %107 = vsyncpa [#allocation33], 0
    %108 = vsyncpa [#allocation36], 0
    %109 = vsyncpa [#allocation39], 0
    %110 = vsyncpa [#allocation42], 0
    %111 = vsyncpa [#allocation45], 0
    %112 = vsyncpa [#allocation48], 0
    %113 = vsyncpa [#allocation51], 0
    %114 = vsyncpa [#allocation7], 0
    // Predicated region
    $region2: #{graphnn_forward.1} parent=1 // pred_check
      _
    $region3: #{graphnn_forward.1} parent=1 // pred_check_branch
      %116 = sbr.rel (0) target = $region5
    $region4: #{graphnn_forward.1} parent=1 // pred_region
      %s118 = ssub.s32 256, 256
      %119 = vsyncadd [#allocation6], %s118
      %s120 = sshll.u32 [#allocation5], 4
      %s121 = int_to_ptr.vmem [resolvable:$true] %s120
      %126 = dma.hbm_to_vmem [thread:$0]  %s1, 256, %s121, [#allocation6], 128, 128, 8
    $region5: #{graphnn_forward.1} parent=1 // pred_fallthru
      _
    // Predicated region
    $region6: #{graphnn_forward.1} parent=1 // pred_check
      _
    $region7: #{graphnn_forward.1} parent=1 // pred_check_branch
      %128 = sbr.rel (0) target = $region9
    $region8: #{graphnn_forward.1} parent=1 // pred_region
      _
    $region9: #{graphnn_forward.1} parent=1 // pred_fallthru
      _
    // Predicated region
    $region10: #{graphnn_forward.1} parent=1 // pred_check
      _
    $region11: #{graphnn_forward.1} parent=1 // pred_check_branch
      %130 = sbr.rel (0) target = $region13
    $region12: #{graphnn_forward.1} parent=1 // pred_region
      _
    $region13: #{graphnn_forward.1} parent=1 // pred_fallthru
      _
    // Predicated region
    $region14: #{graphnn_forward.1} parent=1 // pred_check
      _
    $region15: #{graphnn_forward.1} parent=1 // pred_check_branch
      %132 = sbr.rel (0) target = $region17
    $region16: #{graphnn_forward.1} parent=1 // pred_region
      _
    $region17: #{graphnn_forward.1} parent=1 // pred_fallthru
      _
    // Predicated region
    $region18: #{graphnn_forward.1} parent=1 // pred_check
      _
    $region19: #{graphnn_forward.1} parent=1 // pred_check_branch
      %134 = sbr.rel (0) target = $region21
    $region20: #{graphnn_forward.1} parent=1 // pred_region
      _
    $region21: #{graphnn_forward.1} parent=1 // pred_fallthru
      _
    // Predicated region
    $region22: #{graphnn_forward.1} parent=1 // pred_check
      _
    $region23: #{graphnn_forward.1} parent=1 // pred_check_branch
      %136 = sbr.rel (0) target = $region25
    $region24: #{graphnn_forward.1} parent=1 // pred_region
      %s138 = ssub.s32 4096, 4096
      %139 = vsyncadd [#allocation9], %s138
      %s140 = sshll.u32 [#allocation8], 4
      %s141 = int_to_ptr.vmem [resolvable:$true] %s140
      %146 = dma.hbm_to_vmem [thread:$0]  %s11, 4096, %s141, [#allocation9], 128, 128, 8
    $region25: #{graphnn_forward.1} parent=1 // pred_fallthru
      _
    // Predicated region
    $region26: #{graphnn_forward.1} parent=1 // pred_check
      _
    $region27: #{graphnn_forward.1} parent=1 // pred_check_branch
      %148 = sbr.rel (0) target = $region29
    $region28: #{graphnn_forward.1} parent=1 // pred_region
      _
    $region29: #{graphnn_forward.1} parent=1 // pred_fallthru
      _
    // Predicated region
    $region30: #{graphnn_forward.1} parent=1 // pred_check
      _
    $region31: #{graphnn_forward.1} parent=1 // pred_check_branch
      %150 = sbr.rel (0) target = $region33
    $region32: #{graphnn_forward.1} parent=1 // pred_region
      %s152 = ssub.s32 16, 16
      %153 = vsyncadd [#allocation9], %s152
      %s155 = sshll.u32 [#allocation10], 4
      %s156 = int_to_ptr.vmem [resolvable:$true] %s155
      %158 = dma.hbm_to_vmem [thread:$0]  %s15, 16, %s156, [#allocation9]
    $region33: #{graphnn_forward.1} parent=1 // pred_fallthru
      _
    // Predicated region
    $region34: #{graphnn_forward.1} parent=1 // pred_check
      _
    $region35: #{graphnn_forward.1} parent=1 // pred_check_branch
      %160 = sbr.rel (0) target = $region37
    $region36: #{graphnn_forward.1} parent=1 // pred_region
      %s162 = ssub.s32 16, 16
      %163 = vsyncadd [#allocation12], %s162
      %s165 = sshll.u32 [#allocation11], 4
      %s166 = int_to_ptr.vmem [resolvable:$true] %s165
      %168 = dma.hbm_to_vmem [thread:$0]  %s17, 16, %s166, [#allocation12]
    $region37: #{graphnn_forward.1} parent=1 // pred_fallthru
      _
    // Predicated region
    $region38: #{graphnn_forward.1} parent=1 // pred_check
      _
    $region39: #{graphnn_forward.1} parent=1 // pred_check_branch
      %170 = sbr.rel (0) target = $region41
    $region40: #{graphnn_forward.1} parent=1 // pred_region
      %s172 = ssub.s32 16, 16
      %173 = vsyncadd [#allocation12], %s172
      %s175 = sshll.u32 [#allocation13], 4
      %s176 = int_to_ptr.vmem [resolvable:$true] %s175
      %178 = dma.hbm_to_vmem [thread:$0]  %s19, 16, %s176, [#allocation12]
    $region41: #{graphnn_forward.1} parent=1 // pred_fallthru
      _
    // Predicated region
    $region42: #{graphnn_forward.1} parent=1 // pred_check
      _
    $region43: #{graphnn_forward.1} parent=1 // pred_check_branch
      %180 = sbr.rel (0) target = $region45
    $region44: #{graphnn_forward.1} parent=1 // pred_region
      _
    $region45: #{graphnn_forward.1} parent=1 // pred_fallthru
      _
    // Predicated region
    $region46: #{graphnn_forward.1} parent=1 // pred_check
      _
    $region47: #{graphnn_forward.1} parent=1 // pred_check_branch
      %182 = sbr.rel (0) target = $region49
    $region48: #{graphnn_forward.1} parent=1 // pred_region
      _
    $region49: #{graphnn_forward.1} parent=1 // pred_fallthru
      _
    // Predicated region
    $region50: #{graphnn_forward.1} parent=1 // pred_check
      _
    $region51: #{graphnn_forward.1} parent=1 // pred_check_branch
      %184 = sbr.rel (0) target = $region53
    $region52: #{graphnn_forward.1} parent=1 // pred_region
      %s186 = ssub.s32 16, 16
      %187 = vsyncadd [#allocation15], %s186
      %s189 = sshll.u32 [#allocation14], 4
      %s190 = int_to_ptr.vmem [resolvable:$true] %s189
      %192 = dma.hbm_to_vmem [thread:$0]  %s25, 16, %s190, [#allocation15]
    $region53: #{graphnn_forward.1} parent=1 // pred_fallthru
      _
    // Predicated region
    $region54: #{graphnn_forward.1} parent=1 // pred_check
      _
    $region55: #{graphnn_forward.1} parent=1 // pred_check_branch
      %194 = sbr.rel (0) target = $region57
    $region56: #{graphnn_forward.1} parent=1 // pred_region
      %s196 = ssub.s32 16, 16
      %197 = vsyncadd [#allocation15], %s196
      %s199 = sshll.u32 [#allocation16], 4
      %s200 = int_to_ptr.vmem [resolvable:$true] %s199
      %202 = dma.hbm_to_vmem [thread:$0]  %s27, 16, %s200, [#allocation15]
    $region57: #{graphnn_forward.1} parent=1 // pred_fallthru
      _
    // Predicated region
    $region58: #{graphnn_forward.1} parent=1 // pred_check
      _
    $region59: #{graphnn_forward.1} parent=1 // pred_check_branch
      %204 = sbr.rel (0) target = $region61
    $region60: #{graphnn_forward.1} parent=1 // pred_region
      %s206 = ssub.s32 16, 16
      %207 = vsyncadd [#allocation18], %s206
      %s209 = sshll.u32 [#allocation17], 4
      %s210 = int_to_ptr.vmem [resolvable:$true] %s209
      %212 = dma.hbm_to_vmem [thread:$0]  %s29, 16, %s210, [#allocation18]
    $region61: #{graphnn_forward.1} parent=1 // pred_fallthru
      _
    // Predicated region
    $region62: #{graphnn_forward.1} parent=1 // pred_check
      _
    $region63: #{graphnn_forward.1} parent=1 // pred_check_branch
      %214 = sbr.rel (0) target = $region65
    $region64: #{graphnn_forward.1} parent=1 // pred_region
      %s216 = ssub.s32 2560, 2560
      %217 = vsyncadd [#allocation18], %s216
      %s218 = sshll.u32 [#allocation19], 4
      %s219 = int_to_ptr.vmem [resolvable:$true] %s218
      %224 = dma.hbm_to_vmem [thread:$0]  %s31, 2560, %s219, [#allocation18], 256, 256, 16
    $region65: #{graphnn_forward.1} parent=1 // pred_fallthru
      _
    // Predicated region
    $region66: #{graphnn_forward.1} parent=1 // pred_check
      _
    $region67: #{graphnn_forward.1} parent=1 // pred_check_branch
      %226 = sbr.rel (0) target = $region69
    $region68: #{graphnn_forward.1} parent=1 // pred_region
      %s228 = ssub.s32 32, 32
      %229 = vsyncadd [#allocation21], %s228
      %s231 = sshll.u32 [#allocation20], 4
      %s232 = int_to_ptr.vmem [resolvable:$true] %s231
      %234 = dma.hbm_to_vmem [thread:$0]  %s33, 32, %s232, [#allocation21]
    $region69: #{graphnn_forward.1} parent=1 // pred_fallthru
      _
    // Predicated region
    $region70: #{graphnn_forward.1} parent=1 // pred_check
      _
    $region71: #{graphnn_forward.1} parent=1 // pred_check_branch
      %236 = sbr.rel (0) target = $region73
    $region72: #{graphnn_forward.1} parent=1 // pred_region
      %s238 = ssub.s32 32, 32
      %239 = vsyncadd [#allocation21], %s238
      %s241 = sshll.u32 [#allocation22], 4
      %s242 = int_to_ptr.vmem [resolvable:$true] %s241
      %244 = dma.hbm_to_vmem [thread:$0]  %s35, 32, %s242, [#allocation21]
    $region73: #{graphnn_forward.1} parent=1 // pred_fallthru
      _
    // Predicated region
    $region74: #{graphnn_forward.1} parent=1 // pred_check
      _
    $region75: #{graphnn_forward.1} parent=1 // pred_check_branch
      %246 = sbr.rel (0) target = $region77
    $region76: #{graphnn_forward.1} parent=1 // pred_region
      %s248 = ssub.s32 32, 32
      %249 = vsyncadd [#allocation24], %s248
      %s251 = sshll.u32 [#allocation23], 4
      %s252 = int_to_ptr.vmem [resolvable:$true] %s251
      %254 = dma.hbm_to_vmem [thread:$0]  %s37, 32, %s252, [#allocation24]
    $region77: #{graphnn_forward.1} parent=1 // pred_fallthru
      _
    // Predicated region
    $region78: #{graphnn_forward.1} parent=1 // pred_check
      _
    $region79: #{graphnn_forward.1} parent=1 // pred_check_branch
      %256 = sbr.rel (0) target = $region81
    $region80: #{graphnn_forward.1} parent=1 // pred_region
      %s258 = ssub.s32 4096, 4096
      %259 = vsyncadd [#allocation24], %s258
      %s260 = sshll.u32 [#allocation25], 4
      %s261 = int_to_ptr.vmem [resolvable:$true] %s260
      %266 = dma.hbm_to_vmem [thread:$0]  %s39, 4096, %s261, [#allocation24], 128, 128, 8
    $region81: #{graphnn_forward.1} parent=1 // pred_fallthru
      _
    // Predicated region
    $region82: #{graphnn_forward.1} parent=1 // pred_check
      _
    $region83: #{graphnn_forward.1} parent=1 // pred_check_branch
      %268 = sbr.rel (0) target = $region85
    $region84: #{graphnn_forward.1} parent=1 // pred_region
      %s270 = ssub.s32 16, 16
      %271 = vsyncadd [#allocation27], %s270
      %s273 = sshll.u32 [#allocation26], 4
      %s274 = int_to_ptr.vmem [resolvable:$true] %s273
      %276 = dma.hbm_to_vmem [thread:$0]  %s41, 16, %s274, [#allocation27]
    $region85: #{graphnn_forward.1} parent=1 // pred_fallthru
      _
    // Predicated region
    $region86: #{graphnn_forward.1} parent=1 // pred_check
      _
    $region87: #{graphnn_forward.1} parent=1 // pred_check_branch
      %278 = sbr.rel (0) target = $region89
    $region88: #{graphnn_forward.1} parent=1 // pred_region
      %s280 = ssub.s32 16, 16
      %281 = vsyncadd [#allocation27], %s280
      %s283 = sshll.u32 [#allocation28], 4
      %s284 = int_to_ptr.vmem [resolvable:$true] %s283
      %286 = dma.hbm_to_vmem [thread:$0]  %s43, 16, %s284, [#allocation27]
    $region89: #{graphnn_forward.1} parent=1 // pred_fallthru
      _
    // Predicated region
    $region90: #{graphnn_forward.1} parent=1 // pred_check
      _
    $region91: #{graphnn_forward.1} parent=1 // pred_check_branch
      %288 = sbr.rel (0) target = $region93
    $region92: #{graphnn_forward.1} parent=1 // pred_region
      %s290 = ssub.s32 16, 16
      %291 = vsyncadd [#allocation30], %s290
      %s293 = sshll.u32 [#allocation29], 4
      %s294 = int_to_ptr.vmem [resolvable:$true] %s293
      %296 = dma.hbm_to_vmem [thread:$0]  %s45, 16, %s294, [#allocation30]
    $region93: #{graphnn_forward.1} parent=1 // pred_fallthru
      _
    // Predicated region
    $region94: #{graphnn_forward.1} parent=1 // pred_check
      _
    $region95: #{graphnn_forward.1} parent=1 // pred_check_branch
      %298 = sbr.rel (0) target = $region97
    $region96: #{graphnn_forward.1} parent=1 // pred_region
      %s300 = ssub.s32 16, 16
      %301 = vsyncadd [#allocation30], %s300
      %s303 = sshll.u32 [#allocation31], 4
      %s304 = int_to_ptr.vmem [resolvable:$true] %s303
      %306 = dma.hbm_to_vmem [thread:$0]  %s47, 16, %s304, [#allocation30]
    $region97: #{graphnn_forward.1} parent=1 // pred_fallthru
      _
    // Predicated region
    $region98: #{graphnn_forward.1} parent=1 // pred_check
      _
    $region99: #{graphnn_forward.1} parent=1 // pred_check_branch
      %308 = sbr.rel (0) target = $region101
    $region100: #{graphnn_forward.1} parent=1 // pred_region
      _
    $region101: #{graphnn_forward.1} parent=1 // pred_fallthru
      _
    // Predicated region
    $region102: #{graphnn_forward.1} parent=1 // pred_check
      _
    $region103: #{graphnn_forward.1} parent=1 // pred_check_branch
      %310 = sbr.rel (0) target = $region105
    $region104: #{graphnn_forward.1} parent=1 // pred_region
      _
    $region105: #{graphnn_forward.1} parent=1 // pred_fallthru
      _
    // Predicated region
    $region106: #{graphnn_forward.1} parent=1 // pred_check
      _
    $region107: #{graphnn_forward.1} parent=1 // pred_check_branch
      %312 = sbr.rel (0) target = $region109
    $region108: #{graphnn_forward.1} parent=1 // pred_region
      %s314 = ssub.s32 16, 16
      %315 = vsyncadd [#allocation33], %s314
      %s317 = sshll.u32 [#allocation32], 4
      %s318 = int_to_ptr.vmem [resolvable:$true] %s317
      %320 = dma.hbm_to_vmem [thread:$0]  %s53, 16, %s318, [#allocation33]
    $region109: #{graphnn_forward.1} parent=1 // pred_fallthru
      _
    // Predicated region
    $region110: #{graphnn_forward.1} parent=1 // pred_check
      _
    $region111: #{graphnn_forward.1} parent=1 // pred_check_branch
      %322 = sbr.rel (0) target = $region113
    $region112: #{graphnn_forward.1} parent=1 // pred_region
      %s324 = ssub.s32 16, 16
      %325 = vsyncadd [#allocation33], %s324
      %s327 = sshll.u32 [#allocation34], 4
      %s328 = int_to_ptr.vmem [resolvable:$true] %s327
      %330 = dma.hbm_to_vmem [thread:$0]  %s55, 16, %s328, [#allocation33]
    $region113: #{graphnn_forward.1} parent=1 // pred_fallthru
      _
    // Predicated region
    $region114: #{graphnn_forward.1} parent=1 // pred_check
      _
    $region115: #{graphnn_forward.1} parent=1 // pred_check_branch
      %332 = sbr.rel (0) target = $region117
    $region116: #{graphnn_forward.1} parent=1 // pred_region
      %s334 = ssub.s32 16, 16
      %335 = vsyncadd [#allocation36], %s334
      %s337 = sshll.u32 [#allocation35], 4
      %s338 = int_to_ptr.vmem [resolvable:$true] %s337
      %340 = dma.hbm_to_vmem [thread:$0]  %s57, 16, %s338, [#allocation36]
    $region117: #{graphnn_forward.1} parent=1 // pred_fallthru
      _
    // Predicated region
    $region118: #{graphnn_forward.1} parent=1 // pred_check
      _
    $region119: #{graphnn_forward.1} parent=1 // pred_check_branch
      %342 = sbr.rel (0) target = $region121
    $region120: #{graphnn_forward.1} parent=1 // pred_region
      _
    $region121: #{graphnn_forward.1} parent=1 // pred_fallthru
      _
    // Predicated region
    $region122: #{graphnn_forward.1} parent=1 // pred_check
      _
    $region123: #{graphnn_forward.1} parent=1 // pred_check_branch
      %344 = sbr.rel (0) target = $region125
    $region124: #{graphnn_forward.1} parent=1 // pred_region
      %s346 = ssub.s32 32, 32
      %347 = vsyncadd [#allocation36], %s346
      %s349 = sshll.u32 [#allocation37], 4
      %s350 = int_to_ptr.vmem [resolvable:$true] %s349
      %352 = dma.hbm_to_vmem [thread:$0]  %s61, 32, %s350, [#allocation36]
    $region125: #{graphnn_forward.1} parent=1 // pred_fallthru
      _
    // Predicated region
    $region126: #{graphnn_forward.1} parent=1 // pred_check
      _
    $region127: #{graphnn_forward.1} parent=1 // pred_check_branch
      %354 = sbr.rel (0) target = $region129
    $region128: #{graphnn_forward.1} parent=1 // pred_region
      %s356 = ssub.s32 32, 32
      %357 = vsyncadd [#allocation39], %s356
      %s359 = sshll.u32 [#allocation38], 4
      %s360 = int_to_ptr.vmem [resolvable:$true] %s359
      %362 = dma.hbm_to_vmem [thread:$0]  %s63, 32, %s360, [#allocation39]
    $region129: #{graphnn_forward.1} parent=1 // pred_fallthru
      _
    // Predicated region
    $region130: #{graphnn_forward.1} parent=1 // pred_check
      _
    $region131: #{graphnn_forward.1} parent=1 // pred_check_branch
      %364 = sbr.rel (0) target = $region133
    $region132: #{graphnn_forward.1} parent=1 // pred_region
      %s366 = ssub.s32 32, 32
      %367 = vsyncadd [#allocation39], %s366
      %s369 = sshll.u32 [#allocation40], 4
      %s370 = int_to_ptr.vmem [resolvable:$true] %s369
      %372 = dma.hbm_to_vmem [thread:$0]  %s65, 32, %s370, [#allocation39]
    $region133: #{graphnn_forward.1} parent=1 // pred_fallthru
      _
    // Predicated region
    $region134: #{graphnn_forward.1} parent=1 // pred_check
      _
    $region135: #{graphnn_forward.1} parent=1 // pred_check_branch
      %374 = sbr.rel (0) target = $region137
    $region136: #{graphnn_forward.1} parent=1 // pred_region
      %s376 = ssub.s32 4096, 4096
      %377 = vsyncadd [#allocation42], %s376
      %s378 = sshll.u32 [#allocation41], 4
      %s379 = int_to_ptr.vmem [resolvable:$true] %s378
      %384 = dma.hbm_to_vmem [thread:$0]  %s67, 4096, %s379, [#allocation42], 128, 128, 8
    $region137: #{graphnn_forward.1} parent=1 // pred_fallthru
      _
    // Predicated region
    $region138: #{graphnn_forward.1} parent=1 // pred_check
      _
    $region139: #{graphnn_forward.1} parent=1 // pred_check_branch
      %386 = sbr.rel (0) target = $region141
    $region140: #{graphnn_forward.1} parent=1 // pred_region
      %s388 = ssub.s32 16, 16
      %389 = vsyncadd [#allocation42], %s388
      %s391 = sshll.u32 [#allocation43], 4
      %s392 = int_to_ptr.vmem [resolvable:$true] %s391
      %394 = dma.hbm_to_vmem [thread:$0]  %s69, 16, %s392, [#allocation42]
    $region141: #{graphnn_forward.1} parent=1 // pred_fallthru
      _
    // Predicated region
    $region142: #{graphnn_forward.1} parent=1 // pred_check
      _
    $region143: #{graphnn_forward.1} parent=1 // pred_check_branch
      %396 = sbr.rel (0) target = $region145
    $region144: #{graphnn_forward.1} parent=1 // pred_region
      %s398 = ssub.s32 16, 16
      %399 = vsyncadd [#allocation45], %s398
      %s401 = sshll.u32 [#allocation44], 4
      %s402 = int_to_ptr.vmem [resolvable:$true] %s401
      %404 = dma.hbm_to_vmem [thread:$0]  %s71, 16, %s402, [#allocation45]
    $region145: #{graphnn_forward.1} parent=1 // pred_fallthru
      _
    // Predicated region
    $region146: #{graphnn_forward.1} parent=1 // pred_check
      _
    $region147: #{graphnn_forward.1} parent=1 // pred_check_branch
      %406 = sbr.rel (0) target = $region149
    $region148: #{graphnn_forward.1} parent=1 // pred_region
      %s408 = ssub.s32 16, 16
      %409 = vsyncadd [#allocation45], %s408
      %s411 = sshll.u32 [#allocation46], 4
      %s412 = int_to_ptr.vmem [resolvable:$true] %s411
      %414 = dma.hbm_to_vmem [thread:$0]  %s73, 16, %s412, [#allocation45]
    $region149: #{graphnn_forward.1} parent=1 // pred_fallthru
      _
    // Predicated region
    $region150: #{graphnn_forward.1} parent=1 // pred_check
      _
    $region151: #{graphnn_forward.1} parent=1 // pred_check_branch
      %416 = sbr.rel (0) target = $region153
    $region152: #{graphnn_forward.1} parent=1 // pred_region
      _
    $region153: #{graphnn_forward.1} parent=1 // pred_fallthru
      _
    // Predicated region
    $region154: #{graphnn_forward.1} parent=1 // pred_check
      _
    $region155: #{graphnn_forward.1} parent=1 // pred_check_branch
      %418 = sbr.rel (0) target = $region157
    $region156: #{graphnn_forward.1} parent=1 // pred_region
      _
    $region157: #{graphnn_forward.1} parent=1 // pred_fallthru
      _
    // Predicated region
    $region158: #{graphnn_forward.1} parent=1 // pred_check
      _
    $region159: #{graphnn_forward.1} parent=1 // pred_check_branch
      %420 = sbr.rel (0) target = $region161
    $region160: #{graphnn_forward.1} parent=1 // pred_region
      %s422 = ssub.s32 4608, 4608
      %423 = vsyncadd [#allocation48], %s422
      %s424 = sshll.u32 [#allocation47], 4
      %s425 = int_to_ptr.vmem [resolvable:$true] %s424
      %430 = dma.hbm_to_vmem [thread:$0]  %s79, 4608, %s425, [#allocation48], 128, 128, 8
    $region161: #{graphnn_forward.1} parent=1 // pred_fallthru
      _
    // Predicated region
    $region162: #{graphnn_forward.1} parent=1 // pred_check
      _
    $region163: #{graphnn_forward.1} parent=1 // pred_check_branch
      %432 = sbr.rel (0) target = $region165
    $region164: #{graphnn_forward.1} parent=1 // pred_region
      %s434 = ssub.s32 16, 16
      %435 = vsyncadd [#allocation48], %s434
      %s437 = sshll.u32 [#allocation49], 4
      %s438 = int_to_ptr.vmem [resolvable:$true] %s437
      %440 = dma.hbm_to_vmem [thread:$0]  %s81, 16, %s438, [#allocation48]
    $region165: #{graphnn_forward.1} parent=1 // pred_fallthru
      _
    // Predicated region
    $region166: #{graphnn_forward.1} parent=1 // pred_check
      _
    $region167: #{graphnn_forward.1} parent=1 // pred_check_branch
      %442 = sbr.rel (0) target = $region169
    $region168: #{graphnn_forward.1} parent=1 // pred_region
      %s444 = ssub.s32 16, 16
      %445 = vsyncadd [#allocation51], %s444
      %s447 = sshll.u32 [#allocation50], 4
      %s448 = int_to_ptr.vmem [resolvable:$true] %s447
      %450 = dma.hbm_to_vmem [thread:$0]  %s83, 16, %s448, [#allocation51]
    $region169: #{graphnn_forward.1} parent=1 // pred_fallthru
      _
    // Predicated region
    $region170: #{graphnn_forward.1} parent=1 // pred_check
      _
    $region171: #{graphnn_forward.1} parent=1 // pred_check_branch
      %452 = sbr.rel (0) target = $region173
    $region172: #{graphnn_forward.1} parent=1 // pred_region
      %s454 = ssub.s32 16, 16
      %455 = vsyncadd [#allocation51], %s454
      %s457 = sshll.u32 [#allocation52], 4
      %s458 = int_to_ptr.vmem [resolvable:$true] %s457
      %460 = dma.hbm_to_vmem [thread:$0]  %s85, 16, %s458, [#allocation51]
    $region173: #{graphnn_forward.1} parent=1 // pred_fallthru
      _
    // Predicated region
    $region174: #{graphnn_forward.1} parent=1 // pred_check
      _
    $region175: #{graphnn_forward.1} parent=1 // pred_check_branch
      %462 = sbr.rel (0) target = $region177
    $region176: #{graphnn_forward.1} parent=1 // pred_region
      %463 = dma.done [#allocation6], 256
    $region177: #{graphnn_forward.1} parent=1 // pred_fallthru
      _
    // Predicated region
    $region178: #{graphnn_forward.1} parent=1 // pred_check
      _
    $region179: #{graphnn_forward.1} parent=1 // pred_check_branch
      %465 = sbr.rel (0) target = $region181
    $region180: #{graphnn_forward.1} parent=1 // pred_region
      %466 = dma.done [#allocation9], 4096
    $region181: #{graphnn_forward.1} parent=1 // pred_fallthru
      _
    // Predicated region
    $region182: #{graphnn_forward.1} parent=1 // pred_check
      _
    $region183: #{graphnn_forward.1} parent=1 // pred_check_branch
      %468 = sbr.rel (0) target = $region185
    $region184: #{graphnn_forward.1} parent=1 // pred_region
      %469 = dma.done [#allocation9], 16
    $region185: #{graphnn_forward.1} parent=1 // pred_fallthru
      _
    // Predicated region
    $region186: #{graphnn_forward.1} parent=1 // pred_check
      _
    $region187: #{graphnn_forward.1} parent=1 // pred_check_branch
      %471 = sbr.rel (0) target = $region189
    $region188: #{graphnn_forward.1} parent=1 // pred_region
      %472 = dma.done [#allocation12], 16
    $region189: #{graphnn_forward.1} parent=1 // pred_fallthru
      _
    // Predicated region
    $region190: #{graphnn_forward.1} parent=1 // pred_check
      _
    $region191: #{graphnn_forward.1} parent=1 // pred_check_branch
      %474 = sbr.rel (0) target = $region193
    $region192: #{graphnn_forward.1} parent=1 // pred_region
      %475 = dma.done [#allocation12], 16
    $region193: #{graphnn_forward.1} parent=1 // pred_fallthru
      _
    // Predicated region
    $region194: #{graphnn_forward.1} parent=1 // pred_check
      _
    $region195: #{graphnn_forward.1} parent=1 // pred_check_branch
      %477 = sbr.rel (0) target = $region197
    $region196: #{graphnn_forward.1} parent=1 // pred_region
      %478 = dma.done [#allocation15], 16
    $region197: #{graphnn_forward.1} parent=1 // pred_fallthru
      _
    // Predicated region
    $region198: #{graphnn_forward.1} parent=1 // pred_check
      _
    $region199: #{graphnn_forward.1} parent=1 // pred_check_branch
      %480 = sbr.rel (0) target = $region201
    $region200: #{graphnn_forward.1} parent=1 // pred_region
      %481 = dma.done [#allocation15], 16
    $region201: #{graphnn_forward.1} parent=1 // pred_fallthru
      _
    // Predicated region
    $region202: #{graphnn_forward.1} parent=1 // pred_check
      _
    $region203: #{graphnn_forward.1} parent=1 // pred_check_branch
      %483 = sbr.rel (0) target = $region205
    $region204: #{graphnn_forward.1} parent=1 // pred_region
      %484 = dma.done [#allocation18], 16
    $region205: #{graphnn_forward.1} parent=1 // pred_fallthru
      _
    // Predicated region
    $region206: #{graphnn_forward.1} parent=1 // pred_check
      _
    $region207: #{graphnn_forward.1} parent=1 // pred_check_branch
      %486 = sbr.rel (0) target = $region209
    $region208: #{graphnn_forward.1} parent=1 // pred_region
      %487 = dma.done [#allocation18], 2560
    $region209: #{graphnn_forward.1} parent=1 // pred_fallthru
      _
    // Predicated region
    $region210: #{graphnn_forward.1} parent=1 // pred_check
      _
    $region211: #{graphnn_forward.1} parent=1 // pred_check_branch
      %489 = sbr.rel (0) target = $region213
    $region212: #{graphnn_forward.1} parent=1 // pred_region
      %490 = dma.done [#allocation21], 32
    $region213: #{graphnn_forward.1} parent=1 // pred_fallthru
      _
    // Predicated region
    $region214: #{graphnn_forward.1} parent=1 // pred_check
      _
    $region215: #{graphnn_forward.1} parent=1 // pred_check_branch
      %492 = sbr.rel (0) target = $region217
    $region216: #{graphnn_forward.1} parent=1 // pred_region
      %493 = dma.done [#allocation21], 32
    $region217: #{graphnn_forward.1} parent=1 // pred_fallthru
      _
    // Predicated region
    $region218: #{graphnn_forward.1} parent=1 // pred_check
      _
    $region219: #{graphnn_forward.1} parent=1 // pred_check_branch
      %495 = sbr.rel (0) target = $region221
    $region220: #{graphnn_forward.1} parent=1 // pred_region
      %496 = dma.done [#allocation24], 32
    $region221: #{graphnn_forward.1} parent=1 // pred_fallthru
      _
    // Predicated region
    $region222: #{graphnn_forward.1} parent=1 // pred_check
      _
    $region223: #{graphnn_forward.1} parent=1 // pred_check_branch
      %498 = sbr.rel (0) target = $region225
    $region224: #{graphnn_forward.1} parent=1 // pred_region
      %499 = dma.done [#allocation24], 4096
    $region225: #{graphnn_forward.1} parent=1 // pred_fallthru
      _
    // Predicated region
    $region226: #{graphnn_forward.1} parent=1 // pred_check
      _
    $region227: #{graphnn_forward.1} parent=1 // pred_check_branch
      %501 = sbr.rel (0) target = $region229
    $region228: #{graphnn_forward.1} parent=1 // pred_region
      %502 = dma.done [#allocation27], 16
    $region229: #{graphnn_forward.1} parent=1 // pred_fallthru
      _
    // Predicated region
    $region230: #{graphnn_forward.1} parent=1 // pred_check
      _
    $region231: #{graphnn_forward.1} parent=1 // pred_check_branch
      %504 = sbr.rel (0) target = $region233
    $region232: #{graphnn_forward.1} parent=1 // pred_region
      %505 = dma.done [#allocation27], 16
    $region233: #{graphnn_forward.1} parent=1 // pred_fallthru
      _
    // Predicated region
    $region234: #{graphnn_forward.1} parent=1 // pred_check
      _
    $region235: #{graphnn_forward.1} parent=1 // pred_check_branch
      %507 = sbr.rel (0) target = $region237
    $region236: #{graphnn_forward.1} parent=1 // pred_region
      %508 = dma.done [#allocation30], 16
    $region237: #{graphnn_forward.1} parent=1 // pred_fallthru
      _
    // Predicated region
    $region238: #{graphnn_forward.1} parent=1 // pred_check
      _
    $region239: #{graphnn_forward.1} parent=1 // pred_check_branch
      %510 = sbr.rel (0) target = $region241
    $region240: #{graphnn_forward.1} parent=1 // pred_region
      %511 = dma.done [#allocation30], 16
    $region241: #{graphnn_forward.1} parent=1 // pred_fallthru
      _
    // Predicated region
    $region242: #{graphnn_forward.1} parent=1 // pred_check
      _
    $region243: #{graphnn_forward.1} parent=1 // pred_check_branch
      %513 = sbr.rel (0) target = $region245
    $region244: #{graphnn_forward.1} parent=1 // pred_region
      %514 = dma.done [#allocation33], 16
    $region245: #{graphnn_forward.1} parent=1 // pred_fallthru
      _
    // Predicated region
    $region246: #{graphnn_forward.1} parent=1 // pred_check
      _
    $region247: #{graphnn_forward.1} parent=1 // pred_check_branch
      %516 = sbr.rel (0) target = $region249
    $region248: #{graphnn_forward.1} parent=1 // pred_region
      %517 = dma.done [#allocation33], 16
    $region249: #{graphnn_forward.1} parent=1 // pred_fallthru
      _
    // Predicated region
    $region250: #{graphnn_forward.1} parent=1 // pred_check
      _
    $region251: #{graphnn_forward.1} parent=1 // pred_check_branch
      %519 = sbr.rel (0) target = $region253
    $region252: #{graphnn_forward.1} parent=1 // pred_region
      %520 = dma.done [#allocation36], 16
    $region253: #{graphnn_forward.1} parent=1 // pred_fallthru
      _
    // Predicated region
    $region254: #{graphnn_forward.1} parent=1 // pred_check
      _
    $region255: #{graphnn_forward.1} parent=1 // pred_check_branch
      %522 = sbr.rel (0) target = $region257
    $region256: #{graphnn_forward.1} parent=1 // pred_region
      %523 = dma.done [#allocation36], 32
    $region257: #{graphnn_forward.1} parent=1 // pred_fallthru
      _
    // Predicated region
    $region258: #{graphnn_forward.1} parent=1 // pred_check
      _
    $region259: #{graphnn_forward.1} parent=1 // pred_check_branch
      %525 = sbr.rel (0) target = $region261
    $region260: #{graphnn_forward.1} parent=1 // pred_region
      %526 = dma.done [#allocation39], 32
    $region261: #{graphnn_forward.1} parent=1 // pred_fallthru
      _
    // Predicated region
    $region262: #{graphnn_forward.1} parent=1 // pred_check
      _
    $region263: #{graphnn_forward.1} parent=1 // pred_check_branch
      %528 = sbr.rel (0) target = $region265
    $region264: #{graphnn_forward.1} parent=1 // pred_region
      %529 = dma.done [#allocation39], 32
    $region265: #{graphnn_forward.1} parent=1 // pred_fallthru
      _
    // Predicated region
    $region266: #{graphnn_forward.1} parent=1 // pred_check
      _
    $region267: #{graphnn_forward.1} parent=1 // pred_check_branch
      %531 = sbr.rel (0) target = $region269
    $region268: #{graphnn_forward.1} parent=1 // pred_region
      %532 = dma.done [#allocation42], 4096
    $region269: #{graphnn_forward.1} parent=1 // pred_fallthru
      _
    // Predicated region
    $region270: #{graphnn_forward.1} parent=1 // pred_check
      _
    $region271: #{graphnn_forward.1} parent=1 // pred_check_branch
      %534 = sbr.rel (0) target = $region273
    $region272: #{graphnn_forward.1} parent=1 // pred_region
      %535 = dma.done [#allocation42], 16
    $region273: #{graphnn_forward.1} parent=1 // pred_fallthru
      _
    // Predicated region
    $region274: #{graphnn_forward.1} parent=1 // pred_check
      _
    $region275: #{graphnn_forward.1} parent=1 // pred_check_branch
      %537 = sbr.rel (0) target = $region277
    $region276: #{graphnn_forward.1} parent=1 // pred_region
      %538 = dma.done [#allocation45], 16
    $region277: #{graphnn_forward.1} parent=1 // pred_fallthru
      _
    // Predicated region
    $region278: #{graphnn_forward.1} parent=1 // pred_check
      _
    $region279: #{graphnn_forward.1} parent=1 // pred_check_branch
      %540 = sbr.rel (0) target = $region281
    $region280: #{graphnn_forward.1} parent=1 // pred_region
      %541 = dma.done [#allocation45], 16
    $region281: #{graphnn_forward.1} parent=1 // pred_fallthru
      _
    // Predicated region
    $region282: #{graphnn_forward.1} parent=1 // pred_check
      _
    $region283: #{graphnn_forward.1} parent=1 // pred_check_branch
      %543 = sbr.rel (0) target = $region285
    $region284: #{graphnn_forward.1} parent=1 // pred_region
      %544 = dma.done [#allocation48], 4608
    $region285: #{graphnn_forward.1} parent=1 // pred_fallthru
      _
    // Predicated region
    $region286: #{graphnn_forward.1} parent=1 // pred_check
      _
    $region287: #{graphnn_forward.1} parent=1 // pred_check_branch
      %546 = sbr.rel (0) target = $region289
    $region288: #{graphnn_forward.1} parent=1 // pred_region
      %547 = dma.done [#allocation48], 16
    $region289: #{graphnn_forward.1} parent=1 // pred_fallthru
      _
    // Predicated region
    $region290: #{graphnn_forward.1} parent=1 // pred_check
      _
    $region291: #{graphnn_forward.1} parent=1 // pred_check_branch
      %549 = sbr.rel (0) target = $region293
    $region292: #{graphnn_forward.1} parent=1 // pred_region
      %550 = dma.done [#allocation51], 16
    $region293: #{graphnn_forward.1} parent=1 // pred_fallthru
      _
    // Predicated region
    $region294: #{graphnn_forward.1} parent=1 // pred_check
      _
    $region295: #{graphnn_forward.1} parent=1 // pred_check_branch
      %552 = sbr.rel (0) target = $region297
    $region296: #{graphnn_forward.1} parent=1 // pred_region
      %553 = dma.done [#allocation51], 16
    $region297: #{graphnn_forward.1} parent=1 // pred_fallthru
      _
    %v555 = vld [vmem:[#allocation5] sm:$0xff]
    %v556 = vld [vmem:[#allocation5 + $0x8] sm:$0xff]
    %v557 = vlaneseq
    %v558 = vshrl.u32 %v557, 7
    %v559 = vlaneseq
    %v560 = vand.u32 %v559, 127
    %vm561 = vcmp.eq.s32.totalorder %v558, %v560
    %v562 = vsel %vm561, -1e+08, 0.0
    %v563 = vld [vmem:[%s3] sm:$0xff]
    %v564 = vld [vmem:[%s3 + $0x8] sm:$0xff]
    %v565 = vld [vmem:[%s3 + $0x10] sm:$0xff]
    %v566 = vld [vmem:[%s3 + $0x18] sm:$0xff]
    %v567 = vld [vmem:[%s5] sm:$0x3]
    %v568 = vld [vmem:[%s7] sm:$0x3]
    %v569 = vld [vmem:[%s9] sm:$0x3]
    %v570 = vld [vmem:[#allocation8] sm:$0xff]
    %v571 = vld [vmem:[#allocation8 + $0x8] sm:$0xff]
    %v572 = vld [vmem:[#allocation8 + $0x10] sm:$0xff]
    %v573 = vld [vmem:[#allocation8 + $0x18] sm:$0xff]
    %v574 = vld [vmem:[#allocation8 + $0x20] sm:$0xff]
    %v575 = vld [vmem:[#allocation8 + $0x28] sm:$0xff]
    %v576 = vld [vmem:[#allocation8 + $0x30] sm:$0xff]
    %v577 = vld [vmem:[#allocation8 + $0x38] sm:$0xff]
    %v578 = vld [vmem:[#allocation8 + $0x40] sm:$0xff]
    %v579 = vld [vmem:[#allocation8 + $0x48] sm:$0xff]
    %v580 = vld [vmem:[#allocation8 + $0x50] sm:$0xff]
    %v581 = vld [vmem:[#allocation8 + $0x58] sm:$0xff]
    %v582 = vld [vmem:[#allocation8 + $0x60] sm:$0xff]
    %v583 = vld [vmem:[#allocation8 + $0x68] sm:$0xff]
    %v584 = vld [vmem:[#allocation8 + $0x70] sm:$0xff]
    %v585 = vld [vmem:[#allocation8 + $0x78] sm:$0xff]
    %v586 = vld [vmem:[#allocation8 + $0x80] sm:$0xff]
    %v587 = vld [vmem:[#allocation8 + $0x88] sm:$0xff]
    %v588 = vld [vmem:[#allocation8 + $0x90] sm:$0xff]
    %v589 = vld [vmem:[#allocation8 + $0x98] sm:$0xff]
    %v590 = vld [vmem:[#allocation8 + $0xa0] sm:$0xff]
    %v591 = vld [vmem:[#allocation8 + $0xa8] sm:$0xff]
    %v592 = vld [vmem:[#allocation8 + $0xb0] sm:$0xff]
    %v593 = vld [vmem:[#allocation8 + $0xb8] sm:$0xff]
    %v594 = vld [vmem:[#allocation8 + $0xc0] sm:$0xff]
    %v595 = vld [vmem:[#allocation8 + $0xc8] sm:$0xff]
    %v596 = vld [vmem:[#allocation8 + $0xd0] sm:$0xff]
    %v597 = vld [vmem:[#allocation8 + $0xd8] sm:$0xff]
    %v598 = vld [vmem:[#allocation8 + $0xe0] sm:$0xff]
    %v599 = vld [vmem:[#allocation8 + $0xe8] sm:$0xff]
    %v600 = vld [vmem:[#allocation8 + $0xf0] sm:$0xff]
    %v601 = vld [vmem:[#allocation8 + $0xf8] sm:$0xff]
    %v602 = vld [vmem:[%s13] sm:$0x1]
    %v603 = vld [vmem:[#allocation10] sm:$0x1]
    %v604 = vld [vmem:[#allocation11] sm:$0x1]
    %v605 = vld [vmem:[#allocation13] sm:$0x1]
    %v606 = vld [vmem:[#allocation2] sm:$0x1]
    %v607 = vld [vmem:[%s23] sm:$0xff]
    %v608 = vld [vmem:[%s23 + $0x8] sm:$0xff]
    %v609 = vld [vmem:[%s23 + $0x10] sm:$0xff]
    %v610 = vld [vmem:[%s23 + $0x18] sm:$0xff]
    %v611 = vld [vmem:[#allocation14] sm:$0x1]
    %v612 = vld [vmem:[#allocation16] sm:$0x1]
    %v613 = vld [vmem:[#allocation17] sm:$0x1]
    %v616 = vcombine.high %v555, %v555
    %v618 = vunpack.c.l.s4 1966171168
    %v619 = vunpack.c.0.s8 %v618
    %v620 = vlaneseq
    %v621 = vshrl.u32 %v620, 7
    %v622 = vsub.s32 %v619, %v621
    %v623 = vrot.slane %v555, %v622
    %v625 = vunpack.c.l.s4 1966171168
    %v626 = vunpack.c.0.s8 %v625
    %v627 = vlaneseq
    %v628 = vshrl.u32 %v627, 7
    %v629 = vsub.s32 %v626, %v628
    %v630 = vrot.slane %v616, %v629
    %v631 = vcombine.high %v623, %v623
    %v632 = vcombine.high %v630, %v630
    %v634 = vunpack.c.l.s4 1966171168
    %v635 = vunpack.c.0.s8 %v634
    %v636 = vlaneseq
    %v637 = vshrl.u32 %v636, 7
    %v638 = vsub.s32 %v635, %v637
    %v639 = vrot.slane %v623, %v638
    %v641 = vunpack.c.l.s4 1966171168
    %v642 = vunpack.c.0.s8 %v641
    %v643 = vlaneseq
    %v644 = vshrl.u32 %v643, 7
    %v645 = vsub.s32 %v642, %v644
    %v646 = vrot.slane %v630, %v645
    %v648 = vunpack.c.l.s4 1966171168
    %v649 = vunpack.c.0.s8 %v648
    %v650 = vlaneseq
    %v651 = vshrl.u32 %v650, 7
    %v652 = vsub.s32 %v649, %v651
    %v653 = vrot.slane %v631, %v652
    %v655 = vunpack.c.l.s4 1966171168
    %v656 = vunpack.c.0.s8 %v655
    %v657 = vlaneseq
    %v658 = vshrl.u32 %v657, 7
    %v659 = vsub.s32 %v656, %v658
    %v660 = vrot.slane %v632, %v659
    %v661 = vcombine.high %v639, %v639
    %v662 = vcombine.high %v646, %v646
    %v663 = vcombine.high %v653, %v653
    %v664 = vcombine.high %v660, %v660
    %v665 = vcombine.high %v556, %v556
    %v667 = vunpack.c.l.s4 1966171168
    %v668 = vunpack.c.0.s8 %v667
    %v669 = vlaneseq
    %v670 = vshrl.u32 %v669, 7
    %v671 = vsub.s32 %v668, %v670
    %v672 = vrot.slane %v556, %v671
    %v674 = vunpack.c.l.s4 1966171168
    %v675 = vunpack.c.0.s8 %v674
    %v676 = vlaneseq
    %v677 = vshrl.u32 %v676, 7
    %v678 = vsub.s32 %v675, %v677
    %v679 = vrot.slane %v665, %v678
    %v680 = vcombine.high %v672, %v672
    %v681 = vcombine.high %v679, %v679
    %v683 = vunpack.c.l.s4 1966171168
    %v684 = vunpack.c.0.s8 %v683
    %v685 = vlaneseq
    %v686 = vshrl.u32 %v685, 7
    %v687 = vsub.s32 %v684, %v686
    %v688 = vrot.slane %v672, %v687
    %v690 = vunpack.c.l.s4 1966171168
    %v691 = vunpack.c.0.s8 %v690
    %v692 = vlaneseq
    %v693 = vshrl.u32 %v692, 7
    %v694 = vsub.s32 %v691, %v693
    %v695 = vrot.slane %v679, %v694
    %v697 = vunpack.c.l.s4 1966171168
    %v698 = vunpack.c.0.s8 %v697
    %v699 = vlaneseq
    %v700 = vshrl.u32 %v699, 7
    %v701 = vsub.s32 %v698, %v700
    %v702 = vrot.slane %v680, %v701
    %v704 = vunpack.c.l.s4 1966171168
    %v705 = vunpack.c.0.s8 %v704
    %v706 = vlaneseq
    %v707 = vshrl.u32 %v706, 7
    %v708 = vsub.s32 %v705, %v707
    %v709 = vrot.slane %v681, %v708
    %v710 = vcombine.high %v688, %v688
    %v711 = vcombine.high %v695, %v695
    %v712 = vcombine.high %v702, %v702
    %v713 = vcombine.high %v709, %v709
    %v714 = vlaneseq
    %v715 = vshrl.u32 %v714, 7
    %v716 = vsub.s32 0, %v715
    %v717 = vrot.slane %v639, %v716
    %v718 = vlaneseq
    %v719 = vshrl.u32 %v718, 7
    %v720 = vsub.s32 0, %v719
    %v721 = vrot.slane %v653, %v720
    %v722 = vlaneseq
    %v723 = vshrl.u32 %v722, 7
    %v724 = vsub.s32 0, %v723
    %v725 = vrot.slane %v661, %v724
    %v726 = vlaneseq
    %v727 = vshrl.u32 %v726, 7
    %v728 = vsub.s32 0, %v727
    %v729 = vrot.slane %v663, %v728
    %v730 = vlaneseq
    %v731 = vshrl.u32 %v730, 7
    %v732 = vsub.s32 0, %v731
    %v733 = vrot.slane %v646, %v732
    %v734 = vlaneseq
    %v735 = vshrl.u32 %v734, 7
    %v736 = vsub.s32 0, %v735
    %v737 = vrot.slane %v660, %v736
    %v738 = vlaneseq
    %v739 = vshrl.u32 %v738, 7
    %v740 = vsub.s32 0, %v739
    %v741 = vrot.slane %v662, %v740
    %v742 = vlaneseq
    %v743 = vshrl.u32 %v742, 7
    %v744 = vsub.s32 0, %v743
    %v745 = vrot.slane %v664, %v744
    %v746 = vlaneseq
    %v747 = vshrl.u32 %v746, 7
    %v748 = vsub.s32 0, %v747
    %v749 = vrot.slane %v688, %v748
    %v750 = vlaneseq
    %v751 = vshrl.u32 %v750, 7
    %v752 = vsub.s32 0, %v751
    %v753 = vrot.slane %v702, %v752
    %v754 = vlaneseq
    %v755 = vshrl.u32 %v754, 7
    %v756 = vsub.s32 0, %v755
    %v757 = vrot.slane %v710, %v756
    %v758 = vlaneseq
    %v759 = vshrl.u32 %v758, 7
    %v760 = vsub.s32 0, %v759
    %v761 = vrot.slane %v712, %v760
    %v762 = vlaneseq
    %v763 = vshrl.u32 %v762, 7
    %v764 = vsub.s32 0, %v763
    %v765 = vrot.slane %v695, %v764
    %v766 = vlaneseq
    %v767 = vshrl.u32 %v766, 7
    %v768 = vsub.s32 0, %v767
    %v769 = vrot.slane %v709, %v768
    %v770 = vlaneseq
    %v771 = vshrl.u32 %v770, 7
    %v772 = vsub.s32 0, %v771
    %v773 = vrot.slane %v711, %v772
    %v774 = vlaneseq
    %v775 = vshrl.u32 %v774, 7
    %v776 = vsub.s32 0, %v775
    %v777 = vrot.slane %v713, %v776
    %v794 = vsub.f32 %v717, %v555
    %v795 = vsub.f32 %v721, %v555
    %v796 = vsub.f32 %v725, %v555
    %v797 = vsub.f32 %v729, %v555
    %v798 = vsub.f32 %v733, %v555
    %v799 = vsub.f32 %v737, %v555
    %v800 = vsub.f32 %v741, %v555
    %v801 = vsub.f32 %v745, %v555
    %v802 = vsub.f32 %v749, %v556
    %v803 = vsub.f32 %v753, %v556
    %v804 = vsub.f32 %v757, %v556
    %v805 = vsub.f32 %v761, %v556
    %v806 = vsub.f32 %v765, %v556
    %v807 = vsub.f32 %v769, %v556
    %v808 = vsub.f32 %v773, %v556
    %v809 = vsub.f32 %v777, %v556
    %v810 = vand.u32 2147483647, %v794
    %v811 = vand.u32 2147483647, %v795
    %v812 = vand.u32 2147483647, %v796
    %v813 = vand.u32 2147483647, %v797
    %v814 = vand.u32 2147483647, %v798
    %v815 = vand.u32 2147483647, %v799
    %v816 = vand.u32 2147483647, %v800
    %v817 = vand.u32 2147483647, %v801
    %v818 = vand.u32 2147483647, %v802
    %v819 = vand.u32 2147483647, %v803
    %v820 = vand.u32 2147483647, %v804
    %v821 = vand.u32 2147483647, %v805
    %v822 = vand.u32 2147483647, %v806
    %v823 = vand.u32 2147483647, %v807
    %v824 = vand.u32 2147483647, %v808
    %v825 = vand.u32 2147483647, %v809
    %v826 = vpack.c.bf16 %v811, %v810
    %v827 = vpack.c.bf16 %v813, %v812
    %v828 = vpack.c.bf16 %v815, %v814
    %v829 = vpack.c.bf16 %v817, %v816
    %v830 = vpack.c.bf16 %v819, %v818
    %v831 = vpack.c.bf16 %v821, %v820
    %v832 = vpack.c.bf16 %v823, %v822
    %v833 = vpack.c.bf16 %v825, %v824
    %v834 = vpack.c.bf16 %v565, %v563
    %v835 = vpack.c.bf16 %v566, %v564
    %v837 = vlaneseq
    %v838 = vshrl.u32 %v837, 7
    %v839 = vsub.s32 0, %v838
    %v840 = vrot.slane %v567, %v839
    %v841 = vlaneseq
    %v842 = vshrl.u32 %v841, 7
    %v843 = vsub.s32 1, %v842
    %v844 = vrot.slane %v567, %v843
    %vm847 = vcmask 130048
    %v849 = vsel %vm847, %v826, 0
    %v852 = vsel %vm847, %v827, 0
    %v855 = vsel %vm847, %v828, 0
    %v858 = vsel %vm847, %v829, 0
    %v861 = vsel %vm847, %v830, 0
    %v864 = vsel %vm847, %v831, 0
    %v867 = vsel %vm847, %v832, 0
    %v870 = vsel %vm847, %v833, 0
    %872 = vmatprep.subr.bf16.mxu0 0
    %873 = vmatpush1.bf16.msra.mxu0 0
    %874 = vmatprep.subr.bf16.mxu0 0
    %875 = vmatpush1.bf16.msra.mxu0 0
    %876 = vmatprep.subr.bf16.mxu0 0
    %877 = vmatpush1.bf16.msra.mxu0 0
    %878 = vmatprep.subr.bf16.mxu0 0
    %879 = vmatpush1.bf16.msra.mxu0 0
    %880 = vmatprep.subr.bf16.mxu0 0
    %881 = vmatpush1.bf16.msra.mxu0 0
    %882 = vmatprep.subr.bf16.mxu0 0
    %883 = vmatpush1.bf16.msra.mxu0 0
    %884 = vmatprep.subr.bf16.mxu0 0
    %885 = vmatpush1.bf16.msra.mxu0 0
    %886 = vmatprep.subr.bf16.mxu0 %v835
    %887 = vmatpush1.bf16.msra.mxu0 %v834
    %888 = vmatprep.subr.bf16.mxu0 0
    %889 = vmatpush2.bf16.msra.mxu0 0
    %890 = vmatprep.subr.bf16.mxu0 0
    %891 = vmatpush2.bf16.msra.mxu0 0
    %892 = vmatprep.subr.bf16.mxu0 0
    %893 = vmatpush2.bf16.msra.mxu0 0
    %894 = vmatprep.subr.bf16.mxu0 0
    %895 = vmatpush2.bf16.msra.mxu0 0
    %896 = vmatprep.subr.bf16.mxu0 0
    %897 = vmatpush2.bf16.msra.mxu0 0
    %898 = vmatprep.subr.bf16.mxu0 0
    %899 = vmatpush2.bf16.msra.mxu0 0
    %900 = vmatprep.subr.bf16.mxu0 0
    %901 = vmatpush2.bf16.msra.mxu0 0
    %902 = vmatprep.subr.bf16.mxu0 0
    %903 = vmatpush2.bf16.msra.mxu0 0
    %904 = vmatprep.mubr.bf16.mxu0 0
    %905 = vmatmul.mubr.bf16.gmra.mxu0 %v849
    %v906 = vpop.f32.mrf.mxu0
    %v907 = vadd.f32 %v840, %v906
    %v908 = vpop.f32.mrf.mxu0
    %v909 = vadd.f32 %v844, %v908
    %v910 = vpop.f32.mrf.mxu0
    %v911 = vadd.f32 %v840, %v910
    %v912 = vpop.f32.mrf.mxu0
    %v913 = vadd.f32 %v844, %v912
    %914 = vmatprep.mubr.bf16.mxu0 0
    %915 = vmatmul.mubr.bf16.gmra.mxu0 %v852
    %v916 = vpop.f32.mrf.mxu0
    %v917 = vadd.f32 %v840, %v916
    %v918 = vpop.f32.mrf.mxu0
    %v919 = vadd.f32 %v844, %v918
    %v920 = vpop.f32.mrf.mxu0
    %v921 = vadd.f32 %v840, %v920
    %v922 = vpop.f32.mrf.mxu0
    %v923 = vadd.f32 %v844, %v922
    %924 = vmatprep.mubr.bf16.mxu0 0
    %925 = vmatmul.mubr.bf16.gmra.mxu0 %v855
    %v926 = vpop.f32.mrf.mxu0
    %v927 = vadd.f32 %v840, %v926
    %v928 = vpop.f32.mrf.mxu0
    %v929 = vadd.f32 %v844, %v928
    %v930 = vpop.f32.mrf.mxu0
    %v931 = vadd.f32 %v840, %v930
    %v932 = vpop.f32.mrf.mxu0
    %v933 = vadd.f32 %v844, %v932
    %934 = vmatprep.mubr.bf16.mxu0 0
    %935 = vmatmul.mubr.bf16.gmra.mxu0 %v858
    %v936 = vpop.f32.mrf.mxu0
    %v937 = vadd.f32 %v840, %v936
    %v938 = vpop.f32.mrf.mxu0
    %v939 = vadd.f32 %v844, %v938
    %v940 = vpop.f32.mrf.mxu0
    %v941 = vadd.f32 %v840, %v940
    %v942 = vpop.f32.mrf.mxu0
    %v943 = vadd.f32 %v844, %v942
    %944 = vmatprep.mubr.bf16.mxu0 0
    %945 = vmatmul.mubr.bf16.gmra.mxu0 %v861
    %v946 = vpop.f32.mrf.mxu0
    %v947 = vadd.f32 %v840, %v946
    %v948 = vpop.f32.mrf.mxu0
    %v949 = vadd.f32 %v844, %v948
    %v950 = vpop.f32.mrf.mxu0
    %v951 = vadd.f32 %v840, %v950
    %v952 = vpop.f32.mrf.mxu0
    %v953 = vadd.f32 %v844, %v952
    %954 = vmatprep.mubr.bf16.mxu0 0
    %955 = vmatmul.mubr.bf16.gmra.mxu0 %v864
    %v956 = vpop.f32.mrf.mxu0
    %v957 = vadd.f32 %v840, %v956
    %v958 = vpop.f32.mrf.mxu0
    %v959 = vadd.f32 %v844, %v958
    %v960 = vpop.f32.mrf.mxu0
    %v961 = vadd.f32 %v840, %v960
    %v962 = vpop.f32.mrf.mxu0
    %v963 = vadd.f32 %v844, %v962
    %964 = vmatprep.mubr.bf16.mxu0 0
    %965 = vmatmul.mubr.bf16.gmra.mxu0 %v867
    %v966 = vpop.f32.mrf.mxu0
    %v967 = vadd.f32 %v840, %v966
    %v968 = vpop.f32.mrf.mxu0
    %v969 = vadd.f32 %v844, %v968
    %v970 = vpop.f32.mrf.mxu0
    %v971 = vadd.f32 %v840, %v970
    %v972 = vpop.f32.mrf.mxu0
    %v973 = vadd.f32 %v844, %v972
    %974 = vmatprep.mubr.bf16.mxu0 0
    %975 = vmatmul.mubr.bf16.gmra.mxu0 %v870
    %v976 = vpop.f32.mrf.mxu0
    %v977 = vadd.f32 %v840, %v976
    %v978 = vpop.f32.mrf.mxu0
    %v979 = vadd.f32 %v844, %v978
    %v980 = vpop.f32.mrf.mxu0
    %v981 = vadd.f32 %v840, %v980
    %v982 = vpop.f32.mrf.mxu0
    %v983 = vadd.f32 %v844, %v982
    %984 = vdwg.mxu0
    %v985 = vadd.f32 %v907, %v911
    %v986 = vadd.f32 %v985, %v917
    %v987 = vadd.f32 %v986, %v921
    %v988 = vadd.f32 %v987, %v927
    %v989 = vadd.f32 %v988, %v931
    %v990 = vadd.f32 %v989, %v937
    %v991 = vadd.f32 %v990, %v941
    %v992 = vadd.f32 %v991, %v947
    %v993 = vadd.f32 %v992, %v951
    %v994 = vadd.f32 %v993, %v957
    %v995 = vadd.f32 %v994, %v961
    %v996 = vadd.f32 %v995, %v967
    %v997 = vadd.f32 %v996, %v971
    %v998 = vadd.f32 %v997, %v977
    %v999 = vadd.f32 %v998, %v981
    %v1000 = vrot.slane %v999, 4
    %v1001 = vadd.f32 %v999, %v1000
    %v1002 = vrot.slane %v1001, 2
    %v1003 = vadd.f32 %v1001, %v1002
    %v1004 = vrot.slane %v1003, 1
    %v1005 = vadd.f32 %v1003, %v1004
    %v1006 = vadd.f32 %v909, %v913
    %v1007 = vadd.f32 %v1006, %v919
    %v1008 = vadd.f32 %v1007, %v923
    %v1009 = vadd.f32 %v1008, %v929
    %v1010 = vadd.f32 %v1009, %v933
    %v1011 = vadd.f32 %v1010, %v939
    %v1012 = vadd.f32 %v1011, %v943
    %v1013 = vadd.f32 %v1012, %v949
    %v1014 = vadd.f32 %v1013, %v953
    %v1015 = vadd.f32 %v1014, %v959
    %v1016 = vadd.f32 %v1015, %v963
    %v1017 = vadd.f32 %v1016, %v969
    %v1018 = vadd.f32 %v1017, %v973
    %v1019 = vadd.f32 %v1018, %v979
    %v1020 = vadd.f32 %v1019, %v983
    %v1021 = vrot.slane %v1020, 4
    %v1022 = vadd.f32 %v1020, %v1021
    %v1023 = vrot.slane %v1022, 2
    %v1024 = vadd.f32 %v1022, %v1023
    %v1025 = vrot.slane %v1024, 1
    %v1026 = vadd.f32 %v1024, %v1025
    %v1027 = vrcp.pop 128.0
    %v1028 = vmul.f32 %v1005, %v1027
    %v1029 = vmul.f32 %v1026, %v1027
    %v1030 = vmul.f32 %v907, %v907
    %v1031 = vmul.f32 %v909, %v909
    %v1032 = vmul.f32 %v911, %v911
    %v1033 = vmul.f32 %v913, %v913
    %v1034 = vmul.f32 %v917, %v917
    %v1035 = vmul.f32 %v919, %v919
    %v1036 = vmul.f32 %v921, %v921
    %v1037 = vmul.f32 %v923, %v923
    %v1038 = vmul.f32 %v927, %v927
    %v1039 = vmul.f32 %v929, %v929
    %v1040 = vmul.f32 %v931, %v931
    %v1041 = vmul.f32 %v933, %v933
    %v1042 = vmul.f32 %v937, %v937
    %v1043 = vmul.f32 %v939, %v939
    %v1044 = vmul.f32 %v941, %v941
    %v1045 = vmul.f32 %v943, %v943
    %v1046 = vmul.f32 %v947, %v947
    %v1047 = vmul.f32 %v949, %v949
    %v1048 = vmul.f32 %v951, %v951
    %v1049 = vmul.f32 %v953, %v953
    %v1050 = vmul.f32 %v957, %v957
    %v1051 = vmul.f32 %v959, %v959
    %v1052 = vmul.f32 %v961, %v961
    %v1053 = vmul.f32 %v963, %v963
    %v1054 = vmul.f32 %v967, %v967
    %v1055 = vmul.f32 %v969, %v969
    %v1056 = vmul.f32 %v971, %v971
    %v1057 = vmul.f32 %v973, %v973
    %v1058 = vmul.f32 %v977, %v977
    %v1059 = vmul.f32 %v979, %v979
    %v1060 = vmul.f32 %v981, %v981
    %v1061 = vmul.f32 %v983, %v983
    %v1062 = vadd.f32 %v1030, %v1032
    %v1063 = vadd.f32 %v1062, %v1034
    %v1064 = vadd.f32 %v1063, %v1036
    %v1065 = vadd.f32 %v1064, %v1038
    %v1066 = vadd.f32 %v1065, %v1040
    %v1067 = vadd.f32 %v1066, %v1042
    %v1068 = vadd.f32 %v1067, %v1044
    %v1069 = vadd.f32 %v1068, %v1046
    %v1070 = vadd.f32 %v1069, %v1048
    %v1071 = vadd.f32 %v1070, %v1050
    %v1072 = vadd.f32 %v1071, %v1052
    %v1073 = vadd.f32 %v1072, %v1054
    %v1074 = vadd.f32 %v1073, %v1056
    %v1075 = vadd.f32 %v1074, %v1058
    %v1076 = vadd.f32 %v1075, %v1060
    %v1077 = vrot.slane %v1076, 4
    %v1078 = vadd.f32 %v1076, %v1077
    %v1079 = vrot.slane %v1078, 2
    %v1080 = vadd.f32 %v1078, %v1079
    %v1081 = vrot.slane %v1080, 1
    %v1082 = vadd.f32 %v1080, %v1081
    %v1083 = vadd.f32 %v1031, %v1033
    %v1084 = vadd.f32 %v1083, %v1035
    %v1085 = vadd.f32 %v1084, %v1037
    %v1086 = vadd.f32 %v1085, %v1039
    %v1087 = vadd.f32 %v1086, %v1041
    %v1088 = vadd.f32 %v1087, %v1043
    %v1089 = vadd.f32 %v1088, %v1045
    %v1090 = vadd.f32 %v1089, %v1047
    %v1091 = vadd.f32 %v1090, %v1049
    %v1092 = vadd.f32 %v1091, %v1051
    %v1093 = vadd.f32 %v1092, %v1053
    %v1094 = vadd.f32 %v1093, %v1055
    %v1095 = vadd.f32 %v1094, %v1057
    %v1096 = vadd.f32 %v1095, %v1059
    %v1097 = vadd.f32 %v1096, %v1061
    %v1098 = vrot.slane %v1097, 4
    %v1099 = vadd.f32 %v1097, %v1098
    %v1100 = vrot.slane %v1099, 2
    %v1101 = vadd.f32 %v1099, %v1100
    %v1102 = vrot.slane %v1101, 1
    %v1103 = vadd.f32 %v1101, %v1102
    %v1104 = vmul.f32 %v1082, %v1027
    %v1105 = vmul.f32 %v1103, %v1027
    %v1106 = vmul.f32 %v1028, %v1028
    %v1107 = vmul.f32 %v1029, %v1029
    %v1108 = vsub.f32 %v1104, %v1106
    %v1109 = vsub.f32 %v1105, %v1107
    %v1110 = vmax.f32 %v1108, 0.0
    %v1111 = vmax.f32 %v1109, 0.0
    %v1112 = vsub.f32 %v907, %v1028
    %v1113 = vsub.f32 %v909, %v1029
    %v1114 = vsub.f32 %v911, %v1028
    %v1115 = vsub.f32 %v913, %v1029
    %v1116 = vsub.f32 %v917, %v1028
    %v1117 = vsub.f32 %v919, %v1029
    %v1118 = vsub.f32 %v921, %v1028
    %v1119 = vsub.f32 %v923, %v1029
    %v1120 = vsub.f32 %v927, %v1028
    %v1121 = vsub.f32 %v929, %v1029
    %v1122 = vsub.f32 %v931, %v1028
    %v1123 = vsub.f32 %v933, %v1029
    %v1124 = vsub.f32 %v937, %v1028
    %v1125 = vsub.f32 %v939, %v1029
    %v1126 = vsub.f32 %v941, %v1028
    %v1127 = vsub.f32 %v943, %v1029
    %v1128 = vsub.f32 %v947, %v1028
    %v1129 = vsub.f32 %v949, %v1029
    %v1130 = vsub.f32 %v951, %v1028
    %v1131 = vsub.f32 %v953, %v1029
    %v1132 = vsub.f32 %v957, %v1028
    %v1133 = vsub.f32 %v959, %v1029
    %v1134 = vsub.f32 %v961, %v1028
    %v1135 = vsub.f32 %v963, %v1029
    %v1136 = vsub.f32 %v967, %v1028
    %v1137 = vsub.f32 %v969, %v1029
    %v1138 = vsub.f32 %v971, %v1028
    %v1139 = vsub.f32 %v973, %v1029
    %v1140 = vsub.f32 %v977, %v1028
    %v1141 = vsub.f32 %v979, %v1029
    %v1142 = vsub.f32 %v981, %v1028
    %v1143 = vsub.f32 %v983, %v1029
    %v1144 = vadd.f32 %v1110, 1e-05
    %v1145 = vadd.f32 %v1111, 1e-05
    %v1146 = vrsqrt.pop %v1144
    %v1147 = vrsqrt.pop %v1145
    %v1148 = vmul.f32 %v1112, %v1146
    %v1149 = vmul.f32 %v1113, %v1147
    %v1150 = vmul.f32 %v1114, %v1146
    %v1151 = vmul.f32 %v1115, %v1147
    %v1152 = vmul.f32 %v1116, %v1146
    %v1153 = vmul.f32 %v1117, %v1147
    %v1154 = vmul.f32 %v1118, %v1146
    %v1155 = vmul.f32 %v1119, %v1147
    %v1156 = vmul.f32 %v1120, %v1146
    %v1157 = vmul.f32 %v1121, %v1147
    %v1158 = vmul.f32 %v1122, %v1146
    %v1159 = vmul.f32 %v1123, %v1147
    %v1160 = vmul.f32 %v1124, %v1146
    %v1161 = vmul.f32 %v1125, %v1147
    %v1162 = vmul.f32 %v1126, %v1146
    %v1163 = vmul.f32 %v1127, %v1147
    %v1164 = vmul.f32 %v1128, %v1146
    %v1165 = vmul.f32 %v1129, %v1147
    %v1166 = vmul.f32 %v1130, %v1146
    %v1167 = vmul.f32 %v1131, %v1147
    %v1168 = vmul.f32 %v1132, %v1146
    %v1169 = vmul.f32 %v1133, %v1147
    %v1170 = vmul.f32 %v1134, %v1146
    %v1171 = vmul.f32 %v1135, %v1147
    %v1172 = vmul.f32 %v1136, %v1146
    %v1173 = vmul.f32 %v1137, %v1147
    %v1174 = vmul.f32 %v1138, %v1146
    %v1175 = vmul.f32 %v1139, %v1147
    %v1176 = vmul.f32 %v1140, %v1146
    %v1177 = vmul.f32 %v1141, %v1147
    %v1178 = vmul.f32 %v1142, %v1146
    %v1179 = vmul.f32 %v1143, %v1147
    %v1181 = vlaneseq
    %v1182 = vshrl.u32 %v1181, 7
    %v1183 = vsub.s32 0, %v1182
    %v1184 = vrot.slane %v568, %v1183
    %v1185 = vlaneseq
    %v1186 = vshrl.u32 %v1185, 7
    %v1187 = vsub.s32 1, %v1186
    %v1188 = vrot.slane %v568, %v1187
    %v1191 = vmul.f32 %v1148, %v1184
    %v1192 = vmul.f32 %v1149, %v1188
    %v1193 = vmul.f32 %v1150, %v1184
    %v1194 = vmul.f32 %v1151, %v1188
    %v1195 = vmul.f32 %v1152, %v1184
    %v1196 = vmul.f32 %v1153, %v1188
    %v1197 = vmul.f32 %v1154, %v1184
    %v1198 = vmul.f32 %v1155, %v1188
    %v1199 = vmul.f32 %v1156, %v1184
    %v1200 = vmul.f32 %v1157, %v1188
    %v1201 = vmul.f32 %v1158, %v1184
    %v1202 = vmul.f32 %v1159, %v1188
    %v1203 = vmul.f32 %v1160, %v1184
    %v1204 = vmul.f32 %v1161, %v1188
    %v1205 = vmul.f32 %v1162, %v1184
    %v1206 = vmul.f32 %v1163, %v1188
    %v1207 = vmul.f32 %v1164, %v1184
    %v1208 = vmul.f32 %v1165, %v1188
    %v1209 = vmul.f32 %v1166, %v1184
    %v1210 = vmul.f32 %v1167, %v1188
    %v1211 = vmul.f32 %v1168, %v1184
    %v1212 = vmul.f32 %v1169, %v1188
    %v1213 = vmul.f32 %v1170, %v1184
    %v1214 = vmul.f32 %v1171, %v1188
    %v1215 = vmul.f32 %v1172, %v1184
    %v1216 = vmul.f32 %v1173, %v1188
    %v1217 = vmul.f32 %v1174, %v1184
    %v1218 = vmul.f32 %v1175, %v1188
    %v1219 = vmul.f32 %v1176, %v1184
    %v1220 = vmul.f32 %v1177, %v1188
    %v1221 = vmul.f32 %v1178, %v1184
    %v1222 = vmul.f32 %v1179, %v1188
    %v1224 = vlaneseq
    %v1225 = vshrl.u32 %v1224, 7
    %v1226 = vsub.s32 0, %v1225
    %v1227 = vrot.slane %v569, %v1226
    %v1228 = vlaneseq
    %v1229 = vshrl.u32 %v1228, 7
    %v1230 = vsub.s32 1, %v1229
    %v1231 = vrot.slane %v569, %v1230
    %v1234 = vadd.f32 %v1191, %v1227
    %v1235 = vadd.f32 %v1192, %v1231
    %v1236 = vadd.f32 %v1193, %v1227
    %v1237 = vadd.f32 %v1194, %v1231
    %v1238 = vadd.f32 %v1195, %v1227
    %v1239 = vadd.f32 %v1196, %v1231
    %v1240 = vadd.f32 %v1197, %v1227
    %v1241 = vadd.f32 %v1198, %v1231
    %v1242 = vadd.f32 %v1199, %v1227
    %v1243 = vadd.f32 %v1200, %v1231
    %v1244 = vadd.f32 %v1201, %v1227
    %v1245 = vadd.f32 %v1202, %v1231
    %v1246 = vadd.f32 %v1203, %v1227
    %v1247 = vadd.f32 %v1204, %v1231
    %v1248 = vadd.f32 %v1205, %v1227
    %v1249 = vadd.f32 %v1206, %v1231
    %v1250 = vadd.f32 %v1207, %v1227
    %v1251 = vadd.f32 %v1208, %v1231
    %v1252 = vadd.f32 %v1209, %v1227
    %v1253 = vadd.f32 %v1210, %v1231
    %v1254 = vadd.f32 %v1211, %v1227
    %v1255 = vadd.f32 %v1212, %v1231
    %v1256 = vadd.f32 %v1213, %v1227
    %v1257 = vadd.f32 %v1214, %v1231
    %v1258 = vadd.f32 %v1215, %v1227
    %v1259 = vadd.f32 %v1216, %v1231
    %v1260 = vadd.f32 %v1217, %v1227
    %v1261 = vadd.f32 %v1218, %v1231
    %v1262 = vadd.f32 %v1219, %v1227
    %v1263 = vadd.f32 %v1220, %v1231
    %v1264 = vadd.f32 %v1221, %v1227
    %v1265 = vadd.f32 %v1222, %v1231
    %vm1266 = vcmp.ge.f32.partialorder %v1234, 0.0
    %vm1267 = vcmp.ge.f32.partialorder %v1235, 0.0
    %vm1268 = vcmp.ge.f32.partialorder %v1236, 0.0
    %vm1269 = vcmp.ge.f32.partialorder %v1237, 0.0
    %vm1270 = vcmp.ge.f32.partialorder %v1238, 0.0
    %vm1271 = vcmp.ge.f32.partialorder %v1239, 0.0
    %vm1272 = vcmp.ge.f32.partialorder %v1240, 0.0
    %vm1273 = vcmp.ge.f32.partialorder %v1241, 0.0
    %vm1274 = vcmp.ge.f32.partialorder %v1242, 0.0
    %vm1275 = vcmp.ge.f32.partialorder %v1243, 0.0
    %vm1276 = vcmp.ge.f32.partialorder %v1244, 0.0
    %vm1277 = vcmp.ge.f32.partialorder %v1245, 0.0
    %vm1278 = vcmp.ge.f32.partialorder %v1246, 0.0
    %vm1279 = vcmp.ge.f32.partialorder %v1247, 0.0
    %vm1280 = vcmp.ge.f32.partialorder %v1248, 0.0
    %vm1281 = vcmp.ge.f32.partialorder %v1249, 0.0
    %vm1282 = vcmp.ge.f32.partialorder %v1250, 0.0
    %vm1283 = vcmp.ge.f32.partialorder %v1251, 0.0
    %vm1284 = vcmp.ge.f32.partialorder %v1252, 0.0
    %vm1285 = vcmp.ge.f32.partialorder %v1253, 0.0
    %vm1286 = vcmp.ge.f32.partialorder %v1254, 0.0
    %vm1287 = vcmp.ge.f32.partialorder %v1255, 0.0
    %vm1288 = vcmp.ge.f32.partialorder %v1256, 0.0
    %vm1289 = vcmp.ge.f32.partialorder %v1257, 0.0
    %vm1290 = vcmp.ge.f32.partialorder %v1258, 0.0
    %vm1291 = vcmp.ge.f32.partialorder %v1259, 0.0
    %vm1292 = vcmp.ge.f32.partialorder %v1260, 0.0
    %vm1293 = vcmp.ge.f32.partialorder %v1261, 0.0
    %vm1294 = vcmp.ge.f32.partialorder %v1262, 0.0
    %vm1295 = vcmp.ge.f32.partialorder %v1263, 0.0
    %vm1296 = vcmp.ge.f32.partialorder %v1264, 0.0
    %vm1297 = vcmp.ge.f32.partialorder %v1265, 0.0
    %v1298 = vmul.f32 %v1234, 0.01
    %v1299 = vmul.f32 %v1235, 0.01
    %v1300 = vmul.f32 %v1236, 0.01
    %v1301 = vmul.f32 %v1237, 0.01
    %v1302 = vmul.f32 %v1238, 0.01
    %v1303 = vmul.f32 %v1239, 0.01
    %v1304 = vmul.f32 %v1240, 0.01
    %v1305 = vmul.f32 %v1241, 0.01
    %v1306 = vmul.f32 %v1242, 0.01
    %v1307 = vmul.f32 %v1243, 0.01
    %v1308 = vmul.f32 %v1244, 0.01
    %v1309 = vmul.f32 %v1245, 0.01
    %v1310 = vmul.f32 %v1246, 0.01
    %v1311 = vmul.f32 %v1247, 0.01
    %v1312 = vmul.f32 %v1248, 0.01
    %v1313 = vmul.f32 %v1249, 0.01
    %v1314 = vmul.f32 %v1250, 0.01
    %v1315 = vmul.f32 %v1251, 0.01
    %v1316 = vmul.f32 %v1252, 0.01
    %v1317 = vmul.f32 %v1253, 0.01
    %v1318 = vmul.f32 %v1254, 0.01
    %v1319 = vmul.f32 %v1255, 0.01
    %v1320 = vmul.f32 %v1256, 0.01
    %v1321 = vmul.f32 %v1257, 0.01
    %v1322 = vmul.f32 %v1258, 0.01
    %v1323 = vmul.f32 %v1259, 0.01
    %v1324 = vmul.f32 %v1260, 0.01
    %v1325 = vmul.f32 %v1261, 0.01
    %v1326 = vmul.f32 %v1262, 0.01
    %v1327 = vmul.f32 %v1263, 0.01
    %v1328 = vmul.f32 %v1264, 0.01
    %v1329 = vmul.f32 %v1265, 0.01
    %v1330 = vsel %vm1266, %v1234, %v1298
    %v1331 = vsel %vm1267, %v1235, %v1299
    %v1332 = vsel %vm1268, %v1236, %v1300
    %v1333 = vsel %vm1269, %v1237, %v1301
    %v1334 = vsel %vm1270, %v1238, %v1302
    %v1335 = vsel %vm1271, %v1239, %v1303
    %v1336 = vsel %vm1272, %v1240, %v1304
    %v1337 = vsel %vm1273, %v1241, %v1305
    %v1338 = vsel %vm1274, %v1242, %v1306
    %v1339 = vsel %vm1275, %v1243, %v1307
    %v1340 = vsel %vm1276, %v1244, %v1308
    %v1341 = vsel %vm1277, %v1245, %v1309
    %v1342 = vsel %vm1278, %v1246, %v1310
    %v1343 = vsel %vm1279, %v1247, %v1311
    %v1344 = vsel %vm1280, %v1248, %v1312
    %v1345 = vsel %vm1281, %v1249, %v1313
    %v1346 = vsel %vm1282, %v1250, %v1314
    %v1347 = vsel %vm1283, %v1251, %v1315
    %v1348 = vsel %vm1284, %v1252, %v1316
    %v1349 = vsel %vm1285, %v1253, %v1317
    %v1350 = vsel %vm1286, %v1254, %v1318
    %v1351 = vsel %vm1287, %v1255, %v1319
    %v1352 = vsel %vm1288, %v1256, %v1320
    %v1353 = vsel %vm1289, %v1257, %v1321
    %v1354 = vsel %vm1290, %v1258, %v1322
    %v1355 = vsel %vm1291, %v1259, %v1323
    %v1356 = vsel %vm1292, %v1260, %v1324
    %v1357 = vsel %vm1293, %v1261, %v1325
    %v1358 = vsel %vm1294, %v1262, %v1326
    %v1359 = vsel %vm1295, %v1263, %v1327
    %v1360 = vsel %vm1296, %v1264, %v1328
    %v1361 = vsel %vm1297, %v1265, %v1329
    %v1362 = vpack.c.bf16 %v1332, %v1330
    %v1363 = vpack.c.bf16 %v1333, %v1331
    %v1364 = vpack.c.bf16 %v1336, %v1334
    %v1365 = vpack.c.bf16 %v1337, %v1335
    %v1366 = vpack.c.bf16 %v1340, %v1338
    %v1367 = vpack.c.bf16 %v1341, %v1339
    %v1368 = vpack.c.bf16 %v1344, %v1342
    %v1369 = vpack.c.bf16 %v1345, %v1343
    %v1370 = vpack.c.bf16 %v1348, %v1346
    %v1371 = vpack.c.bf16 %v1349, %v1347
    %v1372 = vpack.c.bf16 %v1352, %v1350
    %v1373 = vpack.c.bf16 %v1353, %v1351
    %v1374 = vpack.c.bf16 %v1356, %v1354
    %v1375 = vpack.c.bf16 %v1357, %v1355
    %v1376 = vpack.c.bf16 %v1360, %v1358
    %v1377 = vpack.c.bf16 %v1361, %v1359
    %v1378 = vpack.c.bf16 %v571, %v570
    %v1379 = vpack.c.bf16 %v573, %v572
    %v1380 = vpack.c.bf16 %v575, %v574
    %v1381 = vpack.c.bf16 %v577, %v576
    %v1382 = vpack.c.bf16 %v579, %v578
    %v1383 = vpack.c.bf16 %v581, %v580
    %v1384 = vpack.c.bf16 %v583, %v582
    %v1385 = vpack.c.bf16 %v585, %v584
    %v1386 = vpack.c.bf16 %v587, %v586
    %v1387 = vpack.c.bf16 %v589, %v588
    %v1388 = vpack.c.bf16 %v591, %v590
    %v1389 = vpack.c.bf16 %v593, %v592
    %v1390 = vpack.c.bf16 %v595, %v594
    %v1391 = vpack.c.bf16 %v597, %v596
    %v1392 = vpack.c.bf16 %v599, %v598
    %v1393 = vpack.c.bf16 %v601, %v600
    %v1395 = vlaneseq
    %v1396 = vshrl.u32 %v1395, 7
    %v1397 = vsub.s32 0, %v1396
    %v1398 = vrot.slane %v602, %v1397
    %1400 = vmatprep.subr.bf16.mxu0 0
    %1401 = vmatpush1.bf16.msra.mxu0 %v1385
    %1402 = vmatprep.subr.bf16.mxu0 0
    %1403 = vmatpush1.bf16.msra.mxu0 %v1384
    %1404 = vmatprep.subr.bf16.mxu0 0
    %1405 = vmatpush1.bf16.msra.mxu0 %v1383
    %1406 = vmatprep.subr.bf16.mxu0 0
    %1407 = vmatpush1.bf16.msra.mxu0 %v1382
    %1408 = vmatprep.subr.bf16.mxu0 0
    %1409 = vmatpush1.bf16.msra.mxu0 %v1381
    %1410 = vmatprep.subr.bf16.mxu0 0
    %1411 = vmatpush1.bf16.msra.mxu0 %v1380
    %1412 = vmatprep.subr.bf16.mxu0 0
    %1413 = vmatpush1.bf16.msra.mxu0 %v1379
    %1414 = vmatprep.subr.bf16.mxu0 0
    %1415 = vmatpush1.bf16.msra.mxu0 %v1378
    %1416 = vmatprep.subr.bf16.mxu0 0
    %1417 = vmatpush2.bf16.msra.mxu0 %v1393
    %1418 = vmatprep.subr.bf16.mxu0 0
    %1419 = vmatpush2.bf16.msra.mxu0 %v1392
    %1420 = vmatprep.subr.bf16.mxu0 0
    %1421 = vmatpush2.bf16.msra.mxu0 %v1391
    %1422 = vmatprep.subr.bf16.mxu0 0
    %1423 = vmatpush2.bf16.msra.mxu0 %v1390
    %1424 = vmatprep.subr.bf16.mxu0 0
    %1425 = vmatpush2.bf16.msra.mxu0 %v1389
    %1426 = vmatprep.subr.bf16.mxu0 0
    %1427 = vmatpush2.bf16.msra.mxu0 %v1388
    %1428 = vmatprep.subr.bf16.mxu0 0
    %1429 = vmatpush2.bf16.msra.mxu0 %v1387
    %1430 = vmatprep.subr.bf16.mxu0 0
    %1431 = vmatpush2.bf16.msra.mxu0 %v1386
    %1432 = vmatprep.mubr.bf16.mxu0 %v1363
    %1433 = vmatmul.mubr.bf16.gmra.mxu0 %v1362
    %v1434 = vpop.f32.mrf.mxu0
    %v1435 = vadd.f32 %v1398, %v1434
    %v1436 = vpop.f32.mrf.mxu0
    %v1437 = vpop.f32.mrf.mxu0
    %v1438 = vadd.f32 %v1398, %v1437
    %v1439 = vpop.f32.mrf.mxu0
    %1440 = vmatprep.mubr.bf16.mxu0 %v1365
    %1441 = vmatmul.mubr.bf16.gmra.mxu0 %v1364
    %v1442 = vpop.f32.mrf.mxu0
    %v1443 = vadd.f32 %v1398, %v1442
    %v1444 = vpop.f32.mrf.mxu0
    %v1445 = vpop.f32.mrf.mxu0
    %v1446 = vadd.f32 %v1398, %v1445
    %v1447 = vpop.f32.mrf.mxu0
    %1448 = vmatprep.mubr.bf16.mxu0 %v1367
    %1449 = vmatmul.mubr.bf16.gmra.mxu0 %v1366
    %v1450 = vpop.f32.mrf.mxu0
    %v1451 = vadd.f32 %v1398, %v1450
    %v1452 = vpop.f32.mrf.mxu0
    %v1453 = vpop.f32.mrf.mxu0
    %v1454 = vadd.f32 %v1398, %v1453
    %v1455 = vpop.f32.mrf.mxu0
    %1456 = vmatprep.mubr.bf16.mxu0 %v1369
    %1457 = vmatmul.mubr.bf16.gmra.mxu0 %v1368
    %v1458 = vpop.f32.mrf.mxu0
    %v1459 = vadd.f32 %v1398, %v1458
    %v1460 = vpop.f32.mrf.mxu0
    %v1461 = vpop.f32.mrf.mxu0
    %v1462 = vadd.f32 %v1398, %v1461
    %v1463 = vpop.f32.mrf.mxu0
    %1464 = vmatprep.mubr.bf16.mxu0 %v1371
    %1465 = vmatmul.mubr.bf16.gmra.mxu0 %v1370
    %v1466 = vpop.f32.mrf.mxu0
    %v1467 = vadd.f32 %v1398, %v1466
    %v1468 = vpop.f32.mrf.mxu0
    %v1469 = vpop.f32.mrf.mxu0
    %v1470 = vadd.f32 %v1398, %v1469
    %v1471 = vpop.f32.mrf.mxu0
    %1472 = vmatprep.mubr.bf16.mxu0 %v1373
    %1473 = vmatmul.mubr.bf16.gmra.mxu0 %v1372
    %v1474 = vpop.f32.mrf.mxu0
    %v1475 = vadd.f32 %v1398, %v1474
    %v1476 = vpop.f32.mrf.mxu0
    %v1477 = vpop.f32.mrf.mxu0
    %v1478 = vadd.f32 %v1398, %v1477
    %v1479 = vpop.f32.mrf.mxu0
    %1480 = vmatprep.mubr.bf16.mxu0 %v1375
    %1481 = vmatmul.mubr.bf16.gmra.mxu0 %v1374
    %v1482 = vpop.f32.mrf.mxu0
    %v1483 = vadd.f32 %v1398, %v1482
    %v1484 = vpop.f32.mrf.mxu0
    %v1485 = vpop.f32.mrf.mxu0
    %v1486 = vadd.f32 %v1398, %v1485
    %v1487 = vpop.f32.mrf.mxu0
    %1488 = vmatprep.mubr.bf16.mxu0 %v1377
    %1489 = vmatmul.mubr.bf16.gmra.mxu0 %v1376
    %v1490 = vpop.f32.mrf.mxu0
    %v1491 = vadd.f32 %v1398, %v1490
    %v1492 = vpop.f32.mrf.mxu0
    %v1493 = vpop.f32.mrf.mxu0
    %v1494 = vadd.f32 %v1398, %v1493
    %v1495 = vpop.f32.mrf.mxu0
    %1496 = vdwg.mxu0
    %v1497 = vadd.f32 %v1435, %v1438
    %v1498 = vadd.f32 %v1497, %v1443
    %v1499 = vadd.f32 %v1498, %v1446
    %v1500 = vadd.f32 %v1499, %v1451
    %v1501 = vadd.f32 %v1500, %v1454
    %v1502 = vadd.f32 %v1501, %v1459
    %v1503 = vadd.f32 %v1502, %v1462
    %v1504 = vadd.f32 %v1503, %v1467
    %v1505 = vadd.f32 %v1504, %v1470
    %v1506 = vadd.f32 %v1505, %v1475
    %v1507 = vadd.f32 %v1506, %v1478
    %v1508 = vadd.f32 %v1507, %v1483
    %v1509 = vadd.f32 %v1508, %v1486
    %v1510 = vadd.f32 %v1509, %v1491
    %v1511 = vadd.f32 %v1510, %v1494
    %v1512 = vrot.slane %v1511, 4
    %v1513 = vadd.f32 %v1511, %v1512
    %v1514 = vrot.slane %v1513, 2
    %v1515 = vadd.f32 %v1513, %v1514
    %v1516 = vrot.slane %v1515, 1
    %v1517 = vadd.f32 %v1515, %v1516
    %v1518 = vmul.f32 %v1517, %v1027
    %v1519 = vmul.f32 %v1435, %v1435
    %v1520 = vmul.f32 %v1438, %v1438
    %v1521 = vmul.f32 %v1443, %v1443
    %v1522 = vmul.f32 %v1446, %v1446
    %v1523 = vmul.f32 %v1451, %v1451
    %v1524 = vmul.f32 %v1454, %v1454
    %v1525 = vmul.f32 %v1459, %v1459
    %v1526 = vmul.f32 %v1462, %v1462
    %v1527 = vmul.f32 %v1467, %v1467
    %v1528 = vmul.f32 %v1470, %v1470
    %v1529 = vmul.f32 %v1475, %v1475
    %v1530 = vmul.f32 %v1478, %v1478
    %v1531 = vmul.f32 %v1483, %v1483
    %v1532 = vmul.f32 %v1486, %v1486
    %v1533 = vmul.f32 %v1491, %v1491
    %v1534 = vmul.f32 %v1494, %v1494
    %v1535 = vadd.f32 %v1519, %v1520
    %v1536 = vadd.f32 %v1535, %v1521
    %v1537 = vadd.f32 %v1536, %v1522
    %v1538 = vadd.f32 %v1537, %v1523
    %v1539 = vadd.f32 %v1538, %v1524
    %v1540 = vadd.f32 %v1539, %v1525
    %v1541 = vadd.f32 %v1540, %v1526
    %v1542 = vadd.f32 %v1541, %v1527
    %v1543 = vadd.f32 %v1542, %v1528
    %v1544 = vadd.f32 %v1543, %v1529
    %v1545 = vadd.f32 %v1544, %v1530
    %v1546 = vadd.f32 %v1545, %v1531
    %v1547 = vadd.f32 %v1546, %v1532
    %v1548 = vadd.f32 %v1547, %v1533
    %v1549 = vadd.f32 %v1548, %v1534
    %v1550 = vrot.slane %v1549, 4
    %v1551 = vadd.f32 %v1549, %v1550
    %v1552 = vrot.slane %v1551, 2
    %v1553 = vadd.f32 %v1551, %v1552
    %v1554 = vrot.slane %v1553, 1
    %v1555 = vadd.f32 %v1553, %v1554
    %v1556 = vmul.f32 %v1555, %v1027
    %v1557 = vmul.f32 %v1518, %v1518
    %v1558 = vsub.f32 %v1556, %v1557
    %v1559 = vmax.f32 %v1558, 0.0
    %v1560 = vsub.f32 %v1435, %v1518
    %v1561 = vsub.f32 %v1438, %v1518
    %v1562 = vsub.f32 %v1443, %v1518
    %v1563 = vsub.f32 %v1446, %v1518
    %v1564 = vsub.f32 %v1451, %v1518
    %v1565 = vsub.f32 %v1454, %v1518
    %v1566 = vsub.f32 %v1459, %v1518
    %v1567 = vsub.f32 %v1462, %v1518
    %v1568 = vsub.f32 %v1467, %v1518
    %v1569 = vsub.f32 %v1470, %v1518
    %v1570 = vsub.f32 %v1475, %v1518
    %v1571 = vsub.f32 %v1478, %v1518
    %v1572 = vsub.f32 %v1483, %v1518
    %v1573 = vsub.f32 %v1486, %v1518
    %v1574 = vsub.f32 %v1491, %v1518
    %v1575 = vsub.f32 %v1494, %v1518
    %v1576 = vadd.f32 %v1559, 1e-05
    %v1577 = vrsqrt.pop %v1576
    %v1578 = vmul.f32 %v1560, %v1577
    %v1579 = vmul.f32 %v1561, %v1577
    %v1580 = vmul.f32 %v1562, %v1577
    %v1581 = vmul.f32 %v1563, %v1577
    %v1582 = vmul.f32 %v1564, %v1577
    %v1583 = vmul.f32 %v1565, %v1577
    %v1584 = vmul.f32 %v1566, %v1577
    %v1585 = vmul.f32 %v1567, %v1577
    %v1586 = vmul.f32 %v1568, %v1577
    %v1587 = vmul.f32 %v1569, %v1577
    %v1588 = vmul.f32 %v1570, %v1577
    %v1589 = vmul.f32 %v1571, %v1577
    %v1590 = vmul.f32 %v1572, %v1577
    %v1591 = vmul.f32 %v1573, %v1577
    %v1592 = vmul.f32 %v1574, %v1577
    %v1593 = vmul.f32 %v1575, %v1577
    %v1595 = vlaneseq
    %v1596 = vshrl.u32 %v1595, 7
    %v1597 = vsub.s32 0, %v1596
    %v1598 = vrot.slane %v603, %v1597
    %v1600 = vmul.f32 %v1578, %v1598
    %v1601 = vmul.f32 %v1579, %v1598
    %v1602 = vmul.f32 %v1580, %v1598
    %v1603 = vmul.f32 %v1581, %v1598
    %v1604 = vmul.f32 %v1582, %v1598
    %v1605 = vmul.f32 %v1583, %v1598
    %v1606 = vmul.f32 %v1584, %v1598
    %v1607 = vmul.f32 %v1585, %v1598
    %v1608 = vmul.f32 %v1586, %v1598
    %v1609 = vmul.f32 %v1587, %v1598
    %v1610 = vmul.f32 %v1588, %v1598
    %v1611 = vmul.f32 %v1589, %v1598
    %v1612 = vmul.f32 %v1590, %v1598
    %v1613 = vmul.f32 %v1591, %v1598
    %v1614 = vmul.f32 %v1592, %v1598
    %v1615 = vmul.f32 %v1593, %v1598
    %v1617 = vlaneseq
    %v1618 = vshrl.u32 %v1617, 7
    %v1619 = vsub.s32 0, %v1618
    %v1620 = vrot.slane %v604, %v1619
    %v1622 = vadd.f32 %v1600, %v1620
    %v1623 = vadd.f32 %v1601, %v1620
    %v1624 = vadd.f32 %v1602, %v1620
    %v1625 = vadd.f32 %v1603, %v1620
    %v1626 = vadd.f32 %v1604, %v1620
    %v1627 = vadd.f32 %v1605, %v1620
    %v1628 = vadd.f32 %v1606, %v1620
    %v1629 = vadd.f32 %v1607, %v1620
    %v1630 = vadd.f32 %v1608, %v1620
    %v1631 = vadd.f32 %v1609, %v1620
    %v1632 = vadd.f32 %v1610, %v1620
    %v1633 = vadd.f32 %v1611, %v1620
    %v1634 = vadd.f32 %v1612, %v1620
    %v1635 = vadd.f32 %v1613, %v1620
    %v1636 = vadd.f32 %v1614, %v1620
    %v1637 = vadd.f32 %v1615, %v1620
    %vm1638 = vcmp.ge.f32.partialorder %v1622, 0.0
    %vm1639 = vcmp.ge.f32.partialorder %v1623, 0.0
    %vm1640 = vcmp.ge.f32.partialorder %v1624, 0.0
    %vm1641 = vcmp.ge.f32.partialorder %v1625, 0.0
    %vm1642 = vcmp.ge.f32.partialorder %v1626, 0.0
    %vm1643 = vcmp.ge.f32.partialorder %v1627, 0.0
    %vm1644 = vcmp.ge.f32.partialorder %v1628, 0.0
    %vm1645 = vcmp.ge.f32.partialorder %v1629, 0.0
    %vm1646 = vcmp.ge.f32.partialorder %v1630, 0.0
    %vm1647 = vcmp.ge.f32.partialorder %v1631, 0.0
    %vm1648 = vcmp.ge.f32.partialorder %v1632, 0.0
    %vm1649 = vcmp.ge.f32.partialorder %v1633, 0.0
    %vm1650 = vcmp.ge.f32.partialorder %v1634, 0.0
    %vm1651 = vcmp.ge.f32.partialorder %v1635, 0.0
    %vm1652 = vcmp.ge.f32.partialorder %v1636, 0.0
    %vm1653 = vcmp.ge.f32.partialorder %v1637, 0.0
    %v1654 = vmul.f32 %v1622, 0.01
    %v1655 = vmul.f32 %v1623, 0.01
    %v1656 = vmul.f32 %v1624, 0.01
    %v1657 = vmul.f32 %v1625, 0.01
    %v1658 = vmul.f32 %v1626, 0.01
    %v1659 = vmul.f32 %v1627, 0.01
    %v1660 = vmul.f32 %v1628, 0.01
    %v1661 = vmul.f32 %v1629, 0.01
    %v1662 = vmul.f32 %v1630, 0.01
    %v1663 = vmul.f32 %v1631, 0.01
    %v1664 = vmul.f32 %v1632, 0.01
    %v1665 = vmul.f32 %v1633, 0.01
    %v1666 = vmul.f32 %v1634, 0.01
    %v1667 = vmul.f32 %v1635, 0.01
    %v1668 = vmul.f32 %v1636, 0.01
    %v1669 = vmul.f32 %v1637, 0.01
    %v1670 = vsel %vm1638, %v1622, %v1654
    %v1671 = vsel %vm1639, %v1623, %v1655
    %v1672 = vsel %vm1640, %v1624, %v1656
    %v1673 = vsel %vm1641, %v1625, %v1657
    %v1674 = vsel %vm1642, %v1626, %v1658
    %v1675 = vsel %vm1643, %v1627, %v1659
    %v1676 = vsel %vm1644, %v1628, %v1660
    %v1677 = vsel %vm1645, %v1629, %v1661
    %v1678 = vsel %vm1646, %v1630, %v1662
    %v1679 = vsel %vm1647, %v1631, %v1663
    %v1680 = vsel %vm1648, %v1632, %v1664
    %v1681 = vsel %vm1649, %v1633, %v1665
    %v1682 = vsel %vm1650, %v1634, %v1666
    %v1683 = vsel %vm1651, %v1635, %v1667
    %v1684 = vsel %vm1652, %v1636, %v1668
    %v1685 = vsel %vm1653, %v1637, %v1669
    %v1687 = vlaneseq
    %v1688 = vshrl.u32 %v1687, 7
    %v1689 = vsub.s32 0, %v1688
    %v1690 = vrot.slane %v605, %v1689
    %v1692 = vmul.f32 %v1670, %v1690
    %v1693 = vmul.f32 %v1671, %v1690
    %v1694 = vmul.f32 %v1672, %v1690
    %v1695 = vmul.f32 %v1673, %v1690
    %v1696 = vmul.f32 %v1674, %v1690
    %v1697 = vmul.f32 %v1675, %v1690
    %v1698 = vmul.f32 %v1676, %v1690
    %v1699 = vmul.f32 %v1677, %v1690
    %v1700 = vmul.f32 %v1678, %v1690
    %v1701 = vmul.f32 %v1679, %v1690
    %v1702 = vmul.f32 %v1680, %v1690
    %v1703 = vmul.f32 %v1681, %v1690
    %v1704 = vmul.f32 %v1682, %v1690
    %v1705 = vmul.f32 %v1683, %v1690
    %v1706 = vmul.f32 %v1684, %v1690
    %v1707 = vmul.f32 %v1685, %v1690
    %1708 = vadd.xlane.f32.xlu0 %v1692
    %v1709 = vpop.xlane.xlu0 %1708
    %1710 = vadd.xlane.f32.xlu0 %v1693
    %v1711 = vpop.xlane.xlu0 %1710
    %1712 = vadd.xlane.f32.xlu0 %v1694
    %v1713 = vpop.xlane.xlu0 %1712
    %1714 = vadd.xlane.f32.xlu0 %v1695
    %v1715 = vpop.xlane.xlu0 %1714
    %1716 = vadd.xlane.f32.xlu0 %v1696
    %v1717 = vpop.xlane.xlu0 %1716
    %1718 = vadd.xlane.f32.xlu0 %v1697
    %v1719 = vpop.xlane.xlu0 %1718
    %1720 = vadd.xlane.f32.xlu0 %v1698
    %v1721 = vpop.xlane.xlu0 %1720
    %1722 = vadd.xlane.f32.xlu0 %v1699
    %v1723 = vpop.xlane.xlu0 %1722
    %1724 = vadd.xlane.f32.xlu0 %v1700
    %v1725 = vpop.xlane.xlu0 %1724
    %1726 = vadd.xlane.f32.xlu0 %v1701
    %v1727 = vpop.xlane.xlu0 %1726
    %1728 = vadd.xlane.f32.xlu0 %v1702
    %v1729 = vpop.xlane.xlu0 %1728
    %1730 = vadd.xlane.f32.xlu0 %v1703
    %v1731 = vpop.xlane.xlu0 %1730
    %1732 = vadd.xlane.f32.xlu0 %v1704
    %v1733 = vpop.xlane.xlu0 %1732
    %1734 = vadd.xlane.f32.xlu0 %v1705
    %v1735 = vpop.xlane.xlu0 %1734
    %1736 = vadd.xlane.f32.xlu0 %v1706
    %v1737 = vpop.xlane.xlu0 %1736
    %1738 = vadd.xlane.f32.xlu0 %v1707
    %v1739 = vpop.xlane.xlu0 %1738
    %v1741 = vlaneseq
    %v1742 = vshrl.u32 %v1741, 7
    %v1743 = vsub.s32 0, %v1742
    %v1744 = vrot.slane %v606, %v1743
    %1745 = vset.pattern.permute.xlu0 0
    %1746 = vperm.xlu0 %1745, %v1744
    %v1747 = vpop.permute.xlu0 %1746
    %v1749 = vadd.f32 %v1709, %v1747
    %v1750 = vadd.f32 %v1711, %v1747
    %v1751 = vadd.f32 %v1713, %v1747
    %v1752 = vadd.f32 %v1715, %v1747
    %v1753 = vadd.f32 %v1717, %v1747
    %v1754 = vadd.f32 %v1719, %v1747
    %v1755 = vadd.f32 %v1721, %v1747
    %v1756 = vadd.f32 %v1723, %v1747
    %v1757 = vadd.f32 %v1725, %v1747
    %v1758 = vadd.f32 %v1727, %v1747
    %v1759 = vadd.f32 %v1729, %v1747
    %v1760 = vadd.f32 %v1731, %v1747
    %v1761 = vadd.f32 %v1733, %v1747
    %v1762 = vadd.f32 %v1735, %v1747
    %v1763 = vadd.f32 %v1737, %v1747
    %v1764 = vadd.f32 %v1739, %v1747
    %v1766 = vlaneseq
    %v1767 = vshrl.u32 %v1766, 7
    %v1768 = vsub.s32 0, %v1767
    %v1769 = vrot.slane %v562, %v1768
    %1771 = vbcast.lane.b32.xlu0 %v1769, 256
    %v1772 = vpop.permute.xlu0 %1771
    %v1773 = vlaneseq
    %v1774 = vshrl.u32 %v1773, 7
    %v1775 = vsub.s32 1, %v1774
    %v1776 = vrot.slane %v562, %v1775
    %1778 = vbcast.lane.b32.xlu0 %v1776, 256
    %v1779 = vpop.permute.xlu0 %1778
    %v1780 = vlaneseq
    %v1781 = vshrl.u32 %v1780, 7
    %v1782 = vsub.s32 2, %v1781
    %v1783 = vrot.slane %v562, %v1782
    %1785 = vbcast.lane.b32.xlu0 %v1783, 256
    %v1786 = vpop.permute.xlu0 %1785
    %v1787 = vlaneseq
    %v1788 = vshrl.u32 %v1787, 7
    %v1789 = vsub.s32 3, %v1788
    %v1790 = vrot.slane %v562, %v1789
    %1792 = vbcast.lane.b32.xlu0 %v1790, 256
    %v1793 = vpop.permute.xlu0 %1792
    %v1794 = vlaneseq
    %v1795 = vshrl.u32 %v1794, 7
    %v1796 = vsub.s32 4, %v1795
    %v1797 = vrot.slane %v562, %v1796
    %1799 = vbcast.lane.b32.xlu0 %v1797, 256
    %v1800 = vpop.permute.xlu0 %1799
    %v1801 = vlaneseq
    %v1802 = vshrl.u32 %v1801, 7
    %v1803 = vsub.s32 5, %v1802
    %v1804 = vrot.slane %v562, %v1803
    %1806 = vbcast.lane.b32.xlu0 %v1804, 256
    %v1807 = vpop.permute.xlu0 %1806
    %v1808 = vlaneseq
    %v1809 = vshrl.u32 %v1808, 7
    %v1810 = vsub.s32 6, %v1809
    %v1811 = vrot.slane %v562, %v1810
    %1813 = vbcast.lane.b32.xlu0 %v1811, 256
    %v1814 = vpop.permute.xlu0 %1813
    %v1815 = vlaneseq
    %v1816 = vshrl.u32 %v1815, 7
    %v1817 = vsub.s32 7, %v1816
    %v1818 = vrot.slane %v562, %v1817
    %1820 = vbcast.lane.b32.xlu0 %v1818, 256
    %v1821 = vpop.permute.xlu0 %1820
    %v1830 = vadd.f32 %v1749, %v1772
    %v1831 = vadd.f32 %v1750, %v1779
    %v1832 = vadd.f32 %v1751, %v1786
    %v1833 = vadd.f32 %v1752, %v1793
    %v1834 = vadd.f32 %v1753, %v1800
    %v1835 = vadd.f32 %v1754, %v1807
    %v1836 = vadd.f32 %v1755, %v1814
    %v1837 = vadd.f32 %v1756, %v1821
    %v1838 = vadd.f32 %v1757, %v1772
    %v1839 = vadd.f32 %v1758, %v1779
    %v1840 = vadd.f32 %v1759, %v1786
    %v1841 = vadd.f32 %v1760, %v1793
    %v1842 = vadd.f32 %v1761, %v1800
    %v1843 = vadd.f32 %v1762, %v1807
    %v1844 = vadd.f32 %v1763, %v1814
    %v1845 = vadd.f32 %v1764, %v1821
    %1862 = vset.pattern.permute.xlu0 0
    %1863 = vperm.xlu0 %1862, %v1830
    %v1864 = vpop.permute.xlu0 %1863
    %1865 = vset.pattern.permute.xlu0 0
    %1866 = vperm.xlu0 %1865, %v1831
    %v1867 = vpop.permute.xlu0 %1866
    %1868 = vset.pattern.permute.xlu0 0
    %1869 = vperm.xlu0 %1868, %v1832
    %v1870 = vpop.permute.xlu0 %1869
    %1871 = vset.pattern.permute.xlu0 0
    %1872 = vperm.xlu0 %1871, %v1833
    %v1873 = vpop.permute.xlu0 %1872
    %1874 = vset.pattern.permute.xlu0 0
    %1875 = vperm.xlu0 %1874, %v1834
    %v1876 = vpop.permute.xlu0 %1875
    %1877 = vset.pattern.permute.xlu0 0
    %1878 = vperm.xlu0 %1877, %v1835
    %v1879 = vpop.permute.xlu0 %1878
    %1880 = vset.pattern.permute.xlu0 0
    %1881 = vperm.xlu0 %1880, %v1836
    %v1882 = vpop.permute.xlu0 %1881
    %1883 = vset.pattern.permute.xlu0 0
    %1884 = vperm.xlu0 %1883, %v1837
    %v1885 = vpop.permute.xlu0 %1884
    %1886 = vset.pattern.permute.xlu0 0
    %1887 = vperm.xlu0 %1886, %v1838
    %v1888 = vpop.permute.xlu0 %1887
    %1889 = vset.pattern.permute.xlu0 0
    %1890 = vperm.xlu0 %1889, %v1839
    %v1891 = vpop.permute.xlu0 %1890
    %1892 = vset.pattern.permute.xlu0 0
    %1893 = vperm.xlu0 %1892, %v1840
    %v1894 = vpop.permute.xlu0 %1893
    %1895 = vset.pattern.permute.xlu0 0
    %1896 = vperm.xlu0 %1895, %v1841
    %v1897 = vpop.permute.xlu0 %1896
    %1898 = vset.pattern.permute.xlu0 0
    %1899 = vperm.xlu0 %1898, %v1842
    %v1900 = vpop.permute.xlu0 %1899
    %1901 = vset.pattern.permute.xlu0 0
    %1902 = vperm.xlu0 %1901, %v1843
    %v1903 = vpop.permute.xlu0 %1902
    %1904 = vset.pattern.permute.xlu0 0
    %1905 = vperm.xlu0 %1904, %v1844
    %v1906 = vpop.permute.xlu0 %1905
    %1907 = vset.pattern.permute.xlu0 0
    %1908 = vperm.xlu0 %1907, %v1845
    %v1909 = vpop.permute.xlu0 %1908
    %v1910 = vlaneseq
    %v1911 = vshrl.u32 %v1910, 7
    %v1912 = vsub.s32 %v560, %v1911
    %v1913 = vrot.slane %v1864, %v1912
    %v1914 = vlaneseq
    %v1915 = vshrl.u32 %v1914, 7
    %v1916 = vsub.s32 %v560, %v1915
    %v1917 = vrot.slane %v1867, %v1916
    %v1918 = vlaneseq
    %v1919 = vshrl.u32 %v1918, 7
    %v1920 = vsub.s32 %v560, %v1919
    %v1921 = vrot.slane %v1870, %v1920
    %v1922 = vlaneseq
    %v1923 = vshrl.u32 %v1922, 7
    %v1924 = vsub.s32 %v560, %v1923
    %v1925 = vrot.slane %v1873, %v1924
    %v1926 = vlaneseq
    %v1927 = vshrl.u32 %v1926, 7
    %v1928 = vsub.s32 %v560, %v1927
    %v1929 = vrot.slane %v1876, %v1928
    %v1930 = vlaneseq
    %v1931 = vshrl.u32 %v1930, 7
    %v1932 = vsub.s32 %v560, %v1931
    %v1933 = vrot.slane %v1879, %v1932
    %v1934 = vlaneseq
    %v1935 = vshrl.u32 %v1934, 7
    %v1936 = vsub.s32 %v560, %v1935
    %v1937 = vrot.slane %v1882, %v1936
    %v1938 = vlaneseq
    %v1939 = vshrl.u32 %v1938, 7
    %v1940 = vsub.s32 %v560, %v1939
    %v1941 = vrot.slane %v1885, %v1940
    %v1942 = vlaneseq
    %v1943 = vshrl.u32 %v1942, 7
    %v1944 = vsub.s32 %v560, %v1943
    %v1945 = vrot.slane %v1888, %v1944
    %v1946 = vlaneseq
    %v1947 = vshrl.u32 %v1946, 7
    %v1948 = vsub.s32 %v560, %v1947
    %v1949 = vrot.slane %v1891, %v1948
    %v1950 = vlaneseq
    %v1951 = vshrl.u32 %v1950, 7
    %v1952 = vsub.s32 %v560, %v1951
    %v1953 = vrot.slane %v1894, %v1952
    %v1954 = vlaneseq
    %v1955 = vshrl.u32 %v1954, 7
    %v1956 = vsub.s32 %v560, %v1955
    %v1957 = vrot.slane %v1897, %v1956
    %v1958 = vlaneseq
    %v1959 = vshrl.u32 %v1958, 7
    %v1960 = vsub.s32 %v560, %v1959
    %v1961 = vrot.slane %v1900, %v1960
    %v1962 = vlaneseq
    %v1963 = vshrl.u32 %v1962, 7
    %v1964 = vsub.s32 %v560, %v1963
    %v1965 = vrot.slane %v1903, %v1964
    %v1966 = vlaneseq
    %v1967 = vshrl.u32 %v1966, 7
    %v1968 = vsub.s32 %v560, %v1967
    %v1969 = vrot.slane %v1906, %v1968
    %v1970 = vlaneseq
    %v1971 = vshrl.u32 %v1970, 7
    %v1972 = vsub.s32 %v560, %v1971
    %v1973 = vrot.slane %v1909, %v1972
    %vm1974 = vcmask 1041409
    %v1975 = vsel %vm1974, %v1917, %v1913
    %vm1976 = vcmask 1042434
    %v1977 = vsel %vm1976, %v1921, %v1975
    %vm1978 = vcmask 1043459
    %v1979 = vsel %vm1978, %v1925, %v1977
    %vm1980 = vcmask 1044484
    %v1981 = vsel %vm1980, %v1929, %v1979
    %vm1982 = vcmask 1045509
    %v1983 = vsel %vm1982, %v1933, %v1981
    %vm1984 = vcmask 1046534
    %v1985 = vsel %vm1984, %v1937, %v1983
    %vm1986 = vcmask 1047559
    %v1987 = vsel %vm1986, %v1941, %v1985
    %v1988 = vsel %vm1974, %v1949, %v1945
    %v1989 = vsel %vm1976, %v1953, %v1988
    %v1990 = vsel %vm1978, %v1957, %v1989
    %v1991 = vsel %vm1980, %v1961, %v1990
    %v1992 = vsel %vm1982, %v1965, %v1991
    %v1993 = vsel %vm1984, %v1969, %v1992
    %v1994 = vsel %vm1986, %v1973, %v1993
    %vm1997 = vcmask 64512
    %v1998 = vsel %vm1997, %v1987, -inf
    %1999 = vmax.xlane.f32.xlu0 %v1998
    %v2000 = vpop.xlane.xlu0 %1999
    %v2001 = vsel %vm1997, %v1994, -inf
    %2002 = vmax.xlane.f32.xlu0 %v2001
    %v2003 = vpop.xlane.xlu0 %2002
    %v2006 = vlaneseq
    %v2007 = vshrl.u32 %v2006, 7
    %v2008 = vsub.s32 0, %v2007
    %v2009 = vrot.slane %v2000, %v2008
    %v2010 = vlaneseq
    %v2011 = vshrl.u32 %v2010, 7
    %v2012 = vsub.s32 1, %v2011
    %v2013 = vrot.slane %v2000, %v2012
    %v2014 = vlaneseq
    %v2015 = vshrl.u32 %v2014, 7
    %v2016 = vsub.s32 2, %v2015
    %v2017 = vrot.slane %v2000, %v2016
    %v2018 = vlaneseq
    %v2019 = vshrl.u32 %v2018, 7
    %v2020 = vsub.s32 3, %v2019
    %v2021 = vrot.slane %v2000, %v2020
    %v2022 = vlaneseq
    %v2023 = vshrl.u32 %v2022, 7
    %v2024 = vsub.s32 4, %v2023
    %v2025 = vrot.slane %v2000, %v2024
    %v2026 = vlaneseq
    %v2027 = vshrl.u32 %v2026, 7
    %v2028 = vsub.s32 5, %v2027
    %v2029 = vrot.slane %v2000, %v2028
    %v2030 = vlaneseq
    %v2031 = vshrl.u32 %v2030, 7
    %v2032 = vsub.s32 6, %v2031
    %v2033 = vrot.slane %v2000, %v2032
    %v2034 = vlaneseq
    %v2035 = vshrl.u32 %v2034, 7
    %v2036 = vsub.s32 7, %v2035
    %v2037 = vrot.slane %v2000, %v2036
    %v2038 = vlaneseq
    %v2039 = vshrl.u32 %v2038, 7
    %v2040 = vsub.s32 0, %v2039
    %v2041 = vrot.slane %v2003, %v2040
    %v2042 = vlaneseq
    %v2043 = vshrl.u32 %v2042, 7
    %v2044 = vsub.s32 1, %v2043
    %v2045 = vrot.slane %v2003, %v2044
    %v2046 = vlaneseq
    %v2047 = vshrl.u32 %v2046, 7
    %v2048 = vsub.s32 2, %v2047
    %v2049 = vrot.slane %v2003, %v2048
    %v2050 = vlaneseq
    %v2051 = vshrl.u32 %v2050, 7
    %v2052 = vsub.s32 3, %v2051
    %v2053 = vrot.slane %v2003, %v2052
    %v2054 = vlaneseq
    %v2055 = vshrl.u32 %v2054, 7
    %v2056 = vsub.s32 4, %v2055
    %v2057 = vrot.slane %v2003, %v2056
    %v2058 = vlaneseq
    %v2059 = vshrl.u32 %v2058, 7
    %v2060 = vsub.s32 5, %v2059
    %v2061 = vrot.slane %v2003, %v2060
    %v2062 = vlaneseq
    %v2063 = vshrl.u32 %v2062, 7
    %v2064 = vsub.s32 6, %v2063
    %v2065 = vrot.slane %v2003, %v2064
    %v2066 = vlaneseq
    %v2067 = vshrl.u32 %v2066, 7
    %v2068 = vsub.s32 7, %v2067
    %v2069 = vrot.slane %v2003, %v2068
    %v2086 = vsub.f32 %v1830, %v2009
    %v2087 = vsub.f32 %v1831, %v2013
    %v2088 = vsub.f32 %v1832, %v2017
    %v2089 = vsub.f32 %v1833, %v2021
    %v2090 = vsub.f32 %v1834, %v2025
    %v2091 = vsub.f32 %v1835, %v2029
    %v2092 = vsub.f32 %v1836, %v2033
    %v2093 = vsub.f32 %v1837, %v2037
    %v2094 = vsub.f32 %v1838, %v2041
    %v2095 = vsub.f32 %v1839, %v2045
    %v2096 = vsub.f32 %v1840, %v2049
    %v2097 = vsub.f32 %v1841, %v2053
    %v2098 = vsub.f32 %v1842, %v2057
    %v2099 = vsub.f32 %v1843, %v2061
    %v2100 = vsub.f32 %v1844, %v2065
    %v2101 = vsub.f32 %v1845, %v2069
    %v2102 = vmul.f32 %v2086, 1.442695
    %v2103 = vpow.pop %v2102
    %v2104 = vmul.f32 %v2087, 1.442695
    %v2105 = vpow.pop %v2104
    %v2106 = vmul.f32 %v2088, 1.442695
    %v2107 = vpow.pop %v2106
    %v2108 = vmul.f32 %v2089, 1.442695
    %v2109 = vpow.pop %v2108
    %v2110 = vmul.f32 %v2090, 1.442695
    %v2111 = vpow.pop %v2110
    %v2112 = vmul.f32 %v2091, 1.442695
    %v2113 = vpow.pop %v2112
    %v2114 = vmul.f32 %v2092, 1.442695
    %v2115 = vpow.pop %v2114
    %v2116 = vmul.f32 %v2093, 1.442695
    %v2117 = vpow.pop %v2116
    %v2118 = vmul.f32 %v2094, 1.442695
    %v2119 = vpow.pop %v2118
    %v2120 = vmul.f32 %v2095, 1.442695
    %v2121 = vpow.pop %v2120
    %v2122 = vmul.f32 %v2096, 1.442695
    %v2123 = vpow.pop %v2122
    %v2124 = vmul.f32 %v2097, 1.442695
    %v2125 = vpow.pop %v2124
    %v2126 = vmul.f32 %v2098, 1.442695
    %v2127 = vpow.pop %v2126
    %v2128 = vmul.f32 %v2099, 1.442695
    %v2129 = vpow.pop %v2128
    %v2130 = vmul.f32 %v2100, 1.442695
    %v2131 = vpow.pop %v2130
    %v2132 = vmul.f32 %v2101, 1.442695
    %v2133 = vpow.pop %v2132
    %2150 = vset.pattern.permute.xlu0 0
    %2151 = vperm.xlu0 %2150, %v2103
    %v2152 = vpop.permute.xlu0 %2151
    %2153 = vset.pattern.permute.xlu0 0
    %2154 = vperm.xlu0 %2153, %v2105
    %v2155 = vpop.permute.xlu0 %2154
    %2156 = vset.pattern.permute.xlu0 0
    %2157 = vperm.xlu0 %2156, %v2107
    %v2158 = vpop.permute.xlu0 %2157
    %2159 = vset.pattern.permute.xlu0 0
    %2160 = vperm.xlu0 %2159, %v2109
    %v2161 = vpop.permute.xlu0 %2160
    %2162 = vset.pattern.permute.xlu0 0
    %2163 = vperm.xlu0 %2162, %v2111
    %v2164 = vpop.permute.xlu0 %2163
    %2165 = vset.pattern.permute.xlu0 0
    %2166 = vperm.xlu0 %2165, %v2113
    %v2167 = vpop.permute.xlu0 %2166
    %2168 = vset.pattern.permute.xlu0 0
    %2169 = vperm.xlu0 %2168, %v2115
    %v2170 = vpop.permute.xlu0 %2169
    %2171 = vset.pattern.permute.xlu0 0
    %2172 = vperm.xlu0 %2171, %v2117
    %v2173 = vpop.permute.xlu0 %2172
    %2174 = vset.pattern.permute.xlu0 0
    %2175 = vperm.xlu0 %2174, %v2119
    %v2176 = vpop.permute.xlu0 %2175
    %2177 = vset.pattern.permute.xlu0 0
    %2178 = vperm.xlu0 %2177, %v2121
    %v2179 = vpop.permute.xlu0 %2178
    %2180 = vset.pattern.permute.xlu0 0
    %2181 = vperm.xlu0 %2180, %v2123
    %v2182 = vpop.permute.xlu0 %2181
    %2183 = vset.pattern.permute.xlu0 0
    %2184 = vperm.xlu0 %2183, %v2125
    %v2185 = vpop.permute.xlu0 %2184
    %2186 = vset.pattern.permute.xlu0 0
    %2187 = vperm.xlu0 %2186, %v2127
    %v2188 = vpop.permute.xlu0 %2187
    %2189 = vset.pattern.permute.xlu0 0
    %2190 = vperm.xlu0 %2189, %v2129
    %v2191 = vpop.permute.xlu0 %2190
    %2192 = vset.pattern.permute.xlu0 0
    %2193 = vperm.xlu0 %2192, %v2131
    %v2194 = vpop.permute.xlu0 %2193
    %2195 = vset.pattern.permute.xlu0 0
    %2196 = vperm.xlu0 %2195, %v2133
    %v2197 = vpop.permute.xlu0 %2196
    %v2198 = vlaneseq
    %v2199 = vshrl.u32 %v2198, 7
    %v2200 = vsub.s32 %v560, %v2199
    %v2201 = vrot.slane %v2152, %v2200
    %v2202 = vlaneseq
    %v2203 = vshrl.u32 %v2202, 7
    %v2204 = vsub.s32 %v560, %v2203
    %v2205 = vrot.slane %v2155, %v2204
    %v2206 = vlaneseq
    %v2207 = vshrl.u32 %v2206, 7
    %v2208 = vsub.s32 %v560, %v2207
    %v2209 = vrot.slane %v2158, %v2208
    %v2210 = vlaneseq
    %v2211 = vshrl.u32 %v2210, 7
    %v2212 = vsub.s32 %v560, %v2211
    %v2213 = vrot.slane %v2161, %v2212
    %v2214 = vlaneseq
    %v2215 = vshrl.u32 %v2214, 7
    %v2216 = vsub.s32 %v560, %v2215
    %v2217 = vrot.slane %v2164, %v2216
    %v2218 = vlaneseq
    %v2219 = vshrl.u32 %v2218, 7
    %v2220 = vsub.s32 %v560, %v2219
    %v2221 = vrot.slane %v2167, %v2220
    %v2222 = vlaneseq
    %v2223 = vshrl.u32 %v2222, 7
    %v2224 = vsub.s32 %v560, %v2223
    %v2225 = vrot.slane %v2170, %v2224
    %v2226 = vlaneseq
    %v2227 = vshrl.u32 %v2226, 7
    %v2228 = vsub.s32 %v560, %v2227
    %v2229 = vrot.slane %v2173, %v2228
    %v2230 = vlaneseq
    %v2231 = vshrl.u32 %v2230, 7
    %v2232 = vsub.s32 %v560, %v2231
    %v2233 = vrot.slane %v2176, %v2232
    %v2234 = vlaneseq
    %v2235 = vshrl.u32 %v2234, 7
    %v2236 = vsub.s32 %v560, %v2235
    %v2237 = vrot.slane %v2179, %v2236
    %v2238 = vlaneseq
    %v2239 = vshrl.u32 %v2238, 7
    %v2240 = vsub.s32 %v560, %v2239
    %v2241 = vrot.slane %v2182, %v2240
    %v2242 = vlaneseq
    %v2243 = vshrl.u32 %v2242, 7
    %v2244 = vsub.s32 %v560, %v2243
    %v2245 = vrot.slane %v2185, %v2244
    %v2246 = vlaneseq
    %v2247 = vshrl.u32 %v2246, 7
    %v2248 = vsub.s32 %v560, %v2247
    %v2249 = vrot.slane %v2188, %v2248
    %v2250 = vlaneseq
    %v2251 = vshrl.u32 %v2250, 7
    %v2252 = vsub.s32 %v560, %v2251
    %v2253 = vrot.slane %v2191, %v2252
    %v2254 = vlaneseq
    %v2255 = vshrl.u32 %v2254, 7
    %v2256 = vsub.s32 %v560, %v2255
    %v2257 = vrot.slane %v2194, %v2256
    %v2258 = vlaneseq
    %v2259 = vshrl.u32 %v2258, 7
    %v2260 = vsub.s32 %v560, %v2259
    %v2261 = vrot.slane %v2197, %v2260
    %v2262 = vsel %vm1974, %v2205, %v2201
    %v2263 = vsel %vm1976, %v2209, %v2262
    %v2264 = vsel %vm1978, %v2213, %v2263
    %v2265 = vsel %vm1980, %v2217, %v2264
    %v2266 = vsel %vm1982, %v2221, %v2265
    %v2267 = vsel %vm1984, %v2225, %v2266
    %v2268 = vsel %vm1986, %v2229, %v2267
    %v2269 = vsel %vm1974, %v2237, %v2233
    %v2270 = vsel %vm1976, %v2241, %v2269
    %v2271 = vsel %vm1978, %v2245, %v2270
    %v2272 = vsel %vm1980, %v2249, %v2271
    %v2273 = vsel %vm1982, %v2253, %v2272
    %v2274 = vsel %vm1984, %v2257, %v2273
    %v2275 = vsel %vm1986, %v2261, %v2274
    %v2278 = vsel %vm1997, %v2268, 0.0
    %2279 = vadd.xlane.f32.xlu0 %v2278
    %v2280 = vpop.xlane.xlu0 %2279
    %v2281 = vsel %vm1997, %v2275, 0.0
    %2282 = vadd.xlane.f32.xlu0 %v2281
    %v2283 = vpop.xlane.xlu0 %2282
    %v2284 = vrcp.pop %v2280
    %v2285 = vrcp.pop %v2283
    %v2288 = vlaneseq
    %v2289 = vshrl.u32 %v2288, 7
    %v2290 = vsub.s32 0, %v2289
    %v2291 = vrot.slane %v2284, %v2290
    %v2292 = vlaneseq
    %v2293 = vshrl.u32 %v2292, 7
    %v2294 = vsub.s32 1, %v2293
    %v2295 = vrot.slane %v2284, %v2294
    %v2296 = vlaneseq
    %v2297 = vshrl.u32 %v2296, 7
    %v2298 = vsub.s32 2, %v2297
    %v2299 = vrot.slane %v2284, %v2298
    %v2300 = vlaneseq
    %v2301 = vshrl.u32 %v2300, 7
    %v2302 = vsub.s32 3, %v2301
    %v2303 = vrot.slane %v2284, %v2302
    %v2304 = vlaneseq
    %v2305 = vshrl.u32 %v2304, 7
    %v2306 = vsub.s32 4, %v2305
    %v2307 = vrot.slane %v2284, %v2306
    %v2308 = vlaneseq
    %v2309 = vshrl.u32 %v2308, 7
    %v2310 = vsub.s32 5, %v2309
    %v2311 = vrot.slane %v2284, %v2310
    %v2312 = vlaneseq
    %v2313 = vshrl.u32 %v2312, 7
    %v2314 = vsub.s32 6, %v2313
    %v2315 = vrot.slane %v2284, %v2314
    %v2316 = vlaneseq
    %v2317 = vshrl.u32 %v2316, 7
    %v2318 = vsub.s32 7, %v2317
    %v2319 = vrot.slane %v2284, %v2318
    %v2320 = vlaneseq
    %v2321 = vshrl.u32 %v2320, 7
    %v2322 = vsub.s32 0, %v2321
    %v2323 = vrot.slane %v2285, %v2322
    %v2324 = vlaneseq
    %v2325 = vshrl.u32 %v2324, 7
    %v2326 = vsub.s32 1, %v2325
    %v2327 = vrot.slane %v2285, %v2326
    %v2328 = vlaneseq
    %v2329 = vshrl.u32 %v2328, 7
    %v2330 = vsub.s32 2, %v2329
    %v2331 = vrot.slane %v2285, %v2330
    %v2332 = vlaneseq
    %v2333 = vshrl.u32 %v2332, 7
    %v2334 = vsub.s32 3, %v2333
    %v2335 = vrot.slane %v2285, %v2334
    %v2336 = vlaneseq
    %v2337 = vshrl.u32 %v2336, 7
    %v2338 = vsub.s32 4, %v2337
    %v2339 = vrot.slane %v2285, %v2338
    %v2340 = vlaneseq
    %v2341 = vshrl.u32 %v2340, 7
    %v2342 = vsub.s32 5, %v2341
    %v2343 = vrot.slane %v2285, %v2342
    %v2344 = vlaneseq
    %v2345 = vshrl.u32 %v2344, 7
    %v2346 = vsub.s32 6, %v2345
    %v2347 = vrot.slane %v2285, %v2346
    %v2348 = vlaneseq
    %v2349 = vshrl.u32 %v2348, 7
    %v2350 = vsub.s32 7, %v2349
    %v2351 = vrot.slane %v2285, %v2350
    %v2368 = vmul.f32 %v2103, %v2291
    %v2369 = vmul.f32 %v2105, %v2295
    %v2370 = vmul.f32 %v2107, %v2299
    %v2371 = vmul.f32 %v2109, %v2303
    %v2372 = vmul.f32 %v2111, %v2307
    %v2373 = vmul.f32 %v2113, %v2311
    %v2374 = vmul.f32 %v2115, %v2315
    %v2375 = vmul.f32 %v2117, %v2319
    %v2376 = vmul.f32 %v2119, %v2323
    %v2377 = vmul.f32 %v2121, %v2327
    %v2378 = vmul.f32 %v2123, %v2331
    %v2379 = vmul.f32 %v2125, %v2335
    %v2380 = vmul.f32 %v2127, %v2339
    %v2381 = vmul.f32 %v2129, %v2343
    %v2382 = vmul.f32 %v2131, %v2347
    %v2383 = vmul.f32 %v2133, %v2351
    %2392 = vset.pattern.permute.xlu0 0
    %2393 = vperm.xlu0 %2392, %v2368
    %v2394 = vpop.permute.xlu0 %2393
    %2395 = vset.pattern.permute.xlu0 0
    %2396 = vperm.xlu0 %2395, %v2369
    %v2397 = vpop.permute.xlu0 %2396
    %2398 = vset.pattern.permute.xlu0 0
    %2399 = vperm.xlu0 %2398, %v2370
    %v2400 = vpop.permute.xlu0 %2399
    %2401 = vset.pattern.permute.xlu0 0
    %2402 = vperm.xlu0 %2401, %v2371
    %v2403 = vpop.permute.xlu0 %2402
    %2404 = vset.pattern.permute.xlu0 0
    %2405 = vperm.xlu0 %2404, %v2372
    %v2406 = vpop.permute.xlu0 %2405
    %2407 = vset.pattern.permute.xlu0 0
    %2408 = vperm.xlu0 %2407, %v2373
    %v2409 = vpop.permute.xlu0 %2408
    %2410 = vset.pattern.permute.xlu0 0
    %2411 = vperm.xlu0 %2410, %v2374
    %v2412 = vpop.permute.xlu0 %2411
    %2413 = vset.pattern.permute.xlu0 0
    %2414 = vperm.xlu0 %2413, %v2375
    %v2415 = vpop.permute.xlu0 %2414
    %v2416 = vlaneseq
    %v2417 = vshrl.u32 %v2416, 7
    %v2418 = vsub.s32 %v560, %v2417
    %v2419 = vrot.slane %v2394, %v2418
    %v2420 = vlaneseq
    %v2421 = vshrl.u32 %v2420, 7
    %v2422 = vsub.s32 %v560, %v2421
    %v2423 = vrot.slane %v2397, %v2422
    %v2424 = vlaneseq
    %v2425 = vshrl.u32 %v2424, 7
    %v2426 = vsub.s32 %v560, %v2425
    %v2427 = vrot.slane %v2400, %v2426
    %v2428 = vlaneseq
    %v2429 = vshrl.u32 %v2428, 7
    %v2430 = vsub.s32 %v560, %v2429
    %v2431 = vrot.slane %v2403, %v2430
    %v2432 = vlaneseq
    %v2433 = vshrl.u32 %v2432, 7
    %v2434 = vsub.s32 %v560, %v2433
    %v2435 = vrot.slane %v2406, %v2434
    %v2436 = vlaneseq
    %v2437 = vshrl.u32 %v2436, 7
    %v2438 = vsub.s32 %v560, %v2437
    %v2439 = vrot.slane %v2409, %v2438
    %v2440 = vlaneseq
    %v2441 = vshrl.u32 %v2440, 7
    %v2442 = vsub.s32 %v560, %v2441
    %v2443 = vrot.slane %v2412, %v2442
    %v2444 = vlaneseq
    %v2445 = vshrl.u32 %v2444, 7
    %v2446 = vsub.s32 %v560, %v2445
    %v2447 = vrot.slane %v2415, %v2446
    %v2448 = vsel %vm1974, %v2423, %v2419
    %v2449 = vsel %vm1976, %v2427, %v2448
    %v2450 = vsel %vm1978, %v2431, %v2449
    %v2451 = vsel %vm1980, %v2435, %v2450
    %v2452 = vsel %vm1982, %v2439, %v2451
    %v2453 = vsel %vm1984, %v2443, %v2452
    %v2454 = vsel %vm1986, %v2447, %v2453
    %v2455 = vsel %vm1997, %v2454, 0
    %2457 = vmatprep.subr.mxu0 0.0
    %2458 = vmatpush1.msra.mxu0 0.0
    %2459 = vmatprep.subr.mxu0 0.0
    %2460 = vmatpush1.msra.mxu0 0.0
    %2461 = vmatprep.subr.mxu0 0.0
    %2462 = vmatpush1.msra.mxu0 0.0
    %2463 = vmatprep.subr.mxu0 0.0
    %2464 = vmatpush1.msra.mxu0 0.0
    %2465 = vmatprep.subr.mxu0 0.0
    %2466 = vmatpush1.msra.mxu0 0.0
    %2467 = vmatprep.subr.mxu0 0.0
    %2468 = vmatpush1.msra.mxu0 0.0
    %2469 = vmatprep.subr.mxu0 0.0
    %2470 = vmatpush1.msra.mxu0 0.0
    %2471 = vmatprep.subr.mxu0 0.0
    %2472 = vmatpush1.msra.mxu0 0.0
    %2473 = vmatprep.subr.mxu0 0.0
    %2474 = vmatpush1.msra.mxu0 0.0
    %2475 = vmatprep.subr.mxu0 0.0
    %2476 = vmatpush1.msra.mxu0 0.0
    %2477 = vmatprep.subr.mxu0 0.0
    %2478 = vmatpush1.msra.mxu0 0.0
    %2479 = vmatprep.subr.mxu0 0.0
    %2480 = vmatpush1.msra.mxu0 0.0
    %2481 = vmatprep.subr.mxu0 0.0
    %2482 = vmatpush1.msra.mxu0 0.0
    %2483 = vmatprep.subr.mxu0 0.0
    %2484 = vmatpush1.msra.mxu0 0.0
    %2485 = vmatprep.subr.mxu0 0.0
    %2486 = vmatpush1.msra.mxu0 0.0
    %2487 = vmatprep.subr.mxu0 0.0
    %2488 = vmatpush1.msra.mxu0 %v555
    %2489 = vmatprep.subr.mxu0 0.0
    %2490 = vmatpush2.msra.mxu0 0.0
    %2491 = vmatprep.subr.mxu0 0.0
    %2492 = vmatpush2.msra.mxu0 0.0
    %2493 = vmatprep.subr.mxu0 0.0
    %2494 = vmatpush2.msra.mxu0 0.0
    %2495 = vmatprep.subr.mxu0 0.0
    %2496 = vmatpush2.msra.mxu0 0.0
    %2497 = vmatprep.subr.mxu0 0.0
    %2498 = vmatpush2.msra.mxu0 0.0
    %2499 = vmatprep.subr.mxu0 0.0
    %2500 = vmatpush2.msra.mxu0 0.0
    %2501 = vmatprep.subr.mxu0 0.0
    %2502 = vmatpush2.msra.mxu0 0.0
    %2503 = vmatprep.subr.mxu0 0.0
    %2504 = vmatpush2.msra.mxu0 0.0
    %2505 = vmatprep.subr.mxu0 0.0
    %2506 = vmatpush2.msra.mxu0 0.0
    %2507 = vmatprep.subr.mxu0 0.0
    %2508 = vmatpush2.msra.mxu0 0.0
    %2509 = vmatprep.subr.mxu0 0.0
    %2510 = vmatpush2.msra.mxu0 0.0
    %2511 = vmatprep.subr.mxu0 0.0
    %2512 = vmatpush2.msra.mxu0 0.0
    %2513 = vmatprep.subr.mxu0 0.0
    %2514 = vmatpush2.msra.mxu0 0.0
    %2515 = vmatprep.subr.mxu0 0.0
    %2516 = vmatpush2.msra.mxu0 0.0
    %2517 = vmatprep.subr.mxu0 0.0
    %2518 = vmatpush2.msra.mxu0 0.0
    %2519 = vmatprep.subr.mxu0 0.0
    %2520 = vmatpush2.msra.mxu0 0.0
    %2521 = vmatprep.mubr.f32.mxu0 0.0
    %2522 = vmatmul.mubr.f32.gmra.mxu0 %v2455
    %v2523 = vpop.f32.mrf.mxu0
    %v2524 = vadd.f32 0.0, %v2523
    %v2525 = vpop.f32.mrf.mxu0
    %2526 = vdwg.mxu0
    %2535 = vset.pattern.permute.xlu0 0
    %2536 = vperm.xlu0 %2535, %v2376
    %v2537 = vpop.permute.xlu0 %2536
    %2538 = vset.pattern.permute.xlu0 0
    %2539 = vperm.xlu0 %2538, %v2377
    %v2540 = vpop.permute.xlu0 %2539
    %2541 = vset.pattern.permute.xlu0 0
    %2542 = vperm.xlu0 %2541, %v2378
    %v2543 = vpop.permute.xlu0 %2542
    %2544 = vset.pattern.permute.xlu0 0
    %2545 = vperm.xlu0 %2544, %v2379
    %v2546 = vpop.permute.xlu0 %2545
    %2547 = vset.pattern.permute.xlu0 0
    %2548 = vperm.xlu0 %2547, %v2380
    %v2549 = vpop.permute.xlu0 %2548
    %2550 = vset.pattern.permute.xlu0 0
    %2551 = vperm.xlu0 %2550, %v2381
    %v2552 = vpop.permute.xlu0 %2551
    %2553 = vset.pattern.permute.xlu0 0
    %2554 = vperm.xlu0 %2553, %v2382
    %v2555 = vpop.permute.xlu0 %2554
    %2556 = vset.pattern.permute.xlu0 0
    %2557 = vperm.xlu0 %2556, %v2383
    %v2558 = vpop.permute.xlu0 %2557
    %v2559 = vlaneseq
    %v2560 = vshrl.u32 %v2559, 7
    %v2561 = vsub.s32 %v560, %v2560
    %v2562 = vrot.slane %v2537, %v2561
    %v2563 = vlaneseq
    %v2564 = vshrl.u32 %v2563, 7
    %v2565 = vsub.s32 %v560, %v2564
    %v2566 = vrot.slane %v2540, %v2565
    %v2567 = vlaneseq
    %v2568 = vshrl.u32 %v2567, 7
    %v2569 = vsub.s32 %v560, %v2568
    %v2570 = vrot.slane %v2543, %v2569
    %v2571 = vlaneseq
    %v2572 = vshrl.u32 %v2571, 7
    %v2573 = vsub.s32 %v560, %v2572
    %v2574 = vrot.slane %v2546, %v2573
    %v2575 = vlaneseq
    %v2576 = vshrl.u32 %v2575, 7
    %v2577 = vsub.s32 %v560, %v2576
    %v2578 = vrot.slane %v2549, %v2577
    %v2579 = vlaneseq
    %v2580 = vshrl.u32 %v2579, 7
    %v2581 = vsub.s32 %v560, %v2580
    %v2582 = vrot.slane %v2552, %v2581
    %v2583 = vlaneseq
    %v2584 = vshrl.u32 %v2583, 7
    %v2585 = vsub.s32 %v560, %v2584
    %v2586 = vrot.slane %v2555, %v2585
    %v2587 = vlaneseq
    %v2588 = vshrl.u32 %v2587, 7
    %v2589 = vsub.s32 %v560, %v2588
    %v2590 = vrot.slane %v2558, %v2589
    %v2591 = vsel %vm1974, %v2566, %v2562
    %v2592 = vsel %vm1976, %v2570, %v2591
    %v2593 = vsel %vm1978, %v2574, %v2592
    %v2594 = vsel %vm1980, %v2578, %v2593
    %v2595 = vsel %vm1982, %v2582, %v2594
    %v2596 = vsel %vm1984, %v2586, %v2595
    %v2597 = vsel %vm1986, %v2590, %v2596
    %v2598 = vsel %vm1997, %v2597, 0
    %2600 = vmatprep.subr.mxu0 0.0
    %2601 = vmatpush1.msra.mxu0 0.0
    %2602 = vmatprep.subr.mxu0 0.0
    %2603 = vmatpush1.msra.mxu0 0.0
    %2604 = vmatprep.subr.mxu0 0.0
    %2605 = vmatpush1.msra.mxu0 0.0
    %2606 = vmatprep.subr.mxu0 0.0
    %2607 = vmatpush1.msra.mxu0 0.0
    %2608 = vmatprep.subr.mxu0 0.0
    %2609 = vmatpush1.msra.mxu0 0.0
    %2610 = vmatprep.subr.mxu0 0.0
    %2611 = vmatpush1.msra.mxu0 0.0
    %2612 = vmatprep.subr.mxu0 0.0
    %2613 = vmatpush1.msra.mxu0 0.0
    %2614 = vmatprep.subr.mxu0 0.0
    %2615 = vmatpush1.msra.mxu0 0.0
    %2616 = vmatprep.subr.mxu0 0.0
    %2617 = vmatpush1.msra.mxu0 0.0
    %2618 = vmatprep.subr.mxu0 0.0
    %2619 = vmatpush1.msra.mxu0 0.0
    %2620 = vmatprep.subr.mxu0 0.0
    %2621 = vmatpush1.msra.mxu0 0.0
    %2622 = vmatprep.subr.mxu0 0.0
    %2623 = vmatpush1.msra.mxu0 0.0
    %2624 = vmatprep.subr.mxu0 0.0
    %2625 = vmatpush1.msra.mxu0 0.0
    %2626 = vmatprep.subr.mxu0 0.0
    %2627 = vmatpush1.msra.mxu0 0.0
    %2628 = vmatprep.subr.mxu0 0.0
    %2629 = vmatpush1.msra.mxu0 0.0
    %2630 = vmatprep.subr.mxu0 0.0
    %2631 = vmatpush1.msra.mxu0 %v556
    %2632 = vmatprep.subr.mxu0 0.0
    %2633 = vmatpush2.msra.mxu0 0.0
    %2634 = vmatprep.subr.mxu0 0.0
    %2635 = vmatpush2.msra.mxu0 0.0
    %2636 = vmatprep.subr.mxu0 0.0
    %2637 = vmatpush2.msra.mxu0 0.0
    %2638 = vmatprep.subr.mxu0 0.0
    %2639 = vmatpush2.msra.mxu0 0.0
    %2640 = vmatprep.subr.mxu0 0.0
    %2641 = vmatpush2.msra.mxu0 0.0
    %2642 = vmatprep.subr.mxu0 0.0
    %2643 = vmatpush2.msra.mxu0 0.0
    %2644 = vmatprep.subr.mxu0 0.0
    %2645 = vmatpush2.msra.mxu0 0.0
    %2646 = vmatprep.subr.mxu0 0.0
    %2647 = vmatpush2.msra.mxu0 0.0
    %2648 = vmatprep.subr.mxu0 0.0
    %2649 = vmatpush2.msra.mxu0 0.0
    %2650 = vmatprep.subr.mxu0 0.0
    %2651 = vmatpush2.msra.mxu0 0.0
    %2652 = vmatprep.subr.mxu0 0.0
    %2653 = vmatpush2.msra.mxu0 0.0
    %2654 = vmatprep.subr.mxu0 0.0
    %2655 = vmatpush2.msra.mxu0 0.0
    %2656 = vmatprep.subr.mxu0 0.0
    %2657 = vmatpush2.msra.mxu0 0.0
    %2658 = vmatprep.subr.mxu0 0.0
    %2659 = vmatpush2.msra.mxu0 0.0
    %2660 = vmatprep.subr.mxu0 0.0
    %2661 = vmatpush2.msra.mxu0 0.0
    %2662 = vmatprep.subr.mxu0 0.0
    %2663 = vmatpush2.msra.mxu0 0.0
    %2664 = vmatprep.mubr.f32.mxu0 0.0
    %2665 = vmatmul.mubr.f32.gmra.mxu0 %v2598
    %v2666 = vpop.f32.mrf.mxu0
    %v2667 = vadd.f32 0.0, %v2666
    %v2668 = vpop.f32.mrf.mxu0
    %2669 = vdwg.mxu0
    %2672 = vrot.lane.b32.xlu0 %v2524, 16
    %v2673 = vpop.permute.xlu0 %2672
    %2674 = vrot.lane.b32.xlu0 %v2667, 16
    %v2675 = vpop.permute.xlu0 %2674
    %v2678 = vsel %vm847, %v555, %v2673
    %v2679 = vsel %vm847, %v556, %v2675
    %v2680 = vpack.c.bf16 %v2679, %v2678
    %v2681 = vpack.c.bf16 %v608, %v607
    %v2682 = vpack.c.bf16 %v610, %v609
    %v2684 = vlaneseq
    %v2685 = vshrl.u32 %v2684, 7
    %v2686 = vsub.s32 0, %v2685
    %v2687 = vrot.slane %v611, %v2686
    %vm2689 = vcmask 261120
    %v2691 = vsel %vm2689, %v2680, 0
    %2693 = vmatprep.subr.bf16.mxu0 0
    %2694 = vmatpush1.bf16.msra.mxu0 0
    %2695 = vmatprep.subr.bf16.mxu0 0
    %2696 = vmatpush1.bf16.msra.mxu0 0
    %2697 = vmatprep.subr.bf16.mxu0 0
    %2698 = vmatpush1.bf16.msra.mxu0 0
    %2699 = vmatprep.subr.bf16.mxu0 0
    %2700 = vmatpush1.bf16.msra.mxu0 0
    %2701 = vmatprep.subr.bf16.mxu0 0
    %2702 = vmatpush1.bf16.msra.mxu0 0
    %2703 = vmatprep.subr.bf16.mxu0 0
    %2704 = vmatpush1.bf16.msra.mxu0 0
    %2705 = vmatprep.subr.bf16.mxu0 0
    %2706 = vmatpush1.bf16.msra.mxu0 %v2682
    %2707 = vmatprep.subr.bf16.mxu0 0
    %2708 = vmatpush1.bf16.msra.mxu0 %v2681
    %2709 = vmatprep.subr.bf16.mxu0 0
    %2710 = vmatpush2.bf16.msra.mxu0 0
    %2711 = vmatprep.subr.bf16.mxu0 0
    %2712 = vmatpush2.bf16.msra.mxu0 0
    %2713 = vmatprep.subr.bf16.mxu0 0
    %2714 = vmatpush2.bf16.msra.mxu0 0
    %2715 = vmatprep.subr.bf16.mxu0 0
    %2716 = vmatpush2.bf16.msra.mxu0 0
    %2717 = vmatprep.subr.bf16.mxu0 0
    %2718 = vmatpush2.bf16.msra.mxu0 0
    %2719 = vmatprep.subr.bf16.mxu0 0
    %2720 = vmatpush2.bf16.msra.mxu0 0
    %2721 = vmatprep.subr.bf16.mxu0 0
    %2722 = vmatpush2.bf16.msra.mxu0 0
    %2723 = vmatprep.subr.bf16.mxu0 0
    %2724 = vmatpush2.bf16.msra.mxu0 0
    %2725 = vmatprep.mubr.bf16.mxu0 0
    %2726 = vmatmul.mubr.bf16.gmra.mxu0 %v2691
    %v2727 = vpop.f32.mrf.mxu0
    %v2728 = vadd.f32 %v2687, %v2727
    %v2729 = vpop.f32.mrf.mxu0
    %v2730 = vpop.f32.mrf.mxu0
    %v2731 = vadd.f32 %v2687, %v2730
    %v2732 = vpop.f32.mrf.mxu0
    %2733 = vdwg.mxu0
    %vm2734 = vcmask 523264
    %v2735 = vsel %vm2734, %v2728, 0.0
    %v2736 = vsel %vm2734, %v2731, 0.0
    %v2737 = vadd.f32 %v2735, %v2736
    %v2738 = vrot.slane %v2737, 4
    %v2739 = vadd.f32 %v2737, %v2738
    %v2740 = vrot.slane %v2739, 2
    %v2741 = vadd.f32 %v2739, %v2740
    %v2742 = vrot.slane %v2741, 1
    %v2743 = vadd.f32 %v2741, %v2742
    %v2744 = vrcp.pop 16.0
    %v2745 = vmul.f32 %v2743, %v2744
    %v2746 = vmul.f32 %v2728, %v2728
    %v2747 = vmul.f32 %v2731, %v2731
    %v2748 = vsel %vm2734, %v2746, 0.0
    %v2749 = vsel %vm2734, %v2747, 0.0
    %v2750 = vadd.f32 %v2748, %v2749
    %v2751 = vrot.slane %v2750, 4
    %v2752 = vadd.f32 %v2750, %v2751
    %v2753 = vrot.slane %v2752, 2
    %v2754 = vadd.f32 %v2752, %v2753
    %v2755 = vrot.slane %v2754, 1
    %v2756 = vadd.f32 %v2754, %v2755
    %v2757 = vmul.f32 %v2756, %v2744
    %v2758 = vmul.f32 %v2745, %v2745
    %v2759 = vsub.f32 %v2757, %v2758
    %v2760 = vmax.f32 %v2759, 0.0
    %v2761 = vsub.f32 %v2728, %v2745
    %v2762 = vsub.f32 %v2731, %v2745
    %v2763 = vadd.f32 %v2760, 1e-05
    %v2764 = vrsqrt.pop %v2763
    %v2765 = vmul.f32 %v2761, %v2764
    %v2766 = vmul.f32 %v2762, %v2764
    %v2768 = vlaneseq
    %v2769 = vshrl.u32 %v2768, 7
    %v2770 = vsub.s32 0, %v2769
    %v2771 = vrot.slane %v612, %v2770
    %v2773 = vmul.f32 %v2765, %v2771
    %v2774 = vmul.f32 %v2766, %v2771
    %v2776 = vlaneseq
    %v2777 = vshrl.u32 %v2776, 7
    %v2778 = vsub.s32 0, %v2777
    %v2779 = vrot.slane %v613, %v2778
    %v2781 = vadd.f32 %v2773, %v2779
    %v2782 = vadd.f32 %v2774, %v2779
    %vm2783 = vcmp.ge.f32.partialorder %v2781, 0.0
    %vm2784 = vcmp.ge.f32.partialorder %v2782, 0.0
    %v2785 = vmul.f32 %v2781, 0.01
    %v2786 = vmul.f32 %v2782, 0.01
    %v2787 = vsel %vm2783, %v2781, %v2785
    %v2788 = vsel %vm2784, %v2782, %v2786
    %2791 = vrot.lane.b32.xlu0 %v2787, 16
    %v2792 = vpop.permute.xlu0 %2791
    %2793 = vrot.lane.b32.xlu0 %v2788, 16
    %v2794 = vpop.permute.xlu0 %2793
    %v2797 = vsel %vm847, %v555, %v2792
    %v2798 = vsel %vm847, %v556, %v2794
    %v2799 = vld [vmem:[#allocation19] sm:$0xff]
    %v2800 = vld [vmem:[#allocation19 + $0x8] sm:$0xff]
    %v2801 = vld [vmem:[#allocation19 + $0x10] sm:$0xff]
    %v2802 = vld [vmem:[#allocation19 + $0x18] sm:$0xff]
    %v2803 = vld [vmem:[#allocation19 + $0x20] sm:$0xff]
    %v2804 = vld [vmem:[#allocation19 + $0x28] sm:$0xff]
    %v2805 = vld [vmem:[#allocation19 + $0x30] sm:$0xff]
    %v2806 = vld [vmem:[#allocation19 + $0x38] sm:$0xff]
    %v2807 = vld [vmem:[#allocation19 + $0x40] sm:$0xff]
    %v2808 = vld [vmem:[#allocation19 + $0x48] sm:$0xff]
    %v2809 = vld [vmem:[#allocation19 + $0x50] sm:$0xff]
    %v2810 = vld [vmem:[#allocation19 + $0x58] sm:$0xff]
    %v2811 = vld [vmem:[#allocation19 + $0x60] sm:$0xff]
    %v2812 = vld [vmem:[#allocation19 + $0x68] sm:$0xff]
    %v2813 = vld [vmem:[#allocation19 + $0x70] sm:$0xff]
    %v2814 = vld [vmem:[#allocation19 + $0x78] sm:$0xff]
    %v2815 = vld [vmem:[#allocation19 + $0x80] sm:$0xff]
    %v2816 = vld [vmem:[#allocation19 + $0x88] sm:$0xff]
    %v2817 = vld [vmem:[#allocation19 + $0x90] sm:$0xff]
    %v2818 = vld [vmem:[#allocation19 + $0x98] sm:$0xff]
    %v2819 = vld [vmem:[#allocation20] sm:$0x3]
    %v2820 = vld [vmem:[#allocation22] sm:$0x3]
    %v2821 = vld [vmem:[#allocation23] sm:$0x3]
    %v2822 = vld [vmem:[#allocation25] sm:$0xff]
    %v2823 = vld [vmem:[#allocation25 + $0x8] sm:$0xff]
    %v2824 = vld [vmem:[#allocation25 + $0x10] sm:$0xff]
    %v2825 = vld [vmem:[#allocation25 + $0x18] sm:$0xff]
    %v2826 = vld [vmem:[#allocation25 + $0x20] sm:$0xff]
    %v2827 = vld [vmem:[#allocation25 + $0x28] sm:$0xff]
    %v2828 = vld [vmem:[#allocation25 + $0x30] sm:$0xff]
    %v2829 = vld [vmem:[#allocation25 + $0x38] sm:$0xff]
    %v2830 = vld [vmem:[#allocation25 + $0x40] sm:$0xff]
    %v2831 = vld [vmem:[#allocation25 + $0x48] sm:$0xff]
    %v2832 = vld [vmem:[#allocation25 + $0x50] sm:$0xff]
    %v2833 = vld [vmem:[#allocation25 + $0x58] sm:$0xff]
    %v2834 = vld [vmem:[#allocation25 + $0x60] sm:$0xff]
    %v2835 = vld [vmem:[#allocation25 + $0x68] sm:$0xff]
    %v2836 = vld [vmem:[#allocation25 + $0x70] sm:$0xff]
    %v2837 = vld [vmem:[#allocation25 + $0x78] sm:$0xff]
    %v2838 = vld [vmem:[#allocation25 + $0x80] sm:$0xff]
    %v2839 = vld [vmem:[#allocation25 + $0x88] sm:$0xff]
    %v2840 = vld [vmem:[#allocation25 + $0x90] sm:$0xff]
    %v2841 = vld [vmem:[#allocation25 + $0x98] sm:$0xff]
    %v2842 = vld [vmem:[#allocation25 + $0xa0] sm:$0xff]
    %v2843 = vld [vmem:[#allocation25 + $0xa8] sm:$0xff]
    %v2844 = vld [vmem:[#allocation25 + $0xb0] sm:$0xff]
    %v2845 = vld [vmem:[#allocation25 + $0xb8] sm:$0xff]
    %v2846 = vld [vmem:[#allocation25 + $0xc0] sm:$0xff]
    %v2847 = vld [vmem:[#allocation25 + $0xc8] sm:$0xff]
    %v2848 = vld [vmem:[#allocation25 + $0xd0] sm:$0xff]
    %v2849 = vld [vmem:[#allocation25 + $0xd8] sm:$0xff]
    %v2850 = vld [vmem:[#allocation25 + $0xe0] sm:$0xff]
    %v2851 = vld [vmem:[#allocation25 + $0xe8] sm:$0xff]
    %v2852 = vld [vmem:[#allocation25 + $0xf0] sm:$0xff]
    %v2853 = vld [vmem:[#allocation25 + $0xf8] sm:$0xff]
    %v2854 = vld [vmem:[#allocation26] sm:$0x1]
    %v2855 = vld [vmem:[#allocation28] sm:$0x1]
    %v2856 = vld [vmem:[#allocation29] sm:$0x1]
    %v2857 = vld [vmem:[#allocation31] sm:$0x1]
    %v2858 = vld [vmem:[#allocation3] sm:$0x1]
    %v2859 = vld [vmem:[%s51] sm:$0xff]
    %v2860 = vld [vmem:[%s51 + $0x8] sm:$0xff]
    %v2861 = vld [vmem:[%s51 + $0x10] sm:$0xff]
    %v2862 = vld [vmem:[%s51 + $0x18] sm:$0xff]
    %v2863 = vld [vmem:[%s51 + $0x20] sm:$0xff]
    %v2864 = vld [vmem:[%s51 + $0x28] sm:$0xff]
    %v2865 = vld [vmem:[%s51 + $0x30] sm:$0xff]
    %v2866 = vld [vmem:[%s51 + $0x38] sm:$0xff]
    %v2867 = vld [vmem:[%s51 + $0x40] sm:$0xff]
    %v2868 = vld [vmem:[%s51 + $0x48] sm:$0xff]
    %v2869 = vld [vmem:[%s51 + $0x50] sm:$0xff]
    %v2870 = vld [vmem:[%s51 + $0x58] sm:$0xff]
    %v2871 = vld [vmem:[%s51 + $0x60] sm:$0xff]
    %v2872 = vld [vmem:[%s51 + $0x68] sm:$0xff]
    %v2873 = vld [vmem:[%s51 + $0x70] sm:$0xff]
    %v2874 = vld [vmem:[%s51 + $0x78] sm:$0xff]
    %v2875 = vld [vmem:[%s51 + $0x80] sm:$0xff]
    %v2876 = vld [vmem:[%s51 + $0x88] sm:$0xff]
    %v2877 = vld [vmem:[%s51 + $0x90] sm:$0xff]
    %v2878 = vld [vmem:[%s51 + $0x98] sm:$0xff]
    %v2879 = vld [vmem:[#allocation32] sm:$0x1]
    %v2880 = vld [vmem:[#allocation34] sm:$0x1]
    %v2881 = vld [vmem:[#allocation35] sm:$0x1]
    %v2884 = vcombine.high %v2797, %v2797
    %v2886 = vunpack.c.l.s4 1966171168
    %v2887 = vunpack.c.0.s8 %v2886
    %v2888 = vlaneseq
    %v2889 = vshrl.u32 %v2888, 7
    %v2890 = vsub.s32 %v2887, %v2889
    %v2891 = vrot.slane %v2797, %v2890
    %v2893 = vunpack.c.l.s4 1966171168
    %v2894 = vunpack.c.0.s8 %v2893
    %v2895 = vlaneseq
    %v2896 = vshrl.u32 %v2895, 7
    %v2897 = vsub.s32 %v2894, %v2896
    %v2898 = vrot.slane %v2884, %v2897
    %v2899 = vcombine.high %v2891, %v2891
    %v2900 = vcombine.high %v2898, %v2898
    %v2902 = vunpack.c.l.s4 1966171168
    %v2903 = vunpack.c.0.s8 %v2902
    %v2904 = vlaneseq
    %v2905 = vshrl.u32 %v2904, 7
    %v2906 = vsub.s32 %v2903, %v2905
    %v2907 = vrot.slane %v2891, %v2906
    %v2909 = vunpack.c.l.s4 1966171168
    %v2910 = vunpack.c.0.s8 %v2909
    %v2911 = vlaneseq
    %v2912 = vshrl.u32 %v2911, 7
    %v2913 = vsub.s32 %v2910, %v2912
    %v2914 = vrot.slane %v2898, %v2913
    %v2916 = vunpack.c.l.s4 1966171168
    %v2917 = vunpack.c.0.s8 %v2916
    %v2918 = vlaneseq
    %v2919 = vshrl.u32 %v2918, 7
    %v2920 = vsub.s32 %v2917, %v2919
    %v2921 = vrot.slane %v2899, %v2920
    %v2923 = vunpack.c.l.s4 1966171168
    %v2924 = vunpack.c.0.s8 %v2923
    %v2925 = vlaneseq
    %v2926 = vshrl.u32 %v2925, 7
    %v2927 = vsub.s32 %v2924, %v2926
    %v2928 = vrot.slane %v2900, %v2927
    %v2929 = vcombine.high %v2907, %v2907
    %v2930 = vcombine.high %v2914, %v2914
    %v2931 = vcombine.high %v2921, %v2921
    %v2932 = vcombine.high %v2928, %v2928
    %v2933 = vcombine.high %v2798, %v2798
    %v2935 = vunpack.c.l.s4 1966171168
    %v2936 = vunpack.c.0.s8 %v2935
    %v2937 = vlaneseq
    %v2938 = vshrl.u32 %v2937, 7
    %v2939 = vsub.s32 %v2936, %v2938
    %v2940 = vrot.slane %v2798, %v2939
    %v2942 = vunpack.c.l.s4 1966171168
    %v2943 = vunpack.c.0.s8 %v2942
    %v2944 = vlaneseq
    %v2945 = vshrl.u32 %v2944, 7
    %v2946 = vsub.s32 %v2943, %v2945
    %v2947 = vrot.slane %v2933, %v2946
    %v2948 = vcombine.high %v2940, %v2940
    %v2949 = vcombine.high %v2947, %v2947
    %v2951 = vunpack.c.l.s4 1966171168
    %v2952 = vunpack.c.0.s8 %v2951
    %v2953 = vlaneseq
    %v2954 = vshrl.u32 %v2953, 7
    %v2955 = vsub.s32 %v2952, %v2954
    %v2956 = vrot.slane %v2940, %v2955
    %v2958 = vunpack.c.l.s4 1966171168
    %v2959 = vunpack.c.0.s8 %v2958
    %v2960 = vlaneseq
    %v2961 = vshrl.u32 %v2960, 7
    %v2962 = vsub.s32 %v2959, %v2961
    %v2963 = vrot.slane %v2947, %v2962
    %v2965 = vunpack.c.l.s4 1966171168
    %v2966 = vunpack.c.0.s8 %v2965
    %v2967 = vlaneseq
    %v2968 = vshrl.u32 %v2967, 7
    %v2969 = vsub.s32 %v2966, %v2968
    %v2970 = vrot.slane %v2948, %v2969
    %v2972 = vunpack.c.l.s4 1966171168
    %v2973 = vunpack.c.0.s8 %v2972
    %v2974 = vlaneseq
    %v2975 = vshrl.u32 %v2974, 7
    %v2976 = vsub.s32 %v2973, %v2975
    %v2977 = vrot.slane %v2949, %v2976
    %v2978 = vcombine.high %v2956, %v2956
    %v2979 = vcombine.high %v2963, %v2963
    %v2980 = vcombine.high %v2970, %v2970
    %v2981 = vcombine.high %v2977, %v2977
    %v2982 = vlaneseq
    %v2983 = vshrl.u32 %v2982, 7
    %v2984 = vsub.s32 0, %v2983
    %v2985 = vrot.slane %v2907, %v2984
    %v2986 = vlaneseq
    %v2987 = vshrl.u32 %v2986, 7
    %v2988 = vsub.s32 0, %v2987
    %v2989 = vrot.slane %v2921, %v2988
    %v2990 = vlaneseq
    %v2991 = vshrl.u32 %v2990, 7
    %v2992 = vsub.s32 0, %v2991
    %v2993 = vrot.slane %v2929, %v2992
    %v2994 = vlaneseq
    %v2995 = vshrl.u32 %v2994, 7
    %v2996 = vsub.s32 0, %v2995
    %v2997 = vrot.slane %v2931, %v2996
    %v2998 = vlaneseq
    %v2999 = vshrl.u32 %v2998, 7
    %v3000 = vsub.s32 0, %v2999
    %v3001 = vrot.slane %v2914, %v3000
    %v3002 = vlaneseq
    %v3003 = vshrl.u32 %v3002, 7
    %v3004 = vsub.s32 0, %v3003
    %v3005 = vrot.slane %v2928, %v3004
    %v3006 = vlaneseq
    %v3007 = vshrl.u32 %v3006, 7
    %v3008 = vsub.s32 0, %v3007
    %v3009 = vrot.slane %v2930, %v3008
    %v3010 = vlaneseq
    %v3011 = vshrl.u32 %v3010, 7
    %v3012 = vsub.s32 0, %v3011
    %v3013 = vrot.slane %v2932, %v3012
    %v3014 = vlaneseq
    %v3015 = vshrl.u32 %v3014, 7
    %v3016 = vsub.s32 0, %v3015
    %v3017 = vrot.slane %v2956, %v3016
    %v3018 = vlaneseq
    %v3019 = vshrl.u32 %v3018, 7
    %v3020 = vsub.s32 0, %v3019
    %v3021 = vrot.slane %v2970, %v3020
    %v3022 = vlaneseq
    %v3023 = vshrl.u32 %v3022, 7
    %v3024 = vsub.s32 0, %v3023
    %v3025 = vrot.slane %v2978, %v3024
    %v3026 = vlaneseq
    %v3027 = vshrl.u32 %v3026, 7
    %v3028 = vsub.s32 0, %v3027
    %v3029 = vrot.slane %v2980, %v3028
    %v3030 = vlaneseq
    %v3031 = vshrl.u32 %v3030, 7
    %v3032 = vsub.s32 0, %v3031
    %v3033 = vrot.slane %v2963, %v3032
    %v3034 = vlaneseq
    %v3035 = vshrl.u32 %v3034, 7
    %v3036 = vsub.s32 0, %v3035
    %v3037 = vrot.slane %v2977, %v3036
    %v3038 = vlaneseq
    %v3039 = vshrl.u32 %v3038, 7
    %v3040 = vsub.s32 0, %v3039
    %v3041 = vrot.slane %v2979, %v3040
    %v3042 = vlaneseq
    %v3043 = vshrl.u32 %v3042, 7
    %v3044 = vsub.s32 0, %v3043
    %v3045 = vrot.slane %v2981, %v3044
    %v3062 = vsub.f32 %v2985, %v2797
    %v3063 = vsub.f32 %v2989, %v2797
    %v3064 = vsub.f32 %v2993, %v2797
    %v3065 = vsub.f32 %v2997, %v2797
    %v3066 = vsub.f32 %v3001, %v2797
    %v3067 = vsub.f32 %v3005, %v2797
    %v3068 = vsub.f32 %v3009, %v2797
    %v3069 = vsub.f32 %v3013, %v2797
    %v3070 = vsub.f32 %v3017, %v2798
    %v3071 = vsub.f32 %v3021, %v2798
    %v3072 = vsub.f32 %v3025, %v2798
    %v3073 = vsub.f32 %v3029, %v2798
    %v3074 = vsub.f32 %v3033, %v2798
    %v3075 = vsub.f32 %v3037, %v2798
    %v3076 = vsub.f32 %v3041, %v2798
    %v3077 = vsub.f32 %v3045, %v2798
    %v3078 = vand.u32 2147483647, %v3062
    %v3079 = vand.u32 2147483647, %v3063
    %v3080 = vand.u32 2147483647, %v3064
    %v3081 = vand.u32 2147483647, %v3065
    %v3082 = vand.u32 2147483647, %v3066
    %v3083 = vand.u32 2147483647, %v3067
    %v3084 = vand.u32 2147483647, %v3068
    %v3085 = vand.u32 2147483647, %v3069
    %v3086 = vand.u32 2147483647, %v3070
    %v3087 = vand.u32 2147483647, %v3071
    %v3088 = vand.u32 2147483647, %v3072
    %v3089 = vand.u32 2147483647, %v3073
    %v3090 = vand.u32 2147483647, %v3074
    %v3091 = vand.u32 2147483647, %v3075
    %v3092 = vand.u32 2147483647, %v3076
    %v3093 = vand.u32 2147483647, %v3077
    %v3094 = vpack.c.bf16 %v3079, %v3078
    %v3095 = vpack.c.bf16 %v3081, %v3080
    %v3096 = vpack.c.bf16 %v3083, %v3082
    %v3097 = vpack.c.bf16 %v3085, %v3084
    %v3098 = vpack.c.bf16 %v3087, %v3086
    %v3099 = vpack.c.bf16 %v3089, %v3088
    %v3100 = vpack.c.bf16 %v3091, %v3090
    %v3101 = vpack.c.bf16 %v3093, %v3092
    %v3102 = vpack.c.bf16 %v2801, %v2799
    %v3103 = vpack.c.bf16 %v2802, %v2800
    %v3104 = vpack.c.bf16 %v2805, %v2803
    %v3105 = vpack.c.bf16 %v2806, %v2804
    %v3106 = vpack.c.bf16 %v2809, %v2807
    %v3107 = vpack.c.bf16 %v2810, %v2808
    %v3108 = vpack.c.bf16 %v2813, %v2811
    %v3109 = vpack.c.bf16 %v2814, %v2812
    %v3110 = vpack.c.bf16 %v2817, %v2815
    %v3111 = vpack.c.bf16 %v2818, %v2816
    %v3113 = vlaneseq
    %v3114 = vshrl.u32 %v3113, 7
    %v3115 = vsub.s32 0, %v3114
    %v3116 = vrot.slane %v2819, %v3115
    %v3117 = vlaneseq
    %v3118 = vshrl.u32 %v3117, 7
    %v3119 = vsub.s32 1, %v3118
    %v3120 = vrot.slane %v2819, %v3119
    %vm3123 = vcmask 654336
    %v3125 = vsel %vm3123, %v3094, 0
    %v3128 = vsel %vm3123, %v3095, 0
    %v3131 = vsel %vm3123, %v3096, 0
    %v3134 = vsel %vm3123, %v3097, 0
    %v3137 = vsel %vm3123, %v3098, 0
    %v3140 = vsel %vm3123, %v3099, 0
    %v3143 = vsel %vm3123, %v3100, 0
    %v3146 = vsel %vm3123, %v3101, 0
    %3148 = vmatprep.subr.bf16.mxu0 0
    %3149 = vmatpush1.bf16.msra.mxu0 0
    %3150 = vmatprep.subr.bf16.mxu0 0
    %3151 = vmatpush1.bf16.msra.mxu0 0
    %3152 = vmatprep.subr.bf16.mxu0 0
    %3153 = vmatpush1.bf16.msra.mxu0 0
    %3154 = vmatprep.subr.bf16.mxu0 %v3111
    %3155 = vmatpush1.bf16.msra.mxu0 %v3110
    %3156 = vmatprep.subr.bf16.mxu0 %v3109
    %3157 = vmatpush1.bf16.msra.mxu0 %v3108
    %3158 = vmatprep.subr.bf16.mxu0 %v3107
    %3159 = vmatpush1.bf16.msra.mxu0 %v3106
    %3160 = vmatprep.subr.bf16.mxu0 %v3105
    %3161 = vmatpush1.bf16.msra.mxu0 %v3104
    %3162 = vmatprep.subr.bf16.mxu0 %v3103
    %3163 = vmatpush1.bf16.msra.mxu0 %v3102
    %3164 = vmatprep.subr.bf16.mxu0 0
    %3165 = vmatpush2.bf16.msra.mxu0 0
    %3166 = vmatprep.subr.bf16.mxu0 0
    %3167 = vmatpush2.bf16.msra.mxu0 0
    %3168 = vmatprep.subr.bf16.mxu0 0
    %3169 = vmatpush2.bf16.msra.mxu0 0
    %3170 = vmatprep.subr.bf16.mxu0 0
    %3171 = vmatpush2.bf16.msra.mxu0 0
    %3172 = vmatprep.subr.bf16.mxu0 0
    %3173 = vmatpush2.bf16.msra.mxu0 0
    %3174 = vmatprep.subr.bf16.mxu0 0
    %3175 = vmatpush2.bf16.msra.mxu0 0
    %3176 = vmatprep.subr.bf16.mxu0 0
    %3177 = vmatpush2.bf16.msra.mxu0 0
    %3178 = vmatprep.subr.bf16.mxu0 0
    %3179 = vmatpush2.bf16.msra.mxu0 0
    %3180 = vmatprep.mubr.bf16.mxu0 0
    %3181 = vmatmul.mubr.bf16.gmra.mxu0 %v3125
    %v3182 = vpop.f32.mrf.mxu0
    %v3183 = vadd.f32 %v3116, %v3182
    %v3184 = vpop.f32.mrf.mxu0
    %v3185 = vadd.f32 %v3120, %v3184
    %v3186 = vpop.f32.mrf.mxu0
    %v3187 = vadd.f32 %v3116, %v3186
    %v3188 = vpop.f32.mrf.mxu0
    %v3189 = vadd.f32 %v3120, %v3188
    %3190 = vmatprep.mubr.bf16.mxu0 0
    %3191 = vmatmul.mubr.bf16.gmra.mxu0 %v3128
    %v3192 = vpop.f32.mrf.mxu0
    %v3193 = vadd.f32 %v3116, %v3192
    %v3194 = vpop.f32.mrf.mxu0
    %v3195 = vadd.f32 %v3120, %v3194
    %v3196 = vpop.f32.mrf.mxu0
    %v3197 = vadd.f32 %v3116, %v3196
    %v3198 = vpop.f32.mrf.mxu0
    %v3199 = vadd.f32 %v3120, %v3198
    %3200 = vmatprep.mubr.bf16.mxu0 0
    %3201 = vmatmul.mubr.bf16.gmra.mxu0 %v3131
    %v3202 = vpop.f32.mrf.mxu0
    %v3203 = vadd.f32 %v3116, %v3202
    %v3204 = vpop.f32.mrf.mxu0
    %v3205 = vadd.f32 %v3120, %v3204
    %v3206 = vpop.f32.mrf.mxu0
    %v3207 = vadd.f32 %v3116, %v3206
    %v3208 = vpop.f32.mrf.mxu0
    %v3209 = vadd.f32 %v3120, %v3208
    %3210 = vmatprep.mubr.bf16.mxu0 0
    %3211 = vmatmul.mubr.bf16.gmra.mxu0 %v3134
    %v3212 = vpop.f32.mrf.mxu0
    %v3213 = vadd.f32 %v3116, %v3212
    %v3214 = vpop.f32.mrf.mxu0
    %v3215 = vadd.f32 %v3120, %v3214
    %v3216 = vpop.f32.mrf.mxu0
    %v3217 = vadd.f32 %v3116, %v3216
    %v3218 = vpop.f32.mrf.mxu0
    %v3219 = vadd.f32 %v3120, %v3218
    %3220 = vmatprep.mubr.bf16.mxu0 0
    %3221 = vmatmul.mubr.bf16.gmra.mxu0 %v3137
    %v3222 = vpop.f32.mrf.mxu0
    %v3223 = vadd.f32 %v3116, %v3222
    %v3224 = vpop.f32.mrf.mxu0
    %v3225 = vadd.f32 %v3120, %v3224
    %v3226 = vpop.f32.mrf.mxu0
    %v3227 = vadd.f32 %v3116, %v3226
    %v3228 = vpop.f32.mrf.mxu0
    %v3229 = vadd.f32 %v3120, %v3228
    %3230 = vmatprep.mubr.bf16.mxu0 0
    %3231 = vmatmul.mubr.bf16.gmra.mxu0 %v3140
    %v3232 = vpop.f32.mrf.mxu0
    %v3233 = vadd.f32 %v3116, %v3232
    %v3234 = vpop.f32.mrf.mxu0
    %v3235 = vadd.f32 %v3120, %v3234
    %v3236 = vpop.f32.mrf.mxu0
    %v3237 = vadd.f32 %v3116, %v3236
    %v3238 = vpop.f32.mrf.mxu0
    %v3239 = vadd.f32 %v3120, %v3238
    %3240 = vmatprep.mubr.bf16.mxu0 0
    %3241 = vmatmul.mubr.bf16.gmra.mxu0 %v3143
    %v3242 = vpop.f32.mrf.mxu0
    %v3243 = vadd.f32 %v3116, %v3242
    %v3244 = vpop.f32.mrf.mxu0
    %v3245 = vadd.f32 %v3120, %v3244
    %v3246 = vpop.f32.mrf.mxu0
    %v3247 = vadd.f32 %v3116, %v3246
    %v3248 = vpop.f32.mrf.mxu0
    %v3249 = vadd.f32 %v3120, %v3248
    %3250 = vmatprep.mubr.bf16.mxu0 0
    %3251 = vmatmul.mubr.bf16.gmra.mxu0 %v3146
    %v3252 = vpop.f32.mrf.mxu0
    %v3253 = vadd.f32 %v3116, %v3252
    %v3254 = vpop.f32.mrf.mxu0
    %v3255 = vadd.f32 %v3120, %v3254
    %v3256 = vpop.f32.mrf.mxu0
    %v3257 = vadd.f32 %v3116, %v3256
    %v3258 = vpop.f32.mrf.mxu0
    %v3259 = vadd.f32 %v3120, %v3258
    %3260 = vdwg.mxu0
    %v3261 = vadd.f32 %v3183, %v3187
    %v3262 = vadd.f32 %v3261, %v3193
    %v3263 = vadd.f32 %v3262, %v3197
    %v3264 = vadd.f32 %v3263, %v3203
    %v3265 = vadd.f32 %v3264, %v3207
    %v3266 = vadd.f32 %v3265, %v3213
    %v3267 = vadd.f32 %v3266, %v3217
    %v3268 = vadd.f32 %v3267, %v3223
    %v3269 = vadd.f32 %v3268, %v3227
    %v3270 = vadd.f32 %v3269, %v3233
    %v3271 = vadd.f32 %v3270, %v3237
    %v3272 = vadd.f32 %v3271, %v3243
    %v3273 = vadd.f32 %v3272, %v3247
    %v3274 = vadd.f32 %v3273, %v3253
    %v3275 = vadd.f32 %v3274, %v3257
    %v3276 = vrot.slane %v3275, 4
    %v3277 = vadd.f32 %v3275, %v3276
    %v3278 = vrot.slane %v3277, 2
    %v3279 = vadd.f32 %v3277, %v3278
    %v3280 = vrot.slane %v3279, 1
    %v3281 = vadd.f32 %v3279, %v3280
    %v3282 = vadd.f32 %v3185, %v3189
    %v3283 = vadd.f32 %v3282, %v3195
    %v3284 = vadd.f32 %v3283, %v3199
    %v3285 = vadd.f32 %v3284, %v3205
    %v3286 = vadd.f32 %v3285, %v3209
    %v3287 = vadd.f32 %v3286, %v3215
    %v3288 = vadd.f32 %v3287, %v3219
    %v3289 = vadd.f32 %v3288, %v3225
    %v3290 = vadd.f32 %v3289, %v3229
    %v3291 = vadd.f32 %v3290, %v3235
    %v3292 = vadd.f32 %v3291, %v3239
    %v3293 = vadd.f32 %v3292, %v3245
    %v3294 = vadd.f32 %v3293, %v3249
    %v3295 = vadd.f32 %v3294, %v3255
    %v3296 = vadd.f32 %v3295, %v3259
    %v3297 = vrot.slane %v3296, 4
    %v3298 = vadd.f32 %v3296, %v3297
    %v3299 = vrot.slane %v3298, 2
    %v3300 = vadd.f32 %v3298, %v3299
    %v3301 = vrot.slane %v3300, 1
    %v3302 = vadd.f32 %v3300, %v3301
    %v3303 = vmul.f32 %v3281, %v1027
    %v3304 = vmul.f32 %v3302, %v1027
    %v3305 = vmul.f32 %v3183, %v3183
    %v3306 = vmul.f32 %v3185, %v3185
    %v3307 = vmul.f32 %v3187, %v3187
    %v3308 = vmul.f32 %v3189, %v3189
    %v3309 = vmul.f32 %v3193, %v3193
    %v3310 = vmul.f32 %v3195, %v3195
    %v3311 = vmul.f32 %v3197, %v3197
    %v3312 = vmul.f32 %v3199, %v3199
    %v3313 = vmul.f32 %v3203, %v3203
    %v3314 = vmul.f32 %v3205, %v3205
    %v3315 = vmul.f32 %v3207, %v3207
    %v3316 = vmul.f32 %v3209, %v3209
    %v3317 = vmul.f32 %v3213, %v3213
    %v3318 = vmul.f32 %v3215, %v3215
    %v3319 = vmul.f32 %v3217, %v3217
    %v3320 = vmul.f32 %v3219, %v3219
    %v3321 = vmul.f32 %v3223, %v3223
    %v3322 = vmul.f32 %v3225, %v3225
    %v3323 = vmul.f32 %v3227, %v3227
    %v3324 = vmul.f32 %v3229, %v3229
    %v3325 = vmul.f32 %v3233, %v3233
    %v3326 = vmul.f32 %v3235, %v3235
    %v3327 = vmul.f32 %v3237, %v3237
    %v3328 = vmul.f32 %v3239, %v3239
    %v3329 = vmul.f32 %v3243, %v3243
    %v3330 = vmul.f32 %v3245, %v3245
    %v3331 = vmul.f32 %v3247, %v3247
    %v3332 = vmul.f32 %v3249, %v3249
    %v3333 = vmul.f32 %v3253, %v3253
    %v3334 = vmul.f32 %v3255, %v3255
    %v3335 = vmul.f32 %v3257, %v3257
    %v3336 = vmul.f32 %v3259, %v3259
    %v3337 = vadd.f32 %v3305, %v3307
    %v3338 = vadd.f32 %v3337, %v3309
    %v3339 = vadd.f32 %v3338, %v3311
    %v3340 = vadd.f32 %v3339, %v3313
    %v3341 = vadd.f32 %v3340, %v3315
    %v3342 = vadd.f32 %v3341, %v3317
    %v3343 = vadd.f32 %v3342, %v3319
    %v3344 = vadd.f32 %v3343, %v3321
    %v3345 = vadd.f32 %v3344, %v3323
    %v3346 = vadd.f32 %v3345, %v3325
    %v3347 = vadd.f32 %v3346, %v3327
    %v3348 = vadd.f32 %v3347, %v3329
    %v3349 = vadd.f32 %v3348, %v3331
    %v3350 = vadd.f32 %v3349, %v3333
    %v3351 = vadd.f32 %v3350, %v3335
    %v3352 = vrot.slane %v3351, 4
    %v3353 = vadd.f32 %v3351, %v3352
    %v3354 = vrot.slane %v3353, 2
    %v3355 = vadd.f32 %v3353, %v3354
    %v3356 = vrot.slane %v3355, 1
    %v3357 = vadd.f32 %v3355, %v3356
    %v3358 = vadd.f32 %v3306, %v3308
    %v3359 = vadd.f32 %v3358, %v3310
    %v3360 = vadd.f32 %v3359, %v3312
    %v3361 = vadd.f32 %v3360, %v3314
    %v3362 = vadd.f32 %v3361, %v3316
    %v3363 = vadd.f32 %v3362, %v3318
    %v3364 = vadd.f32 %v3363, %v3320
    %v3365 = vadd.f32 %v3364, %v3322
    %v3366 = vadd.f32 %v3365, %v3324
    %v3367 = vadd.f32 %v3366, %v3326
    %v3368 = vadd.f32 %v3367, %v3328
    %v3369 = vadd.f32 %v3368, %v3330
    %v3370 = vadd.f32 %v3369, %v3332
    %v3371 = vadd.f32 %v3370, %v3334
    %v3372 = vadd.f32 %v3371, %v3336
    %v3373 = vrot.slane %v3372, 4
    %v3374 = vadd.f32 %v3372, %v3373
    %v3375 = vrot.slane %v3374, 2
    %v3376 = vadd.f32 %v3374, %v3375
    %v3377 = vrot.slane %v3376, 1
    %v3378 = vadd.f32 %v3376, %v3377
    %v3379 = vmul.f32 %v3357, %v1027
    %v3380 = vmul.f32 %v3378, %v1027
    %v3381 = vmul.f32 %v3303, %v3303
    %v3382 = vmul.f32 %v3304, %v3304
    %v3383 = vsub.f32 %v3379, %v3381
    %v3384 = vsub.f32 %v3380, %v3382
    %v3385 = vmax.f32 %v3383, 0.0
    %v3386 = vmax.f32 %v3384, 0.0
    %v3387 = vsub.f32 %v3183, %v3303
    %v3388 = vsub.f32 %v3185, %v3304
    %v3389 = vsub.f32 %v3187, %v3303
    %v3390 = vsub.f32 %v3189, %v3304
    %v3391 = vsub.f32 %v3193, %v3303
    %v3392 = vsub.f32 %v3195, %v3304
    %v3393 = vsub.f32 %v3197, %v3303
    %v3394 = vsub.f32 %v3199, %v3304
    %v3395 = vsub.f32 %v3203, %v3303
    %v3396 = vsub.f32 %v3205, %v3304
    %v3397 = vsub.f32 %v3207, %v3303
    %v3398 = vsub.f32 %v3209, %v3304
    %v3399 = vsub.f32 %v3213, %v3303
    %v3400 = vsub.f32 %v3215, %v3304
    %v3401 = vsub.f32 %v3217, %v3303
    %v3402 = vsub.f32 %v3219, %v3304
    %v3403 = vsub.f32 %v3223, %v3303
    %v3404 = vsub.f32 %v3225, %v3304
    %v3405 = vsub.f32 %v3227, %v3303
    %v3406 = vsub.f32 %v3229, %v3304
    %v3407 = vsub.f32 %v3233, %v3303
    %v3408 = vsub.f32 %v3235, %v3304
    %v3409 = vsub.f32 %v3237, %v3303
    %v3410 = vsub.f32 %v3239, %v3304
    %v3411 = vsub.f32 %v3243, %v3303
    %v3412 = vsub.f32 %v3245, %v3304
    %v3413 = vsub.f32 %v3247, %v3303
    %v3414 = vsub.f32 %v3249, %v3304
    %v3415 = vsub.f32 %v3253, %v3303
    %v3416 = vsub.f32 %v3255, %v3304
    %v3417 = vsub.f32 %v3257, %v3303
    %v3418 = vsub.f32 %v3259, %v3304
    %v3419 = vadd.f32 %v3385, 1e-05
    %v3420 = vadd.f32 %v3386, 1e-05
    %v3421 = vrsqrt.pop %v3419
    %v3422 = vrsqrt.pop %v3420
    %v3423 = vmul.f32 %v3387, %v3421
    %v3424 = vmul.f32 %v3388, %v3422
    %v3425 = vmul.f32 %v3389, %v3421
    %v3426 = vmul.f32 %v3390, %v3422
    %v3427 = vmul.f32 %v3391, %v3421
    %v3428 = vmul.f32 %v3392, %v3422
    %v3429 = vmul.f32 %v3393, %v3421
    %v3430 = vmul.f32 %v3394, %v3422
    %v3431 = vmul.f32 %v3395, %v3421
    %v3432 = vmul.f32 %v3396, %v3422
    %v3433 = vmul.f32 %v3397, %v3421
    %v3434 = vmul.f32 %v3398, %v3422
    %v3435 = vmul.f32 %v3399, %v3421
    %v3436 = vmul.f32 %v3400, %v3422
    %v3437 = vmul.f32 %v3401, %v3421
    %v3438 = vmul.f32 %v3402, %v3422
    %v3439 = vmul.f32 %v3403, %v3421
    %v3440 = vmul.f32 %v3404, %v3422
    %v3441 = vmul.f32 %v3405, %v3421
    %v3442 = vmul.f32 %v3406, %v3422
    %v3443 = vmul.f32 %v3407, %v3421
    %v3444 = vmul.f32 %v3408, %v3422
    %v3445 = vmul.f32 %v3409, %v3421
    %v3446 = vmul.f32 %v3410, %v3422
    %v3447 = vmul.f32 %v3411, %v3421
    %v3448 = vmul.f32 %v3412, %v3422
    %v3449 = vmul.f32 %v3413, %v3421
    %v3450 = vmul.f32 %v3414, %v3422
    %v3451 = vmul.f32 %v3415, %v3421
    %v3452 = vmul.f32 %v3416, %v3422
    %v3453 = vmul.f32 %v3417, %v3421
    %v3454 = vmul.f32 %v3418, %v3422
    %v3456 = vlaneseq
    %v3457 = vshrl.u32 %v3456, 7
    %v3458 = vsub.s32 0, %v3457
    %v3459 = vrot.slane %v2820, %v3458
    %v3460 = vlaneseq
    %v3461 = vshrl.u32 %v3460, 7
    %v3462 = vsub.s32 1, %v3461
    %v3463 = vrot.slane %v2820, %v3462
    %v3466 = vmul.f32 %v3423, %v3459
    %v3467 = vmul.f32 %v3424, %v3463
    %v3468 = vmul.f32 %v3425, %v3459
    %v3469 = vmul.f32 %v3426, %v3463
    %v3470 = vmul.f32 %v3427, %v3459
    %v3471 = vmul.f32 %v3428, %v3463
    %v3472 = vmul.f32 %v3429, %v3459
    %v3473 = vmul.f32 %v3430, %v3463
    %v3474 = vmul.f32 %v3431, %v3459
    %v3475 = vmul.f32 %v3432, %v3463
    %v3476 = vmul.f32 %v3433, %v3459
    %v3477 = vmul.f32 %v3434, %v3463
    %v3478 = vmul.f32 %v3435, %v3459
    %v3479 = vmul.f32 %v3436, %v3463
    %v3480 = vmul.f32 %v3437, %v3459
    %v3481 = vmul.f32 %v3438, %v3463
    %v3482 = vmul.f32 %v3439, %v3459
    %v3483 = vmul.f32 %v3440, %v3463
    %v3484 = vmul.f32 %v3441, %v3459
    %v3485 = vmul.f32 %v3442, %v3463
    %v3486 = vmul.f32 %v3443, %v3459
    %v3487 = vmul.f32 %v3444, %v3463
    %v3488 = vmul.f32 %v3445, %v3459
    %v3489 = vmul.f32 %v3446, %v3463
    %v3490 = vmul.f32 %v3447, %v3459
    %v3491 = vmul.f32 %v3448, %v3463
    %v3492 = vmul.f32 %v3449, %v3459
    %v3493 = vmul.f32 %v3450, %v3463
    %v3494 = vmul.f32 %v3451, %v3459
    %v3495 = vmul.f32 %v3452, %v3463
    %v3496 = vmul.f32 %v3453, %v3459
    %v3497 = vmul.f32 %v3454, %v3463
    %v3499 = vlaneseq
    %v3500 = vshrl.u32 %v3499, 7
    %v3501 = vsub.s32 0, %v3500
    %v3502 = vrot.slane %v2821, %v3501
    %v3503 = vlaneseq
    %v3504 = vshrl.u32 %v3503, 7
    %v3505 = vsub.s32 1, %v3504
    %v3506 = vrot.slane %v2821, %v3505
    %v3509 = vadd.f32 %v3466, %v3502
    %v3510 = vadd.f32 %v3467, %v3506
    %v3511 = vadd.f32 %v3468, %v3502
    %v3512 = vadd.f32 %v3469, %v3506
    %v3513 = vadd.f32 %v3470, %v3502
    %v3514 = vadd.f32 %v3471, %v3506
    %v3515 = vadd.f32 %v3472, %v3502
    %v3516 = vadd.f32 %v3473, %v3506
    %v3517 = vadd.f32 %v3474, %v3502
    %v3518 = vadd.f32 %v3475, %v3506
    %v3519 = vadd.f32 %v3476, %v3502
    %v3520 = vadd.f32 %v3477, %v3506
    %v3521 = vadd.f32 %v3478, %v3502
    %v3522 = vadd.f32 %v3479, %v3506
    %v3523 = vadd.f32 %v3480, %v3502
    %v3524 = vadd.f32 %v3481, %v3506
    %v3525 = vadd.f32 %v3482, %v3502
    %v3526 = vadd.f32 %v3483, %v3506
    %v3527 = vadd.f32 %v3484, %v3502
    %v3528 = vadd.f32 %v3485, %v3506
    %v3529 = vadd.f32 %v3486, %v3502
    %v3530 = vadd.f32 %v3487, %v3506
    %v3531 = vadd.f32 %v3488, %v3502
    %v3532 = vadd.f32 %v3489, %v3506
    %v3533 = vadd.f32 %v3490, %v3502
    %v3534 = vadd.f32 %v3491, %v3506
    %v3535 = vadd.f32 %v3492, %v3502
    %v3536 = vadd.f32 %v3493, %v3506
    %v3537 = vadd.f32 %v3494, %v3502
    %v3538 = vadd.f32 %v3495, %v3506
    %v3539 = vadd.f32 %v3496, %v3502
    %v3540 = vadd.f32 %v3497, %v3506
    %vm3541 = vcmp.ge.f32.partialorder %v3509, 0.0
    %vm3542 = vcmp.ge.f32.partialorder %v3510, 0.0
    %vm3543 = vcmp.ge.f32.partialorder %v3511, 0.0
    %vm3544 = vcmp.ge.f32.partialorder %v3512, 0.0
    %vm3545 = vcmp.ge.f32.partialorder %v3513, 0.0
    %vm3546 = vcmp.ge.f32.partialorder %v3514, 0.0
    %vm3547 = vcmp.ge.f32.partialorder %v3515, 0.0
    %vm3548 = vcmp.ge.f32.partialorder %v3516, 0.0
    %vm3549 = vcmp.ge.f32.partialorder %v3517, 0.0
    %vm3550 = vcmp.ge.f32.partialorder %v3518, 0.0
    %vm3551 = vcmp.ge.f32.partialorder %v3519, 0.0
    %vm3552 = vcmp.ge.f32.partialorder %v3520, 0.0
    %vm3553 = vcmp.ge.f32.partialorder %v3521, 0.0
    %vm3554 = vcmp.ge.f32.partialorder %v3522, 0.0
    %vm3555 = vcmp.ge.f32.partialorder %v3523, 0.0
    %vm3556 = vcmp.ge.f32.partialorder %v3524, 0.0
    %vm3557 = vcmp.ge.f32.partialorder %v3525, 0.0
    %vm3558 = vcmp.ge.f32.partialorder %v3526, 0.0
    %vm3559 = vcmp.ge.f32.partialorder %v3527, 0.0
    %vm3560 = vcmp.ge.f32.partialorder %v3528, 0.0
    %vm3561 = vcmp.ge.f32.partialorder %v3529, 0.0
    %vm3562 = vcmp.ge.f32.partialorder %v3530, 0.0
    %vm3563 = vcmp.ge.f32.partialorder %v3531, 0.0
    %vm3564 = vcmp.ge.f32.partialorder %v3532, 0.0
    %vm3565 = vcmp.ge.f32.partialorder %v3533, 0.0
    %vm3566 = vcmp.ge.f32.partialorder %v3534, 0.0
    %vm3567 = vcmp.ge.f32.partialorder %v3535, 0.0
    %vm3568 = vcmp.ge.f32.partialorder %v3536, 0.0
    %vm3569 = vcmp.ge.f32.partialorder %v3537, 0.0
    %vm3570 = vcmp.ge.f32.partialorder %v3538, 0.0
    %vm3571 = vcmp.ge.f32.partialorder %v3539, 0.0
    %vm3572 = vcmp.ge.f32.partialorder %v3540, 0.0
    %v3573 = vmul.f32 %v3509, 0.01
    %v3574 = vmul.f32 %v3510, 0.01
    %v3575 = vmul.f32 %v3511, 0.01
    %v3576 = vmul.f32 %v3512, 0.01
    %v3577 = vmul.f32 %v3513, 0.01
    %v3578 = vmul.f32 %v3514, 0.01
    %v3579 = vmul.f32 %v3515, 0.01
    %v3580 = vmul.f32 %v3516, 0.01
    %v3581 = vmul.f32 %v3517, 0.01
    %v3582 = vmul.f32 %v3518, 0.01
    %v3583 = vmul.f32 %v3519, 0.01
    %v3584 = vmul.f32 %v3520, 0.01
    %v3585 = vmul.f32 %v3521, 0.01
    %v3586 = vmul.f32 %v3522, 0.01
    %v3587 = vmul.f32 %v3523, 0.01
    %v3588 = vmul.f32 %v3524, 0.01
    %v3589 = vmul.f32 %v3525, 0.01
    %v3590 = vmul.f32 %v3526, 0.01
    %v3591 = vmul.f32 %v3527, 0.01
    %v3592 = vmul.f32 %v3528, 0.01
    %v3593 = vmul.f32 %v3529, 0.01
    %v3594 = vmul.f32 %v3530, 0.01
    %v3595 = vmul.f32 %v3531, 0.01
    %v3596 = vmul.f32 %v3532, 0.01
    %v3597 = vmul.f32 %v3533, 0.01
    %v3598 = vmul.f32 %v3534, 0.01
    %v3599 = vmul.f32 %v3535, 0.01
    %v3600 = vmul.f32 %v3536, 0.01
    %v3601 = vmul.f32 %v3537, 0.01
    %v3602 = vmul.f32 %v3538, 0.01
    %v3603 = vmul.f32 %v3539, 0.01
    %v3604 = vmul.f32 %v3540, 0.01
    %v3605 = vsel %vm3541, %v3509, %v3573
    %v3606 = vsel %vm3542, %v3510, %v3574
    %v3607 = vsel %vm3543, %v3511, %v3575
    %v3608 = vsel %vm3544, %v3512, %v3576
    %v3609 = vsel %vm3545, %v3513, %v3577
    %v3610 = vsel %vm3546, %v3514, %v3578
    %v3611 = vsel %vm3547, %v3515, %v3579
    %v3612 = vsel %vm3548, %v3516, %v3580
    %v3613 = vsel %vm3549, %v3517, %v3581
    %v3614 = vsel %vm3550, %v3518, %v3582
    %v3615 = vsel %vm3551, %v3519, %v3583
    %v3616 = vsel %vm3552, %v3520, %v3584
    %v3617 = vsel %vm3553, %v3521, %v3585
    %v3618 = vsel %vm3554, %v3522, %v3586
    %v3619 = vsel %vm3555, %v3523, %v3587
    %v3620 = vsel %vm3556, %v3524, %v3588
    %v3621 = vsel %vm3557, %v3525, %v3589
    %v3622 = vsel %vm3558, %v3526, %v3590
    %v3623 = vsel %vm3559, %v3527, %v3591
    %v3624 = vsel %vm3560, %v3528, %v3592
    %v3625 = vsel %vm3561, %v3529, %v3593
    %v3626 = vsel %vm3562, %v3530, %v3594
    %v3627 = vsel %vm3563, %v3531, %v3595
    %v3628 = vsel %vm3564, %v3532, %v3596
    %v3629 = vsel %vm3565, %v3533, %v3597
    %v3630 = vsel %vm3566, %v3534, %v3598
    %v3631 = vsel %vm3567, %v3535, %v3599
    %v3632 = vsel %vm3568, %v3536, %v3600
    %v3633 = vsel %vm3569, %v3537, %v3601
    %v3634 = vsel %vm3570, %v3538, %v3602
    %v3635 = vsel %vm3571, %v3539, %v3603
    %v3636 = vsel %vm3572, %v3540, %v3604
    %v3637 = vpack.c.bf16 %v3607, %v3605
    %v3638 = vpack.c.bf16 %v3608, %v3606
    %v3639 = vpack.c.bf16 %v3611, %v3609
    %v3640 = vpack.c.bf16 %v3612, %v3610
    %v3641 = vpack.c.bf16 %v3615, %v3613
    %v3642 = vpack.c.bf16 %v3616, %v3614
    %v3643 = vpack.c.bf16 %v3619, %v3617
    %v3644 = vpack.c.bf16 %v3620, %v3618
    %v3645 = vpack.c.bf16 %v3623, %v3621
    %v3646 = vpack.c.bf16 %v3624, %v3622
    %v3647 = vpack.c.bf16 %v3627, %v3625
    %v3648 = vpack.c.bf16 %v3628, %v3626
    %v3649 = vpack.c.bf16 %v3631, %v3629
    %v3650 = vpack.c.bf16 %v3632, %v3630
    %v3651 = vpack.c.bf16 %v3635, %v3633
    %v3652 = vpack.c.bf16 %v3636, %v3634
    %v3653 = vpack.c.bf16 %v2823, %v2822
    %v3654 = vpack.c.bf16 %v2825, %v2824
    %v3655 = vpack.c.bf16 %v2827, %v2826
    %v3656 = vpack.c.bf16 %v2829, %v2828
    %v3657 = vpack.c.bf16 %v2831, %v2830
    %v3658 = vpack.c.bf16 %v2833, %v2832
    %v3659 = vpack.c.bf16 %v2835, %v2834
    %v3660 = vpack.c.bf16 %v2837, %v2836
    %v3661 = vpack.c.bf16 %v2839, %v2838
    %v3662 = vpack.c.bf16 %v2841, %v2840
    %v3663 = vpack.c.bf16 %v2843, %v2842
    %v3664 = vpack.c.bf16 %v2845, %v2844
    %v3665 = vpack.c.bf16 %v2847, %v2846
    %v3666 = vpack.c.bf16 %v2849, %v2848
    %v3667 = vpack.c.bf16 %v2851, %v2850
    %v3668 = vpack.c.bf16 %v2853, %v2852
    %v3670 = vlaneseq
    %v3671 = vshrl.u32 %v3670, 7
    %v3672 = vsub.s32 0, %v3671
    %v3673 = vrot.slane %v2854, %v3672
    %3675 = vmatprep.subr.bf16.mxu0 0
    %3676 = vmatpush1.bf16.msra.mxu0 %v3660
    %3677 = vmatprep.subr.bf16.mxu0 0
    %3678 = vmatpush1.bf16.msra.mxu0 %v3659
    %3679 = vmatprep.subr.bf16.mxu0 0
    %3680 = vmatpush1.bf16.msra.mxu0 %v3658
    %3681 = vmatprep.subr.bf16.mxu0 0
    %3682 = vmatpush1.bf16.msra.mxu0 %v3657
    %3683 = vmatprep.subr.bf16.mxu0 0
    %3684 = vmatpush1.bf16.msra.mxu0 %v3656
    %3685 = vmatprep.subr.bf16.mxu0 0
    %3686 = vmatpush1.bf16.msra.mxu0 %v3655
    %3687 = vmatprep.subr.bf16.mxu0 0
    %3688 = vmatpush1.bf16.msra.mxu0 %v3654
    %3689 = vmatprep.subr.bf16.mxu0 0
    %3690 = vmatpush1.bf16.msra.mxu0 %v3653
    %3691 = vmatprep.subr.bf16.mxu0 0
    %3692 = vmatpush2.bf16.msra.mxu0 %v3668
    %3693 = vmatprep.subr.bf16.mxu0 0
    %3694 = vmatpush2.bf16.msra.mxu0 %v3667
    %3695 = vmatprep.subr.bf16.mxu0 0
    %3696 = vmatpush2.bf16.msra.mxu0 %v3666
    %3697 = vmatprep.subr.bf16.mxu0 0
    %3698 = vmatpush2.bf16.msra.mxu0 %v3665
    %3699 = vmatprep.subr.bf16.mxu0 0
    %3700 = vmatpush2.bf16.msra.mxu0 %v3664
    %3701 = vmatprep.subr.bf16.mxu0 0
    %3702 = vmatpush2.bf16.msra.mxu0 %v3663
    %3703 = vmatprep.subr.bf16.mxu0 0
    %3704 = vmatpush2.bf16.msra.mxu0 %v3662
    %3705 = vmatprep.subr.bf16.mxu0 0
    %3706 = vmatpush2.bf16.msra.mxu0 %v3661
    %3707 = vmatprep.mubr.bf16.mxu0 %v3638
    %3708 = vmatmul.mubr.bf16.gmra.mxu0 %v3637
    %v3709 = vpop.f32.mrf.mxu0
    %v3710 = vadd.f32 %v3673, %v3709
    %v3711 = vpop.f32.mrf.mxu0
    %v3712 = vpop.f32.mrf.mxu0
    %v3713 = vadd.f32 %v3673, %v3712
    %v3714 = vpop.f32.mrf.mxu0
    %3715 = vmatprep.mubr.bf16.mxu0 %v3640
    %3716 = vmatmul.mubr.bf16.gmra.mxu0 %v3639
    %v3717 = vpop.f32.mrf.mxu0
    %v3718 = vadd.f32 %v3673, %v3717
    %v3719 = vpop.f32.mrf.mxu0
    %v3720 = vpop.f32.mrf.mxu0
    %v3721 = vadd.f32 %v3673, %v3720
    %v3722 = vpop.f32.mrf.mxu0
    %3723 = vmatprep.mubr.bf16.mxu0 %v3642
    %3724 = vmatmul.mubr.bf16.gmra.mxu0 %v3641
    %v3725 = vpop.f32.mrf.mxu0
    %v3726 = vadd.f32 %v3673, %v3725
    %v3727 = vpop.f32.mrf.mxu0
    %v3728 = vpop.f32.mrf.mxu0
    %v3729 = vadd.f32 %v3673, %v3728
    %v3730 = vpop.f32.mrf.mxu0
    %3731 = vmatprep.mubr.bf16.mxu0 %v3644
    %3732 = vmatmul.mubr.bf16.gmra.mxu0 %v3643
    %v3733 = vpop.f32.mrf.mxu0
    %v3734 = vadd.f32 %v3673, %v3733
    %v3735 = vpop.f32.mrf.mxu0
    %v3736 = vpop.f32.mrf.mxu0
    %v3737 = vadd.f32 %v3673, %v3736
    %v3738 = vpop.f32.mrf.mxu0
    %3739 = vmatprep.mubr.bf16.mxu0 %v3646
    %3740 = vmatmul.mubr.bf16.gmra.mxu0 %v3645
    %v3741 = vpop.f32.mrf.mxu0
    %v3742 = vadd.f32 %v3673, %v3741
    %v3743 = vpop.f32.mrf.mxu0
    %v3744 = vpop.f32.mrf.mxu0
    %v3745 = vadd.f32 %v3673, %v3744
    %v3746 = vpop.f32.mrf.mxu0
    %3747 = vmatprep.mubr.bf16.mxu0 %v3648
    %3748 = vmatmul.mubr.bf16.gmra.mxu0 %v3647
    %v3749 = vpop.f32.mrf.mxu0
    %v3750 = vadd.f32 %v3673, %v3749
    %v3751 = vpop.f32.mrf.mxu0
    %v3752 = vpop.f32.mrf.mxu0
    %v3753 = vadd.f32 %v3673, %v3752
    %v3754 = vpop.f32.mrf.mxu0
    %3755 = vmatprep.mubr.bf16.mxu0 %v3650
    %3756 = vmatmul.mubr.bf16.gmra.mxu0 %v3649
    %v3757 = vpop.f32.mrf.mxu0
    %v3758 = vadd.f32 %v3673, %v3757
    %v3759 = vpop.f32.mrf.mxu0
    %v3760 = vpop.f32.mrf.mxu0
    %v3761 = vadd.f32 %v3673, %v3760
    %v3762 = vpop.f32.mrf.mxu0
    %3763 = vmatprep.mubr.bf16.mxu0 %v3652
    %3764 = vmatmul.mubr.bf16.gmra.mxu0 %v3651
    %v3765 = vpop.f32.mrf.mxu0
    %v3766 = vadd.f32 %v3673, %v3765
    %v3767 = vpop.f32.mrf.mxu0
    %v3768 = vpop.f32.mrf.mxu0
    %v3769 = vadd.f32 %v3673, %v3768
    %v3770 = vpop.f32.mrf.mxu0
    %3771 = vdwg.mxu0
    %v3772 = vadd.f32 %v3710, %v3713
    %v3773 = vadd.f32 %v3772, %v3718
    %v3774 = vadd.f32 %v3773, %v3721
    %v3775 = vadd.f32 %v3774, %v3726
    %v3776 = vadd.f32 %v3775, %v3729
    %v3777 = vadd.f32 %v3776, %v3734
    %v3778 = vadd.f32 %v3777, %v3737
    %v3779 = vadd.f32 %v3778, %v3742
    %v3780 = vadd.f32 %v3779, %v3745
    %v3781 = vadd.f32 %v3780, %v3750
    %v3782 = vadd.f32 %v3781, %v3753
    %v3783 = vadd.f32 %v3782, %v3758
    %v3784 = vadd.f32 %v3783, %v3761
    %v3785 = vadd.f32 %v3784, %v3766
    %v3786 = vadd.f32 %v3785, %v3769
    %v3787 = vrot.slane %v3786, 4
    %v3788 = vadd.f32 %v3786, %v3787
    %v3789 = vrot.slane %v3788, 2
    %v3790 = vadd.f32 %v3788, %v3789
    %v3791 = vrot.slane %v3790, 1
    %v3792 = vadd.f32 %v3790, %v3791
    %v3793 = vmul.f32 %v3792, %v1027
    %v3794 = vmul.f32 %v3710, %v3710
    %v3795 = vmul.f32 %v3713, %v3713
    %v3796 = vmul.f32 %v3718, %v3718
    %v3797 = vmul.f32 %v3721, %v3721
    %v3798 = vmul.f32 %v3726, %v3726
    %v3799 = vmul.f32 %v3729, %v3729
    %v3800 = vmul.f32 %v3734, %v3734
    %v3801 = vmul.f32 %v3737, %v3737
    %v3802 = vmul.f32 %v3742, %v3742
    %v3803 = vmul.f32 %v3745, %v3745
    %v3804 = vmul.f32 %v3750, %v3750
    %v3805 = vmul.f32 %v3753, %v3753
    %v3806 = vmul.f32 %v3758, %v3758
    %v3807 = vmul.f32 %v3761, %v3761
    %v3808 = vmul.f32 %v3766, %v3766
    %v3809 = vmul.f32 %v3769, %v3769
    %v3810 = vadd.f32 %v3794, %v3795
    %v3811 = vadd.f32 %v3810, %v3796
    %v3812 = vadd.f32 %v3811, %v3797
    %v3813 = vadd.f32 %v3812, %v3798
    %v3814 = vadd.f32 %v3813, %v3799
    %v3815 = vadd.f32 %v3814, %v3800
    %v3816 = vadd.f32 %v3815, %v3801
    %v3817 = vadd.f32 %v3816, %v3802
    %v3818 = vadd.f32 %v3817, %v3803
    %v3819 = vadd.f32 %v3818, %v3804
    %v3820 = vadd.f32 %v3819, %v3805
    %v3821 = vadd.f32 %v3820, %v3806
    %v3822 = vadd.f32 %v3821, %v3807
    %v3823 = vadd.f32 %v3822, %v3808
    %v3824 = vadd.f32 %v3823, %v3809
    %v3825 = vrot.slane %v3824, 4
    %v3826 = vadd.f32 %v3824, %v3825
    %v3827 = vrot.slane %v3826, 2
    %v3828 = vadd.f32 %v3826, %v3827
    %v3829 = vrot.slane %v3828, 1
    %v3830 = vadd.f32 %v3828, %v3829
    %v3831 = vmul.f32 %v3830, %v1027
    %v3832 = vmul.f32 %v3793, %v3793
    %v3833 = vsub.f32 %v3831, %v3832
    %v3834 = vmax.f32 %v3833, 0.0
    %v3835 = vsub.f32 %v3710, %v3793
    %v3836 = vsub.f32 %v3713, %v3793
    %v3837 = vsub.f32 %v3718, %v3793
    %v3838 = vsub.f32 %v3721, %v3793
    %v3839 = vsub.f32 %v3726, %v3793
    %v3840 = vsub.f32 %v3729, %v3793
    %v3841 = vsub.f32 %v3734, %v3793
    %v3842 = vsub.f32 %v3737, %v3793
    %v3843 = vsub.f32 %v3742, %v3793
    %v3844 = vsub.f32 %v3745, %v3793
    %v3845 = vsub.f32 %v3750, %v3793
    %v3846 = vsub.f32 %v3753, %v3793
    %v3847 = vsub.f32 %v3758, %v3793
    %v3848 = vsub.f32 %v3761, %v3793
    %v3849 = vsub.f32 %v3766, %v3793
    %v3850 = vsub.f32 %v3769, %v3793
    %v3851 = vadd.f32 %v3834, 1e-05
    %v3852 = vrsqrt.pop %v3851
    %v3853 = vmul.f32 %v3835, %v3852
    %v3854 = vmul.f32 %v3836, %v3852
    %v3855 = vmul.f32 %v3837, %v3852
    %v3856 = vmul.f32 %v3838, %v3852
    %v3857 = vmul.f32 %v3839, %v3852
    %v3858 = vmul.f32 %v3840, %v3852
    %v3859 = vmul.f32 %v3841, %v3852
    %v3860 = vmul.f32 %v3842, %v3852
    %v3861 = vmul.f32 %v3843, %v3852
    %v3862 = vmul.f32 %v3844, %v3852
    %v3863 = vmul.f32 %v3845, %v3852
    %v3864 = vmul.f32 %v3846, %v3852
    %v3865 = vmul.f32 %v3847, %v3852
    %v3866 = vmul.f32 %v3848, %v3852
    %v3867 = vmul.f32 %v3849, %v3852
    %v3868 = vmul.f32 %v3850, %v3852
    %v3870 = vlaneseq
    %v3871 = vshrl.u32 %v3870, 7
    %v3872 = vsub.s32 0, %v3871
    %v3873 = vrot.slane %v2855, %v3872
    %v3875 = vmul.f32 %v3853, %v3873
    %v3876 = vmul.f32 %v3854, %v3873
    %v3877 = vmul.f32 %v3855, %v3873
    %v3878 = vmul.f32 %v3856, %v3873
    %v3879 = vmul.f32 %v3857, %v3873
    %v3880 = vmul.f32 %v3858, %v3873
    %v3881 = vmul.f32 %v3859, %v3873
    %v3882 = vmul.f32 %v3860, %v3873
    %v3883 = vmul.f32 %v3861, %v3873
    %v3884 = vmul.f32 %v3862, %v3873
    %v3885 = vmul.f32 %v3863, %v3873
    %v3886 = vmul.f32 %v3864, %v3873
    %v3887 = vmul.f32 %v3865, %v3873
    %v3888 = vmul.f32 %v3866, %v3873
    %v3889 = vmul.f32 %v3867, %v3873
    %v3890 = vmul.f32 %v3868, %v3873
    %v3892 = vlaneseq
    %v3893 = vshrl.u32 %v3892, 7
    %v3894 = vsub.s32 0, %v3893
    %v3895 = vrot.slane %v2856, %v3894
    %v3897 = vadd.f32 %v3875, %v3895
    %v3898 = vadd.f32 %v3876, %v3895
    %v3899 = vadd.f32 %v3877, %v3895
    %v3900 = vadd.f32 %v3878, %v3895
    %v3901 = vadd.f32 %v3879, %v3895
    %v3902 = vadd.f32 %v3880, %v3895
    %v3903 = vadd.f32 %v3881, %v3895
    %v3904 = vadd.f32 %v3882, %v3895
    %v3905 = vadd.f32 %v3883, %v3895
    %v3906 = vadd.f32 %v3884, %v3895
    %v3907 = vadd.f32 %v3885, %v3895
    %v3908 = vadd.f32 %v3886, %v3895
    %v3909 = vadd.f32 %v3887, %v3895
    %v3910 = vadd.f32 %v3888, %v3895
    %v3911 = vadd.f32 %v3889, %v3895
    %v3912 = vadd.f32 %v3890, %v3895
    %vm3913 = vcmp.ge.f32.partialorder %v3897, 0.0
    %vm3914 = vcmp.ge.f32.partialorder %v3898, 0.0
    %vm3915 = vcmp.ge.f32.partialorder %v3899, 0.0
    %vm3916 = vcmp.ge.f32.partialorder %v3900, 0.0
    %vm3917 = vcmp.ge.f32.partialorder %v3901, 0.0
    %vm3918 = vcmp.ge.f32.partialorder %v3902, 0.0
    %vm3919 = vcmp.ge.f32.partialorder %v3903, 0.0
    %vm3920 = vcmp.ge.f32.partialorder %v3904, 0.0
    %vm3921 = vcmp.ge.f32.partialorder %v3905, 0.0
    %vm3922 = vcmp.ge.f32.partialorder %v3906, 0.0
    %vm3923 = vcmp.ge.f32.partialorder %v3907, 0.0
    %vm3924 = vcmp.ge.f32.partialorder %v3908, 0.0
    %vm3925 = vcmp.ge.f32.partialorder %v3909, 0.0
    %vm3926 = vcmp.ge.f32.partialorder %v3910, 0.0
    %vm3927 = vcmp.ge.f32.partialorder %v3911, 0.0
    %vm3928 = vcmp.ge.f32.partialorder %v3912, 0.0
    %v3929 = vmul.f32 %v3897, 0.01
    %v3930 = vmul.f32 %v3898, 0.01
    %v3931 = vmul.f32 %v3899, 0.01
    %v3932 = vmul.f32 %v3900, 0.01
    %v3933 = vmul.f32 %v3901, 0.01
    %v3934 = vmul.f32 %v3902, 0.01
    %v3935 = vmul.f32 %v3903, 0.01
    %v3936 = vmul.f32 %v3904, 0.01
    %v3937 = vmul.f32 %v3905, 0.01
    %v3938 = vmul.f32 %v3906, 0.01
    %v3939 = vmul.f32 %v3907, 0.01
    %v3940 = vmul.f32 %v3908, 0.01
    %v3941 = vmul.f32 %v3909, 0.01
    %v3942 = vmul.f32 %v3910, 0.01
    %v3943 = vmul.f32 %v3911, 0.01
    %v3944 = vmul.f32 %v3912, 0.01
    %v3945 = vsel %vm3913, %v3897, %v3929
    %v3946 = vsel %vm3914, %v3898, %v3930
    %v3947 = vsel %vm3915, %v3899, %v3931
    %v3948 = vsel %vm3916, %v3900, %v3932
    %v3949 = vsel %vm3917, %v3901, %v3933
    %v3950 = vsel %vm3918, %v3902, %v3934
    %v3951 = vsel %vm3919, %v3903, %v3935
    %v3952 = vsel %vm3920, %v3904, %v3936
    %v3953 = vsel %vm3921, %v3905, %v3937
    %v3954 = vsel %vm3922, %v3906, %v3938
    %v3955 = vsel %vm3923, %v3907, %v3939
    %v3956 = vsel %vm3924, %v3908, %v3940
    %v3957 = vsel %vm3925, %v3909, %v3941
    %v3958 = vsel %vm3926, %v3910, %v3942
    %v3959 = vsel %vm3927, %v3911, %v3943
    %v3960 = vsel %vm3928, %v3912, %v3944
    %v3962 = vlaneseq
    %v3963 = vshrl.u32 %v3962, 7
    %v3964 = vsub.s32 0, %v3963
    %v3965 = vrot.slane %v2857, %v3964
    %v3967 = vmul.f32 %v3945, %v3965
    %v3968 = vmul.f32 %v3946, %v3965
    %v3969 = vmul.f32 %v3947, %v3965
    %v3970 = vmul.f32 %v3948, %v3965
    %v3971 = vmul.f32 %v3949, %v3965
    %v3972 = vmul.f32 %v3950, %v3965
    %v3973 = vmul.f32 %v3951, %v3965
    %v3974 = vmul.f32 %v3952, %v3965
    %v3975 = vmul.f32 %v3953, %v3965
    %v3976 = vmul.f32 %v3954, %v3965
    %v3977 = vmul.f32 %v3955, %v3965
    %v3978 = vmul.f32 %v3956, %v3965
    %v3979 = vmul.f32 %v3957, %v3965
    %v3980 = vmul.f32 %v3958, %v3965
    %v3981 = vmul.f32 %v3959, %v3965
    %v3982 = vmul.f32 %v3960, %v3965
    %3983 = vadd.xlane.f32.xlu0 %v3967
    %v3984 = vpop.xlane.xlu0 %3983
    %3985 = vadd.xlane.f32.xlu0 %v3968
    %v3986 = vpop.xlane.xlu0 %3985
    %3987 = vadd.xlane.f32.xlu0 %v3969
    %v3988 = vpop.xlane.xlu0 %3987
    %3989 = vadd.xlane.f32.xlu0 %v3970
    %v3990 = vpop.xlane.xlu0 %3989
    %3991 = vadd.xlane.f32.xlu0 %v3971
    %v3992 = vpop.xlane.xlu0 %3991
    %3993 = vadd.xlane.f32.xlu0 %v3972
    %v3994 = vpop.xlane.xlu0 %3993
    %3995 = vadd.xlane.f32.xlu0 %v3973
    %v3996 = vpop.xlane.xlu0 %3995
    %3997 = vadd.xlane.f32.xlu0 %v3974
    %v3998 = vpop.xlane.xlu0 %3997
    %3999 = vadd.xlane.f32.xlu0 %v3975
    %v4000 = vpop.xlane.xlu0 %3999
    %4001 = vadd.xlane.f32.xlu0 %v3976
    %v4002 = vpop.xlane.xlu0 %4001
    %4003 = vadd.xlane.f32.xlu0 %v3977
    %v4004 = vpop.xlane.xlu0 %4003
    %4005 = vadd.xlane.f32.xlu0 %v3978
    %v4006 = vpop.xlane.xlu0 %4005
    %4007 = vadd.xlane.f32.xlu0 %v3979
    %v4008 = vpop.xlane.xlu0 %4007
    %4009 = vadd.xlane.f32.xlu0 %v3980
    %v4010 = vpop.xlane.xlu0 %4009
    %4011 = vadd.xlane.f32.xlu0 %v3981
    %v4012 = vpop.xlane.xlu0 %4011
    %4013 = vadd.xlane.f32.xlu0 %v3982
    %v4014 = vpop.xlane.xlu0 %4013
    %v4016 = vlaneseq
    %v4017 = vshrl.u32 %v4016, 7
    %v4018 = vsub.s32 0, %v4017
    %v4019 = vrot.slane %v2858, %v4018
    %4020 = vset.pattern.permute.xlu0 0
    %4021 = vperm.xlu0 %4020, %v4019
    %v4022 = vpop.permute.xlu0 %4021
    %v4024 = vadd.f32 %v3984, %v4022
    %v4025 = vadd.f32 %v3986, %v4022
    %v4026 = vadd.f32 %v3988, %v4022
    %v4027 = vadd.f32 %v3990, %v4022
    %v4028 = vadd.f32 %v3992, %v4022
    %v4029 = vadd.f32 %v3994, %v4022
    %v4030 = vadd.f32 %v3996, %v4022
    %v4031 = vadd.f32 %v3998, %v4022
    %v4032 = vadd.f32 %v4000, %v4022
    %v4033 = vadd.f32 %v4002, %v4022
    %v4034 = vadd.f32 %v4004, %v4022
    %v4035 = vadd.f32 %v4006, %v4022
    %v4036 = vadd.f32 %v4008, %v4022
    %v4037 = vadd.f32 %v4010, %v4022
    %v4038 = vadd.f32 %v4012, %v4022
    %v4039 = vadd.f32 %v4014, %v4022
    %v4040 = vadd.f32 %v4024, %v1772
    %v4041 = vadd.f32 %v4025, %v1779
    %v4042 = vadd.f32 %v4026, %v1786
    %v4043 = vadd.f32 %v4027, %v1793
    %v4044 = vadd.f32 %v4028, %v1800
    %v4045 = vadd.f32 %v4029, %v1807
    %v4046 = vadd.f32 %v4030, %v1814
    %v4047 = vadd.f32 %v4031, %v1821
    %v4048 = vadd.f32 %v4032, %v1772
    %v4049 = vadd.f32 %v4033, %v1779
    %v4050 = vadd.f32 %v4034, %v1786
    %v4051 = vadd.f32 %v4035, %v1793
    %v4052 = vadd.f32 %v4036, %v1800
    %v4053 = vadd.f32 %v4037, %v1807
    %v4054 = vadd.f32 %v4038, %v1814
    %v4055 = vadd.f32 %v4039, %v1821
    %4072 = vset.pattern.permute.xlu0 0
    %4073 = vperm.xlu0 %4072, %v4040
    %v4074 = vpop.permute.xlu0 %4073
    %4075 = vset.pattern.permute.xlu0 0
    %4076 = vperm.xlu0 %4075, %v4041
    %v4077 = vpop.permute.xlu0 %4076
    %4078 = vset.pattern.permute.xlu0 0
    %4079 = vperm.xlu0 %4078, %v4042
    %v4080 = vpop.permute.xlu0 %4079
    %4081 = vset.pattern.permute.xlu0 0
    %4082 = vperm.xlu0 %4081, %v4043
    %v4083 = vpop.permute.xlu0 %4082
    %4084 = vset.pattern.permute.xlu0 0
    %4085 = vperm.xlu0 %4084, %v4044
    %v4086 = vpop.permute.xlu0 %4085
    %4087 = vset.pattern.permute.xlu0 0
    %4088 = vperm.xlu0 %4087, %v4045
    %v4089 = vpop.permute.xlu0 %4088
    %4090 = vset.pattern.permute.xlu0 0
    %4091 = vperm.xlu0 %4090, %v4046
    %v4092 = vpop.permute.xlu0 %4091
    %4093 = vset.pattern.permute.xlu0 0
    %4094 = vperm.xlu0 %4093, %v4047
    %v4095 = vpop.permute.xlu0 %4094
    %4096 = vset.pattern.permute.xlu0 0
    %4097 = vperm.xlu0 %4096, %v4048
    %v4098 = vpop.permute.xlu0 %4097
    %4099 = vset.pattern.permute.xlu0 0
    %4100 = vperm.xlu0 %4099, %v4049
    %v4101 = vpop.permute.xlu0 %4100
    %4102 = vset.pattern.permute.xlu0 0
    %4103 = vperm.xlu0 %4102, %v4050
    %v4104 = vpop.permute.xlu0 %4103
    %4105 = vset.pattern.permute.xlu0 0
    %4106 = vperm.xlu0 %4105, %v4051
    %v4107 = vpop.permute.xlu0 %4106
    %4108 = vset.pattern.permute.xlu0 0
    %4109 = vperm.xlu0 %4108, %v4052
    %v4110 = vpop.permute.xlu0 %4109
    %4111 = vset.pattern.permute.xlu0 0
    %4112 = vperm.xlu0 %4111, %v4053
    %v4113 = vpop.permute.xlu0 %4112
    %4114 = vset.pattern.permute.xlu0 0
    %4115 = vperm.xlu0 %4114, %v4054
    %v4116 = vpop.permute.xlu0 %4115
    %4117 = vset.pattern.permute.xlu0 0
    %4118 = vperm.xlu0 %4117, %v4055
    %v4119 = vpop.permute.xlu0 %4118
    %v4120 = vlaneseq
    %v4121 = vshrl.u32 %v4120, 7
    %v4122 = vsub.s32 %v560, %v4121
    %v4123 = vrot.slane %v4074, %v4122
    %v4124 = vlaneseq
    %v4125 = vshrl.u32 %v4124, 7
    %v4126 = vsub.s32 %v560, %v4125
    %v4127 = vrot.slane %v4077, %v4126
    %v4128 = vlaneseq
    %v4129 = vshrl.u32 %v4128, 7
    %v4130 = vsub.s32 %v560, %v4129
    %v4131 = vrot.slane %v4080, %v4130
    %v4132 = vlaneseq
    %v4133 = vshrl.u32 %v4132, 7
    %v4134 = vsub.s32 %v560, %v4133
    %v4135 = vrot.slane %v4083, %v4134
    %v4136 = vlaneseq
    %v4137 = vshrl.u32 %v4136, 7
    %v4138 = vsub.s32 %v560, %v4137
    %v4139 = vrot.slane %v4086, %v4138
    %v4140 = vlaneseq
    %v4141 = vshrl.u32 %v4140, 7
    %v4142 = vsub.s32 %v560, %v4141
    %v4143 = vrot.slane %v4089, %v4142
    %v4144 = vlaneseq
    %v4145 = vshrl.u32 %v4144, 7
    %v4146 = vsub.s32 %v560, %v4145
    %v4147 = vrot.slane %v4092, %v4146
    %v4148 = vlaneseq
    %v4149 = vshrl.u32 %v4148, 7
    %v4150 = vsub.s32 %v560, %v4149
    %v4151 = vrot.slane %v4095, %v4150
    %v4152 = vlaneseq
    %v4153 = vshrl.u32 %v4152, 7
    %v4154 = vsub.s32 %v560, %v4153
    %v4155 = vrot.slane %v4098, %v4154
    %v4156 = vlaneseq
    %v4157 = vshrl.u32 %v4156, 7
    %v4158 = vsub.s32 %v560, %v4157
    %v4159 = vrot.slane %v4101, %v4158
    %v4160 = vlaneseq
    %v4161 = vshrl.u32 %v4160, 7
    %v4162 = vsub.s32 %v560, %v4161
    %v4163 = vrot.slane %v4104, %v4162
    %v4164 = vlaneseq
    %v4165 = vshrl.u32 %v4164, 7
    %v4166 = vsub.s32 %v560, %v4165
    %v4167 = vrot.slane %v4107, %v4166
    %v4168 = vlaneseq
    %v4169 = vshrl.u32 %v4168, 7
    %v4170 = vsub.s32 %v560, %v4169
    %v4171 = vrot.slane %v4110, %v4170
    %v4172 = vlaneseq
    %v4173 = vshrl.u32 %v4172, 7
    %v4174 = vsub.s32 %v560, %v4173
    %v4175 = vrot.slane %v4113, %v4174
    %v4176 = vlaneseq
    %v4177 = vshrl.u32 %v4176, 7
    %v4178 = vsub.s32 %v560, %v4177
    %v4179 = vrot.slane %v4116, %v4178
    %v4180 = vlaneseq
    %v4181 = vshrl.u32 %v4180, 7
    %v4182 = vsub.s32 %v560, %v4181
    %v4183 = vrot.slane %v4119, %v4182
    %v4184 = vsel %vm1974, %v4127, %v4123
    %v4185 = vsel %vm1976, %v4131, %v4184
    %v4186 = vsel %vm1978, %v4135, %v4185
    %v4187 = vsel %vm1980, %v4139, %v4186
    %v4188 = vsel %vm1982, %v4143, %v4187
    %v4189 = vsel %vm1984, %v4147, %v4188
    %v4190 = vsel %vm1986, %v4151, %v4189
    %v4191 = vsel %vm1974, %v4159, %v4155
    %v4192 = vsel %vm1976, %v4163, %v4191
    %v4193 = vsel %vm1978, %v4167, %v4192
    %v4194 = vsel %vm1980, %v4171, %v4193
    %v4195 = vsel %vm1982, %v4175, %v4194
    %v4196 = vsel %vm1984, %v4179, %v4195
    %v4197 = vsel %vm1986, %v4183, %v4196
    %v4200 = vsel %vm1997, %v4190, -inf
    %4201 = vmax.xlane.f32.xlu0 %v4200
    %v4202 = vpop.xlane.xlu0 %4201
    %v4203 = vsel %vm1997, %v4197, -inf
    %4204 = vmax.xlane.f32.xlu0 %v4203
    %v4205 = vpop.xlane.xlu0 %4204
    %v4208 = vlaneseq
    %v4209 = vshrl.u32 %v4208, 7
    %v4210 = vsub.s32 0, %v4209
    %v4211 = vrot.slane %v4202, %v4210
    %v4212 = vlaneseq
    %v4213 = vshrl.u32 %v4212, 7
    %v4214 = vsub.s32 1, %v4213
    %v4215 = vrot.slane %v4202, %v4214
    %v4216 = vlaneseq
    %v4217 = vshrl.u32 %v4216, 7
    %v4218 = vsub.s32 2, %v4217
    %v4219 = vrot.slane %v4202, %v4218
    %v4220 = vlaneseq
    %v4221 = vshrl.u32 %v4220, 7
    %v4222 = vsub.s32 3, %v4221
    %v4223 = vrot.slane %v4202, %v4222
    %v4224 = vlaneseq
    %v4225 = vshrl.u32 %v4224, 7
    %v4226 = vsub.s32 4, %v4225
    %v4227 = vrot.slane %v4202, %v4226
    %v4228 = vlaneseq
    %v4229 = vshrl.u32 %v4228, 7
    %v4230 = vsub.s32 5, %v4229
    %v4231 = vrot.slane %v4202, %v4230
    %v4232 = vlaneseq
    %v4233 = vshrl.u32 %v4232, 7
    %v4234 = vsub.s32 6, %v4233
    %v4235 = vrot.slane %v4202, %v4234
    %v4236 = vlaneseq
    %v4237 = vshrl.u32 %v4236, 7
    %v4238 = vsub.s32 7, %v4237
    %v4239 = vrot.slane %v4202, %v4238
    %v4240 = vlaneseq
    %v4241 = vshrl.u32 %v4240, 7
    %v4242 = vsub.s32 0, %v4241
    %v4243 = vrot.slane %v4205, %v4242
    %v4244 = vlaneseq
    %v4245 = vshrl.u32 %v4244, 7
    %v4246 = vsub.s32 1, %v4245
    %v4247 = vrot.slane %v4205, %v4246
    %v4248 = vlaneseq
    %v4249 = vshrl.u32 %v4248, 7
    %v4250 = vsub.s32 2, %v4249
    %v4251 = vrot.slane %v4205, %v4250
    %v4252 = vlaneseq
    %v4253 = vshrl.u32 %v4252, 7
    %v4254 = vsub.s32 3, %v4253
    %v4255 = vrot.slane %v4205, %v4254
    %v4256 = vlaneseq
    %v4257 = vshrl.u32 %v4256, 7
    %v4258 = vsub.s32 4, %v4257
    %v4259 = vrot.slane %v4205, %v4258
    %v4260 = vlaneseq
    %v4261 = vshrl.u32 %v4260, 7
    %v4262 = vsub.s32 5, %v4261
    %v4263 = vrot.slane %v4205, %v4262
    %v4264 = vlaneseq
    %v4265 = vshrl.u32 %v4264, 7
    %v4266 = vsub.s32 6, %v4265
    %v4267 = vrot.slane %v4205, %v4266
    %v4268 = vlaneseq
    %v4269 = vshrl.u32 %v4268, 7
    %v4270 = vsub.s32 7, %v4269
    %v4271 = vrot.slane %v4205, %v4270
    %v4288 = vsub.f32 %v4040, %v4211
    %v4289 = vsub.f32 %v4041, %v4215
    %v4290 = vsub.f32 %v4042, %v4219
    %v4291 = vsub.f32 %v4043, %v4223
    %v4292 = vsub.f32 %v4044, %v4227
    %v4293 = vsub.f32 %v4045, %v4231
    %v4294 = vsub.f32 %v4046, %v4235
    %v4295 = vsub.f32 %v4047, %v4239
    %v4296 = vsub.f32 %v4048, %v4243
    %v4297 = vsub.f32 %v4049, %v4247
    %v4298 = vsub.f32 %v4050, %v4251
    %v4299 = vsub.f32 %v4051, %v4255
    %v4300 = vsub.f32 %v4052, %v4259
    %v4301 = vsub.f32 %v4053, %v4263
    %v4302 = vsub.f32 %v4054, %v4267
    %v4303 = vsub.f32 %v4055, %v4271
    %v4304 = vmul.f32 %v4288, 1.442695
    %v4305 = vpow.pop %v4304
    %v4306 = vmul.f32 %v4289, 1.442695
    %v4307 = vpow.pop %v4306
    %v4308 = vmul.f32 %v4290, 1.442695
    %v4309 = vpow.pop %v4308
    %v4310 = vmul.f32 %v4291, 1.442695
    %v4311 = vpow.pop %v4310
    %v4312 = vmul.f32 %v4292, 1.442695
    %v4313 = vpow.pop %v4312
    %v4314 = vmul.f32 %v4293, 1.442695
    %v4315 = vpow.pop %v4314
    %v4316 = vmul.f32 %v4294, 1.442695
    %v4317 = vpow.pop %v4316
    %v4318 = vmul.f32 %v4295, 1.442695
    %v4319 = vpow.pop %v4318
    %v4320 = vmul.f32 %v4296, 1.442695
    %v4321 = vpow.pop %v4320
    %v4322 = vmul.f32 %v4297, 1.442695
    %v4323 = vpow.pop %v4322
    %v4324 = vmul.f32 %v4298, 1.442695
    %v4325 = vpow.pop %v4324
    %v4326 = vmul.f32 %v4299, 1.442695
    %v4327 = vpow.pop %v4326
    %v4328 = vmul.f32 %v4300, 1.442695
    %v4329 = vpow.pop %v4328
    %v4330 = vmul.f32 %v4301, 1.442695
    %v4331 = vpow.pop %v4330
    %v4332 = vmul.f32 %v4302, 1.442695
    %v4333 = vpow.pop %v4332
    %v4334 = vmul.f32 %v4303, 1.442695
    %v4335 = vpow.pop %v4334
    %4352 = vset.pattern.permute.xlu0 0
    %4353 = vperm.xlu0 %4352, %v4305
    %v4354 = vpop.permute.xlu0 %4353
    %4355 = vset.pattern.permute.xlu0 0
    %4356 = vperm.xlu0 %4355, %v4307
    %v4357 = vpop.permute.xlu0 %4356
    %4358 = vset.pattern.permute.xlu0 0
    %4359 = vperm.xlu0 %4358, %v4309
    %v4360 = vpop.permute.xlu0 %4359
    %4361 = vset.pattern.permute.xlu0 0
    %4362 = vperm.xlu0 %4361, %v4311
    %v4363 = vpop.permute.xlu0 %4362
    %4364 = vset.pattern.permute.xlu0 0
    %4365 = vperm.xlu0 %4364, %v4313
    %v4366 = vpop.permute.xlu0 %4365
    %4367 = vset.pattern.permute.xlu0 0
    %4368 = vperm.xlu0 %4367, %v4315
    %v4369 = vpop.permute.xlu0 %4368
    %4370 = vset.pattern.permute.xlu0 0
    %4371 = vperm.xlu0 %4370, %v4317
    %v4372 = vpop.permute.xlu0 %4371
    %4373 = vset.pattern.permute.xlu0 0
    %4374 = vperm.xlu0 %4373, %v4319
    %v4375 = vpop.permute.xlu0 %4374
    %4376 = vset.pattern.permute.xlu0 0
    %4377 = vperm.xlu0 %4376, %v4321
    %v4378 = vpop.permute.xlu0 %4377
    %4379 = vset.pattern.permute.xlu0 0
    %4380 = vperm.xlu0 %4379, %v4323
    %v4381 = vpop.permute.xlu0 %4380
    %4382 = vset.pattern.permute.xlu0 0
    %4383 = vperm.xlu0 %4382, %v4325
    %v4384 = vpop.permute.xlu0 %4383
    %4385 = vset.pattern.permute.xlu0 0
    %4386 = vperm.xlu0 %4385, %v4327
    %v4387 = vpop.permute.xlu0 %4386
    %4388 = vset.pattern.permute.xlu0 0
    %4389 = vperm.xlu0 %4388, %v4329
    %v4390 = vpop.permute.xlu0 %4389
    %4391 = vset.pattern.permute.xlu0 0
    %4392 = vperm.xlu0 %4391, %v4331
    %v4393 = vpop.permute.xlu0 %4392
    %4394 = vset.pattern.permute.xlu0 0
    %4395 = vperm.xlu0 %4394, %v4333
    %v4396 = vpop.permute.xlu0 %4395
    %4397 = vset.pattern.permute.xlu0 0
    %4398 = vperm.xlu0 %4397, %v4335
    %v4399 = vpop.permute.xlu0 %4398
    %v4400 = vlaneseq
    %v4401 = vshrl.u32 %v4400, 7
    %v4402 = vsub.s32 %v560, %v4401
    %v4403 = vrot.slane %v4354, %v4402
    %v4404 = vlaneseq
    %v4405 = vshrl.u32 %v4404, 7
    %v4406 = vsub.s32 %v560, %v4405
    %v4407 = vrot.slane %v4357, %v4406
    %v4408 = vlaneseq
    %v4409 = vshrl.u32 %v4408, 7
    %v4410 = vsub.s32 %v560, %v4409
    %v4411 = vrot.slane %v4360, %v4410
    %v4412 = vlaneseq
    %v4413 = vshrl.u32 %v4412, 7
    %v4414 = vsub.s32 %v560, %v4413
    %v4415 = vrot.slane %v4363, %v4414
    %v4416 = vlaneseq
    %v4417 = vshrl.u32 %v4416, 7
    %v4418 = vsub.s32 %v560, %v4417
    %v4419 = vrot.slane %v4366, %v4418
    %v4420 = vlaneseq
    %v4421 = vshrl.u32 %v4420, 7
    %v4422 = vsub.s32 %v560, %v4421
    %v4423 = vrot.slane %v4369, %v4422
    %v4424 = vlaneseq
    %v4425 = vshrl.u32 %v4424, 7
    %v4426 = vsub.s32 %v560, %v4425
    %v4427 = vrot.slane %v4372, %v4426
    %v4428 = vlaneseq
    %v4429 = vshrl.u32 %v4428, 7
    %v4430 = vsub.s32 %v560, %v4429
    %v4431 = vrot.slane %v4375, %v4430
    %v4432 = vlaneseq
    %v4433 = vshrl.u32 %v4432, 7
    %v4434 = vsub.s32 %v560, %v4433
    %v4435 = vrot.slane %v4378, %v4434
    %v4436 = vlaneseq
    %v4437 = vshrl.u32 %v4436, 7
    %v4438 = vsub.s32 %v560, %v4437
    %v4439 = vrot.slane %v4381, %v4438
    %v4440 = vlaneseq
    %v4441 = vshrl.u32 %v4440, 7
    %v4442 = vsub.s32 %v560, %v4441
    %v4443 = vrot.slane %v4384, %v4442
    %v4444 = vlaneseq
    %v4445 = vshrl.u32 %v4444, 7
    %v4446 = vsub.s32 %v560, %v4445
    %v4447 = vrot.slane %v4387, %v4446
    %v4448 = vlaneseq
    %v4449 = vshrl.u32 %v4448, 7
    %v4450 = vsub.s32 %v560, %v4449
    %v4451 = vrot.slane %v4390, %v4450
    %v4452 = vlaneseq
    %v4453 = vshrl.u32 %v4452, 7
    %v4454 = vsub.s32 %v560, %v4453
    %v4455 = vrot.slane %v4393, %v4454
    %v4456 = vlaneseq
    %v4457 = vshrl.u32 %v4456, 7
    %v4458 = vsub.s32 %v560, %v4457
    %v4459 = vrot.slane %v4396, %v4458
    %v4460 = vlaneseq
    %v4461 = vshrl.u32 %v4460, 7
    %v4462 = vsub.s32 %v560, %v4461
    %v4463 = vrot.slane %v4399, %v4462
    %v4464 = vsel %vm1974, %v4407, %v4403
    %v4465 = vsel %vm1976, %v4411, %v4464
    %v4466 = vsel %vm1978, %v4415, %v4465
    %v4467 = vsel %vm1980, %v4419, %v4466
    %v4468 = vsel %vm1982, %v4423, %v4467
    %v4469 = vsel %vm1984, %v4427, %v4468
    %v4470 = vsel %vm1986, %v4431, %v4469
    %v4471 = vsel %vm1974, %v4439, %v4435
    %v4472 = vsel %vm1976, %v4443, %v4471
    %v4473 = vsel %vm1978, %v4447, %v4472
    %v4474 = vsel %vm1980, %v4451, %v4473
    %v4475 = vsel %vm1982, %v4455, %v4474
    %v4476 = vsel %vm1984, %v4459, %v4475
    %v4477 = vsel %vm1986, %v4463, %v4476
    %v4480 = vsel %vm1997, %v4470, 0.0
    %4481 = vadd.xlane.f32.xlu0 %v4480
    %v4482 = vpop.xlane.xlu0 %4481
    %v4483 = vsel %vm1997, %v4477, 0.0
    %4484 = vadd.xlane.f32.xlu0 %v4483
    %v4485 = vpop.xlane.xlu0 %4484
    %v4486 = vrcp.pop %v4482
    %v4487 = vrcp.pop %v4485
    %v4490 = vlaneseq
    %v4491 = vshrl.u32 %v4490, 7
    %v4492 = vsub.s32 0, %v4491
    %v4493 = vrot.slane %v4486, %v4492
    %v4494 = vlaneseq
    %v4495 = vshrl.u32 %v4494, 7
    %v4496 = vsub.s32 1, %v4495
    %v4497 = vrot.slane %v4486, %v4496
    %v4498 = vlaneseq
    %v4499 = vshrl.u32 %v4498, 7
    %v4500 = vsub.s32 2, %v4499
    %v4501 = vrot.slane %v4486, %v4500
    %v4502 = vlaneseq
    %v4503 = vshrl.u32 %v4502, 7
    %v4504 = vsub.s32 3, %v4503
    %v4505 = vrot.slane %v4486, %v4504
    %v4506 = vlaneseq
    %v4507 = vshrl.u32 %v4506, 7
    %v4508 = vsub.s32 4, %v4507
    %v4509 = vrot.slane %v4486, %v4508
    %v4510 = vlaneseq
    %v4511 = vshrl.u32 %v4510, 7
    %v4512 = vsub.s32 5, %v4511
    %v4513 = vrot.slane %v4486, %v4512
    %v4514 = vlaneseq
    %v4515 = vshrl.u32 %v4514, 7
    %v4516 = vsub.s32 6, %v4515
    %v4517 = vrot.slane %v4486, %v4516
    %v4518 = vlaneseq
    %v4519 = vshrl.u32 %v4518, 7
    %v4520 = vsub.s32 7, %v4519
    %v4521 = vrot.slane %v4486, %v4520
    %v4522 = vlaneseq
    %v4523 = vshrl.u32 %v4522, 7
    %v4524 = vsub.s32 0, %v4523
    %v4525 = vrot.slane %v4487, %v4524
    %v4526 = vlaneseq
    %v4527 = vshrl.u32 %v4526, 7
    %v4528 = vsub.s32 1, %v4527
    %v4529 = vrot.slane %v4487, %v4528
    %v4530 = vlaneseq
    %v4531 = vshrl.u32 %v4530, 7
    %v4532 = vsub.s32 2, %v4531
    %v4533 = vrot.slane %v4487, %v4532
    %v4534 = vlaneseq
    %v4535 = vshrl.u32 %v4534, 7
    %v4536 = vsub.s32 3, %v4535
    %v4537 = vrot.slane %v4487, %v4536
    %v4538 = vlaneseq
    %v4539 = vshrl.u32 %v4538, 7
    %v4540 = vsub.s32 4, %v4539
    %v4541 = vrot.slane %v4487, %v4540
    %v4542 = vlaneseq
    %v4543 = vshrl.u32 %v4542, 7
    %v4544 = vsub.s32 5, %v4543
    %v4545 = vrot.slane %v4487, %v4544
    %v4546 = vlaneseq
    %v4547 = vshrl.u32 %v4546, 7
    %v4548 = vsub.s32 6, %v4547
    %v4549 = vrot.slane %v4487, %v4548
    %v4550 = vlaneseq
    %v4551 = vshrl.u32 %v4550, 7
    %v4552 = vsub.s32 7, %v4551
    %v4553 = vrot.slane %v4487, %v4552
    %v4570 = vmul.f32 %v4305, %v4493
    %v4571 = vmul.f32 %v4307, %v4497
    %v4572 = vmul.f32 %v4309, %v4501
    %v4573 = vmul.f32 %v4311, %v4505
    %v4574 = vmul.f32 %v4313, %v4509
    %v4575 = vmul.f32 %v4315, %v4513
    %v4576 = vmul.f32 %v4317, %v4517
    %v4577 = vmul.f32 %v4319, %v4521
    %v4578 = vmul.f32 %v4321, %v4525
    %v4579 = vmul.f32 %v4323, %v4529
    %v4580 = vmul.f32 %v4325, %v4533
    %v4581 = vmul.f32 %v4327, %v4537
    %v4582 = vmul.f32 %v4329, %v4541
    %v4583 = vmul.f32 %v4331, %v4545
    %v4584 = vmul.f32 %v4333, %v4549
    %v4585 = vmul.f32 %v4335, %v4553
    %4594 = vset.pattern.permute.xlu0 0
    %4595 = vperm.xlu0 %4594, %v4570
    %v4596 = vpop.permute.xlu0 %4595
    %4597 = vset.pattern.permute.xlu0 0
    %4598 = vperm.xlu0 %4597, %v4571
    %v4599 = vpop.permute.xlu0 %4598
    %4600 = vset.pattern.permute.xlu0 0
    %4601 = vperm.xlu0 %4600, %v4572
    %v4602 = vpop.permute.xlu0 %4601
    %4603 = vset.pattern.permute.xlu0 0
    %4604 = vperm.xlu0 %4603, %v4573
    %v4605 = vpop.permute.xlu0 %4604
    %4606 = vset.pattern.permute.xlu0 0
    %4607 = vperm.xlu0 %4606, %v4574
    %v4608 = vpop.permute.xlu0 %4607
    %4609 = vset.pattern.permute.xlu0 0
    %4610 = vperm.xlu0 %4609, %v4575
    %v4611 = vpop.permute.xlu0 %4610
    %4612 = vset.pattern.permute.xlu0 0
    %4613 = vperm.xlu0 %4612, %v4576
    %v4614 = vpop.permute.xlu0 %4613
    %4615 = vset.pattern.permute.xlu0 0
    %4616 = vperm.xlu0 %4615, %v4577
    %v4617 = vpop.permute.xlu0 %4616
    %v4618 = vlaneseq
    %v4619 = vshrl.u32 %v4618, 7
    %v4620 = vsub.s32 %v560, %v4619
    %v4621 = vrot.slane %v4596, %v4620
    %v4622 = vlaneseq
    %v4623 = vshrl.u32 %v4622, 7
    %v4624 = vsub.s32 %v560, %v4623
    %v4625 = vrot.slane %v4599, %v4624
    %v4626 = vlaneseq
    %v4627 = vshrl.u32 %v4626, 7
    %v4628 = vsub.s32 %v560, %v4627
    %v4629 = vrot.slane %v4602, %v4628
    %v4630 = vlaneseq
    %v4631 = vshrl.u32 %v4630, 7
    %v4632 = vsub.s32 %v560, %v4631
    %v4633 = vrot.slane %v4605, %v4632
    %v4634 = vlaneseq
    %v4635 = vshrl.u32 %v4634, 7
    %v4636 = vsub.s32 %v560, %v4635
    %v4637 = vrot.slane %v4608, %v4636
    %v4638 = vlaneseq
    %v4639 = vshrl.u32 %v4638, 7
    %v4640 = vsub.s32 %v560, %v4639
    %v4641 = vrot.slane %v4611, %v4640
    %v4642 = vlaneseq
    %v4643 = vshrl.u32 %v4642, 7
    %v4644 = vsub.s32 %v560, %v4643
    %v4645 = vrot.slane %v4614, %v4644
    %v4646 = vlaneseq
    %v4647 = vshrl.u32 %v4646, 7
    %v4648 = vsub.s32 %v560, %v4647
    %v4649 = vrot.slane %v4617, %v4648
    %v4650 = vsel %vm1974, %v4625, %v4621
    %v4651 = vsel %vm1976, %v4629, %v4650
    %v4652 = vsel %vm1978, %v4633, %v4651
    %v4653 = vsel %vm1980, %v4637, %v4652
    %v4654 = vsel %vm1982, %v4641, %v4653
    %v4655 = vsel %vm1984, %v4645, %v4654
    %v4656 = vsel %vm1986, %v4649, %v4655
    %v4657 = vsel %vm1997, %v4656, 0
    %4659 = vmatprep.subr.mxu0 0.0
    %4660 = vmatpush1.msra.mxu0 0.0
    %4661 = vmatprep.subr.mxu0 0.0
    %4662 = vmatpush1.msra.mxu0 0.0
    %4663 = vmatprep.subr.mxu0 0.0
    %4664 = vmatpush1.msra.mxu0 0.0
    %4665 = vmatprep.subr.mxu0 0.0
    %4666 = vmatpush1.msra.mxu0 0.0
    %4667 = vmatprep.subr.mxu0 0.0
    %4668 = vmatpush1.msra.mxu0 0.0
    %4669 = vmatprep.subr.mxu0 0.0
    %4670 = vmatpush1.msra.mxu0 0.0
    %4671 = vmatprep.subr.mxu0 0.0
    %4672 = vmatpush1.msra.mxu0 0.0
    %4673 = vmatprep.subr.mxu0 0.0
    %4674 = vmatpush1.msra.mxu0 0.0
    %4675 = vmatprep.subr.mxu0 0.0
    %4676 = vmatpush1.msra.mxu0 0.0
    %4677 = vmatprep.subr.mxu0 0.0
    %4678 = vmatpush1.msra.mxu0 0.0
    %4679 = vmatprep.subr.mxu0 0.0
    %4680 = vmatpush1.msra.mxu0 0.0
    %4681 = vmatprep.subr.mxu0 0.0
    %4682 = vmatpush1.msra.mxu0 0.0
    %4683 = vmatprep.subr.mxu0 0.0
    %4684 = vmatpush1.msra.mxu0 0.0
    %4685 = vmatprep.subr.mxu0 0.0
    %4686 = vmatpush1.msra.mxu0 0.0
    %4687 = vmatprep.subr.mxu0 0.0
    %4688 = vmatpush1.msra.mxu0 0.0
    %4689 = vmatprep.subr.mxu0 0.0
    %4690 = vmatpush1.msra.mxu0 %v2797
    %4691 = vmatprep.subr.mxu0 0.0
    %4692 = vmatpush2.msra.mxu0 0.0
    %4693 = vmatprep.subr.mxu0 0.0
    %4694 = vmatpush2.msra.mxu0 0.0
    %4695 = vmatprep.subr.mxu0 0.0
    %4696 = vmatpush2.msra.mxu0 0.0
    %4697 = vmatprep.subr.mxu0 0.0
    %4698 = vmatpush2.msra.mxu0 0.0
    %4699 = vmatprep.subr.mxu0 0.0
    %4700 = vmatpush2.msra.mxu0 0.0
    %4701 = vmatprep.subr.mxu0 0.0
    %4702 = vmatpush2.msra.mxu0 0.0
    %4703 = vmatprep.subr.mxu0 0.0
    %4704 = vmatpush2.msra.mxu0 0.0
    %4705 = vmatprep.subr.mxu0 0.0
    %4706 = vmatpush2.msra.mxu0 0.0
    %4707 = vmatprep.subr.mxu0 0.0
    %4708 = vmatpush2.msra.mxu0 0.0
    %4709 = vmatprep.subr.mxu0 0.0
    %4710 = vmatpush2.msra.mxu0 0.0
    %4711 = vmatprep.subr.mxu0 0.0
    %4712 = vmatpush2.msra.mxu0 0.0
    %4713 = vmatprep.subr.mxu0 0.0
    %4714 = vmatpush2.msra.mxu0 0.0
    %4715 = vmatprep.subr.mxu0 0.0
    %4716 = vmatpush2.msra.mxu0 0.0
    %4717 = vmatprep.subr.mxu0 0.0
    %4718 = vmatpush2.msra.mxu0 0.0
    %4719 = vmatprep.subr.mxu0 0.0
    %4720 = vmatpush2.msra.mxu0 0.0
    %4721 = vmatprep.subr.mxu0 0.0
    %4722 = vmatpush2.msra.mxu0 0.0
    %4723 = vmatprep.mubr.f32.mxu0 0.0
    %4724 = vmatmul.mubr.f32.gmra.mxu0 %v4657
    %v4725 = vpop.f32.mrf.mxu0
    %v4726 = vadd.f32 0.0, %v4725
    %v4727 = vpop.f32.mrf.mxu0
    %4728 = vdwg.mxu0
    %4737 = vset.pattern.permute.xlu0 0
    %4738 = vperm.xlu0 %4737, %v4578
    %v4739 = vpop.permute.xlu0 %4738
    %4740 = vset.pattern.permute.xlu0 0
    %4741 = vperm.xlu0 %4740, %v4579
    %v4742 = vpop.permute.xlu0 %4741
    %4743 = vset.pattern.permute.xlu0 0
    %4744 = vperm.xlu0 %4743, %v4580
    %v4745 = vpop.permute.xlu0 %4744
    %4746 = vset.pattern.permute.xlu0 0
    %4747 = vperm.xlu0 %4746, %v4581
    %v4748 = vpop.permute.xlu0 %4747
    %4749 = vset.pattern.permute.xlu0 0
    %4750 = vperm.xlu0 %4749, %v4582
    %v4751 = vpop.permute.xlu0 %4750
    %4752 = vset.pattern.permute.xlu0 0
    %4753 = vperm.xlu0 %4752, %v4583
    %v4754 = vpop.permute.xlu0 %4753
    %4755 = vset.pattern.permute.xlu0 0
    %4756 = vperm.xlu0 %4755, %v4584
    %v4757 = vpop.permute.xlu0 %4756
    %4758 = vset.pattern.permute.xlu0 0
    %4759 = vperm.xlu0 %4758, %v4585
    %v4760 = vpop.permute.xlu0 %4759
    %v4761 = vlaneseq
    %v4762 = vshrl.u32 %v4761, 7
    %v4763 = vsub.s32 %v560, %v4762
    %v4764 = vrot.slane %v4739, %v4763
    %v4765 = vlaneseq
    %v4766 = vshrl.u32 %v4765, 7
    %v4767 = vsub.s32 %v560, %v4766
    %v4768 = vrot.slane %v4742, %v4767
    %v4769 = vlaneseq
    %v4770 = vshrl.u32 %v4769, 7
    %v4771 = vsub.s32 %v560, %v4770
    %v4772 = vrot.slane %v4745, %v4771
    %v4773 = vlaneseq
    %v4774 = vshrl.u32 %v4773, 7
    %v4775 = vsub.s32 %v560, %v4774
    %v4776 = vrot.slane %v4748, %v4775
    %v4777 = vlaneseq
    %v4778 = vshrl.u32 %v4777, 7
    %v4779 = vsub.s32 %v560, %v4778
    %v4780 = vrot.slane %v4751, %v4779
    %v4781 = vlaneseq
    %v4782 = vshrl.u32 %v4781, 7
    %v4783 = vsub.s32 %v560, %v4782
    %v4784 = vrot.slane %v4754, %v4783
    %v4785 = vlaneseq
    %v4786 = vshrl.u32 %v4785, 7
    %v4787 = vsub.s32 %v560, %v4786
    %v4788 = vrot.slane %v4757, %v4787
    %v4789 = vlaneseq
    %v4790 = vshrl.u32 %v4789, 7
    %v4791 = vsub.s32 %v560, %v4790
    %v4792 = vrot.slane %v4760, %v4791
    %v4793 = vsel %vm1974, %v4768, %v4764
    %v4794 = vsel %vm1976, %v4772, %v4793
    %v4795 = vsel %vm1978, %v4776, %v4794
    %v4796 = vsel %vm1980, %v4780, %v4795
    %v4797 = vsel %vm1982, %v4784, %v4796
    %v4798 = vsel %vm1984, %v4788, %v4797
    %v4799 = vsel %vm1986, %v4792, %v4798
    %v4800 = vsel %vm1997, %v4799, 0
    %4802 = vmatprep.subr.mxu0 0.0
    %4803 = vmatpush1.msra.mxu0 0.0
    %4804 = vmatprep.subr.mxu0 0.0
    %4805 = vmatpush1.msra.mxu0 0.0
    %4806 = vmatprep.subr.mxu0 0.0
    %4807 = vmatpush1.msra.mxu0 0.0
    %4808 = vmatprep.subr.mxu0 0.0
    %4809 = vmatpush1.msra.mxu0 0.0
    %4810 = vmatprep.subr.mxu0 0.0
    %4811 = vmatpush1.msra.mxu0 0.0
    %4812 = vmatprep.subr.mxu0 0.0
    %4813 = vmatpush1.msra.mxu0 0.0
    %4814 = vmatprep.subr.mxu0 0.0
    %4815 = vmatpush1.msra.mxu0 0.0
    %4816 = vmatprep.subr.mxu0 0.0
    %4817 = vmatpush1.msra.mxu0 0.0
    %4818 = vmatprep.subr.mxu0 0.0
    %4819 = vmatpush1.msra.mxu0 0.0
    %4820 = vmatprep.subr.mxu0 0.0
    %4821 = vmatpush1.msra.mxu0 0.0
    %4822 = vmatprep.subr.mxu0 0.0
    %4823 = vmatpush1.msra.mxu0 0.0
    %4824 = vmatprep.subr.mxu0 0.0
    %4825 = vmatpush1.msra.mxu0 0.0
    %4826 = vmatprep.subr.mxu0 0.0
    %4827 = vmatpush1.msra.mxu0 0.0
    %4828 = vmatprep.subr.mxu0 0.0
    %4829 = vmatpush1.msra.mxu0 0.0
    %4830 = vmatprep.subr.mxu0 0.0
    %4831 = vmatpush1.msra.mxu0 0.0
    %4832 = vmatprep.subr.mxu0 0.0
    %4833 = vmatpush1.msra.mxu0 %v2798
    %4834 = vmatprep.subr.mxu0 0.0
    %4835 = vmatpush2.msra.mxu0 0.0
    %4836 = vmatprep.subr.mxu0 0.0
    %4837 = vmatpush2.msra.mxu0 0.0
    %4838 = vmatprep.subr.mxu0 0.0
    %4839 = vmatpush2.msra.mxu0 0.0
    %4840 = vmatprep.subr.mxu0 0.0
    %4841 = vmatpush2.msra.mxu0 0.0
    %4842 = vmatprep.subr.mxu0 0.0
    %4843 = vmatpush2.msra.mxu0 0.0
    %4844 = vmatprep.subr.mxu0 0.0
    %4845 = vmatpush2.msra.mxu0 0.0
    %4846 = vmatprep.subr.mxu0 0.0
    %4847 = vmatpush2.msra.mxu0 0.0
    %4848 = vmatprep.subr.mxu0 0.0
    %4849 = vmatpush2.msra.mxu0 0.0
    %4850 = vmatprep.subr.mxu0 0.0
    %4851 = vmatpush2.msra.mxu0 0.0
    %4852 = vmatprep.subr.mxu0 0.0
    %4853 = vmatpush2.msra.mxu0 0.0
    %4854 = vmatprep.subr.mxu0 0.0
    %4855 = vmatpush2.msra.mxu0 0.0
    %4856 = vmatprep.subr.mxu0 0.0
    %4857 = vmatpush2.msra.mxu0 0.0
    %4858 = vmatprep.subr.mxu0 0.0
    %4859 = vmatpush2.msra.mxu0 0.0
    %4860 = vmatprep.subr.mxu0 0.0
    %4861 = vmatpush2.msra.mxu0 0.0
    %4862 = vmatprep.subr.mxu0 0.0
    %4863 = vmatpush2.msra.mxu0 0.0
    %4864 = vmatprep.subr.mxu0 0.0
    %4865 = vmatpush2.msra.mxu0 0.0
    %4866 = vmatprep.mubr.f32.mxu0 0.0
    %4867 = vmatmul.mubr.f32.gmra.mxu0 %v4800
    %v4868 = vpop.f32.mrf.mxu0
    %v4869 = vadd.f32 0.0, %v4868
    %v4870 = vpop.f32.mrf.mxu0
    %4871 = vdwg.mxu0
    %4874 = vrot.lane.b32.xlu0 %v4726, 80
    %v4875 = vpop.permute.xlu0 %4874
    %4876 = vrot.lane.b32.xlu0 %v4869, 80
    %v4877 = vpop.permute.xlu0 %4876
    %v4880 = vsel %vm3123, %v2797, %v4875
    %v4881 = vsel %vm3123, %v2798, %v4877
    %v4882 = vpack.c.bf16 %v4881, %v4880
    %v4883 = vpack.c.bf16 %v4877, %v4875
    %v4884 = vpack.c.bf16 %v2860, %v2859
    %v4885 = vpack.c.bf16 %v2862, %v2861
    %v4886 = vpack.c.bf16 %v2864, %v2863
    %v4887 = vpack.c.bf16 %v2866, %v2865
    %v4888 = vpack.c.bf16 %v2868, %v2867
    %v4889 = vpack.c.bf16 %v2870, %v2869
    %v4890 = vpack.c.bf16 %v2872, %v2871
    %v4891 = vpack.c.bf16 %v2874, %v2873
    %v4892 = vpack.c.bf16 %v2876, %v2875
    %v4893 = vpack.c.bf16 %v2878, %v2877
    %v4895 = vlaneseq
    %v4896 = vshrl.u32 %v4895, 7
    %v4897 = vsub.s32 0, %v4896
    %v4898 = vrot.slane %v2879, %v4897
    %v4901 = vsel %vm2689, %v4883, 0
    %4903 = vmatprep.subr.bf16.mxu0 0
    %4904 = vmatpush1.bf16.msra.mxu0 %v4891
    %4905 = vmatprep.subr.bf16.mxu0 0
    %4906 = vmatpush1.bf16.msra.mxu0 %v4890
    %4907 = vmatprep.subr.bf16.mxu0 0
    %4908 = vmatpush1.bf16.msra.mxu0 %v4889
    %4909 = vmatprep.subr.bf16.mxu0 0
    %4910 = vmatpush1.bf16.msra.mxu0 %v4888
    %4911 = vmatprep.subr.bf16.mxu0 0
    %4912 = vmatpush1.bf16.msra.mxu0 %v4887
    %4913 = vmatprep.subr.bf16.mxu0 0
    %4914 = vmatpush1.bf16.msra.mxu0 %v4886
    %4915 = vmatprep.subr.bf16.mxu0 0
    %4916 = vmatpush1.bf16.msra.mxu0 %v4885
    %4917 = vmatprep.subr.bf16.mxu0 0
    %4918 = vmatpush1.bf16.msra.mxu0 %v4884
    %4919 = vmatprep.subr.bf16.mxu0 0
    %4920 = vmatpush2.bf16.msra.mxu0 0
    %4921 = vmatprep.subr.bf16.mxu0 0
    %4922 = vmatpush2.bf16.msra.mxu0 0
    %4923 = vmatprep.subr.bf16.mxu0 0
    %4924 = vmatpush2.bf16.msra.mxu0 0
    %4925 = vmatprep.subr.bf16.mxu0 0
    %4926 = vmatpush2.bf16.msra.mxu0 0
    %4927 = vmatprep.subr.bf16.mxu0 0
    %4928 = vmatpush2.bf16.msra.mxu0 0
    %4929 = vmatprep.subr.bf16.mxu0 0
    %4930 = vmatpush2.bf16.msra.mxu0 0
    %4931 = vmatprep.subr.bf16.mxu0 0
    %4932 = vmatpush2.bf16.msra.mxu0 %v4893
    %4933 = vmatprep.subr.bf16.mxu0 0
    %4934 = vmatpush2.bf16.msra.mxu0 %v4892
    %4935 = vmatprep.mubr.bf16.mxu0 %v4901
    %4936 = vmatmul.mubr.bf16.gmra.mxu0 %v4882
    %v4937 = vpop.f32.mrf.mxu0
    %v4938 = vadd.f32 %v4898, %v4937
    %v4939 = vpop.f32.mrf.mxu0
    %v4940 = vpop.f32.mrf.mxu0
    %v4941 = vadd.f32 %v4898, %v4940
    %v4942 = vpop.f32.mrf.mxu0
    %4943 = vdwg.mxu0
    %v4944 = vsel %vm2734, %v4938, 0.0
    %v4945 = vsel %vm2734, %v4941, 0.0
    %v4946 = vadd.f32 %v4944, %v4945
    %v4947 = vrot.slane %v4946, 4
    %v4948 = vadd.f32 %v4946, %v4947
    %v4949 = vrot.slane %v4948, 2
    %v4950 = vadd.f32 %v4948, %v4949
    %v4951 = vrot.slane %v4950, 1
    %v4952 = vadd.f32 %v4950, %v4951
    %v4953 = vmul.f32 %v4952, %v2744
    %v4954 = vmul.f32 %v4938, %v4938
    %v4955 = vmul.f32 %v4941, %v4941
    %v4956 = vsel %vm2734, %v4954, 0.0
    %v4957 = vsel %vm2734, %v4955, 0.0
    %v4958 = vadd.f32 %v4956, %v4957
    %v4959 = vrot.slane %v4958, 4
    %v4960 = vadd.f32 %v4958, %v4959
    %v4961 = vrot.slane %v4960, 2
    %v4962 = vadd.f32 %v4960, %v4961
    %v4963 = vrot.slane %v4962, 1
    %v4964 = vadd.f32 %v4962, %v4963
    %v4965 = vmul.f32 %v4964, %v2744
    %v4966 = vmul.f32 %v4953, %v4953
    %v4967 = vsub.f32 %v4965, %v4966
    %v4968 = vmax.f32 %v4967, 0.0
    %v4969 = vsub.f32 %v4938, %v4953
    %v4970 = vsub.f32 %v4941, %v4953
    %v4971 = vadd.f32 %v4968, 1e-05
    %v4972 = vrsqrt.pop %v4971
    %v4973 = vmul.f32 %v4969, %v4972
    %v4974 = vmul.f32 %v4970, %v4972
    %v4976 = vlaneseq
    %v4977 = vshrl.u32 %v4976, 7
    %v4978 = vsub.s32 0, %v4977
    %v4979 = vrot.slane %v2880, %v4978
    %v4981 = vmul.f32 %v4973, %v4979
    %v4982 = vmul.f32 %v4974, %v4979
    %v4984 = vlaneseq
    %v4985 = vshrl.u32 %v4984, 7
    %v4986 = vsub.s32 0, %v4985
    %v4987 = vrot.slane %v2881, %v4986
    %v4989 = vadd.f32 %v4981, %v4987
    %v4990 = vadd.f32 %v4982, %v4987
    %vm4991 = vcmp.ge.f32.partialorder %v4989, 0.0
    %vm4992 = vcmp.ge.f32.partialorder %v4990, 0.0
    %v4993 = vmul.f32 %v4989, 0.01
    %v4994 = vmul.f32 %v4990, 0.01
    %v4995 = vsel %vm4991, %v4989, %v4993
    %v4996 = vsel %vm4992, %v4990, %v4994
    %4999 = vrot.lane.b32.xlu0 %v4995, 80
    %v5000 = vpop.permute.xlu0 %4999
    %5001 = vrot.lane.b32.xlu0 %v4996, 80
    %v5002 = vpop.permute.xlu0 %5001
    %v5005 = vsel %vm3123, %v2797, %v5000
    %v5006 = vsel %vm3123, %v2798, %v5002
    %v5007 = vld [vmem:[%s59] sm:$0xff]
    %v5008 = vld [vmem:[%s59 + $0x8] sm:$0xff]
    %v5009 = vld [vmem:[%s59 + $0x10] sm:$0xff]
    %v5010 = vld [vmem:[%s59 + $0x18] sm:$0xff]
    %v5011 = vld [vmem:[%s59 + $0x20] sm:$0xff]
    %v5012 = vld [vmem:[%s59 + $0x28] sm:$0xff]
    %v5013 = vld [vmem:[%s59 + $0x30] sm:$0xff]
    %v5014 = vld [vmem:[%s59 + $0x38] sm:$0xff]
    %v5015 = vld [vmem:[%s59 + $0x40] sm:$0xff]
    %v5016 = vld [vmem:[%s59 + $0x48] sm:$0xff]
    %v5017 = vld [vmem:[%s59 + $0x50] sm:$0xff]
    %v5018 = vld [vmem:[%s59 + $0x58] sm:$0xff]
    %v5019 = vld [vmem:[%s59 + $0x60] sm:$0xff]
    %v5020 = vld [vmem:[%s59 + $0x68] sm:$0xff]
    %v5021 = vld [vmem:[%s59 + $0x70] sm:$0xff]
    %v5022 = vld [vmem:[%s59 + $0x78] sm:$0xff]
    %v5023 = vld [vmem:[%s59 + $0x80] sm:$0xff]
    %v5024 = vld [vmem:[%s59 + $0x88] sm:$0xff]
    %v5025 = vld [vmem:[%s59 + $0x90] sm:$0xff]
    %v5026 = vld [vmem:[%s59 + $0x98] sm:$0xff]
    %v5027 = vld [vmem:[%s59 + $0xa0] sm:$0xff]
    %v5028 = vld [vmem:[%s59 + $0xa8] sm:$0xff]
    %v5029 = vld [vmem:[%s59 + $0xb0] sm:$0xff]
    %v5030 = vld [vmem:[%s59 + $0xb8] sm:$0xff]
    %v5031 = vld [vmem:[%s59 + $0xc0] sm:$0xff]
    %v5032 = vld [vmem:[%s59 + $0xc8] sm:$0xff]
    %v5033 = vld [vmem:[%s59 + $0xd0] sm:$0xff]
    %v5034 = vld [vmem:[%s59 + $0xd8] sm:$0xff]
    %v5035 = vld [vmem:[%s59 + $0xe0] sm:$0xff]
    %v5036 = vld [vmem:[%s59 + $0xe8] sm:$0xff]
    %v5037 = vld [vmem:[%s59 + $0xf0] sm:$0xff]
    %v5038 = vld [vmem:[%s59 + $0xf8] sm:$0xff]
    %v5039 = vld [vmem:[%s59 + $0x100] sm:$0xff]
    %v5040 = vld [vmem:[%s59 + $0x108] sm:$0xff]
    %v5041 = vld [vmem:[%s59 + $0x110] sm:$0xff]
    %v5042 = vld [vmem:[%s59 + $0x118] sm:$0xff]
    %v5043 = vld [vmem:[#allocation37] sm:$0x3]
    %v5044 = vld [vmem:[#allocation38] sm:$0x3]
    %v5045 = vld [vmem:[#allocation40] sm:$0x3]
    %v5046 = vld [vmem:[#allocation41] sm:$0xff]
    %v5047 = vld [vmem:[#allocation41 + $0x8] sm:$0xff]
    %v5048 = vld [vmem:[#allocation41 + $0x10] sm:$0xff]
    %v5049 = vld [vmem:[#allocation41 + $0x18] sm:$0xff]
    %v5050 = vld [vmem:[#allocation41 + $0x20] sm:$0xff]
    %v5051 = vld [vmem:[#allocation41 + $0x28] sm:$0xff]
    %v5052 = vld [vmem:[#allocation41 + $0x30] sm:$0xff]
    %v5053 = vld [vmem:[#allocation41 + $0x38] sm:$0xff]
    %v5054 = vld [vmem:[#allocation41 + $0x40] sm:$0xff]
    %v5055 = vld [vmem:[#allocation41 + $0x48] sm:$0xff]
    %v5056 = vld [vmem:[#allocation41 + $0x50] sm:$0xff]
    %v5057 = vld [vmem:[#allocation41 + $0x58] sm:$0xff]
    %v5058 = vld [vmem:[#allocation41 + $0x60] sm:$0xff]
    %v5059 = vld [vmem:[#allocation41 + $0x68] sm:$0xff]
    %v5060 = vld [vmem:[#allocation41 + $0x70] sm:$0xff]
    %v5061 = vld [vmem:[#allocation41 + $0x78] sm:$0xff]
    %v5062 = vld [vmem:[#allocation41 + $0x80] sm:$0xff]
    %v5063 = vld [vmem:[#allocation41 + $0x88] sm:$0xff]
    %v5064 = vld [vmem:[#allocation41 + $0x90] sm:$0xff]
    %v5065 = vld [vmem:[#allocation41 + $0x98] sm:$0xff]
    %v5066 = vld [vmem:[#allocation41 + $0xa0] sm:$0xff]
    %v5067 = vld [vmem:[#allocation41 + $0xa8] sm:$0xff]
    %v5068 = vld [vmem:[#allocation41 + $0xb0] sm:$0xff]
    %v5069 = vld [vmem:[#allocation41 + $0xb8] sm:$0xff]
    %v5070 = vld [vmem:[#allocation41 + $0xc0] sm:$0xff]
    %v5071 = vld [vmem:[#allocation41 + $0xc8] sm:$0xff]
    %v5072 = vld [vmem:[#allocation41 + $0xd0] sm:$0xff]
    %v5073 = vld [vmem:[#allocation41 + $0xd8] sm:$0xff]
    %v5074 = vld [vmem:[#allocation41 + $0xe0] sm:$0xff]
    %v5075 = vld [vmem:[#allocation41 + $0xe8] sm:$0xff]
    %v5076 = vld [vmem:[#allocation41 + $0xf0] sm:$0xff]
    %v5077 = vld [vmem:[#allocation41 + $0xf8] sm:$0xff]
    %v5078 = vld [vmem:[#allocation43] sm:$0x1]
    %v5079 = vld [vmem:[#allocation44] sm:$0x1]
    %v5080 = vld [vmem:[#allocation46] sm:$0x1]
    %v5081 = vld [vmem:[%s75] sm:$0x1]
    %v5082 = vld [vmem:[#allocation4] sm:$0x1]
    %v5083 = vld [vmem:[#allocation47] sm:$0xff]
    %v5084 = vld [vmem:[#allocation47 + $0x8] sm:$0xff]
    %v5085 = vld [vmem:[#allocation47 + $0x10] sm:$0xff]
    %v5086 = vld [vmem:[#allocation47 + $0x18] sm:$0xff]
    %v5087 = vld [vmem:[#allocation47 + $0x20] sm:$0xff]
    %v5088 = vld [vmem:[#allocation47 + $0x28] sm:$0xff]
    %v5089 = vld [vmem:[#allocation47 + $0x30] sm:$0xff]
    %v5090 = vld [vmem:[#allocation47 + $0x38] sm:$0xff]
    %v5091 = vld [vmem:[#allocation47 + $0x40] sm:$0xff]
    %v5092 = vld [vmem:[#allocation47 + $0x48] sm:$0xff]
    %v5093 = vld [vmem:[#allocation47 + $0x50] sm:$0xff]
    %v5094 = vld [vmem:[#allocation47 + $0x58] sm:$0xff]
    %v5095 = vld [vmem:[#allocation47 + $0x60] sm:$0xff]
    %v5096 = vld [vmem:[#allocation47 + $0x68] sm:$0xff]
    %v5097 = vld [vmem:[#allocation47 + $0x70] sm:$0xff]
    %v5098 = vld [vmem:[#allocation47 + $0x78] sm:$0xff]
    %v5099 = vld [vmem:[#allocation47 + $0x80] sm:$0xff]
    %v5100 = vld [vmem:[#allocation47 + $0x88] sm:$0xff]
    %v5101 = vld [vmem:[#allocation47 + $0x90] sm:$0xff]
    %v5102 = vld [vmem:[#allocation47 + $0x98] sm:$0xff]
    %v5103 = vld [vmem:[#allocation47 + $0xa0] sm:$0xff]
    %v5104 = vld [vmem:[#allocation47 + $0xa8] sm:$0xff]
    %v5105 = vld [vmem:[#allocation47 + $0xb0] sm:$0xff]
    %v5106 = vld [vmem:[#allocation47 + $0xb8] sm:$0xff]
    %v5107 = vld [vmem:[#allocation47 + $0xc0] sm:$0xff]
    %v5108 = vld [vmem:[#allocation47 + $0xc8] sm:$0xff]
    %v5109 = vld [vmem:[#allocation47 + $0xd0] sm:$0xff]
    %v5110 = vld [vmem:[#allocation47 + $0xd8] sm:$0xff]
    %v5111 = vld [vmem:[#allocation47 + $0xe0] sm:$0xff]
    %v5112 = vld [vmem:[#allocation47 + $0xe8] sm:$0xff]
    %v5113 = vld [vmem:[#allocation47 + $0xf0] sm:$0xff]
    %v5114 = vld [vmem:[#allocation47 + $0xf8] sm:$0xff]
    %v5115 = vld [vmem:[#allocation47 + $0x100] sm:$0xff]
    %v5116 = vld [vmem:[#allocation47 + $0x108] sm:$0xff]
    %v5117 = vld [vmem:[#allocation47 + $0x110] sm:$0xff]
    %v5118 = vld [vmem:[#allocation47 + $0x118] sm:$0xff]
    %v5119 = vld [vmem:[#allocation49] sm:$0x1]
    %v5120 = vld [vmem:[#allocation50] sm:$0x1]
    %v5121 = vld [vmem:[#allocation52] sm:$0x1]
    %v5124 = vcombine.low %v5005, %v5000
    %v5125 = vcombine.high %v5005, %v5000
    %v5127 = vunpack.c.l.s4 1966171168
    %v5128 = vunpack.c.0.s8 %v5127
    %v5129 = vlaneseq
    %v5130 = vshrl.u32 %v5129, 7
    %v5131 = vsub.s32 %v5128, %v5130
    %v5132 = vrot.slane %v5124, %v5131
    %v5134 = vunpack.c.l.s4 1966171168
    %v5135 = vunpack.c.0.s8 %v5134
    %v5136 = vlaneseq
    %v5137 = vshrl.u32 %v5136, 7
    %v5138 = vsub.s32 %v5135, %v5137
    %v5139 = vrot.slane %v5125, %v5138
    %v5140 = vcombine.high %v5132, %v5132
    %v5141 = vcombine.high %v5139, %v5139
    %v5143 = vunpack.c.l.s4 1966171168
    %v5144 = vunpack.c.0.s8 %v5143
    %v5145 = vlaneseq
    %v5146 = vshrl.u32 %v5145, 7
    %v5147 = vsub.s32 %v5144, %v5146
    %v5148 = vrot.slane %v5132, %v5147
    %v5150 = vunpack.c.l.s4 1966171168
    %v5151 = vunpack.c.0.s8 %v5150
    %v5152 = vlaneseq
    %v5153 = vshrl.u32 %v5152, 7
    %v5154 = vsub.s32 %v5151, %v5153
    %v5155 = vrot.slane %v5139, %v5154
    %v5157 = vunpack.c.l.s4 1966171168
    %v5158 = vunpack.c.0.s8 %v5157
    %v5159 = vlaneseq
    %v5160 = vshrl.u32 %v5159, 7
    %v5161 = vsub.s32 %v5158, %v5160
    %v5162 = vrot.slane %v5140, %v5161
    %v5164 = vunpack.c.l.s4 1966171168
    %v5165 = vunpack.c.0.s8 %v5164
    %v5166 = vlaneseq
    %v5167 = vshrl.u32 %v5166, 7
    %v5168 = vsub.s32 %v5165, %v5167
    %v5169 = vrot.slane %v5141, %v5168
    %v5170 = vcombine.high %v5148, %v5148
    %v5171 = vcombine.high %v5155, %v5155
    %v5172 = vcombine.high %v5162, %v5162
    %v5173 = vcombine.high %v5169, %v5169
    %v5174 = vcombine.low %v5006, %v5002
    %v5175 = vcombine.high %v5006, %v5002
    %v5177 = vunpack.c.l.s4 1966171168
    %v5178 = vunpack.c.0.s8 %v5177
    %v5179 = vlaneseq
    %v5180 = vshrl.u32 %v5179, 7
    %v5181 = vsub.s32 %v5178, %v5180
    %v5182 = vrot.slane %v5174, %v5181
    %v5184 = vunpack.c.l.s4 1966171168
    %v5185 = vunpack.c.0.s8 %v5184
    %v5186 = vlaneseq
    %v5187 = vshrl.u32 %v5186, 7
    %v5188 = vsub.s32 %v5185, %v5187
    %v5189 = vrot.slane %v5175, %v5188
    %v5190 = vcombine.high %v5182, %v5182
    %v5191 = vcombine.high %v5189, %v5189
    %v5193 = vunpack.c.l.s4 1966171168
    %v5194 = vunpack.c.0.s8 %v5193
    %v5195 = vlaneseq
    %v5196 = vshrl.u32 %v5195, 7
    %v5197 = vsub.s32 %v5194, %v5196
    %v5198 = vrot.slane %v5182, %v5197
    %v5200 = vunpack.c.l.s4 1966171168
    %v5201 = vunpack.c.0.s8 %v5200
    %v5202 = vlaneseq
    %v5203 = vshrl.u32 %v5202, 7
    %v5204 = vsub.s32 %v5201, %v5203
    %v5205 = vrot.slane %v5189, %v5204
    %v5207 = vunpack.c.l.s4 1966171168
    %v5208 = vunpack.c.0.s8 %v5207
    %v5209 = vlaneseq
    %v5210 = vshrl.u32 %v5209, 7
    %v5211 = vsub.s32 %v5208, %v5210
    %v5212 = vrot.slane %v5190, %v5211
    %v5214 = vunpack.c.l.s4 1966171168
    %v5215 = vunpack.c.0.s8 %v5214
    %v5216 = vlaneseq
    %v5217 = vshrl.u32 %v5216, 7
    %v5218 = vsub.s32 %v5215, %v5217
    %v5219 = vrot.slane %v5191, %v5218
    %v5220 = vcombine.high %v5198, %v5198
    %v5221 = vcombine.high %v5205, %v5205
    %v5222 = vcombine.high %v5212, %v5212
    %v5223 = vcombine.high %v5219, %v5219
    %v5224 = vlaneseq
    %v5225 = vshrl.u32 %v5224, 7
    %v5226 = vsub.s32 0, %v5225
    %v5227 = vrot.slane %v5148, %v5226
    %v5228 = vlaneseq
    %v5229 = vshrl.u32 %v5228, 7
    %v5230 = vsub.s32 1, %v5229
    %v5231 = vrot.slane %v5148, %v5230
    %v5232 = vlaneseq
    %v5233 = vshrl.u32 %v5232, 7
    %v5234 = vsub.s32 0, %v5233
    %v5235 = vrot.slane %v5162, %v5234
    %v5236 = vlaneseq
    %v5237 = vshrl.u32 %v5236, 7
    %v5238 = vsub.s32 1, %v5237
    %v5239 = vrot.slane %v5162, %v5238
    %v5240 = vlaneseq
    %v5241 = vshrl.u32 %v5240, 7
    %v5242 = vsub.s32 0, %v5241
    %v5243 = vrot.slane %v5170, %v5242
    %v5244 = vlaneseq
    %v5245 = vshrl.u32 %v5244, 7
    %v5246 = vsub.s32 1, %v5245
    %v5247 = vrot.slane %v5170, %v5246
    %v5248 = vlaneseq
    %v5249 = vshrl.u32 %v5248, 7
    %v5250 = vsub.s32 0, %v5249
    %v5251 = vrot.slane %v5172, %v5250
    %v5252 = vlaneseq
    %v5253 = vshrl.u32 %v5252, 7
    %v5254 = vsub.s32 1, %v5253
    %v5255 = vrot.slane %v5172, %v5254
    %v5256 = vlaneseq
    %v5257 = vshrl.u32 %v5256, 7
    %v5258 = vsub.s32 0, %v5257
    %v5259 = vrot.slane %v5155, %v5258
    %v5260 = vlaneseq
    %v5261 = vshrl.u32 %v5260, 7
    %v5262 = vsub.s32 1, %v5261
    %v5263 = vrot.slane %v5155, %v5262
    %v5264 = vlaneseq
    %v5265 = vshrl.u32 %v5264, 7
    %v5266 = vsub.s32 0, %v5265
    %v5267 = vrot.slane %v5169, %v5266
    %v5268 = vlaneseq
    %v5269 = vshrl.u32 %v5268, 7
    %v5270 = vsub.s32 1, %v5269
    %v5271 = vrot.slane %v5169, %v5270
    %v5272 = vlaneseq
    %v5273 = vshrl.u32 %v5272, 7
    %v5274 = vsub.s32 0, %v5273
    %v5275 = vrot.slane %v5171, %v5274
    %v5276 = vlaneseq
    %v5277 = vshrl.u32 %v5276, 7
    %v5278 = vsub.s32 1, %v5277
    %v5279 = vrot.slane %v5171, %v5278
    %v5280 = vlaneseq
    %v5281 = vshrl.u32 %v5280, 7
    %v5282 = vsub.s32 0, %v5281
    %v5283 = vrot.slane %v5173, %v5282
    %v5284 = vlaneseq
    %v5285 = vshrl.u32 %v5284, 7
    %v5286 = vsub.s32 1, %v5285
    %v5287 = vrot.slane %v5173, %v5286
    %v5288 = vlaneseq
    %v5289 = vshrl.u32 %v5288, 7
    %v5290 = vsub.s32 0, %v5289
    %v5291 = vrot.slane %v5198, %v5290
    %v5292 = vlaneseq
    %v5293 = vshrl.u32 %v5292, 7
    %v5294 = vsub.s32 1, %v5293
    %v5295 = vrot.slane %v5198, %v5294
    %v5296 = vlaneseq
    %v5297 = vshrl.u32 %v5296, 7
    %v5298 = vsub.s32 0, %v5297
    %v5299 = vrot.slane %v5212, %v5298
    %v5300 = vlaneseq
    %v5301 = vshrl.u32 %v5300, 7
    %v5302 = vsub.s32 1, %v5301
    %v5303 = vrot.slane %v5212, %v5302
    %v5304 = vlaneseq
    %v5305 = vshrl.u32 %v5304, 7
    %v5306 = vsub.s32 0, %v5305
    %v5307 = vrot.slane %v5220, %v5306
    %v5308 = vlaneseq
    %v5309 = vshrl.u32 %v5308, 7
    %v5310 = vsub.s32 1, %v5309
    %v5311 = vrot.slane %v5220, %v5310
    %v5312 = vlaneseq
    %v5313 = vshrl.u32 %v5312, 7
    %v5314 = vsub.s32 0, %v5313
    %v5315 = vrot.slane %v5222, %v5314
    %v5316 = vlaneseq
    %v5317 = vshrl.u32 %v5316, 7
    %v5318 = vsub.s32 1, %v5317
    %v5319 = vrot.slane %v5222, %v5318
    %v5320 = vlaneseq
    %v5321 = vshrl.u32 %v5320, 7
    %v5322 = vsub.s32 0, %v5321
    %v5323 = vrot.slane %v5205, %v5322
    %v5324 = vlaneseq
    %v5325 = vshrl.u32 %v5324, 7
    %v5326 = vsub.s32 1, %v5325
    %v5327 = vrot.slane %v5205, %v5326
    %v5328 = vlaneseq
    %v5329 = vshrl.u32 %v5328, 7
    %v5330 = vsub.s32 0, %v5329
    %v5331 = vrot.slane %v5219, %v5330
    %v5332 = vlaneseq
    %v5333 = vshrl.u32 %v5332, 7
    %v5334 = vsub.s32 1, %v5333
    %v5335 = vrot.slane %v5219, %v5334
    %v5336 = vlaneseq
    %v5337 = vshrl.u32 %v5336, 7
    %v5338 = vsub.s32 0, %v5337
    %v5339 = vrot.slane %v5221, %v5338
    %v5340 = vlaneseq
    %v5341 = vshrl.u32 %v5340, 7
    %v5342 = vsub.s32 1, %v5341
    %v5343 = vrot.slane %v5221, %v5342
    %v5344 = vlaneseq
    %v5345 = vshrl.u32 %v5344, 7
    %v5346 = vsub.s32 0, %v5345
    %v5347 = vrot.slane %v5223, %v5346
    %v5348 = vlaneseq
    %v5349 = vshrl.u32 %v5348, 7
    %v5350 = vsub.s32 1, %v5349
    %v5351 = vrot.slane %v5223, %v5350
    %v5384 = vsub.f32 %v5227, %v5005
    %v5385 = vsub.f32 %v5231, %v5000
    %v5386 = vsub.f32 %v5235, %v5005
    %v5387 = vsub.f32 %v5239, %v5000
    %v5388 = vsub.f32 %v5243, %v5005
    %v5389 = vsub.f32 %v5247, %v5000
    %v5390 = vsub.f32 %v5251, %v5005
    %v5391 = vsub.f32 %v5255, %v5000
    %v5392 = vsub.f32 %v5259, %v5005
    %v5393 = vsub.f32 %v5263, %v5000
    %v5394 = vsub.f32 %v5267, %v5005
    %v5395 = vsub.f32 %v5271, %v5000
    %v5396 = vsub.f32 %v5275, %v5005
    %v5397 = vsub.f32 %v5279, %v5000
    %v5398 = vsub.f32 %v5283, %v5005
    %v5399 = vsub.f32 %v5287, %v5000
    %v5400 = vsub.f32 %v5291, %v5006
    %v5401 = vsub.f32 %v5295, %v5002
    %v5402 = vsub.f32 %v5299, %v5006
    %v5403 = vsub.f32 %v5303, %v5002
    %v5404 = vsub.f32 %v5307, %v5006
    %v5405 = vsub.f32 %v5311, %v5002
    %v5406 = vsub.f32 %v5315, %v5006
    %v5407 = vsub.f32 %v5319, %v5002
    %v5408 = vsub.f32 %v5323, %v5006
    %v5409 = vsub.f32 %v5327, %v5002
    %v5410 = vsub.f32 %v5331, %v5006
    %v5411 = vsub.f32 %v5335, %v5002
    %v5412 = vsub.f32 %v5339, %v5006
    %v5413 = vsub.f32 %v5343, %v5002
    %v5414 = vsub.f32 %v5347, %v5006
    %v5415 = vsub.f32 %v5351, %v5002
    %v5416 = vand.u32 2147483647, %v5384
    %v5417 = vand.u32 2147483647, %v5385
    %v5418 = vand.u32 2147483647, %v5386
    %v5419 = vand.u32 2147483647, %v5387
    %v5420 = vand.u32 2147483647, %v5388
    %v5421 = vand.u32 2147483647, %v5389
    %v5422 = vand.u32 2147483647, %v5390
    %v5423 = vand.u32 2147483647, %v5391
    %v5424 = vand.u32 2147483647, %v5392
    %v5425 = vand.u32 2147483647, %v5393
    %v5426 = vand.u32 2147483647, %v5394
    %v5427 = vand.u32 2147483647, %v5395
    %v5428 = vand.u32 2147483647, %v5396
    %v5429 = vand.u32 2147483647, %v5397
    %v5430 = vand.u32 2147483647, %v5398
    %v5431 = vand.u32 2147483647, %v5399
    %v5432 = vand.u32 2147483647, %v5400
    %v5433 = vand.u32 2147483647, %v5401
    %v5434 = vand.u32 2147483647, %v5402
    %v5435 = vand.u32 2147483647, %v5403
    %v5436 = vand.u32 2147483647, %v5404
    %v5437 = vand.u32 2147483647, %v5405
    %v5438 = vand.u32 2147483647, %v5406
    %v5439 = vand.u32 2147483647, %v5407
    %v5440 = vand.u32 2147483647, %v5408
    %v5441 = vand.u32 2147483647, %v5409
    %v5442 = vand.u32 2147483647, %v5410
    %v5443 = vand.u32 2147483647, %v5411
    %v5444 = vand.u32 2147483647, %v5412
    %v5445 = vand.u32 2147483647, %v5413
    %v5446 = vand.u32 2147483647, %v5414
    %v5447 = vand.u32 2147483647, %v5415
    %v5448 = vpack.c.bf16 %v5418, %v5416
    %v5449 = vpack.c.bf16 %v5419, %v5417
    %v5450 = vpack.c.bf16 %v5422, %v5420
    %v5451 = vpack.c.bf16 %v5423, %v5421
    %v5452 = vpack.c.bf16 %v5426, %v5424
    %v5453 = vpack.c.bf16 %v5427, %v5425
    %v5454 = vpack.c.bf16 %v5430, %v5428
    %v5455 = vpack.c.bf16 %v5431, %v5429
    %v5456 = vpack.c.bf16 %v5434, %v5432
    %v5457 = vpack.c.bf16 %v5435, %v5433
    %v5458 = vpack.c.bf16 %v5438, %v5436
    %v5459 = vpack.c.bf16 %v5439, %v5437
    %v5460 = vpack.c.bf16 %v5442, %v5440
    %v5461 = vpack.c.bf16 %v5443, %v5441
    %v5462 = vpack.c.bf16 %v5446, %v5444
    %v5463 = vpack.c.bf16 %v5447, %v5445
    %v5464 = vpack.c.bf16 %v5009, %v5007
    %v5465 = vpack.c.bf16 %v5010, %v5008
    %v5466 = vpack.c.bf16 %v5013, %v5011
    %v5467 = vpack.c.bf16 %v5014, %v5012
    %v5468 = vpack.c.bf16 %v5017, %v5015
    %v5469 = vpack.c.bf16 %v5018, %v5016
    %v5470 = vpack.c.bf16 %v5021, %v5019
    %v5471 = vpack.c.bf16 %v5022, %v5020
    %v5472 = vpack.c.bf16 %v5025, %v5023
    %v5473 = vpack.c.bf16 %v5026, %v5024
    %v5474 = vpack.c.bf16 %v5029, %v5027
    %v5475 = vpack.c.bf16 %v5030, %v5028
    %v5476 = vpack.c.bf16 %v5033, %v5031
    %v5477 = vpack.c.bf16 %v5034, %v5032
    %v5478 = vpack.c.bf16 %v5037, %v5035
    %v5479 = vpack.c.bf16 %v5038, %v5036
    %v5480 = vpack.c.bf16 %v5041, %v5039
    %v5481 = vpack.c.bf16 %v5042, %v5040
    %v5483 = vlaneseq
    %v5484 = vshrl.u32 %v5483, 7
    %v5485 = vsub.s32 0, %v5484
    %v5486 = vrot.slane %v5043, %v5485
    %v5487 = vlaneseq
    %v5488 = vshrl.u32 %v5487, 7
    %v5489 = vsub.s32 1, %v5488
    %v5490 = vrot.slane %v5043, %v5489
    %v5494 = vsel %vm847, %v5449, 0
    %v5497 = vsel %vm847, %v5451, 0
    %v5500 = vsel %vm847, %v5453, 0
    %v5503 = vsel %vm847, %v5455, 0
    %v5506 = vsel %vm847, %v5457, 0
    %v5509 = vsel %vm847, %v5459, 0
    %v5512 = vsel %vm847, %v5461, 0
    %v5515 = vsel %vm847, %v5463, 0
    %5517 = vmatprep.subr.bf16.mxu0 %v5479
    %5518 = vmatpush1.bf16.msra.mxu0 %v5478
    %5519 = vmatprep.subr.bf16.mxu0 %v5477
    %5520 = vmatpush1.bf16.msra.mxu0 %v5476
    %5521 = vmatprep.subr.bf16.mxu0 %v5475
    %5522 = vmatpush1.bf16.msra.mxu0 %v5474
    %5523 = vmatprep.subr.bf16.mxu0 %v5473
    %5524 = vmatpush1.bf16.msra.mxu0 %v5472
    %5525 = vmatprep.subr.bf16.mxu0 %v5471
    %5526 = vmatpush1.bf16.msra.mxu0 %v5470
    %5527 = vmatprep.subr.bf16.mxu0 %v5469
    %5528 = vmatpush1.bf16.msra.mxu0 %v5468
    %5529 = vmatprep.subr.bf16.mxu0 %v5467
    %5530 = vmatpush1.bf16.msra.mxu0 %v5466
    %5531 = vmatprep.subr.bf16.mxu0 %v5465
    %5532 = vmatpush1.bf16.msra.mxu0 %v5464
    %5533 = vmatprep.subr.bf16.mxu0 0
    %5534 = vmatpush2.bf16.msra.mxu0 0
    %5535 = vmatprep.subr.bf16.mxu0 0
    %5536 = vmatpush2.bf16.msra.mxu0 0
    %5537 = vmatprep.subr.bf16.mxu0 0
    %5538 = vmatpush2.bf16.msra.mxu0 0
    %5539 = vmatprep.subr.bf16.mxu0 0
    %5540 = vmatpush2.bf16.msra.mxu0 0
    %5541 = vmatprep.subr.bf16.mxu0 0
    %5542 = vmatpush2.bf16.msra.mxu0 0
    %5543 = vmatprep.subr.bf16.mxu0 0
    %5544 = vmatpush2.bf16.msra.mxu0 0
    %5545 = vmatprep.subr.bf16.mxu0 0
    %5546 = vmatpush2.bf16.msra.mxu0 0
    %5547 = vmatprep.subr.bf16.mxu0 %v5481
    %5548 = vmatpush2.bf16.msra.mxu0 %v5480
    %5549 = vmatprep.mubr.bf16.mxu0 %v5494
    %5550 = vmatmul.mubr.bf16.gmra.mxu0 %v5448
    %v5551 = vpop.f32.mrf.mxu0
    %v5552 = vadd.f32 %v5486, %v5551
    %v5553 = vpop.f32.mrf.mxu0
    %v5554 = vadd.f32 %v5490, %v5553
    %v5555 = vpop.f32.mrf.mxu0
    %v5556 = vadd.f32 %v5486, %v5555
    %v5557 = vpop.f32.mrf.mxu0
    %v5558 = vadd.f32 %v5490, %v5557
    %5559 = vmatprep.mubr.bf16.mxu0 %v5497
    %5560 = vmatmul.mubr.bf16.gmra.mxu0 %v5450
    %v5561 = vpop.f32.mrf.mxu0
    %v5562 = vadd.f32 %v5486, %v5561
    %v5563 = vpop.f32.mrf.mxu0
    %v5564 = vadd.f32 %v5490, %v5563
    %v5565 = vpop.f32.mrf.mxu0
    %v5566 = vadd.f32 %v5486, %v5565
    %v5567 = vpop.f32.mrf.mxu0
    %v5568 = vadd.f32 %v5490, %v5567
    %5569 = vmatprep.mubr.bf16.mxu0 %v5500
    %5570 = vmatmul.mubr.bf16.gmra.mxu0 %v5452
    %v5571 = vpop.f32.mrf.mxu0
    %v5572 = vadd.f32 %v5486, %v5571
    %v5573 = vpop.f32.mrf.mxu0
    %v5574 = vadd.f32 %v5490, %v5573
    %v5575 = vpop.f32.mrf.mxu0
    %v5576 = vadd.f32 %v5486, %v5575
    %v5577 = vpop.f32.mrf.mxu0
    %v5578 = vadd.f32 %v5490, %v5577
    %5579 = vmatprep.mubr.bf16.mxu0 %v5503
    %5580 = vmatmul.mubr.bf16.gmra.mxu0 %v5454
    %v5581 = vpop.f32.mrf.mxu0
    %v5582 = vadd.f32 %v5486, %v5581
    %v5583 = vpop.f32.mrf.mxu0
    %v5584 = vadd.f32 %v5490, %v5583
    %v5585 = vpop.f32.mrf.mxu0
    %v5586 = vadd.f32 %v5486, %v5585
    %v5587 = vpop.f32.mrf.mxu0
    %v5588 = vadd.f32 %v5490, %v5587
    %5589 = vmatprep.mubr.bf16.mxu0 %v5506
    %5590 = vmatmul.mubr.bf16.gmra.mxu0 %v5456
    %v5591 = vpop.f32.mrf.mxu0
    %v5592 = vadd.f32 %v5486, %v5591
    %v5593 = vpop.f32.mrf.mxu0
    %v5594 = vadd.f32 %v5490, %v5593
    %v5595 = vpop.f32.mrf.mxu0
    %v5596 = vadd.f32 %v5486, %v5595
    %v5597 = vpop.f32.mrf.mxu0
    %v5598 = vadd.f32 %v5490, %v5597
    %5599 = vmatprep.mubr.bf16.mxu0 %v5509
    %5600 = vmatmul.mubr.bf16.gmra.mxu0 %v5458
    %v5601 = vpop.f32.mrf.mxu0
    %v5602 = vadd.f32 %v5486, %v5601
    %v5603 = vpop.f32.mrf.mxu0
    %v5604 = vadd.f32 %v5490, %v5603
    %v5605 = vpop.f32.mrf.mxu0
    %v5606 = vadd.f32 %v5486, %v5605
    %v5607 = vpop.f32.mrf.mxu0
    %v5608 = vadd.f32 %v5490, %v5607
    %5609 = vmatprep.mubr.bf16.mxu0 %v5512
    %5610 = vmatmul.mubr.bf16.gmra.mxu0 %v5460
    %v5611 = vpop.f32.mrf.mxu0
    %v5612 = vadd.f32 %v5486, %v5611
    %v5613 = vpop.f32.mrf.mxu0
    %v5614 = vadd.f32 %v5490, %v5613
    %v5615 = vpop.f32.mrf.mxu0
    %v5616 = vadd.f32 %v5486, %v5615
    %v5617 = vpop.f32.mrf.mxu0
    %v5618 = vadd.f32 %v5490, %v5617
    %5619 = vmatprep.mubr.bf16.mxu0 %v5515
    %5620 = vmatmul.mubr.bf16.gmra.mxu0 %v5462
    %v5621 = vpop.f32.mrf.mxu0
    %v5622 = vadd.f32 %v5486, %v5621
    %v5623 = vpop.f32.mrf.mxu0
    %v5624 = vadd.f32 %v5490, %v5623
    %v5625 = vpop.f32.mrf.mxu0
    %v5626 = vadd.f32 %v5486, %v5625
    %v5627 = vpop.f32.mrf.mxu0
    %v5628 = vadd.f32 %v5490, %v5627
    %5629 = vdwg.mxu0
    %v5630 = vadd.f32 %v5552, %v5556
    %v5631 = vadd.f32 %v5630, %v5562
    %v5632 = vadd.f32 %v5631, %v5566
    %v5633 = vadd.f32 %v5632, %v5572
    %v5634 = vadd.f32 %v5633, %v5576
    %v5635 = vadd.f32 %v5634, %v5582
    %v5636 = vadd.f32 %v5635, %v5586
    %v5637 = vadd.f32 %v5636, %v5592
    %v5638 = vadd.f32 %v5637, %v5596
    %v5639 = vadd.f32 %v5638, %v5602
    %v5640 = vadd.f32 %v5639, %v5606
    %v5641 = vadd.f32 %v5640, %v5612
    %v5642 = vadd.f32 %v5641, %v5616
    %v5643 = vadd.f32 %v5642, %v5622
    %v5644 = vadd.f32 %v5643, %v5626
    %v5645 = vrot.slane %v5644, 4
    %v5646 = vadd.f32 %v5644, %v5645
    %v5647 = vrot.slane %v5646, 2
    %v5648 = vadd.f32 %v5646, %v5647
    %v5649 = vrot.slane %v5648, 1
    %v5650 = vadd.f32 %v5648, %v5649
    %v5651 = vadd.f32 %v5554, %v5558
    %v5652 = vadd.f32 %v5651, %v5564
    %v5653 = vadd.f32 %v5652, %v5568
    %v5654 = vadd.f32 %v5653, %v5574
    %v5655 = vadd.f32 %v5654, %v5578
    %v5656 = vadd.f32 %v5655, %v5584
    %v5657 = vadd.f32 %v5656, %v5588
    %v5658 = vadd.f32 %v5657, %v5594
    %v5659 = vadd.f32 %v5658, %v5598
    %v5660 = vadd.f32 %v5659, %v5604
    %v5661 = vadd.f32 %v5660, %v5608
    %v5662 = vadd.f32 %v5661, %v5614
    %v5663 = vadd.f32 %v5662, %v5618
    %v5664 = vadd.f32 %v5663, %v5624
    %v5665 = vadd.f32 %v5664, %v5628
    %v5666 = vrot.slane %v5665, 4
    %v5667 = vadd.f32 %v5665, %v5666
    %v5668 = vrot.slane %v5667, 2
    %v5669 = vadd.f32 %v5667, %v5668
    %v5670 = vrot.slane %v5669, 1
    %v5671 = vadd.f32 %v5669, %v5670
    %v5672 = vmul.f32 %v5650, %v1027
    %v5673 = vmul.f32 %v5671, %v1027
    %v5674 = vmul.f32 %v5552, %v5552
    %v5675 = vmul.f32 %v5554, %v5554
    %v5676 = vmul.f32 %v5556, %v5556
    %v5677 = vmul.f32 %v5558, %v5558
    %v5678 = vmul.f32 %v5562, %v5562
    %v5679 = vmul.f32 %v5564, %v5564
    %v5680 = vmul.f32 %v5566, %v5566
    %v5681 = vmul.f32 %v5568, %v5568
    %v5682 = vmul.f32 %v5572, %v5572
    %v5683 = vmul.f32 %v5574, %v5574
    %v5684 = vmul.f32 %v5576, %v5576
    %v5685 = vmul.f32 %v5578, %v5578
    %v5686 = vmul.f32 %v5582, %v5582
    %v5687 = vmul.f32 %v5584, %v5584
    %v5688 = vmul.f32 %v5586, %v5586
    %v5689 = vmul.f32 %v5588, %v5588
    %v5690 = vmul.f32 %v5592, %v5592
    %v5691 = vmul.f32 %v5594, %v5594
    %v5692 = vmul.f32 %v5596, %v5596
    %v5693 = vmul.f32 %v5598, %v5598
    %v5694 = vmul.f32 %v5602, %v5602
    %v5695 = vmul.f32 %v5604, %v5604
    %v5696 = vmul.f32 %v5606, %v5606
    %v5697 = vmul.f32 %v5608, %v5608
    %v5698 = vmul.f32 %v5612, %v5612
    %v5699 = vmul.f32 %v5614, %v5614
    %v5700 = vmul.f32 %v5616, %v5616
    %v5701 = vmul.f32 %v5618, %v5618
    %v5702 = vmul.f32 %v5622, %v5622
    %v5703 = vmul.f32 %v5624, %v5624
    %v5704 = vmul.f32 %v5626, %v5626
    %v5705 = vmul.f32 %v5628, %v5628
    %v5706 = vadd.f32 %v5674, %v5676
    %v5707 = vadd.f32 %v5706, %v5678
    %v5708 = vadd.f32 %v5707, %v5680
    %v5709 = vadd.f32 %v5708, %v5682
    %v5710 = vadd.f32 %v5709, %v5684
    %v5711 = vadd.f32 %v5710, %v5686
    %v5712 = vadd.f32 %v5711, %v5688
    %v5713 = vadd.f32 %v5712, %v5690
    %v5714 = vadd.f32 %v5713, %v5692
    %v5715 = vadd.f32 %v5714, %v5694
    %v5716 = vadd.f32 %v5715, %v5696
    %v5717 = vadd.f32 %v5716, %v5698
    %v5718 = vadd.f32 %v5717, %v5700
    %v5719 = vadd.f32 %v5718, %v5702
    %v5720 = vadd.f32 %v5719, %v5704
    %v5721 = vrot.slane %v5720, 4
    %v5722 = vadd.f32 %v5720, %v5721
    %v5723 = vrot.slane %v5722, 2
    %v5724 = vadd.f32 %v5722, %v5723
    %v5725 = vrot.slane %v5724, 1
    %v5726 = vadd.f32 %v5724, %v5725
    %v5727 = vadd.f32 %v5675, %v5677
    %v5728 = vadd.f32 %v5727, %v5679
    %v5729 = vadd.f32 %v5728, %v5681
    %v5730 = vadd.f32 %v5729, %v5683
    %v5731 = vadd.f32 %v5730, %v5685
    %v5732 = vadd.f32 %v5731, %v5687
    %v5733 = vadd.f32 %v5732, %v5689
    %v5734 = vadd.f32 %v5733, %v5691
    %v5735 = vadd.f32 %v5734, %v5693
    %v5736 = vadd.f32 %v5735, %v5695
    %v5737 = vadd.f32 %v5736, %v5697
    %v5738 = vadd.f32 %v5737, %v5699
    %v5739 = vadd.f32 %v5738, %v5701
    %v5740 = vadd.f32 %v5739, %v5703
    %v5741 = vadd.f32 %v5740, %v5705
    %v5742 = vrot.slane %v5741, 4
    %v5743 = vadd.f32 %v5741, %v5742
    %v5744 = vrot.slane %v5743, 2
    %v5745 = vadd.f32 %v5743, %v5744
    %v5746 = vrot.slane %v5745, 1
    %v5747 = vadd.f32 %v5745, %v5746
    %v5748 = vmul.f32 %v5726, %v1027
    %v5749 = vmul.f32 %v5747, %v1027
    %v5750 = vmul.f32 %v5672, %v5672
    %v5751 = vmul.f32 %v5673, %v5673
    %v5752 = vsub.f32 %v5748, %v5750
    %v5753 = vsub.f32 %v5749, %v5751
    %v5754 = vmax.f32 %v5752, 0.0
    %v5755 = vmax.f32 %v5753, 0.0
    %v5756 = vsub.f32 %v5552, %v5672
    %v5757 = vsub.f32 %v5554, %v5673
    %v5758 = vsub.f32 %v5556, %v5672
    %v5759 = vsub.f32 %v5558, %v5673
    %v5760 = vsub.f32 %v5562, %v5672
    %v5761 = vsub.f32 %v5564, %v5673
    %v5762 = vsub.f32 %v5566, %v5672
    %v5763 = vsub.f32 %v5568, %v5673
    %v5764 = vsub.f32 %v5572, %v5672
    %v5765 = vsub.f32 %v5574, %v5673
    %v5766 = vsub.f32 %v5576, %v5672
    %v5767 = vsub.f32 %v5578, %v5673
    %v5768 = vsub.f32 %v5582, %v5672
    %v5769 = vsub.f32 %v5584, %v5673
    %v5770 = vsub.f32 %v5586, %v5672
    %v5771 = vsub.f32 %v5588, %v5673
    %v5772 = vsub.f32 %v5592, %v5672
    %v5773 = vsub.f32 %v5594, %v5673
    %v5774 = vsub.f32 %v5596, %v5672
    %v5775 = vsub.f32 %v5598, %v5673
    %v5776 = vsub.f32 %v5602, %v5672
    %v5777 = vsub.f32 %v5604, %v5673
    %v5778 = vsub.f32 %v5606, %v5672
    %v5779 = vsub.f32 %v5608, %v5673
    %v5780 = vsub.f32 %v5612, %v5672
    %v5781 = vsub.f32 %v5614, %v5673
    %v5782 = vsub.f32 %v5616, %v5672
    %v5783 = vsub.f32 %v5618, %v5673
    %v5784 = vsub.f32 %v5622, %v5672
    %v5785 = vsub.f32 %v5624, %v5673
    %v5786 = vsub.f32 %v5626, %v5672
    %v5787 = vsub.f32 %v5628, %v5673
    %v5788 = vadd.f32 %v5754, 1e-05
    %v5789 = vadd.f32 %v5755, 1e-05
    %v5790 = vrsqrt.pop %v5788
    %v5791 = vrsqrt.pop %v5789
    %v5792 = vmul.f32 %v5756, %v5790
    %v5793 = vmul.f32 %v5757, %v5791
    %v5794 = vmul.f32 %v5758, %v5790
    %v5795 = vmul.f32 %v5759, %v5791
    %v5796 = vmul.f32 %v5760, %v5790
    %v5797 = vmul.f32 %v5761, %v5791
    %v5798 = vmul.f32 %v5762, %v5790
    %v5799 = vmul.f32 %v5763, %v5791
    %v5800 = vmul.f32 %v5764, %v5790
    %v5801 = vmul.f32 %v5765, %v5791
    %v5802 = vmul.f32 %v5766, %v5790
    %v5803 = vmul.f32 %v5767, %v5791
    %v5804 = vmul.f32 %v5768, %v5790
    %v5805 = vmul.f32 %v5769, %v5791
    %v5806 = vmul.f32 %v5770, %v5790
    %v5807 = vmul.f32 %v5771, %v5791
    %v5808 = vmul.f32 %v5772, %v5790
    %v5809 = vmul.f32 %v5773, %v5791
    %v5810 = vmul.f32 %v5774, %v5790
    %v5811 = vmul.f32 %v5775, %v5791
    %v5812 = vmul.f32 %v5776, %v5790
    %v5813 = vmul.f32 %v5777, %v5791
    %v5814 = vmul.f32 %v5778, %v5790
    %v5815 = vmul.f32 %v5779, %v5791
    %v5816 = vmul.f32 %v5780, %v5790
    %v5817 = vmul.f32 %v5781, %v5791
    %v5818 = vmul.f32 %v5782, %v5790
    %v5819 = vmul.f32 %v5783, %v5791
    %v5820 = vmul.f32 %v5784, %v5790
    %v5821 = vmul.f32 %v5785, %v5791
    %v5822 = vmul.f32 %v5786, %v5790
    %v5823 = vmul.f32 %v5787, %v5791
    %v5825 = vlaneseq
    %v5826 = vshrl.u32 %v5825, 7
    %v5827 = vsub.s32 0, %v5826
    %v5828 = vrot.slane %v5044, %v5827
    %v5829 = vlaneseq
    %v5830 = vshrl.u32 %v5829, 7
    %v5831 = vsub.s32 1, %v5830
    %v5832 = vrot.slane %v5044, %v5831
    %v5835 = vmul.f32 %v5792, %v5828
    %v5836 = vmul.f32 %v5793, %v5832
    %v5837 = vmul.f32 %v5794, %v5828
    %v5838 = vmul.f32 %v5795, %v5832
    %v5839 = vmul.f32 %v5796, %v5828
    %v5840 = vmul.f32 %v5797, %v5832
    %v5841 = vmul.f32 %v5798, %v5828
    %v5842 = vmul.f32 %v5799, %v5832
    %v5843 = vmul.f32 %v5800, %v5828
    %v5844 = vmul.f32 %v5801, %v5832
    %v5845 = vmul.f32 %v5802, %v5828
    %v5846 = vmul.f32 %v5803, %v5832
    %v5847 = vmul.f32 %v5804, %v5828
    %v5848 = vmul.f32 %v5805, %v5832
    %v5849 = vmul.f32 %v5806, %v5828
    %v5850 = vmul.f32 %v5807, %v5832
    %v5851 = vmul.f32 %v5808, %v5828
    %v5852 = vmul.f32 %v5809, %v5832
    %v5853 = vmul.f32 %v5810, %v5828
    %v5854 = vmul.f32 %v5811, %v5832
    %v5855 = vmul.f32 %v5812, %v5828
    %v5856 = vmul.f32 %v5813, %v5832
    %v5857 = vmul.f32 %v5814, %v5828
    %v5858 = vmul.f32 %v5815, %v5832
    %v5859 = vmul.f32 %v5816, %v5828
    %v5860 = vmul.f32 %v5817, %v5832
    %v5861 = vmul.f32 %v5818, %v5828
    %v5862 = vmul.f32 %v5819, %v5832
    %v5863 = vmul.f32 %v5820, %v5828
    %v5864 = vmul.f32 %v5821, %v5832
    %v5865 = vmul.f32 %v5822, %v5828
    %v5866 = vmul.f32 %v5823, %v5832
    %v5868 = vlaneseq
    %v5869 = vshrl.u32 %v5868, 7
    %v5870 = vsub.s32 0, %v5869
    %v5871 = vrot.slane %v5045, %v5870
    %v5872 = vlaneseq
    %v5873 = vshrl.u32 %v5872, 7
    %v5874 = vsub.s32 1, %v5873
    %v5875 = vrot.slane %v5045, %v5874
    %v5878 = vadd.f32 %v5835, %v5871
    %v5879 = vadd.f32 %v5836, %v5875
    %v5880 = vadd.f32 %v5837, %v5871
    %v5881 = vadd.f32 %v5838, %v5875
    %v5882 = vadd.f32 %v5839, %v5871
    %v5883 = vadd.f32 %v5840, %v5875
    %v5884 = vadd.f32 %v5841, %v5871
    %v5885 = vadd.f32 %v5842, %v5875
    %v5886 = vadd.f32 %v5843, %v5871
    %v5887 = vadd.f32 %v5844, %v5875
    %v5888 = vadd.f32 %v5845, %v5871
    %v5889 = vadd.f32 %v5846, %v5875
    %v5890 = vadd.f32 %v5847, %v5871
    %v5891 = vadd.f32 %v5848, %v5875
    %v5892 = vadd.f32 %v5849, %v5871
    %v5893 = vadd.f32 %v5850, %v5875
    %v5894 = vadd.f32 %v5851, %v5871
    %v5895 = vadd.f32 %v5852, %v5875
    %v5896 = vadd.f32 %v5853, %v5871
    %v5897 = vadd.f32 %v5854, %v5875
    %v5898 = vadd.f32 %v5855, %v5871
    %v5899 = vadd.f32 %v5856, %v5875
    %v5900 = vadd.f32 %v5857, %v5871
    %v5901 = vadd.f32 %v5858, %v5875
    %v5902 = vadd.f32 %v5859, %v5871
    %v5903 = vadd.f32 %v5860, %v5875
    %v5904 = vadd.f32 %v5861, %v5871
    %v5905 = vadd.f32 %v5862, %v5875
    %v5906 = vadd.f32 %v5863, %v5871
    %v5907 = vadd.f32 %v5864, %v5875
    %v5908 = vadd.f32 %v5865, %v5871
    %v5909 = vadd.f32 %v5866, %v5875
    %vm5910 = vcmp.ge.f32.partialorder %v5878, 0.0
    %vm5911 = vcmp.ge.f32.partialorder %v5879, 0.0
    %vm5912 = vcmp.ge.f32.partialorder %v5880, 0.0
    %vm5913 = vcmp.ge.f32.partialorder %v5881, 0.0
    %vm5914 = vcmp.ge.f32.partialorder %v5882, 0.0
    %vm5915 = vcmp.ge.f32.partialorder %v5883, 0.0
    %vm5916 = vcmp.ge.f32.partialorder %v5884, 0.0
    %vm5917 = vcmp.ge.f32.partialorder %v5885, 0.0
    %vm5918 = vcmp.ge.f32.partialorder %v5886, 0.0
    %vm5919 = vcmp.ge.f32.partialorder %v5887, 0.0
    %vm5920 = vcmp.ge.f32.partialorder %v5888, 0.0
    %vm5921 = vcmp.ge.f32.partialorder %v5889, 0.0
    %vm5922 = vcmp.ge.f32.partialorder %v5890, 0.0
    %vm5923 = vcmp.ge.f32.partialorder %v5891, 0.0
    %vm5924 = vcmp.ge.f32.partialorder %v5892, 0.0
    %vm5925 = vcmp.ge.f32.partialorder %v5893, 0.0
    %vm5926 = vcmp.ge.f32.partialorder %v5894, 0.0
    %vm5927 = vcmp.ge.f32.partialorder %v5895, 0.0
    %vm5928 = vcmp.ge.f32.partialorder %v5896, 0.0
    %vm5929 = vcmp.ge.f32.partialorder %v5897, 0.0
    %vm5930 = vcmp.ge.f32.partialorder %v5898, 0.0
    %vm5931 = vcmp.ge.f32.partialorder %v5899, 0.0
    %vm5932 = vcmp.ge.f32.partialorder %v5900, 0.0
    %vm5933 = vcmp.ge.f32.partialorder %v5901, 0.0
    %vm5934 = vcmp.ge.f32.partialorder %v5902, 0.0
    %vm5935 = vcmp.ge.f32.partialorder %v5903, 0.0
    %vm5936 = vcmp.ge.f32.partialorder %v5904, 0.0
    %vm5937 = vcmp.ge.f32.partialorder %v5905, 0.0
    %vm5938 = vcmp.ge.f32.partialorder %v5906, 0.0
    %vm5939 = vcmp.ge.f32.partialorder %v5907, 0.0
    %vm5940 = vcmp.ge.f32.partialorder %v5908, 0.0
    %vm5941 = vcmp.ge.f32.partialorder %v5909, 0.0
    %v5942 = vmul.f32 %v5878, 0.01
    %v5943 = vmul.f32 %v5879, 0.01
    %v5944 = vmul.f32 %v5880, 0.01
    %v5945 = vmul.f32 %v5881, 0.01
    %v5946 = vmul.f32 %v5882, 0.01
    %v5947 = vmul.f32 %v5883, 0.01
    %v5948 = vmul.f32 %v5884, 0.01
    %v5949 = vmul.f32 %v5885, 0.01
    %v5950 = vmul.f32 %v5886, 0.01
    %v5951 = vmul.f32 %v5887, 0.01
    %v5952 = vmul.f32 %v5888, 0.01
    %v5953 = vmul.f32 %v5889, 0.01
    %v5954 = vmul.f32 %v5890, 0.01
    %v5955 = vmul.f32 %v5891, 0.01
    %v5956 = vmul.f32 %v5892, 0.01
    %v5957 = vmul.f32 %v5893, 0.01
    %v5958 = vmul.f32 %v5894, 0.01
    %v5959 = vmul.f32 %v5895, 0.01
    %v5960 = vmul.f32 %v5896, 0.01
    %v5961 = vmul.f32 %v5897, 0.01
    %v5962 = vmul.f32 %v5898, 0.01
    %v5963 = vmul.f32 %v5899, 0.01
    %v5964 = vmul.f32 %v5900, 0.01
    %v5965 = vmul.f32 %v5901, 0.01
    %v5966 = vmul.f32 %v5902, 0.01
    %v5967 = vmul.f32 %v5903, 0.01
    %v5968 = vmul.f32 %v5904, 0.01
    %v5969 = vmul.f32 %v5905, 0.01
    %v5970 = vmul.f32 %v5906, 0.01
    %v5971 = vmul.f32 %v5907, 0.01
    %v5972 = vmul.f32 %v5908, 0.01
    %v5973 = vmul.f32 %v5909, 0.01
    %v5974 = vsel %vm5910, %v5878, %v5942
    %v5975 = vsel %vm5911, %v5879, %v5943
    %v5976 = vsel %vm5912, %v5880, %v5944
    %v5977 = vsel %vm5913, %v5881, %v5945
    %v5978 = vsel %vm5914, %v5882, %v5946
    %v5979 = vsel %vm5915, %v5883, %v5947
    %v5980 = vsel %vm5916, %v5884, %v5948
    %v5981 = vsel %vm5917, %v5885, %v5949
    %v5982 = vsel %vm5918, %v5886, %v5950
    %v5983 = vsel %vm5919, %v5887, %v5951
    %v5984 = vsel %vm5920, %v5888, %v5952
    %v5985 = vsel %vm5921, %v5889, %v5953
    %v5986 = vsel %vm5922, %v5890, %v5954
    %v5987 = vsel %vm5923, %v5891, %v5955
    %v5988 = vsel %vm5924, %v5892, %v5956
    %v5989 = vsel %vm5925, %v5893, %v5957
    %v5990 = vsel %vm5926, %v5894, %v5958
    %v5991 = vsel %vm5927, %v5895, %v5959
    %v5992 = vsel %vm5928, %v5896, %v5960
    %v5993 = vsel %vm5929, %v5897, %v5961
    %v5994 = vsel %vm5930, %v5898, %v5962
    %v5995 = vsel %vm5931, %v5899, %v5963
    %v5996 = vsel %vm5932, %v5900, %v5964
    %v5997 = vsel %vm5933, %v5901, %v5965
    %v5998 = vsel %vm5934, %v5902, %v5966
    %v5999 = vsel %vm5935, %v5903, %v5967
    %v6000 = vsel %vm5936, %v5904, %v5968
    %v6001 = vsel %vm5937, %v5905, %v5969
    %v6002 = vsel %vm5938, %v5906, %v5970
    %v6003 = vsel %vm5939, %v5907, %v5971
    %v6004 = vsel %vm5940, %v5908, %v5972
    %v6005 = vsel %vm5941, %v5909, %v5973
    %v6006 = vpack.c.bf16 %v5976, %v5974
    %v6007 = vpack.c.bf16 %v5977, %v5975
    %v6008 = vpack.c.bf16 %v5980, %v5978
    %v6009 = vpack.c.bf16 %v5981, %v5979
    %v6010 = vpack.c.bf16 %v5984, %v5982
    %v6011 = vpack.c.bf16 %v5985, %v5983
    %v6012 = vpack.c.bf16 %v5988, %v5986
    %v6013 = vpack.c.bf16 %v5989, %v5987
    %v6014 = vpack.c.bf16 %v5992, %v5990
    %v6015 = vpack.c.bf16 %v5993, %v5991
    %v6016 = vpack.c.bf16 %v5996, %v5994
    %v6017 = vpack.c.bf16 %v5997, %v5995
    %v6018 = vpack.c.bf16 %v6000, %v5998
    %v6019 = vpack.c.bf16 %v6001, %v5999
    %v6020 = vpack.c.bf16 %v6004, %v6002
    %v6021 = vpack.c.bf16 %v6005, %v6003
    %v6022 = vpack.c.bf16 %v5047, %v5046
    %v6023 = vpack.c.bf16 %v5049, %v5048
    %v6024 = vpack.c.bf16 %v5051, %v5050
    %v6025 = vpack.c.bf16 %v5053, %v5052
    %v6026 = vpack.c.bf16 %v5055, %v5054
    %v6027 = vpack.c.bf16 %v5057, %v5056
    %v6028 = vpack.c.bf16 %v5059, %v5058
    %v6029 = vpack.c.bf16 %v5061, %v5060
    %v6030 = vpack.c.bf16 %v5063, %v5062
    %v6031 = vpack.c.bf16 %v5065, %v5064
    %v6032 = vpack.c.bf16 %v5067, %v5066
    %v6033 = vpack.c.bf16 %v5069, %v5068
    %v6034 = vpack.c.bf16 %v5071, %v5070
    %v6035 = vpack.c.bf16 %v5073, %v5072
    %v6036 = vpack.c.bf16 %v5075, %v5074
    %v6037 = vpack.c.bf16 %v5077, %v5076
    %v6039 = vlaneseq
    %v6040 = vshrl.u32 %v6039, 7
    %v6041 = vsub.s32 0, %v6040
    %v6042 = vrot.slane %v5078, %v6041
    %6044 = vmatprep.subr.bf16.mxu0 0
    %6045 = vmatpush1.bf16.msra.mxu0 %v6029
    %6046 = vmatprep.subr.bf16.mxu0 0
    %6047 = vmatpush1.bf16.msra.mxu0 %v6028
    %6048 = vmatprep.subr.bf16.mxu0 0
    %6049 = vmatpush1.bf16.msra.mxu0 %v6027
    %6050 = vmatprep.subr.bf16.mxu0 0
    %6051 = vmatpush1.bf16.msra.mxu0 %v6026
    %6052 = vmatprep.subr.bf16.mxu0 0
    %6053 = vmatpush1.bf16.msra.mxu0 %v6025
    %6054 = vmatprep.subr.bf16.mxu0 0
    %6055 = vmatpush1.bf16.msra.mxu0 %v6024
    %6056 = vmatprep.subr.bf16.mxu0 0
    %6057 = vmatpush1.bf16.msra.mxu0 %v6023
    %6058 = vmatprep.subr.bf16.mxu0 0
    %6059 = vmatpush1.bf16.msra.mxu0 %v6022
    %6060 = vmatprep.subr.bf16.mxu0 0
    %6061 = vmatpush2.bf16.msra.mxu0 %v6037
    %6062 = vmatprep.subr.bf16.mxu0 0
    %6063 = vmatpush2.bf16.msra.mxu0 %v6036
    %6064 = vmatprep.subr.bf16.mxu0 0
    %6065 = vmatpush2.bf16.msra.mxu0 %v6035
    %6066 = vmatprep.subr.bf16.mxu0 0
    %6067 = vmatpush2.bf16.msra.mxu0 %v6034
    %6068 = vmatprep.subr.bf16.mxu0 0
    %6069 = vmatpush2.bf16.msra.mxu0 %v6033
    %6070 = vmatprep.subr.bf16.mxu0 0
    %6071 = vmatpush2.bf16.msra.mxu0 %v6032
    %6072 = vmatprep.subr.bf16.mxu0 0
    %6073 = vmatpush2.bf16.msra.mxu0 %v6031
    %6074 = vmatprep.subr.bf16.mxu0 0
    %6075 = vmatpush2.bf16.msra.mxu0 %v6030
    %6076 = vmatprep.mubr.bf16.mxu0 %v6007
    %6077 = vmatmul.mubr.bf16.gmra.mxu0 %v6006
    %v6078 = vpop.f32.mrf.mxu0
    %v6079 = vadd.f32 %v6042, %v6078
    %v6080 = vpop.f32.mrf.mxu0
    %v6081 = vpop.f32.mrf.mxu0
    %v6082 = vadd.f32 %v6042, %v6081
    %v6083 = vpop.f32.mrf.mxu0
    %6084 = vmatprep.mubr.bf16.mxu0 %v6009
    %6085 = vmatmul.mubr.bf16.gmra.mxu0 %v6008
    %v6086 = vpop.f32.mrf.mxu0
    %v6087 = vadd.f32 %v6042, %v6086
    %v6088 = vpop.f32.mrf.mxu0
    %v6089 = vpop.f32.mrf.mxu0
    %v6090 = vadd.f32 %v6042, %v6089
    %v6091 = vpop.f32.mrf.mxu0
    %6092 = vmatprep.mubr.bf16.mxu0 %v6011
    %6093 = vmatmul.mubr.bf16.gmra.mxu0 %v6010
    %v6094 = vpop.f32.mrf.mxu0
    %v6095 = vadd.f32 %v6042, %v6094
    %v6096 = vpop.f32.mrf.mxu0
    %v6097 = vpop.f32.mrf.mxu0
    %v6098 = vadd.f32 %v6042, %v6097
    %v6099 = vpop.f32.mrf.mxu0
    %6100 = vmatprep.mubr.bf16.mxu0 %v6013
    %6101 = vmatmul.mubr.bf16.gmra.mxu0 %v6012
    %v6102 = vpop.f32.mrf.mxu0
    %v6103 = vadd.f32 %v6042, %v6102
    %v6104 = vpop.f32.mrf.mxu0
    %v6105 = vpop.f32.mrf.mxu0
    %v6106 = vadd.f32 %v6042, %v6105
    %v6107 = vpop.f32.mrf.mxu0
    %6108 = vmatprep.mubr.bf16.mxu0 %v6015
    %6109 = vmatmul.mubr.bf16.gmra.mxu0 %v6014
    %v6110 = vpop.f32.mrf.mxu0
    %v6111 = vadd.f32 %v6042, %v6110
    %v6112 = vpop.f32.mrf.mxu0
    %v6113 = vpop.f32.mrf.mxu0
    %v6114 = vadd.f32 %v6042, %v6113
    %v6115 = vpop.f32.mrf.mxu0
    %6116 = vmatprep.mubr.bf16.mxu0 %v6017
    %6117 = vmatmul.mubr.bf16.gmra.mxu0 %v6016
    %v6118 = vpop.f32.mrf.mxu0
    %v6119 = vadd.f32 %v6042, %v6118
    %v6120 = vpop.f32.mrf.mxu0
    %v6121 = vpop.f32.mrf.mxu0
    %v6122 = vadd.f32 %v6042, %v6121
    %v6123 = vpop.f32.mrf.mxu0
    %6124 = vmatprep.mubr.bf16.mxu0 %v6019
    %6125 = vmatmul.mubr.bf16.gmra.mxu0 %v6018
    %v6126 = vpop.f32.mrf.mxu0
    %v6127 = vadd.f32 %v6042, %v6126
    %v6128 = vpop.f32.mrf.mxu0
    %v6129 = vpop.f32.mrf.mxu0
    %v6130 = vadd.f32 %v6042, %v6129
    %v6131 = vpop.f32.mrf.mxu0
    %6132 = vmatprep.mubr.bf16.mxu0 %v6021
    %6133 = vmatmul.mubr.bf16.gmra.mxu0 %v6020
    %v6134 = vpop.f32.mrf.mxu0
    %v6135 = vadd.f32 %v6042, %v6134
    %v6136 = vpop.f32.mrf.mxu0
    %v6137 = vpop.f32.mrf.mxu0
    %v6138 = vadd.f32 %v6042, %v6137
    %v6139 = vpop.f32.mrf.mxu0
    %6140 = vdwg.mxu0
    %v6141 = vadd.f32 %v6079, %v6082
    %v6142 = vadd.f32 %v6141, %v6087
    %v6143 = vadd.f32 %v6142, %v6090
    %v6144 = vadd.f32 %v6143, %v6095
    %v6145 = vadd.f32 %v6144, %v6098
    %v6146 = vadd.f32 %v6145, %v6103
    %v6147 = vadd.f32 %v6146, %v6106
    %v6148 = vadd.f32 %v6147, %v6111
    %v6149 = vadd.f32 %v6148, %v6114
    %v6150 = vadd.f32 %v6149, %v6119
    %v6151 = vadd.f32 %v6150, %v6122
    %v6152 = vadd.f32 %v6151, %v6127
    %v6153 = vadd.f32 %v6152, %v6130
    %v6154 = vadd.f32 %v6153, %v6135
    %v6155 = vadd.f32 %v6154, %v6138
    %v6156 = vrot.slane %v6155, 4
    %v6157 = vadd.f32 %v6155, %v6156
    %v6158 = vrot.slane %v6157, 2
    %v6159 = vadd.f32 %v6157, %v6158
    %v6160 = vrot.slane %v6159, 1
    %v6161 = vadd.f32 %v6159, %v6160
    %v6162 = vmul.f32 %v6161, %v1027
    %v6163 = vmul.f32 %v6079, %v6079
    %v6164 = vmul.f32 %v6082, %v6082
    %v6165 = vmul.f32 %v6087, %v6087
    %v6166 = vmul.f32 %v6090, %v6090
    %v6167 = vmul.f32 %v6095, %v6095
    %v6168 = vmul.f32 %v6098, %v6098
    %v6169 = vmul.f32 %v6103, %v6103
    %v6170 = vmul.f32 %v6106, %v6106
    %v6171 = vmul.f32 %v6111, %v6111
    %v6172 = vmul.f32 %v6114, %v6114
    %v6173 = vmul.f32 %v6119, %v6119
    %v6174 = vmul.f32 %v6122, %v6122
    %v6175 = vmul.f32 %v6127, %v6127
    %v6176 = vmul.f32 %v6130, %v6130
    %v6177 = vmul.f32 %v6135, %v6135
    %v6178 = vmul.f32 %v6138, %v6138
    %v6179 = vadd.f32 %v6163, %v6164
    %v6180 = vadd.f32 %v6179, %v6165
    %v6181 = vadd.f32 %v6180, %v6166
    %v6182 = vadd.f32 %v6181, %v6167
    %v6183 = vadd.f32 %v6182, %v6168
    %v6184 = vadd.f32 %v6183, %v6169
    %v6185 = vadd.f32 %v6184, %v6170
    %v6186 = vadd.f32 %v6185, %v6171
    %v6187 = vadd.f32 %v6186, %v6172
    %v6188 = vadd.f32 %v6187, %v6173
    %v6189 = vadd.f32 %v6188, %v6174
    %v6190 = vadd.f32 %v6189, %v6175
    %v6191 = vadd.f32 %v6190, %v6176
    %v6192 = vadd.f32 %v6191, %v6177
    %v6193 = vadd.f32 %v6192, %v6178
    %v6194 = vrot.slane %v6193, 4
    %v6195 = vadd.f32 %v6193, %v6194
    %v6196 = vrot.slane %v6195, 2
    %v6197 = vadd.f32 %v6195, %v6196
    %v6198 = vrot.slane %v6197, 1
    %v6199 = vadd.f32 %v6197, %v6198
    %v6200 = vmul.f32 %v6199, %v1027
    %v6201 = vmul.f32 %v6162, %v6162
    %v6202 = vsub.f32 %v6200, %v6201
    %v6203 = vmax.f32 %v6202, 0.0
    %v6204 = vsub.f32 %v6079, %v6162
    %v6205 = vsub.f32 %v6082, %v6162
    %v6206 = vsub.f32 %v6087, %v6162
    %v6207 = vsub.f32 %v6090, %v6162
    %v6208 = vsub.f32 %v6095, %v6162
    %v6209 = vsub.f32 %v6098, %v6162
    %v6210 = vsub.f32 %v6103, %v6162
    %v6211 = vsub.f32 %v6106, %v6162
    %v6212 = vsub.f32 %v6111, %v6162
    %v6213 = vsub.f32 %v6114, %v6162
    %v6214 = vsub.f32 %v6119, %v6162
    %v6215 = vsub.f32 %v6122, %v6162
    %v6216 = vsub.f32 %v6127, %v6162
    %v6217 = vsub.f32 %v6130, %v6162
    %v6218 = vsub.f32 %v6135, %v6162
    %v6219 = vsub.f32 %v6138, %v6162
    %v6220 = vadd.f32 %v6203, 1e-05
    %v6221 = vrsqrt.pop %v6220
    %v6222 = vmul.f32 %v6204, %v6221
    %v6223 = vmul.f32 %v6205, %v6221
    %v6224 = vmul.f32 %v6206, %v6221
    %v6225 = vmul.f32 %v6207, %v6221
    %v6226 = vmul.f32 %v6208, %v6221
    %v6227 = vmul.f32 %v6209, %v6221
    %v6228 = vmul.f32 %v6210, %v6221
    %v6229 = vmul.f32 %v6211, %v6221
    %v6230 = vmul.f32 %v6212, %v6221
    %v6231 = vmul.f32 %v6213, %v6221
    %v6232 = vmul.f32 %v6214, %v6221
    %v6233 = vmul.f32 %v6215, %v6221
    %v6234 = vmul.f32 %v6216, %v6221
    %v6235 = vmul.f32 %v6217, %v6221
    %v6236 = vmul.f32 %v6218, %v6221
    %v6237 = vmul.f32 %v6219, %v6221
    %v6239 = vlaneseq
    %v6240 = vshrl.u32 %v6239, 7
    %v6241 = vsub.s32 0, %v6240
    %v6242 = vrot.slane %v5079, %v6241
    %v6244 = vmul.f32 %v6222, %v6242
    %v6245 = vmul.f32 %v6223, %v6242
    %v6246 = vmul.f32 %v6224, %v6242
    %v6247 = vmul.f32 %v6225, %v6242
    %v6248 = vmul.f32 %v6226, %v6242
    %v6249 = vmul.f32 %v6227, %v6242
    %v6250 = vmul.f32 %v6228, %v6242
    %v6251 = vmul.f32 %v6229, %v6242
    %v6252 = vmul.f32 %v6230, %v6242
    %v6253 = vmul.f32 %v6231, %v6242
    %v6254 = vmul.f32 %v6232, %v6242
    %v6255 = vmul.f32 %v6233, %v6242
    %v6256 = vmul.f32 %v6234, %v6242
    %v6257 = vmul.f32 %v6235, %v6242
    %v6258 = vmul.f32 %v6236, %v6242
    %v6259 = vmul.f32 %v6237, %v6242
    %v6261 = vlaneseq
    %v6262 = vshrl.u32 %v6261, 7
    %v6263 = vsub.s32 0, %v6262
    %v6264 = vrot.slane %v5080, %v6263
    %v6266 = vadd.f32 %v6244, %v6264
    %v6267 = vadd.f32 %v6245, %v6264
    %v6268 = vadd.f32 %v6246, %v6264
    %v6269 = vadd.f32 %v6247, %v6264
    %v6270 = vadd.f32 %v6248, %v6264
    %v6271 = vadd.f32 %v6249, %v6264
    %v6272 = vadd.f32 %v6250, %v6264
    %v6273 = vadd.f32 %v6251, %v6264
    %v6274 = vadd.f32 %v6252, %v6264
    %v6275 = vadd.f32 %v6253, %v6264
    %v6276 = vadd.f32 %v6254, %v6264
    %v6277 = vadd.f32 %v6255, %v6264
    %v6278 = vadd.f32 %v6256, %v6264
    %v6279 = vadd.f32 %v6257, %v6264
    %v6280 = vadd.f32 %v6258, %v6264
    %v6281 = vadd.f32 %v6259, %v6264
    %vm6282 = vcmp.ge.f32.partialorder %v6266, 0.0
    %vm6283 = vcmp.ge.f32.partialorder %v6267, 0.0
    %vm6284 = vcmp.ge.f32.partialorder %v6268, 0.0
    %vm6285 = vcmp.ge.f32.partialorder %v6269, 0.0
    %vm6286 = vcmp.ge.f32.partialorder %v6270, 0.0
    %vm6287 = vcmp.ge.f32.partialorder %v6271, 0.0
    %vm6288 = vcmp.ge.f32.partialorder %v6272, 0.0
    %vm6289 = vcmp.ge.f32.partialorder %v6273, 0.0
    %vm6290 = vcmp.ge.f32.partialorder %v6274, 0.0
    %vm6291 = vcmp.ge.f32.partialorder %v6275, 0.0
    %vm6292 = vcmp.ge.f32.partialorder %v6276, 0.0
    %vm6293 = vcmp.ge.f32.partialorder %v6277, 0.0
    %vm6294 = vcmp.ge.f32.partialorder %v6278, 0.0
    %vm6295 = vcmp.ge.f32.partialorder %v6279, 0.0
    %vm6296 = vcmp.ge.f32.partialorder %v6280, 0.0
    %vm6297 = vcmp.ge.f32.partialorder %v6281, 0.0
    %v6298 = vmul.f32 %v6266, 0.01
    %v6299 = vmul.f32 %v6267, 0.01
    %v6300 = vmul.f32 %v6268, 0.01
    %v6301 = vmul.f32 %v6269, 0.01
    %v6302 = vmul.f32 %v6270, 0.01
    %v6303 = vmul.f32 %v6271, 0.01
    %v6304 = vmul.f32 %v6272, 0.01
    %v6305 = vmul.f32 %v6273, 0.01
    %v6306 = vmul.f32 %v6274, 0.01
    %v6307 = vmul.f32 %v6275, 0.01
    %v6308 = vmul.f32 %v6276, 0.01
    %v6309 = vmul.f32 %v6277, 0.01
    %v6310 = vmul.f32 %v6278, 0.01
    %v6311 = vmul.f32 %v6279, 0.01
    %v6312 = vmul.f32 %v6280, 0.01
    %v6313 = vmul.f32 %v6281, 0.01
    %v6314 = vsel %vm6282, %v6266, %v6298
    %v6315 = vsel %vm6283, %v6267, %v6299
    %v6316 = vsel %vm6284, %v6268, %v6300
    %v6317 = vsel %vm6285, %v6269, %v6301
    %v6318 = vsel %vm6286, %v6270, %v6302
    %v6319 = vsel %vm6287, %v6271, %v6303
    %v6320 = vsel %vm6288, %v6272, %v6304
    %v6321 = vsel %vm6289, %v6273, %v6305
    %v6322 = vsel %vm6290, %v6274, %v6306
    %v6323 = vsel %vm6291, %v6275, %v6307
    %v6324 = vsel %vm6292, %v6276, %v6308
    %v6325 = vsel %vm6293, %v6277, %v6309
    %v6326 = vsel %vm6294, %v6278, %v6310
    %v6327 = vsel %vm6295, %v6279, %v6311
    %v6328 = vsel %vm6296, %v6280, %v6312
    %v6329 = vsel %vm6297, %v6281, %v6313
    %v6331 = vlaneseq
    %v6332 = vshrl.u32 %v6331, 7
    %v6333 = vsub.s32 0, %v6332
    %v6334 = vrot.slane %v5081, %v6333
    %v6336 = vmul.f32 %v6314, %v6334
    %v6337 = vmul.f32 %v6315, %v6334
    %v6338 = vmul.f32 %v6316, %v6334
    %v6339 = vmul.f32 %v6317, %v6334
    %v6340 = vmul.f32 %v6318, %v6334
    %v6341 = vmul.f32 %v6319, %v6334
    %v6342 = vmul.f32 %v6320, %v6334
    %v6343 = vmul.f32 %v6321, %v6334
    %v6344 = vmul.f32 %v6322, %v6334
    %v6345 = vmul.f32 %v6323, %v6334
    %v6346 = vmul.f32 %v6324, %v6334
    %v6347 = vmul.f32 %v6325, %v6334
    %v6348 = vmul.f32 %v6326, %v6334
    %v6349 = vmul.f32 %v6327, %v6334
    %v6350 = vmul.f32 %v6328, %v6334
    %v6351 = vmul.f32 %v6329, %v6334
    %6352 = vadd.xlane.f32.xlu0 %v6336
    %v6353 = vpop.xlane.xlu0 %6352
    %6354 = vadd.xlane.f32.xlu0 %v6337
    %v6355 = vpop.xlane.xlu0 %6354
    %6356 = vadd.xlane.f32.xlu0 %v6338
    %v6357 = vpop.xlane.xlu0 %6356
    %6358 = vadd.xlane.f32.xlu0 %v6339
    %v6359 = vpop.xlane.xlu0 %6358
    %6360 = vadd.xlane.f32.xlu0 %v6340
    %v6361 = vpop.xlane.xlu0 %6360
    %6362 = vadd.xlane.f32.xlu0 %v6341
    %v6363 = vpop.xlane.xlu0 %6362
    %6364 = vadd.xlane.f32.xlu0 %v6342
    %v6365 = vpop.xlane.xlu0 %6364
    %6366 = vadd.xlane.f32.xlu0 %v6343
    %v6367 = vpop.xlane.xlu0 %6366
    %6368 = vadd.xlane.f32.xlu0 %v6344
    %v6369 = vpop.xlane.xlu0 %6368
    %6370 = vadd.xlane.f32.xlu0 %v6345
    %v6371 = vpop.xlane.xlu0 %6370
    %6372 = vadd.xlane.f32.xlu0 %v6346
    %v6373 = vpop.xlane.xlu0 %6372
    %6374 = vadd.xlane.f32.xlu0 %v6347
    %v6375 = vpop.xlane.xlu0 %6374
    %6376 = vadd.xlane.f32.xlu0 %v6348
    %v6377 = vpop.xlane.xlu0 %6376
    %6378 = vadd.xlane.f32.xlu0 %v6349
    %v6379 = vpop.xlane.xlu0 %6378
    %6380 = vadd.xlane.f32.xlu0 %v6350
    %v6381 = vpop.xlane.xlu0 %6380
    %6382 = vadd.xlane.f32.xlu0 %v6351
    %v6383 = vpop.xlane.xlu0 %6382
    %v6385 = vlaneseq
    %v6386 = vshrl.u32 %v6385, 7
    %v6387 = vsub.s32 0, %v6386
    %v6388 = vrot.slane %v5082, %v6387
    %6389 = vset.pattern.permute.xlu0 0
    %6390 = vperm.xlu0 %6389, %v6388
    %v6391 = vpop.permute.xlu0 %6390
    %v6393 = vadd.f32 %v6353, %v6391
    %v6394 = vadd.f32 %v6355, %v6391
    %v6395 = vadd.f32 %v6357, %v6391
    %v6396 = vadd.f32 %v6359, %v6391
    %v6397 = vadd.f32 %v6361, %v6391
    %v6398 = vadd.f32 %v6363, %v6391
    %v6399 = vadd.f32 %v6365, %v6391
    %v6400 = vadd.f32 %v6367, %v6391
    %v6401 = vadd.f32 %v6369, %v6391
    %v6402 = vadd.f32 %v6371, %v6391
    %v6403 = vadd.f32 %v6373, %v6391
    %v6404 = vadd.f32 %v6375, %v6391
    %v6405 = vadd.f32 %v6377, %v6391
    %v6406 = vadd.f32 %v6379, %v6391
    %v6407 = vadd.f32 %v6381, %v6391
    %v6408 = vadd.f32 %v6383, %v6391
    %v6409 = vadd.f32 %v6393, %v1772
    %v6410 = vadd.f32 %v6394, %v1779
    %v6411 = vadd.f32 %v6395, %v1786
    %v6412 = vadd.f32 %v6396, %v1793
    %v6413 = vadd.f32 %v6397, %v1800
    %v6414 = vadd.f32 %v6398, %v1807
    %v6415 = vadd.f32 %v6399, %v1814
    %v6416 = vadd.f32 %v6400, %v1821
    %v6417 = vadd.f32 %v6401, %v1772
    %v6418 = vadd.f32 %v6402, %v1779
    %v6419 = vadd.f32 %v6403, %v1786
    %v6420 = vadd.f32 %v6404, %v1793
    %v6421 = vadd.f32 %v6405, %v1800
    %v6422 = vadd.f32 %v6406, %v1807
    %v6423 = vadd.f32 %v6407, %v1814
    %v6424 = vadd.f32 %v6408, %v1821
    %6441 = vset.pattern.permute.xlu0 0
    %6442 = vperm.xlu0 %6441, %v6409
    %v6443 = vpop.permute.xlu0 %6442
    %6444 = vset.pattern.permute.xlu0 0
    %6445 = vperm.xlu0 %6444, %v6410
    %v6446 = vpop.permute.xlu0 %6445
    %6447 = vset.pattern.permute.xlu0 0
    %6448 = vperm.xlu0 %6447, %v6411
    %v6449 = vpop.permute.xlu0 %6448
    %6450 = vset.pattern.permute.xlu0 0
    %6451 = vperm.xlu0 %6450, %v6412
    %v6452 = vpop.permute.xlu0 %6451
    %6453 = vset.pattern.permute.xlu0 0
    %6454 = vperm.xlu0 %6453, %v6413
    %v6455 = vpop.permute.xlu0 %6454
    %6456 = vset.pattern.permute.xlu0 0
    %6457 = vperm.xlu0 %6456, %v6414
    %v6458 = vpop.permute.xlu0 %6457
    %6459 = vset.pattern.permute.xlu0 0
    %6460 = vperm.xlu0 %6459, %v6415
    %v6461 = vpop.permute.xlu0 %6460
    %6462 = vset.pattern.permute.xlu0 0
    %6463 = vperm.xlu0 %6462, %v6416
    %v6464 = vpop.permute.xlu0 %6463
    %6465 = vset.pattern.permute.xlu0 0
    %6466 = vperm.xlu0 %6465, %v6417
    %v6467 = vpop.permute.xlu0 %6466
    %6468 = vset.pattern.permute.xlu0 0
    %6469 = vperm.xlu0 %6468, %v6418
    %v6470 = vpop.permute.xlu0 %6469
    %6471 = vset.pattern.permute.xlu0 0
    %6472 = vperm.xlu0 %6471, %v6419
    %v6473 = vpop.permute.xlu0 %6472
    %6474 = vset.pattern.permute.xlu0 0
    %6475 = vperm.xlu0 %6474, %v6420
    %v6476 = vpop.permute.xlu0 %6475
    %6477 = vset.pattern.permute.xlu0 0
    %6478 = vperm.xlu0 %6477, %v6421
    %v6479 = vpop.permute.xlu0 %6478
    %6480 = vset.pattern.permute.xlu0 0
    %6481 = vperm.xlu0 %6480, %v6422
    %v6482 = vpop.permute.xlu0 %6481
    %6483 = vset.pattern.permute.xlu0 0
    %6484 = vperm.xlu0 %6483, %v6423
    %v6485 = vpop.permute.xlu0 %6484
    %6486 = vset.pattern.permute.xlu0 0
    %6487 = vperm.xlu0 %6486, %v6424
    %v6488 = vpop.permute.xlu0 %6487
    %v6489 = vlaneseq
    %v6490 = vshrl.u32 %v6489, 7
    %v6491 = vsub.s32 %v560, %v6490
    %v6492 = vrot.slane %v6443, %v6491
    %v6493 = vlaneseq
    %v6494 = vshrl.u32 %v6493, 7
    %v6495 = vsub.s32 %v560, %v6494
    %v6496 = vrot.slane %v6446, %v6495
    %v6497 = vlaneseq
    %v6498 = vshrl.u32 %v6497, 7
    %v6499 = vsub.s32 %v560, %v6498
    %v6500 = vrot.slane %v6449, %v6499
    %v6501 = vlaneseq
    %v6502 = vshrl.u32 %v6501, 7
    %v6503 = vsub.s32 %v560, %v6502
    %v6504 = vrot.slane %v6452, %v6503
    %v6505 = vlaneseq
    %v6506 = vshrl.u32 %v6505, 7
    %v6507 = vsub.s32 %v560, %v6506
    %v6508 = vrot.slane %v6455, %v6507
    %v6509 = vlaneseq
    %v6510 = vshrl.u32 %v6509, 7
    %v6511 = vsub.s32 %v560, %v6510
    %v6512 = vrot.slane %v6458, %v6511
    %v6513 = vlaneseq
    %v6514 = vshrl.u32 %v6513, 7
    %v6515 = vsub.s32 %v560, %v6514
    %v6516 = vrot.slane %v6461, %v6515
    %v6517 = vlaneseq
    %v6518 = vshrl.u32 %v6517, 7
    %v6519 = vsub.s32 %v560, %v6518
    %v6520 = vrot.slane %v6464, %v6519
    %v6521 = vlaneseq
    %v6522 = vshrl.u32 %v6521, 7
    %v6523 = vsub.s32 %v560, %v6522
    %v6524 = vrot.slane %v6467, %v6523
    %v6525 = vlaneseq
    %v6526 = vshrl.u32 %v6525, 7
    %v6527 = vsub.s32 %v560, %v6526
    %v6528 = vrot.slane %v6470, %v6527
    %v6529 = vlaneseq
    %v6530 = vshrl.u32 %v6529, 7
    %v6531 = vsub.s32 %v560, %v6530
    %v6532 = vrot.slane %v6473, %v6531
    %v6533 = vlaneseq
    %v6534 = vshrl.u32 %v6533, 7
    %v6535 = vsub.s32 %v560, %v6534
    %v6536 = vrot.slane %v6476, %v6535
    %v6537 = vlaneseq
    %v6538 = vshrl.u32 %v6537, 7
    %v6539 = vsub.s32 %v560, %v6538
    %v6540 = vrot.slane %v6479, %v6539
    %v6541 = vlaneseq
    %v6542 = vshrl.u32 %v6541, 7
    %v6543 = vsub.s32 %v560, %v6542
    %v6544 = vrot.slane %v6482, %v6543
    %v6545 = vlaneseq
    %v6546 = vshrl.u32 %v6545, 7
    %v6547 = vsub.s32 %v560, %v6546
    %v6548 = vrot.slane %v6485, %v6547
    %v6549 = vlaneseq
    %v6550 = vshrl.u32 %v6549, 7
    %v6551 = vsub.s32 %v560, %v6550
    %v6552 = vrot.slane %v6488, %v6551
    %v6553 = vsel %vm1974, %v6496, %v6492
    %v6554 = vsel %vm1976, %v6500, %v6553
    %v6555 = vsel %vm1978, %v6504, %v6554
    %v6556 = vsel %vm1980, %v6508, %v6555
    %v6557 = vsel %vm1982, %v6512, %v6556
    %v6558 = vsel %vm1984, %v6516, %v6557
    %v6559 = vsel %vm1986, %v6520, %v6558
    %v6560 = vsel %vm1974, %v6528, %v6524
    %v6561 = vsel %vm1976, %v6532, %v6560
    %v6562 = vsel %vm1978, %v6536, %v6561
    %v6563 = vsel %vm1980, %v6540, %v6562
    %v6564 = vsel %vm1982, %v6544, %v6563
    %v6565 = vsel %vm1984, %v6548, %v6564
    %v6566 = vsel %vm1986, %v6552, %v6565
    %v6569 = vsel %vm1997, %v6559, -inf
    %6570 = vmax.xlane.f32.xlu0 %v6569
    %v6571 = vpop.xlane.xlu0 %6570
    %v6572 = vsel %vm1997, %v6566, -inf
    %6573 = vmax.xlane.f32.xlu0 %v6572
    %v6574 = vpop.xlane.xlu0 %6573
    %v6577 = vlaneseq
    %v6578 = vshrl.u32 %v6577, 7
    %v6579 = vsub.s32 0, %v6578
    %v6580 = vrot.slane %v6571, %v6579
    %v6581 = vlaneseq
    %v6582 = vshrl.u32 %v6581, 7
    %v6583 = vsub.s32 1, %v6582
    %v6584 = vrot.slane %v6571, %v6583
    %v6585 = vlaneseq
    %v6586 = vshrl.u32 %v6585, 7
    %v6587 = vsub.s32 2, %v6586
    %v6588 = vrot.slane %v6571, %v6587
    %v6589 = vlaneseq
    %v6590 = vshrl.u32 %v6589, 7
    %v6591 = vsub.s32 3, %v6590
    %v6592 = vrot.slane %v6571, %v6591
    %v6593 = vlaneseq
    %v6594 = vshrl.u32 %v6593, 7
    %v6595 = vsub.s32 4, %v6594
    %v6596 = vrot.slane %v6571, %v6595
    %v6597 = vlaneseq
    %v6598 = vshrl.u32 %v6597, 7
    %v6599 = vsub.s32 5, %v6598
    %v6600 = vrot.slane %v6571, %v6599
    %v6601 = vlaneseq
    %v6602 = vshrl.u32 %v6601, 7
    %v6603 = vsub.s32 6, %v6602
    %v6604 = vrot.slane %v6571, %v6603
    %v6605 = vlaneseq
    %v6606 = vshrl.u32 %v6605, 7
    %v6607 = vsub.s32 7, %v6606
    %v6608 = vrot.slane %v6571, %v6607
    %v6609 = vlaneseq
    %v6610 = vshrl.u32 %v6609, 7
    %v6611 = vsub.s32 0, %v6610
    %v6612 = vrot.slane %v6574, %v6611
    %v6613 = vlaneseq
    %v6614 = vshrl.u32 %v6613, 7
    %v6615 = vsub.s32 1, %v6614
    %v6616 = vrot.slane %v6574, %v6615
    %v6617 = vlaneseq
    %v6618 = vshrl.u32 %v6617, 7
    %v6619 = vsub.s32 2, %v6618
    %v6620 = vrot.slane %v6574, %v6619
    %v6621 = vlaneseq
    %v6622 = vshrl.u32 %v6621, 7
    %v6623 = vsub.s32 3, %v6622
    %v6624 = vrot.slane %v6574, %v6623
    %v6625 = vlaneseq
    %v6626 = vshrl.u32 %v6625, 7
    %v6627 = vsub.s32 4, %v6626
    %v6628 = vrot.slane %v6574, %v6627
    %v6629 = vlaneseq
    %v6630 = vshrl.u32 %v6629, 7
    %v6631 = vsub.s32 5, %v6630
    %v6632 = vrot.slane %v6574, %v6631
    %v6633 = vlaneseq
    %v6634 = vshrl.u32 %v6633, 7
    %v6635 = vsub.s32 6, %v6634
    %v6636 = vrot.slane %v6574, %v6635
    %v6637 = vlaneseq
    %v6638 = vshrl.u32 %v6637, 7
    %v6639 = vsub.s32 7, %v6638
    %v6640 = vrot.slane %v6574, %v6639
    %v6657 = vsub.f32 %v6409, %v6580
    %v6658 = vsub.f32 %v6410, %v6584
    %v6659 = vsub.f32 %v6411, %v6588
    %v6660 = vsub.f32 %v6412, %v6592
    %v6661 = vsub.f32 %v6413, %v6596
    %v6662 = vsub.f32 %v6414, %v6600
    %v6663 = vsub.f32 %v6415, %v6604
    %v6664 = vsub.f32 %v6416, %v6608
    %v6665 = vsub.f32 %v6417, %v6612
    %v6666 = vsub.f32 %v6418, %v6616
    %v6667 = vsub.f32 %v6419, %v6620
    %v6668 = vsub.f32 %v6420, %v6624
    %v6669 = vsub.f32 %v6421, %v6628
    %v6670 = vsub.f32 %v6422, %v6632
    %v6671 = vsub.f32 %v6423, %v6636
    %v6672 = vsub.f32 %v6424, %v6640
    %v6673 = vmul.f32 %v6657, 1.442695
    %v6674 = vpow.pop %v6673
    %v6675 = vmul.f32 %v6658, 1.442695
    %v6676 = vpow.pop %v6675
    %v6677 = vmul.f32 %v6659, 1.442695
    %v6678 = vpow.pop %v6677
    %v6679 = vmul.f32 %v6660, 1.442695
    %v6680 = vpow.pop %v6679
    %v6681 = vmul.f32 %v6661, 1.442695
    %v6682 = vpow.pop %v6681
    %v6683 = vmul.f32 %v6662, 1.442695
    %v6684 = vpow.pop %v6683
    %v6685 = vmul.f32 %v6663, 1.442695
    %v6686 = vpow.pop %v6685
    %v6687 = vmul.f32 %v6664, 1.442695
    %v6688 = vpow.pop %v6687
    %v6689 = vmul.f32 %v6665, 1.442695
    %v6690 = vpow.pop %v6689
    %v6691 = vmul.f32 %v6666, 1.442695
    %v6692 = vpow.pop %v6691
    %v6693 = vmul.f32 %v6667, 1.442695
    %v6694 = vpow.pop %v6693
    %v6695 = vmul.f32 %v6668, 1.442695
    %v6696 = vpow.pop %v6695
    %v6697 = vmul.f32 %v6669, 1.442695
    %v6698 = vpow.pop %v6697
    %v6699 = vmul.f32 %v6670, 1.442695
    %v6700 = vpow.pop %v6699
    %v6701 = vmul.f32 %v6671, 1.442695
    %v6702 = vpow.pop %v6701
    %v6703 = vmul.f32 %v6672, 1.442695
    %v6704 = vpow.pop %v6703
    %6721 = vset.pattern.permute.xlu0 0
    %6722 = vperm.xlu0 %6721, %v6674
    %v6723 = vpop.permute.xlu0 %6722
    %6724 = vset.pattern.permute.xlu0 0
    %6725 = vperm.xlu0 %6724, %v6676
    %v6726 = vpop.permute.xlu0 %6725
    %6727 = vset.pattern.permute.xlu0 0
    %6728 = vperm.xlu0 %6727, %v6678
    %v6729 = vpop.permute.xlu0 %6728
    %6730 = vset.pattern.permute.xlu0 0
    %6731 = vperm.xlu0 %6730, %v6680
    %v6732 = vpop.permute.xlu0 %6731
    %6733 = vset.pattern.permute.xlu0 0
    %6734 = vperm.xlu0 %6733, %v6682
    %v6735 = vpop.permute.xlu0 %6734
    %6736 = vset.pattern.permute.xlu0 0
    %6737 = vperm.xlu0 %6736, %v6684
    %v6738 = vpop.permute.xlu0 %6737
    %6739 = vset.pattern.permute.xlu0 0
    %6740 = vperm.xlu0 %6739, %v6686
    %v6741 = vpop.permute.xlu0 %6740
    %6742 = vset.pattern.permute.xlu0 0
    %6743 = vperm.xlu0 %6742, %v6688
    %v6744 = vpop.permute.xlu0 %6743
    %6745 = vset.pattern.permute.xlu0 0
    %6746 = vperm.xlu0 %6745, %v6690
    %v6747 = vpop.permute.xlu0 %6746
    %6748 = vset.pattern.permute.xlu0 0
    %6749 = vperm.xlu0 %6748, %v6692
    %v6750 = vpop.permute.xlu0 %6749
    %6751 = vset.pattern.permute.xlu0 0
    %6752 = vperm.xlu0 %6751, %v6694
    %v6753 = vpop.permute.xlu0 %6752
    %6754 = vset.pattern.permute.xlu0 0
    %6755 = vperm.xlu0 %6754, %v6696
    %v6756 = vpop.permute.xlu0 %6755
    %6757 = vset.pattern.permute.xlu0 0
    %6758 = vperm.xlu0 %6757, %v6698
    %v6759 = vpop.permute.xlu0 %6758
    %6760 = vset.pattern.permute.xlu0 0
    %6761 = vperm.xlu0 %6760, %v6700
    %v6762 = vpop.permute.xlu0 %6761
    %6763 = vset.pattern.permute.xlu0 0
    %6764 = vperm.xlu0 %6763, %v6702
    %v6765 = vpop.permute.xlu0 %6764
    %6766 = vset.pattern.permute.xlu0 0
    %6767 = vperm.xlu0 %6766, %v6704
    %v6768 = vpop.permute.xlu0 %6767
    %v6769 = vlaneseq
    %v6770 = vshrl.u32 %v6769, 7
    %v6771 = vsub.s32 %v560, %v6770
    %v6772 = vrot.slane %v6723, %v6771
    %v6773 = vlaneseq
    %v6774 = vshrl.u32 %v6773, 7
    %v6775 = vsub.s32 %v560, %v6774
    %v6776 = vrot.slane %v6726, %v6775
    %v6777 = vlaneseq
    %v6778 = vshrl.u32 %v6777, 7
    %v6779 = vsub.s32 %v560, %v6778
    %v6780 = vrot.slane %v6729, %v6779
    %v6781 = vlaneseq
    %v6782 = vshrl.u32 %v6781, 7
    %v6783 = vsub.s32 %v560, %v6782
    %v6784 = vrot.slane %v6732, %v6783
    %v6785 = vlaneseq
    %v6786 = vshrl.u32 %v6785, 7
    %v6787 = vsub.s32 %v560, %v6786
    %v6788 = vrot.slane %v6735, %v6787
    %v6789 = vlaneseq
    %v6790 = vshrl.u32 %v6789, 7
    %v6791 = vsub.s32 %v560, %v6790
    %v6792 = vrot.slane %v6738, %v6791
    %v6793 = vlaneseq
    %v6794 = vshrl.u32 %v6793, 7
    %v6795 = vsub.s32 %v560, %v6794
    %v6796 = vrot.slane %v6741, %v6795
    %v6797 = vlaneseq
    %v6798 = vshrl.u32 %v6797, 7
    %v6799 = vsub.s32 %v560, %v6798
    %v6800 = vrot.slane %v6744, %v6799
    %v6801 = vlaneseq
    %v6802 = vshrl.u32 %v6801, 7
    %v6803 = vsub.s32 %v560, %v6802
    %v6804 = vrot.slane %v6747, %v6803
    %v6805 = vlaneseq
    %v6806 = vshrl.u32 %v6805, 7
    %v6807 = vsub.s32 %v560, %v6806
    %v6808 = vrot.slane %v6750, %v6807
    %v6809 = vlaneseq
    %v6810 = vshrl.u32 %v6809, 7
    %v6811 = vsub.s32 %v560, %v6810
    %v6812 = vrot.slane %v6753, %v6811
    %v6813 = vlaneseq
    %v6814 = vshrl.u32 %v6813, 7
    %v6815 = vsub.s32 %v560, %v6814
    %v6816 = vrot.slane %v6756, %v6815
    %v6817 = vlaneseq
    %v6818 = vshrl.u32 %v6817, 7
    %v6819 = vsub.s32 %v560, %v6818
    %v6820 = vrot.slane %v6759, %v6819
    %v6821 = vlaneseq
    %v6822 = vshrl.u32 %v6821, 7
    %v6823 = vsub.s32 %v560, %v6822
    %v6824 = vrot.slane %v6762, %v6823
    %v6825 = vlaneseq
    %v6826 = vshrl.u32 %v6825, 7
    %v6827 = vsub.s32 %v560, %v6826
    %v6828 = vrot.slane %v6765, %v6827
    %v6829 = vlaneseq
    %v6830 = vshrl.u32 %v6829, 7
    %v6831 = vsub.s32 %v560, %v6830
    %v6832 = vrot.slane %v6768, %v6831
    %v6833 = vsel %vm1974, %v6776, %v6772
    %v6834 = vsel %vm1976, %v6780, %v6833
    %v6835 = vsel %vm1978, %v6784, %v6834
    %v6836 = vsel %vm1980, %v6788, %v6835
    %v6837 = vsel %vm1982, %v6792, %v6836
    %v6838 = vsel %vm1984, %v6796, %v6837
    %v6839 = vsel %vm1986, %v6800, %v6838
    %v6840 = vsel %vm1974, %v6808, %v6804
    %v6841 = vsel %vm1976, %v6812, %v6840
    %v6842 = vsel %vm1978, %v6816, %v6841
    %v6843 = vsel %vm1980, %v6820, %v6842
    %v6844 = vsel %vm1982, %v6824, %v6843
    %v6845 = vsel %vm1984, %v6828, %v6844
    %v6846 = vsel %vm1986, %v6832, %v6845
    %v6849 = vsel %vm1997, %v6839, 0.0
    %6850 = vadd.xlane.f32.xlu0 %v6849
    %v6851 = vpop.xlane.xlu0 %6850
    %v6852 = vsel %vm1997, %v6846, 0.0
    %6853 = vadd.xlane.f32.xlu0 %v6852
    %v6854 = vpop.xlane.xlu0 %6853
    %v6855 = vrcp.pop %v6851
    %v6856 = vrcp.pop %v6854
    %v6859 = vlaneseq
    %v6860 = vshrl.u32 %v6859, 7
    %v6861 = vsub.s32 0, %v6860
    %v6862 = vrot.slane %v6855, %v6861
    %v6863 = vlaneseq
    %v6864 = vshrl.u32 %v6863, 7
    %v6865 = vsub.s32 1, %v6864
    %v6866 = vrot.slane %v6855, %v6865
    %v6867 = vlaneseq
    %v6868 = vshrl.u32 %v6867, 7
    %v6869 = vsub.s32 2, %v6868
    %v6870 = vrot.slane %v6855, %v6869
    %v6871 = vlaneseq
    %v6872 = vshrl.u32 %v6871, 7
    %v6873 = vsub.s32 3, %v6872
    %v6874 = vrot.slane %v6855, %v6873
    %v6875 = vlaneseq
    %v6876 = vshrl.u32 %v6875, 7
    %v6877 = vsub.s32 4, %v6876
    %v6878 = vrot.slane %v6855, %v6877
    %v6879 = vlaneseq
    %v6880 = vshrl.u32 %v6879, 7
    %v6881 = vsub.s32 5, %v6880
    %v6882 = vrot.slane %v6855, %v6881
    %v6883 = vlaneseq
    %v6884 = vshrl.u32 %v6883, 7
    %v6885 = vsub.s32 6, %v6884
    %v6886 = vrot.slane %v6855, %v6885
    %v6887 = vlaneseq
    %v6888 = vshrl.u32 %v6887, 7
    %v6889 = vsub.s32 7, %v6888
    %v6890 = vrot.slane %v6855, %v6889
    %v6891 = vlaneseq
    %v6892 = vshrl.u32 %v6891, 7
    %v6893 = vsub.s32 0, %v6892
    %v6894 = vrot.slane %v6856, %v6893
    %v6895 = vlaneseq
    %v6896 = vshrl.u32 %v6895, 7
    %v6897 = vsub.s32 1, %v6896
    %v6898 = vrot.slane %v6856, %v6897
    %v6899 = vlaneseq
    %v6900 = vshrl.u32 %v6899, 7
    %v6901 = vsub.s32 2, %v6900
    %v6902 = vrot.slane %v6856, %v6901
    %v6903 = vlaneseq
    %v6904 = vshrl.u32 %v6903, 7
    %v6905 = vsub.s32 3, %v6904
    %v6906 = vrot.slane %v6856, %v6905
    %v6907 = vlaneseq
    %v6908 = vshrl.u32 %v6907, 7
    %v6909 = vsub.s32 4, %v6908
    %v6910 = vrot.slane %v6856, %v6909
    %v6911 = vlaneseq
    %v6912 = vshrl.u32 %v6911, 7
    %v6913 = vsub.s32 5, %v6912
    %v6914 = vrot.slane %v6856, %v6913
    %v6915 = vlaneseq
    %v6916 = vshrl.u32 %v6915, 7
    %v6917 = vsub.s32 6, %v6916
    %v6918 = vrot.slane %v6856, %v6917
    %v6919 = vlaneseq
    %v6920 = vshrl.u32 %v6919, 7
    %v6921 = vsub.s32 7, %v6920
    %v6922 = vrot.slane %v6856, %v6921
    %v6939 = vmul.f32 %v6674, %v6862
    %v6940 = vmul.f32 %v6676, %v6866
    %v6941 = vmul.f32 %v6678, %v6870
    %v6942 = vmul.f32 %v6680, %v6874
    %v6943 = vmul.f32 %v6682, %v6878
    %v6944 = vmul.f32 %v6684, %v6882
    %v6945 = vmul.f32 %v6686, %v6886
    %v6946 = vmul.f32 %v6688, %v6890
    %v6947 = vmul.f32 %v6690, %v6894
    %v6948 = vmul.f32 %v6692, %v6898
    %v6949 = vmul.f32 %v6694, %v6902
    %v6950 = vmul.f32 %v6696, %v6906
    %v6951 = vmul.f32 %v6698, %v6910
    %v6952 = vmul.f32 %v6700, %v6914
    %v6953 = vmul.f32 %v6702, %v6918
    %v6954 = vmul.f32 %v6704, %v6922
    %6963 = vset.pattern.permute.xlu0 0
    %6964 = vperm.xlu0 %6963, %v6939
    %v6965 = vpop.permute.xlu0 %6964
    %6966 = vset.pattern.permute.xlu0 0
    %6967 = vperm.xlu0 %6966, %v6940
    %v6968 = vpop.permute.xlu0 %6967
    %6969 = vset.pattern.permute.xlu0 0
    %6970 = vperm.xlu0 %6969, %v6941
    %v6971 = vpop.permute.xlu0 %6970
    %6972 = vset.pattern.permute.xlu0 0
    %6973 = vperm.xlu0 %6972, %v6942
    %v6974 = vpop.permute.xlu0 %6973
    %6975 = vset.pattern.permute.xlu0 0
    %6976 = vperm.xlu0 %6975, %v6943
    %v6977 = vpop.permute.xlu0 %6976
    %6978 = vset.pattern.permute.xlu0 0
    %6979 = vperm.xlu0 %6978, %v6944
    %v6980 = vpop.permute.xlu0 %6979
    %6981 = vset.pattern.permute.xlu0 0
    %6982 = vperm.xlu0 %6981, %v6945
    %v6983 = vpop.permute.xlu0 %6982
    %6984 = vset.pattern.permute.xlu0 0
    %6985 = vperm.xlu0 %6984, %v6946
    %v6986 = vpop.permute.xlu0 %6985
    %v6987 = vlaneseq
    %v6988 = vshrl.u32 %v6987, 7
    %v6989 = vsub.s32 %v560, %v6988
    %v6990 = vrot.slane %v6965, %v6989
    %v6991 = vlaneseq
    %v6992 = vshrl.u32 %v6991, 7
    %v6993 = vsub.s32 %v560, %v6992
    %v6994 = vrot.slane %v6968, %v6993
    %v6995 = vlaneseq
    %v6996 = vshrl.u32 %v6995, 7
    %v6997 = vsub.s32 %v560, %v6996
    %v6998 = vrot.slane %v6971, %v6997
    %v6999 = vlaneseq
    %v7000 = vshrl.u32 %v6999, 7
    %v7001 = vsub.s32 %v560, %v7000
    %v7002 = vrot.slane %v6974, %v7001
    %v7003 = vlaneseq
    %v7004 = vshrl.u32 %v7003, 7
    %v7005 = vsub.s32 %v560, %v7004
    %v7006 = vrot.slane %v6977, %v7005
    %v7007 = vlaneseq
    %v7008 = vshrl.u32 %v7007, 7
    %v7009 = vsub.s32 %v560, %v7008
    %v7010 = vrot.slane %v6980, %v7009
    %v7011 = vlaneseq
    %v7012 = vshrl.u32 %v7011, 7
    %v7013 = vsub.s32 %v560, %v7012
    %v7014 = vrot.slane %v6983, %v7013
    %v7015 = vlaneseq
    %v7016 = vshrl.u32 %v7015, 7
    %v7017 = vsub.s32 %v560, %v7016
    %v7018 = vrot.slane %v6986, %v7017
    %v7019 = vsel %vm1974, %v6994, %v6990
    %v7020 = vsel %vm1976, %v6998, %v7019
    %v7021 = vsel %vm1978, %v7002, %v7020
    %v7022 = vsel %vm1980, %v7006, %v7021
    %v7023 = vsel %vm1982, %v7010, %v7022
    %v7024 = vsel %vm1984, %v7014, %v7023
    %v7025 = vsel %vm1986, %v7018, %v7024
    %v7026 = vsel %vm1997, %v7025, 0
    %7028 = vmatprep.subr.mxu0 0.0
    %7029 = vmatpush1.msra.mxu0 0.0
    %7030 = vmatprep.subr.mxu0 0.0
    %7031 = vmatpush1.msra.mxu0 0.0
    %7032 = vmatprep.subr.mxu0 0.0
    %7033 = vmatpush1.msra.mxu0 0.0
    %7034 = vmatprep.subr.mxu0 0.0
    %7035 = vmatpush1.msra.mxu0 0.0
    %7036 = vmatprep.subr.mxu0 0.0
    %7037 = vmatpush1.msra.mxu0 0.0
    %7038 = vmatprep.subr.mxu0 0.0
    %7039 = vmatpush1.msra.mxu0 0.0
    %7040 = vmatprep.subr.mxu0 0.0
    %7041 = vmatpush1.msra.mxu0 0.0
    %7042 = vmatprep.subr.mxu0 0.0
    %7043 = vmatpush1.msra.mxu0 0.0
    %7044 = vmatprep.subr.mxu0 0.0
    %7045 = vmatpush1.msra.mxu0 0.0
    %7046 = vmatprep.subr.mxu0 0.0
    %7047 = vmatpush1.msra.mxu0 0.0
    %7048 = vmatprep.subr.mxu0 0.0
    %7049 = vmatpush1.msra.mxu0 0.0
    %7050 = vmatprep.subr.mxu0 0.0
    %7051 = vmatpush1.msra.mxu0 0.0
    %7052 = vmatprep.subr.mxu0 0.0
    %7053 = vmatpush1.msra.mxu0 0.0
    %7054 = vmatprep.subr.mxu0 0.0
    %7055 = vmatpush1.msra.mxu0 0.0
    %7056 = vmatprep.subr.mxu0 0.0
    %7057 = vmatpush1.msra.mxu0 0.0
    %7058 = vmatprep.subr.mxu0 %v5000
    %7059 = vmatpush1.msra.mxu0 %v5005
    %7060 = vmatprep.subr.mxu0 0.0
    %7061 = vmatpush2.msra.mxu0 0.0
    %7062 = vmatprep.subr.mxu0 0.0
    %7063 = vmatpush2.msra.mxu0 0.0
    %7064 = vmatprep.subr.mxu0 0.0
    %7065 = vmatpush2.msra.mxu0 0.0
    %7066 = vmatprep.subr.mxu0 0.0
    %7067 = vmatpush2.msra.mxu0 0.0
    %7068 = vmatprep.subr.mxu0 0.0
    %7069 = vmatpush2.msra.mxu0 0.0
    %7070 = vmatprep.subr.mxu0 0.0
    %7071 = vmatpush2.msra.mxu0 0.0
    %7072 = vmatprep.subr.mxu0 0.0
    %7073 = vmatpush2.msra.mxu0 0.0
    %7074 = vmatprep.subr.mxu0 0.0
    %7075 = vmatpush2.msra.mxu0 0.0
    %7076 = vmatprep.subr.mxu0 0.0
    %7077 = vmatpush2.msra.mxu0 0.0
    %7078 = vmatprep.subr.mxu0 0.0
    %7079 = vmatpush2.msra.mxu0 0.0
    %7080 = vmatprep.subr.mxu0 0.0
    %7081 = vmatpush2.msra.mxu0 0.0
    %7082 = vmatprep.subr.mxu0 0.0
    %7083 = vmatpush2.msra.mxu0 0.0
    %7084 = vmatprep.subr.mxu0 0.0
    %7085 = vmatpush2.msra.mxu0 0.0
    %7086 = vmatprep.subr.mxu0 0.0
    %7087 = vmatpush2.msra.mxu0 0.0
    %7088 = vmatprep.subr.mxu0 0.0
    %7089 = vmatpush2.msra.mxu0 0.0
    %7090 = vmatprep.subr.mxu0 0.0
    %7091 = vmatpush2.msra.mxu0 0.0
    %7092 = vmatprep.mubr.f32.mxu0 0.0
    %7093 = vmatmul.mubr.f32.gmra.mxu0 %v7026
    %v7094 = vpop.f32.mrf.mxu0
    %v7095 = vadd.f32 0.0, %v7094
    %v7096 = vpop.f32.mrf.mxu0
    %v7097 = vadd.f32 0.0, %v7096
    %7098 = vdwg.mxu0
    %7107 = vset.pattern.permute.xlu0 0
    %7108 = vperm.xlu0 %7107, %v6947
    %v7109 = vpop.permute.xlu0 %7108
    %7110 = vset.pattern.permute.xlu0 0
    %7111 = vperm.xlu0 %7110, %v6948
    %v7112 = vpop.permute.xlu0 %7111
    %7113 = vset.pattern.permute.xlu0 0
    %7114 = vperm.xlu0 %7113, %v6949
    %v7115 = vpop.permute.xlu0 %7114
    %7116 = vset.pattern.permute.xlu0 0
    %7117 = vperm.xlu0 %7116, %v6950
    %v7118 = vpop.permute.xlu0 %7117
    %7119 = vset.pattern.permute.xlu0 0
    %7120 = vperm.xlu0 %7119, %v6951
    %v7121 = vpop.permute.xlu0 %7120
    %7122 = vset.pattern.permute.xlu0 0
    %7123 = vperm.xlu0 %7122, %v6952
    %v7124 = vpop.permute.xlu0 %7123
    %7125 = vset.pattern.permute.xlu0 0
    %7126 = vperm.xlu0 %7125, %v6953
    %v7127 = vpop.permute.xlu0 %7126
    %7128 = vset.pattern.permute.xlu0 0
    %7129 = vperm.xlu0 %7128, %v6954
    %v7130 = vpop.permute.xlu0 %7129
    %v7131 = vlaneseq
    %v7132 = vshrl.u32 %v7131, 7
    %v7133 = vsub.s32 %v560, %v7132
    %v7134 = vrot.slane %v7109, %v7133
    %v7135 = vlaneseq
    %v7136 = vshrl.u32 %v7135, 7
    %v7137 = vsub.s32 %v560, %v7136
    %v7138 = vrot.slane %v7112, %v7137
    %v7139 = vlaneseq
    %v7140 = vshrl.u32 %v7139, 7
    %v7141 = vsub.s32 %v560, %v7140
    %v7142 = vrot.slane %v7115, %v7141
    %v7143 = vlaneseq
    %v7144 = vshrl.u32 %v7143, 7
    %v7145 = vsub.s32 %v560, %v7144
    %v7146 = vrot.slane %v7118, %v7145
    %v7147 = vlaneseq
    %v7148 = vshrl.u32 %v7147, 7
    %v7149 = vsub.s32 %v560, %v7148
    %v7150 = vrot.slane %v7121, %v7149
    %v7151 = vlaneseq
    %v7152 = vshrl.u32 %v7151, 7
    %v7153 = vsub.s32 %v560, %v7152
    %v7154 = vrot.slane %v7124, %v7153
    %v7155 = vlaneseq
    %v7156 = vshrl.u32 %v7155, 7
    %v7157 = vsub.s32 %v560, %v7156
    %v7158 = vrot.slane %v7127, %v7157
    %v7159 = vlaneseq
    %v7160 = vshrl.u32 %v7159, 7
    %v7161 = vsub.s32 %v560, %v7160
    %v7162 = vrot.slane %v7130, %v7161
    %v7163 = vsel %vm1974, %v7138, %v7134
    %v7164 = vsel %vm1976, %v7142, %v7163
    %v7165 = vsel %vm1978, %v7146, %v7164
    %v7166 = vsel %vm1980, %v7150, %v7165
    %v7167 = vsel %vm1982, %v7154, %v7166
    %v7168 = vsel %vm1984, %v7158, %v7167
    %v7169 = vsel %vm1986, %v7162, %v7168
    %v7170 = vsel %vm1997, %v7169, 0
    %7172 = vmatprep.subr.mxu0 0.0
    %7173 = vmatpush1.msra.mxu0 0.0
    %7174 = vmatprep.subr.mxu0 0.0
    %7175 = vmatpush1.msra.mxu0 0.0
    %7176 = vmatprep.subr.mxu0 0.0
    %7177 = vmatpush1.msra.mxu0 0.0
    %7178 = vmatprep.subr.mxu0 0.0
    %7179 = vmatpush1.msra.mxu0 0.0
    %7180 = vmatprep.subr.mxu0 0.0
    %7181 = vmatpush1.msra.mxu0 0.0
    %7182 = vmatprep.subr.mxu0 0.0
    %7183 = vmatpush1.msra.mxu0 0.0
    %7184 = vmatprep.subr.mxu0 0.0
    %7185 = vmatpush1.msra.mxu0 0.0
    %7186 = vmatprep.subr.mxu0 0.0
    %7187 = vmatpush1.msra.mxu0 0.0
    %7188 = vmatprep.subr.mxu0 0.0
    %7189 = vmatpush1.msra.mxu0 0.0
    %7190 = vmatprep.subr.mxu0 0.0
    %7191 = vmatpush1.msra.mxu0 0.0
    %7192 = vmatprep.subr.mxu0 0.0
    %7193 = vmatpush1.msra.mxu0 0.0
    %7194 = vmatprep.subr.mxu0 0.0
    %7195 = vmatpush1.msra.mxu0 0.0
    %7196 = vmatprep.subr.mxu0 0.0
    %7197 = vmatpush1.msra.mxu0 0.0
    %7198 = vmatprep.subr.mxu0 0.0
    %7199 = vmatpush1.msra.mxu0 0.0
    %7200 = vmatprep.subr.mxu0 0.0
    %7201 = vmatpush1.msra.mxu0 0.0
    %7202 = vmatprep.subr.mxu0 %v5002
    %7203 = vmatpush1.msra.mxu0 %v5006
    %7204 = vmatprep.subr.mxu0 0.0
    %7205 = vmatpush2.msra.mxu0 0.0
    %7206 = vmatprep.subr.mxu0 0.0
    %7207 = vmatpush2.msra.mxu0 0.0
    %7208 = vmatprep.subr.mxu0 0.0
    %7209 = vmatpush2.msra.mxu0 0.0
    %7210 = vmatprep.subr.mxu0 0.0
    %7211 = vmatpush2.msra.mxu0 0.0
    %7212 = vmatprep.subr.mxu0 0.0
    %7213 = vmatpush2.msra.mxu0 0.0
    %7214 = vmatprep.subr.mxu0 0.0
    %7215 = vmatpush2.msra.mxu0 0.0
    %7216 = vmatprep.subr.mxu0 0.0
    %7217 = vmatpush2.msra.mxu0 0.0
    %7218 = vmatprep.subr.mxu0 0.0
    %7219 = vmatpush2.msra.mxu0 0.0
    %7220 = vmatprep.subr.mxu0 0.0
    %7221 = vmatpush2.msra.mxu0 0.0
    %7222 = vmatprep.subr.mxu0 0.0
    %7223 = vmatpush2.msra.mxu0 0.0
    %7224 = vmatprep.subr.mxu0 0.0
    %7225 = vmatpush2.msra.mxu0 0.0
    %7226 = vmatprep.subr.mxu0 0.0
    %7227 = vmatpush2.msra.mxu0 0.0
    %7228 = vmatprep.subr.mxu0 0.0
    %7229 = vmatpush2.msra.mxu0 0.0
    %7230 = vmatprep.subr.mxu0 0.0
    %7231 = vmatpush2.msra.mxu0 0.0
    %7232 = vmatprep.subr.mxu0 0.0
    %7233 = vmatpush2.msra.mxu0 0.0
    %7234 = vmatprep.subr.mxu0 0.0
    %7235 = vmatpush2.msra.mxu0 0.0
    %7236 = vmatprep.mubr.f32.mxu0 0.0
    %7237 = vmatmul.mubr.f32.gmra.mxu0 %v7170
    %v7238 = vpop.f32.mrf.mxu0
    %v7239 = vadd.f32 0.0, %v7238
    %v7240 = vpop.f32.mrf.mxu0
    %v7241 = vadd.f32 0.0, %v7240
    %7242 = vdwg.mxu0
    %7247 = vrot.lane.b32.xlu0 %v7095, 16
    %v7248 = vpop.permute.xlu0 %7247
    %7249 = vrot.lane.b32.xlu0 %v7097, 16
    %v7250 = vpop.permute.xlu0 %7249
    %7251 = vrot.lane.b32.xlu0 %v7239, 16
    %v7252 = vpop.permute.xlu0 %7251
    %7253 = vrot.lane.b32.xlu0 %v7241, 16
    %v7254 = vpop.permute.xlu0 %7253
    %v7255 = vsel %vm847, %v7248, %v7250
    %v7256 = vsel %vm847, %v7252, %v7254
    %v7261 = vsel %vm847, %v5000, %v7248
    %v7262 = vsel %vm847, %v5002, %v7252
    %v7263 = vpack.c.bf16 %v5006, %v5005
    %v7264 = vpack.c.bf16 %v7262, %v7261
    %v7265 = vpack.c.bf16 %v7256, %v7255
    %v7266 = vpack.c.bf16 %v5084, %v5083
    %v7267 = vpack.c.bf16 %v5086, %v5085
    %v7268 = vpack.c.bf16 %v5088, %v5087
    %v7269 = vpack.c.bf16 %v5090, %v5089
    %v7270 = vpack.c.bf16 %v5092, %v5091
    %v7271 = vpack.c.bf16 %v5094, %v5093
    %v7272 = vpack.c.bf16 %v5096, %v5095
    %v7273 = vpack.c.bf16 %v5098, %v5097
    %v7274 = vpack.c.bf16 %v5100, %v5099
    %v7275 = vpack.c.bf16 %v5102, %v5101
    %v7276 = vpack.c.bf16 %v5104, %v5103
    %v7277 = vpack.c.bf16 %v5106, %v5105
    %v7278 = vpack.c.bf16 %v5108, %v5107
    %v7279 = vpack.c.bf16 %v5110, %v5109
    %v7280 = vpack.c.bf16 %v5112, %v5111
    %v7281 = vpack.c.bf16 %v5114, %v5113
    %v7282 = vpack.c.bf16 %v5116, %v5115
    %v7283 = vpack.c.bf16 %v5118, %v5117
    %v7285 = vlaneseq
    %v7286 = vshrl.u32 %v7285, 7
    %v7287 = vsub.s32 0, %v7286
    %v7288 = vrot.slane %v5119, %v7287
    %v7291 = vsel %vm2689, %v7265, 0
    %7293 = vmatprep.subr.bf16.mxu0 0
    %7294 = vmatpush1.bf16.msra.mxu0 %v7273
    %7295 = vmatprep.subr.bf16.mxu0 0
    %7296 = vmatpush1.bf16.msra.mxu0 %v7272
    %7297 = vmatprep.subr.bf16.mxu0 0
    %7298 = vmatpush1.bf16.msra.mxu0 %v7271
    %7299 = vmatprep.subr.bf16.mxu0 0
    %7300 = vmatpush1.bf16.msra.mxu0 %v7270
    %7301 = vmatprep.subr.bf16.mxu0 0
    %7302 = vmatpush1.bf16.msra.mxu0 %v7269
    %7303 = vmatprep.subr.bf16.mxu0 0
    %7304 = vmatpush1.bf16.msra.mxu0 %v7268
    %7305 = vmatprep.subr.bf16.mxu0 0
    %7306 = vmatpush1.bf16.msra.mxu0 %v7267
    %7307 = vmatprep.subr.bf16.mxu0 0
    %7308 = vmatpush1.bf16.msra.mxu0 %v7266
    %7309 = vmatprep.subr.bf16.mxu0 0
    %7310 = vmatpush2.bf16.msra.mxu0 %v7281
    %7311 = vmatprep.subr.bf16.mxu0 0
    %7312 = vmatpush2.bf16.msra.mxu0 %v7280
    %7313 = vmatprep.subr.bf16.mxu0 0
    %7314 = vmatpush2.bf16.msra.mxu0 %v7279
    %7315 = vmatprep.subr.bf16.mxu0 0
    %7316 = vmatpush2.bf16.msra.mxu0 %v7278
    %7317 = vmatprep.subr.bf16.mxu0 0
    %7318 = vmatpush2.bf16.msra.mxu0 %v7277
    %7319 = vmatprep.subr.bf16.mxu0 0
    %7320 = vmatpush2.bf16.msra.mxu0 %v7276
    %7321 = vmatprep.subr.bf16.mxu0 0
    %7322 = vmatpush2.bf16.msra.mxu0 %v7275
    %7323 = vmatprep.subr.bf16.mxu0 0
    %7324 = vmatpush2.bf16.msra.mxu0 %v7274
    %7325 = vmatprep.mubr.bf16.mxu0 %v7264
    %7326 = vmatmul.mubr.bf16.gmra.mxu0 %v7263
    %v7327 = vpop.f32.mrf.mxu0
    %v7328 = vadd.f32 %v7288, %v7327
    %v7329 = vpop.f32.mrf.mxu0
    %v7330 = vpop.f32.mrf.mxu0
    %v7331 = vadd.f32 %v7288, %v7330
    %v7332 = vpop.f32.mrf.mxu0
    %7333 = vdwg.mxu0
    %7334 = vmatprep.subr.bf16.mxu0 0
    %7335 = vmatpush1.bf16.msra.mxu0 0
    %7336 = vmatprep.subr.bf16.mxu0 0
    %7337 = vmatpush1.bf16.msra.mxu0 0
    %7338 = vmatprep.subr.bf16.mxu0 0
    %7339 = vmatpush1.bf16.msra.mxu0 0
    %7340 = vmatprep.subr.bf16.mxu0 0
    %7341 = vmatpush1.bf16.msra.mxu0 0
    %7342 = vmatprep.subr.bf16.mxu0 0
    %7343 = vmatpush1.bf16.msra.mxu0 0
    %7344 = vmatprep.subr.bf16.mxu0 0
    %7345 = vmatpush1.bf16.msra.mxu0 0
    %7346 = vmatprep.subr.bf16.mxu0 0
    %7347 = vmatpush1.bf16.msra.mxu0 %v7283
    %7348 = vmatprep.subr.bf16.mxu0 0
    %7349 = vmatpush1.bf16.msra.mxu0 %v7282
    %7350 = vmatprep.subr.bf16.mxu0 0
    %7351 = vmatpush2.bf16.msra.mxu0 0
    %7352 = vmatprep.subr.bf16.mxu0 0
    %7353 = vmatpush2.bf16.msra.mxu0 0
    %7354 = vmatprep.subr.bf16.mxu0 0
    %7355 = vmatpush2.bf16.msra.mxu0 0
    %7356 = vmatprep.subr.bf16.mxu0 0
    %7357 = vmatpush2.bf16.msra.mxu0 0
    %7358 = vmatprep.subr.bf16.mxu0 0
    %7359 = vmatpush2.bf16.msra.mxu0 0
    %7360 = vmatprep.subr.bf16.mxu0 0
    %7361 = vmatpush2.bf16.msra.mxu0 0
    %7362 = vmatprep.subr.bf16.mxu0 0
    %7363 = vmatpush2.bf16.msra.mxu0 0
    %7364 = vmatprep.subr.bf16.mxu0 0
    %7365 = vmatpush2.bf16.msra.mxu0 0
    %7366 = vmatprep.mubr.bf16.mxu0 0
    %7367 = vmatmul.mubr.bf16.gmra.mxu0 %v7291
    %v7368 = vpop.f32.mrf.mxu0
    %v7369 = vadd.f32 %v7328, %v7368
    %v7370 = vpop.f32.mrf.mxu0
    %v7371 = vpop.f32.mrf.mxu0
    %v7372 = vadd.f32 %v7331, %v7371
    %v7373 = vpop.f32.mrf.mxu0
    %7374 = vdwg.mxu0
    %v7375 = vadd.f32 %v7369, %v7372
    %v7376 = vrot.slane %v7375, 4
    %v7377 = vadd.f32 %v7375, %v7376
    %v7378 = vrot.slane %v7377, 2
    %v7379 = vadd.f32 %v7377, %v7378
    %v7380 = vrot.slane %v7379, 1
    %v7381 = vadd.f32 %v7379, %v7380
    %v7382 = vmul.f32 %v7381, %v2744
    %v7383 = vmul.f32 %v7369, %v7369
    %v7384 = vmul.f32 %v7372, %v7372
    %v7385 = vadd.f32 %v7383, %v7384
    %v7386 = vrot.slane %v7385, 4
    %v7387 = vadd.f32 %v7385, %v7386
    %v7388 = vrot.slane %v7387, 2
    %v7389 = vadd.f32 %v7387, %v7388
    %v7390 = vrot.slane %v7389, 1
    %v7391 = vadd.f32 %v7389, %v7390
    %v7392 = vmul.f32 %v7391, %v2744
    %v7393 = vmul.f32 %v7382, %v7382
    %v7394 = vsub.f32 %v7392, %v7393
    %v7395 = vmax.f32 %v7394, 0.0
    %v7396 = vsub.f32 %v7369, %v7382
    %v7397 = vsub.f32 %v7372, %v7382
    %v7398 = vadd.f32 %v7395, 1e-05
    %v7399 = vrsqrt.pop %v7398
    %v7400 = vmul.f32 %v7396, %v7399
    %v7401 = vmul.f32 %v7397, %v7399
    %v7403 = vlaneseq
    %v7404 = vshrl.u32 %v7403, 7
    %v7405 = vsub.s32 0, %v7404
    %v7406 = vrot.slane %v5120, %v7405
    %v7408 = vmul.f32 %v7400, %v7406
    %v7409 = vmul.f32 %v7401, %v7406
    %v7411 = vlaneseq
    %v7412 = vshrl.u32 %v7411, 7
    %v7413 = vsub.s32 0, %v7412
    %v7414 = vrot.slane %v5121, %v7413
    %v7416 = vadd.f32 %v7408, %v7414
    %v7417 = vadd.f32 %v7409, %v7414
    %vm7418 = vcmp.ge.f32.partialorder %v7416, 0.0
    %vm7419 = vcmp.ge.f32.partialorder %v7417, 0.0
    %v7420 = vmul.f32 %v7416, 0.01
    %v7421 = vmul.f32 %v7417, 0.01
    %v7422 = vsel %vm7418, %v7416, %v7420
    %v7423 = vsel %vm7419, %v7417, %v7421
    %7424 = vst [vmem:[#allocation53] sm:$0xff] %v7422
    %7425 = vst [vmem:[#allocation53 + $0x8] sm:$0xff] %v7423
    // Predicated region
    $region298: #{graphnn_forward.1} parent=1 // pred_check
      _
    $region299: #{graphnn_forward.1} parent=1 // pred_check_branch
      %7427 = sbr.rel (0) target = $region301
    $region300: #{graphnn_forward.1} parent=1 // pred_region
      %s7429 = ssub.s32 256, 256
      %7430 = vsyncadd [#allocation7], %s7429
      %s7431 = sshll.u32 [#allocation53], 4
      %s7432 = int_to_ptr.vmem [resolvable:$true] %s7431
      %7437 = dma.vmem_to_hbm [thread:$0]  %s7432, 256, %s87, [#allocation7], 128, 128, 8
    $region301: #{graphnn_forward.1} parent=1 // pred_fallthru
      _
    // Predicated region
    $region302: #{graphnn_forward.1} parent=1 // pred_check
      _
    $region303: #{graphnn_forward.1} parent=1 // pred_check_branch
      %7439 = sbr.rel (0) target = $region305
    $region304: #{graphnn_forward.1} parent=1 // pred_region
      %7440 = dma.done [#allocation7], 256
    $region305: #{graphnn_forward.1} parent=1 // pred_fallthru
      _
    %7441 = vsyncpa [#allocation6], 1
    %7442 = vsyncpa [#allocation9], 1
    %7443 = vsyncpa [#allocation12], 1
    %7444 = vsyncpa [#allocation15], 1
    %7445 = vsyncpa [#allocation18], 1
    %7446 = vsyncpa [#allocation21], 1
    %7447 = vsyncpa [#allocation24], 1
    %7448 = vsyncpa [#allocation27], 1
    %7449 = vsyncpa [#allocation30], 1
    %7450 = vsyncpa [#allocation33], 1
    %7451 = vsyncpa [#allocation36], 1
    %7452 = vsyncpa [#allocation39], 1
    %7453 = vsyncpa [#allocation42], 1
    %7454 = vsyncpa [#allocation45], 1
    %7455 = vsyncpa [#allocation48], 1
    %7456 = vsyncpa [#allocation51], 1
    %7457 = vsyncpa [#allocation7], 1

</llo_original>
